<compile_context>
chip_gen: v6e
topology: v6e:2x2x1
jax: 0.10.0
libtpu: 0.0.40
codegen_flags: <defaults>
</compile_context>

<pallas_src>
import functools

import jax
import jax.numpy as jnp
from jax.experimental import pallas as pl
from jax.experimental.pallas import tpu as pltpu

LANES = 128
CFG = dict(c1=16, c2=32, c3=48, c4=32, c5=32, fc=64, ncls=10)


def _round_up(x, m):
    return (x + m - 1) // m * m


# ---------------------------------------------------------------------------
# Pallas kernels
# ---------------------------------------------------------------------------

def _maxpool3x3s2_from_flat(conv_scr, o_ref, *, pitch, ph_count, pw_count):
    """MaxPool(3, stride 2) reading the flat conv result (row pitch `pitch`)."""
    band_w = 2 * (pw_count - 1) + 3
    for ph in range(ph_count):
        base = 2 * ph * pitch
        band = conv_scr[base:base + band_w, :]
        band = jnp.maximum(band, conv_scr[base + pitch:base + pitch + band_w, :])
        band = jnp.maximum(band, conv_scr[base + 2 * pitch:base + 2 * pitch + band_w, :])
        pieces = [jnp.max(band[2 * pw:2 * pw + 3, :], axis=0, keepdims=True)
                  for pw in range(pw_count)]
        o_ref[0, ph] = jnp.concatenate(pieces, axis=0).astype(o_ref.dtype)


def _conv1_kernel(p_ref, w_ref, b_ref, o_ref, conv_scr, *, ow, ph_count, pw_count):
    # p_ref: (1, OH*OW, Kp) bf16 im2col patches; w_ref: (Kp, 128) bf16; b_ref: (1,128) f32
    conv = jnp.dot(p_ref[0], w_ref[...], preferred_element_type=jnp.float32)
    conv_scr[...] = jnp.maximum(conv + b_ref[...], 0.0)
    _maxpool3x3s2_from_flat(conv_scr, o_ref, pitch=ow,
                            ph_count=ph_count, pw_count=pw_count)


def _conv_tap_kernel(x_ref, w_ref, b_ref, o_ref, *scratch, kh, kw, wp, oh, ow, pool):
    # x_ref: (1, HP*WP, 128) bf16 flattened zero-padded input (lane-dense channels)
    # w_ref: (KH*KW, 128, 128) bf16 per-tap weights; b_ref: (1, 128) f32
    r = (oh - 1) * wp + ow                      # flat conv rows needed (junk cols unused)
    acc = jnp.broadcast_to(b_ref[...], (r, LANES))
    for ky in range(kh):
        for kx in range(kw):
            off = ky * wp + kx
            acc = acc + jnp.dot(x_ref[0, off:off + r, :], w_ref[ky * kw + kx],
                                preferred_element_type=jnp.float32)
    acc = jnp.maximum(acc, 0.0)
    if pool:
        conv_scr, = scratch
        conv_scr[...] = acc
        phc = (oh - 3) // 2 + 1
        pwc = (ow - 3) // 2 + 1
        _maxpool3x3s2_from_flat(conv_scr, o_ref, pitch=wp, ph_count=phc, pw_count=pwc)
    else:
        for i in range(oh):
            o_ref[0, i] = acc[i * wp:i * wp + ow, :].astype(o_ref.dtype)


def _fc_chain_kernel(x_ref, w1_ref, b1_ref, w2_ref, b2_ref, o6_ref, o7_ref, o8_ref):
    x = x_ref[...]
    h1 = jnp.maximum(
        jnp.dot(x, w1_ref[...], preferred_element_type=jnp.float32) + b1_ref[...], 0.0)
    h2 = jnp.maximum(
        jnp.dot(h1.astype(w2_ref.dtype), w2_ref[...],
                preferred_element_type=jnp.float32) + b2_ref[...], 0.0)
    # NOTE: reference forward computes x_group8 = self.group7(x_group7), i.e.
    # fc2 is applied AGAIN and group8's Linear is never used. Bug preserved.
    h3 = jnp.maximum(
        jnp.dot(h2.astype(w2_ref.dtype), w2_ref[...],
                preferred_element_type=jnp.float32) + b2_ref[...], 0.0)
    o6_ref[...] = h1
    o7_ref[...] = h2
    o8_ref[...] = h3


# ---------------------------------------------------------------------------
# pallas_call wrappers
# ---------------------------------------------------------------------------

def conv1_group(patches, w, b, *, oh_conv, ow_conv):
    n, m, kp = patches.shape
    phc = (oh_conv - 3) // 2 + 1
    pwc = (ow_conv - 3) // 2 + 1
    kern = functools.partial(_conv1_kernel, ow=ow_conv, ph_count=phc, pw_count=pwc)
    return pl.pallas_call(
        kern,
        out_shape=jax.ShapeDtypeStruct((n, phc, pwc, LANES), jnp.bfloat16),
        grid=(n,),
        in_specs=[
            pl.BlockSpec((1, m, kp), lambda i: (i, 0, 0)),
            pl.BlockSpec((kp, LANES), lambda i: (0, 0)),
            pl.BlockSpec((1, LANES), lambda i: (0, 0)),
        ],
        out_specs=pl.BlockSpec((1, phc, pwc, LANES), lambda i: (i, 0, 0, 0)),
        scratch_shapes=[pltpu.VMEM((m, LANES), jnp.float32)],
        compiler_params=pltpu.CompilerParams(dimension_semantics=("parallel",)),
    )(patches, w, b)


def conv_group(x_flat, w, b, *, kh, kw, hp, wp, pool):
    n, hw, cp = x_flat.shape
    assert hw == hp * wp and cp == LANES
    oh, ow = hp - kh + 1, wp - kw + 1
    r = (oh - 1) * wp + ow
    if pool:
        out_h, out_w = (oh - 3) // 2 + 1, (ow - 3) // 2 + 1
        scratch = [pltpu.VMEM((r, LANES), jnp.float32)]
    else:
        out_h, out_w = oh, ow
        scratch = []
    kern = functools.partial(_conv_tap_kernel, kh=kh, kw=kw, wp=wp, oh=oh, ow=ow, pool=pool)
    return pl.pallas_call(
        kern,
        out_shape=jax.ShapeDtypeStruct((n, out_h, out_w, LANES), jnp.bfloat16),
        grid=(n,),
        in_specs=[
            pl.BlockSpec((1, hw, cp), lambda i: (i, 0, 0)),
            pl.BlockSpec((kh * kw, cp, LANES), lambda i: (0, 0, 0)),
            pl.BlockSpec((1, LANES), lambda i: (0, 0)),
        ],
        out_specs=pl.BlockSpec((1, out_h, out_w, LANES), lambda i: (i, 0, 0, 0)),
        scratch_shapes=scratch,
        compiler_params=pltpu.CompilerParams(dimension_semantics=("parallel",)),
    )(x_flat, w, b)


def fc_chain(x, w1, b1, w2, b2):
    m = x.shape[0]
    return pl.pallas_call(
        _fc_chain_kernel,
        out_shape=[jax.ShapeDtypeStruct((m, LANES), jnp.float32)] * 3,
        in_specs=[pl.BlockSpec(memory_space=pltpu.MemorySpace.VMEM)] * 5,
        out_specs=[pl.BlockSpec(memory_space=pltpu.MemorySpace.VMEM)] * 3,
    )(x, w1, b1, w2, b2)


# ---------------------------------------------------------------------------
# Parameters (deterministic synthetic init; scaled-down AlexNet shapes)
# ---------------------------------------------------------------------------

def init_params(key):
    ks = jax.random.split(key, 16)
    s = 0.05

    def cw(k, kh, kw, ic, oc):
        return jax.random.normal(k, (kh, kw, ic, oc), jnp.float32) * s

    def lw(k, i, o):
        return jax.random.normal(k, (i, o), jnp.float32) * s

    def bias(k, o):
        return jax.random.normal(k, (o,), jnp.float32) * s

    p = {}
    p["conv1_w"], p["conv1_b"] = cw(ks[0], 11, 11, 3, CFG["c1"]), bias(ks[1], CFG["c1"])
    p["conv2_w"], p["conv2_b"] = cw(ks[2], 5, 5, CFG["c1"], CFG["c2"]), bias(ks[3], CFG["c2"])
    p["conv3_w"], p["conv3_b"] = cw(ks[4], 3, 3, CFG["c2"], CFG["c3"]), bias(ks[5], CFG["c3"])
    p["conv4_w"], p["conv4_b"] = cw(ks[6], 3, 3, CFG["c3"], CFG["c4"]), bias(ks[7], CFG["c4"])
    p["conv5_w"], p["conv5_b"] = cw(ks[8], 3, 3, CFG["c4"], CFG["c5"]), bias(ks[9], CFG["c5"])
    p["fc1_w"], p["fc1_b"] = lw(ks[10], CFG["c5"] * 1 * 1, CFG["fc"]), bias(ks[11], CFG["fc"])
    p["fc2_w"], p["fc2_b"] = lw(ks[12], CFG["fc"], CFG["fc"]), bias(ks[13], CFG["fc"])
    p["fc3_w"], p["fc3_b"] = lw(ks[14], CFG["fc"], CFG["ncls"]), bias(ks[15], CFG["ncls"])
    return p


def prepare_params(p):
    """One-time prep (hoisted out of the forward): lane-dense 128 padding,
    per-tap weight reshape, bf16 cast of matmul operands (biases stay f32)."""

    def pad_bias(b):
        return jnp.pad(b, (0, LANES - b.shape[0])).reshape(1, LANES).astype(jnp.float32)

    def conv_taps(w):
        kh, kw, ci, co = w.shape
        wt = jnp.zeros((kh * kw, LANES, LANES), jnp.float32)
        wt = wt.at[:, :ci, :co].set(w.reshape(kh * kw, ci, co))
        return wt.astype(jnp.bfloat16)

    def fc_pad(w):
        ki, ko = w.shape
        return jnp.zeros((LANES, LANES), jnp.float32).at[:ki, :ko].set(w).astype(jnp.bfloat16)

    q = {}
    kc = 11 * 11 * 3
    kcp = _round_up(kc, LANES)
    w1 = jnp.zeros((kcp, LANES), jnp.float32)
    w1 = w1.at[:kc, :CFG["c1"]].set(p["conv1_w"].reshape(kc, CFG["c1"]))
    q["conv1_w"], q["conv1_b"] = w1.astype(jnp.bfloat16), pad_bias(p["conv1_b"])
    q["conv2_w"], q["conv2_b"] = conv_taps(p["conv2_w"]), pad_bias(p["conv2_b"])
    q["conv3_w"], q["conv3_b"] = conv_taps(p["conv3_w"]), pad_bias(p["conv3_b"])
    q["conv4_w"], q["conv4_b"] = conv_taps(p["conv4_w"]), pad_bias(p["conv4_b"])
    q["conv5_w"], q["conv5_b"] = conv_taps(p["conv5_w"]), pad_bias(p["conv5_b"])
    q["fc1_w"], q["fc1_b"] = fc_pad(p["fc1_w"]), pad_bias(p["fc1_b"])
    q["fc2_w"], q["fc2_b"] = fc_pad(p["fc2_w"]), pad_bias(p["fc2_b"])
    # TODO(synk): fc3 (group8's Linear) is never reached because the reference
    # forward re-applies group7; its weights are initialized but not prepared.
    return q


# ---------------------------------------------------------------------------
# XLA glue (padding / flattening only; all hot math lives in the kernels)
# ---------------------------------------------------------------------------

def _im2col_stride4(x_nhwc, kh, kw, stride, pad):
    n, h, w, c = x_nhwc.shape
    oh = (h + 2 * pad - kh) // stride + 1
    ow = (w + 2 * pad - kw) // stride + 1
    xp = jnp.pad(x_nhwc, ((0, 0), (pad, pad), (pad, pad), (0, 0)))
    views = []
    for ky in range(kh):
        for kx in range(kw):
            views.append(xp[:, ky:ky + stride * (oh - 1) + 1:stride,
                            kx:kx + stride * (ow - 1) + 1:stride, :])
    patches = jnp.concatenate(views, axis=-1).reshape(n, oh * ow, kh * kw * c)
    kcp = _round_up(kh * kw * c, LANES)
    patches = jnp.pad(patches, ((0, 0), (0, 0), (0, kcp - kh * kw * c)))
    return patches, oh, ow


def _pad_hw_flat(x_nhwc, pad):
    n, h, w, c = x_nhwc.shape
    xp = jnp.pad(x_nhwc, ((0, 0), (pad, pad), (pad, pad), (0, 0)))
    hp, wp = h + 2 * pad, w + 2 * pad
    return xp.reshape(n, hp * wp, c), hp, wp


def _embed(act, c_real):
    """torch x.view(N,-1) on an NCHW tensor: flatten in (C,H,W) order, drop lane pad."""
    a = act[..., :c_real].astype(jnp.float32)
    return jnp.transpose(a, (0, 3, 1, 2)).reshape(a.shape[0], -1)


# ---------------------------------------------------------------------------
# Forward pass (mirrors AlexNetEmbeddings.forward; layer_index semantics kept)
# ---------------------------------------------------------------------------

def alexnet_embeddings(x_nchw, qp, layer_index=-1):
    n = x_nchw.shape[0]
    x = jnp.transpose(x_nchw, (0, 2, 3, 1)).astype(jnp.bfloat16)  # NCHW -> NHWC

    # group1: Conv(11,s4,p2)+ReLU+MaxPool(3,2) — one fused kernel
    patches, oh1, ow1 = _im2col_stride4(x, 11, 11, 4, 2)
    g1 = conv1_group(patches, qp["conv1_w"], qp["conv1_b"], oh_conv=oh1, ow_conv=ow1)
    if layer_index == 0:
        return [_embed(g1, CFG["c1"])]

    # group2: Conv(5,s1,p2)+ReLU+MaxPool(3,2) — fused, im2col done in-kernel
    x2, hp2, wp2 = _pad_hw_flat(g1, 2)
    g2 = conv_group(x2, qp["conv2_w"], qp["conv2_b"], kh=5, kw=5, hp=hp2, wp=wp2, pool=True)
    if layer_index == 1:
        return [_embed(g2, CFG["c2"])]

    x3, hp3, wp3 = _pad_hw_flat(g2, 1)
    g3 = conv_group(x3, qp["conv3_w"], qp["conv3_b"], kh=3, kw=3, hp=hp3, wp=wp3, pool=False)
    if layer_index == 2:
        return [_embed(g3, CFG["c3"])]

    x4, hp4, wp4 = _pad_hw_flat(g3, 1)
    g4 = conv_group(x4, qp["conv4_w"], qp["conv4_b"], kh=3, kw=3, hp=hp4, wp=wp4, pool=False)
    if layer_index == 3:
        return [_embed(g4, CFG["c4"])]

    x5, hp5, wp5 = _pad_hw_flat(g4, 1)
    g5 = conv_group(x5, qp["conv5_w"], qp["conv5_b"], kh=3, kw=3, hp=hp5, wp=wp5, pool=True)
    if layer_index == 4:
        return [_embed(g5, CFG["c5"])]

    # classifier: Dropout layers are identity (eval-mode semantics).
    # TODO(synk): the reference forward omits the flatten before the classifier
    # (would raise in torch); we flatten (NCHW order) so the Linears are defined.
    flat5 = g5.reshape(n, LANES)                      # (N,1,1,128) -> (N,128); pad lanes are 0
    mpad = _round_up(max(n, 8), 8)
    flat5 = jnp.pad(flat5, ((0, mpad - n), (0, 0)))   # sublane-align M
    o6, o7, o8 = fc_chain(flat5, qp["fc1_w"], qp["fc1_b"], qp["fc2_w"], qp["fc2_b"])
    g6 = o6[:n, :CFG["fc"]]
    if layer_index == 5:
        return [g6]
    g7 = o7[:n, :CFG["fc"]]
    if layer_index == 6:
        return [g7]
    g8 = o8[:n, :CFG["fc"]]                           # group7 re-applied, as in reference
    if layer_index == 7:
        return [g8]

    return [_embed(g1, CFG["c1"]), _embed(g2, CFG["c2"]), _embed(g3, CFG["c3"]),
            _embed(g4, CFG["c4"]), _embed(g5, CFG["c5"]), g6, g7, g8]


# ---------------------------------------------------------------------------
# Main
# ---------------------------------------------------------------------------

if __name__ == "__main__":
    key = jax.random.PRNGKey(0)
    k_params, k_x = jax.random.split(key)
    qp = prepare_params(init_params(k_params))

    # small input, NCHW like the PyTorch module: (batch=2, 3 channels, 64x64)
    x = jax.random.normal(k_x, (2, 3, 64, 64), jnp.float32)

    fwd = jax.jit(alexnet_embeddings, static_argnames=("layer_index",))
    embeddings = fwd(x, qp, layer_index=-1)
    embeddings = [jax.block_until_ready(e) for e in embeddings]

    expected = [
        (2, CFG["c1"] * 7 * 7),   # group1
        (2, CFG["c2"] * 3 * 3),   # group2
        (2, CFG["c3"] * 3 * 3),   # group3
        (2, CFG["c4"] * 3 * 3),   # group4
        (2, CFG["c5"] * 1 * 1),   # group5
        (2, CFG["fc"]),           # group6
        (2, CFG["fc"]),           # group7
        (2, CFG["fc"]),           # "group8" (= group7 reapplied, as in reference)
    ]
    assert len(embeddings) == 8
    for e, shp in zip(embeddings, expected):
        assert e.shape == shp, (e.shape, shp)
        assert e.dtype == jnp.float32
        assert bool(jnp.all(jnp.isfinite(e)))

    # also exercise an early-exit path
    single = fwd(x, qp, layer_index=2)
    jax.block_until_ready(single[0])
    assert single[0].shape == expected[2]

    print("KERNEL_OK")
</pallas_src>

<mosaic_0001>
module attributes {stable_mosaic.version = 11 : i64} {
  func.func @_conv1_kernel(%arg0: i32, %arg1: memref<1x225x384xbf16, #tpu.memory_space<vmem>>, %arg2: memref<384x128xbf16, #tpu.memory_space<vmem>>, %arg3: memref<1x128xf32, #tpu.memory_space<vmem>>, %arg4: memref<1x7x7x128xbf16, #tpu.memory_space<vmem>>, %arg5: memref<225x128xf32, #tpu.memory_space<vmem>>) attributes {dimension_semantics = [#tpu.dimension_semantics<parallel>], iteration_bounds = array<i64: 2>, scalar_prefetch = 0 : i64, scratch_operands = 1 : i64, tpu.core_type = #tpu.core_type<tc>, window_params = [{transform_indices = @transform_0, window_bounds = array<i64: 1, 225, 384>}, {pipeline_mode = #tpu.pipeline_mode<synchronous>, transform_indices = @transform_1, window_bounds = array<i64: 384, 128>}, {pipeline_mode = #tpu.pipeline_mode<synchronous>, transform_indices = @transform_2, window_bounds = array<i64: 1, 128>}, {transform_indices = @transform_3, window_bounds = array<i64: 1, 7, 7, 128>}]} {
    %c0 = arith.constant 0 : index
    %c0_0 = arith.constant 0 : index
    %c0_1 = arith.constant 0 : index
    %0 = vector.load %arg1[%c0, %c0_0, %c0_1] : memref<1x225x384xbf16, #tpu.memory_space<vmem>>, vector<1x225x384xbf16>
    %1 = vector.shape_cast %0 : vector<1x225x384xbf16> to vector<225x384xbf16>
    %c0_2 = arith.constant 0 : index
    %c0_3 = arith.constant 0 : index
    %2 = vector.load %arg2[%c0_2, %c0_3] : memref<384x128xbf16, #tpu.memory_space<vmem>>, vector<384x128xbf16>
    %cst = arith.constant dense<0.000000e+00> : vector<225x128xf32>
    %3 = tpu.matmul %1, %2, %cst {dimension_numbers = #tpu.dot_dimension_numbers<[1], [0], [0], [1], [0, 0, 1, 1], [], []>} : vector<225x384xbf16>, vector<384x128xbf16>, vector<225x128xf32> -> vector<225x128xf32>
    %c0_4 = arith.constant 0 : index
    %c0_5 = arith.constant 0 : index
    %4 = vector.load %arg3[%c0_4, %c0_5] : memref<1x128xf32, #tpu.memory_space<vmem>>, vector<1x128xf32>
    %5 = vector.broadcast %4 : vector<1x128xf32> to vector<225x128xf32>
    %6 = arith.addf %3, %5 : vector<225x128xf32>
    %cst_6 = arith.constant 0.000000e+00 : f32
    %7 = vector.broadcast %cst_6 : f32 to vector<225x128xf32>
    %8 = arith.maximumf %6, %7 : vector<225x128xf32>
    %c0_7 = arith.constant 0 : index
    %c0_8 = arith.constant 0 : index
    %9 = vector.load %arg5[%c0_7, %c0_8] : memref<225x128xf32, #tpu.memory_space<vmem>>, vector<225x128xf32>
    tpu.vector_store %arg5[%c0_7, %c0_8], %8 {strides = array<i32>} : memref<225x128xf32, #tpu.memory_space<vmem>>, vector<225x128xf32>,
    %c0_9 = arith.constant 0 : index
    %c0_10 = arith.constant 0 : index
    %10 = vector.load %arg5[%c0_9, %c0_10] : memref<225x128xf32, #tpu.memory_space<vmem>>, vector<15x128xf32>
    %c15 = arith.constant 15 : index
    %c0_11 = arith.constant 0 : index
    %11 = vector.load %arg5[%c15, %c0_11] : memref<225x128xf32, #tpu.memory_space<vmem>>, vector<15x128xf32>
    %12 = arith.maximumf %10, %11 : vector<15x128xf32>
    %c30 = arith.constant 30 : index
    %c0_12 = arith.constant 0 : index
    %13 = vector.load %arg5[%c30, %c0_12] : memref<225x128xf32, #tpu.memory_space<vmem>>, vector<15x128xf32>
    %14 = arith.maximumf %12, %13 : vector<15x128xf32>
    %15 = vector.extract_strided_slice %14 {offsets = [0, 0], sizes = [3, 128], strides = [1, 1]} : vector<15x128xf32> to vector<3x128xf32>
    %cst_13 = arith.constant dense<0xFF800000> : vector<128xf32>
    %16 = vector.multi_reduction <maximumf>, %15, %cst_13 [0] : vector<3x128xf32> to vector<128xf32>
    %17 = vector.shape_cast %16 : vector<128xf32> to vector<1x128xf32>
    %18 = vector.extract_strided_slice %14 {offsets = [2, 0], sizes = [3, 128], strides = [1, 1]} : vector<15x128xf32> to vector<3x128xf32>
    %cst_14 = arith.constant dense<0xFF800000> : vector<128xf32>
    %19 = vector.multi_reduction <maximumf>, %18, %cst_14 [0] : vector<3x128xf32> to vector<128xf32>
    %20 = vector.shape_cast %19 : vector<128xf32> to vector<1x128xf32>
    %21 = vector.extract_strided_slice %14 {offsets = [4, 0], sizes = [3, 128], strides = [1, 1]} : vector<15x128xf32> to vector<3x128xf32>
    %cst_15 = arith.constant dense<0xFF800000> : vector<128xf32>
    %22 = vector.multi_reduction <maximumf>, %21, %cst_15 [0] : vector<3x128xf32> to vector<128xf32>
    %23 = vector.shape_cast %22 : vector<128xf32> to vector<1x128xf32>
    %24 = vector.extract_strided_slice %14 {offsets = [6, 0], sizes = [3, 128], strides = [1, 1]} : vector<15x128xf32> to vector<3x128xf32>
    %cst_16 = arith.constant dense<0xFF800000> : vector<128xf32>
    %25 = vector.multi_reduction <maximumf>, %24, %cst_16 [0] : vector<3x128xf32> to vector<128xf32>
    %26 = vector.shape_cast %25 : vector<128xf32> to vector<1x128xf32>
    %27 = vector.extract_strided_slice %14 {offsets = [8, 0], sizes = [3, 128], strides = [1, 1]} : vector<15x128xf32> to vector<3x128xf32>
    %cst_17 = arith.constant dense<0xFF800000> : vector<128xf32>
    %28 = vector.multi_reduction <maximumf>, %27, %cst_17 [0] : vector<3x128xf32> to vector<128xf32>
    %29 = vector.shape_cast %28 : vector<128xf32> to vector<1x128xf32>
    %30 = vector.extract_strided_slice %14 {offsets = [10, 0], sizes = [3, 128], strides = [1, 1]} : vector<15x128xf32> to vector<3x128xf32>
    %cst_18 = arith.constant dense<0xFF800000> : vector<128xf32>
    %31 = vector.multi_reduction <maximumf>, %30, %cst_18 [0] : vector<3x128xf32> to vector<128xf32>
    %32 = vector.shape_cast %31 : vector<128xf32> to vector<1x128xf32>
    %33 = vector.extract_strided_slice %14 {offsets = [12, 0], sizes = [3, 128], strides = [1, 1]} : vector<15x128xf32> to vector<3x128xf32>
    %cst_19 = arith.constant dense<0xFF800000> : vector<128xf32>
    %34 = vector.multi_reduction <maximumf>, %33, %cst_19 [0] : vector<3x128xf32> to vector<128xf32>
    %35 = vector.shape_cast %34 : vector<128xf32> to vector<1x128xf32>
    %36 = tpu.concatenate %17, %20, %23, %26, %29, %32, %35 in 0 : vector<1x128xf32>, vector<1x128xf32>, vector<1x128xf32>, vector<1x128xf32>, vector<1x128xf32>, vector<1x128xf32>, vector<1x128xf32> -> vector<7x128xf32>
    %37 = arith.truncf %36 : vector<7x128xf32> to vector<7x128xbf16>
    %c0_20 = arith.constant 0 : index
    %c0_21 = arith.constant 0 : index
    %c0_22 = arith.constant 0 : index
    %c0_23 = arith.constant 0 : index
    %38 = vector.load %arg4[%c0_20, %c0_21, %c0_22, %c0_23] : memref<1x7x7x128xbf16, #tpu.memory_space<vmem>>, vector<1x1x7x128xbf16>
    %39 = vector.shape_cast %38 : vector<1x1x7x128xbf16> to vector<7x128xbf16>
    %40 = vector.shape_cast %37 : vector<7x128xbf16> to vector<1x1x7x128xbf16>
    tpu.vector_store %arg4[%c0_20, %c0_21, %c0_22, %c0_23], %40 {strides = array<i32>} : memref<1x7x7x128xbf16, #tpu.memory_space<vmem>>, vector<1x1x7x128xbf16>,
    %c30_24 = arith.constant 30 : index
    %c0_25 = arith.constant 0 : index
    %41 = vector.load %arg5[%c30_24, %c0_25] : memref<225x128xf32, #tpu.memory_space<vmem>>, vector<15x128xf32>
    %c45 = arith.constant 45 : index
    %c0_26 = arith.constant 0 : index
    %42 = vector.load %arg5[%c45, %c0_26] : memref<225x128xf32, #tpu.memory_space<vmem>>, vector<15x128xf32>
    %43 = arith.maximumf %41, %42 : vector<15x128xf32>
    %c60 = arith.constant 60 : index
    %c0_27 = arith.constant 0 : index
    %44 = vector.load %arg5[%c60, %c0_27] : memref<225x128xf32, #tpu.memory_space<vmem>>, vector<15x128xf32>
    %45 = arith.maximumf %43, %44 : vector<15x128xf32>
    %46 = vector.extract_strided_slice %45 {offsets = [0, 0], sizes = [3, 128], strides = [1, 1]} : vector<15x128xf32> to vector<3x128xf32>
    %cst_28 = arith.constant dense<0xFF800000> : vector<128xf32>
    %47 = vector.multi_reduction <maximumf>, %46, %cst_28 [0] : vector<3x128xf32> to vector<128xf32>
    %48 = vector.shape_cast %47 : vector<128xf32> to vector<1x128xf32>
    %49 = vector.extract_strided_slice %45 {offsets = [2, 0], sizes = [3, 128], strides = [1, 1]} : vector<15x128xf32> to vector<3x128xf32>
    %cst_29 = arith.constant dense<0xFF800000> : vector<128xf32>
    %50 = vector.multi_reduction <maximumf>, %49, %cst_29 [0] : vector<3x128xf32> to vector<128xf32>
    %51 = vector.shape_cast %50 : vector<128xf32> to vector<1x128xf32>
    %52 = vector.extract_strided_slice %45 {offsets = [4, 0], sizes = [3, 128], strides = [1, 1]} : vector<15x128xf32> to vector<3x128xf32>
    %cst_30 = arith.constant dense<0xFF800000> : vector<128xf32>
    %53 = vector.multi_reduction <maximumf>, %52, %cst_30 [0] : vector<3x128xf32> to vector<128xf32>
    %54 = vector.shape_cast %53 : vector<128xf32> to vector<1x128xf32>
    %55 = vector.extract_strided_slice %45 {offsets = [6, 0], sizes = [3, 128], strides = [1, 1]} : vector<15x128xf32> to vector<3x128xf32>
    %cst_31 = arith.constant dense<0xFF800000> : vector<128xf32>
    %56 = vector.multi_reduction <maximumf>, %55, %cst_31 [0] : vector<3x128xf32> to vector<128xf32>
    %57 = vector.shape_cast %56 : vector<128xf32> to vector<1x128xf32>
    %58 = vector.extract_strided_slice %45 {offsets = [8, 0], sizes = [3, 128], strides = [1, 1]} : vector<15x128xf32> to vector<3x128xf32>
    %cst_32 = arith.constant dense<0xFF800000> : vector<128xf32>
    %59 = vector.multi_reduction <maximumf>, %58, %cst_32 [0] : vector<3x128xf32> to vector<128xf32>
    %60 = vector.shape_cast %59 : vector<128xf32> to vector<1x128xf32>
    %61 = vector.extract_strided_slice %45 {offsets = [10, 0], sizes = [3, 128], strides = [1, 1]} : vector<15x128xf32> to vector<3x128xf32>
    %cst_33 = arith.constant dense<0xFF800000> : vector<128xf32>
    %62 = vector.multi_reduction <maximumf>, %61, %cst_33 [0] : vector<3x128xf32> to vector<128xf32>
    %63 = vector.shape_cast %62 : vector<128xf32> to vector<1x128xf32>
    %64 = vector.extract_strided_slice %45 {offsets = [12, 0], sizes = [3, 128], strides = [1, 1]} : vector<15x128xf32> to vector<3x128xf32>
    %cst_34 = arith.constant dense<0xFF800000> : vector<128xf32>
    %65 = vector.multi_reduction <maximumf>, %64, %cst_34 [0] : vector<3x128xf32> to vector<128xf32>
    %66 = vector.shape_cast %65 : vector<128xf32> to vector<1x128xf32>
    %67 = tpu.concatenate %48, %51, %54, %57, %60, %63, %66 in 0 : vector<1x128xf32>, vector<1x128xf32>, vector<1x128xf32>, vector<1x128xf32>, vector<1x128xf32>, vector<1x128xf32>, vector<1x128xf32> -> vector<7x128xf32>
    %68 = arith.truncf %67 : vector<7x128xf32> to vector<7x128xbf16>
    %c0_35 = arith.constant 0 : index
    %c1 = arith.constant 1 : index
    %c0_36 = arith.constant 0 : index
    %c0_37 = arith.constant 0 : index
    %69 = vector.load %arg4[%c0_35, %c1, %c0_36, %c0_37] : memref<1x7x7x128xbf16, #tpu.memory_space<vmem>>, vector<1x1x7x128xbf16>
    %70 = vector.shape_cast %69 : vector<1x1x7x128xbf16> to vector<7x128xbf16>
    %71 = vector.shape_cast %68 : vector<7x128xbf16> to vector<1x1x7x128xbf16>
    tpu.vector_store %arg4[%c0_35, %c1, %c0_36, %c0_37], %71 {strides = array<i32>} : memref<1x7x7x128xbf16, #tpu.memory_space<vmem>>, vector<1x1x7x128xbf16>,
    %c60_38 = arith.constant 60 : index
    %c0_39 = arith.constant 0 : index
    %72 = vector.load %arg5[%c60_38, %c0_39] : memref<225x128xf32, #tpu.memory_space<vmem>>, vector<15x128xf32>
    %c75 = arith.constant 75 : index
    %c0_40 = arith.constant 0 : index
    %73 = vector.load %arg5[%c75, %c0_40] : memref<225x128xf32, #tpu.memory_space<vmem>>, vector<15x128xf32>
    %74 = arith.maximumf %72, %73 : vector<15x128xf32>
    %c90 = arith.constant 90 : index
    %c0_41 = arith.constant 0 : index
    %75 = vector.load %arg5[%c90, %c0_41] : memref<225x128xf32, #tpu.memory_space<vmem>>, vector<15x128xf32>
    %76 = arith.maximumf %74, %75 : vector<15x128xf32>
    %77 = vector.extract_strided_slice %76 {offsets = [0, 0], sizes = [3, 128], strides = [1, 1]} : vector<15x128xf32> to vector<3x128xf32>
    %cst_42 = arith.constant dense<0xFF800000> : vector<128xf32>
    %78 = vector.multi_reduction <maximumf>, %77, %cst_42 [0] : vector<3x128xf32> to vector<128xf32>
    %79 = vector.shape_cast %78 : vector<128xf32> to vector<1x128xf32>
    %80 = vector.extract_strided_slice %76 {offsets = [2, 0], sizes = [3, 128], strides = [1, 1]} : vector<15x128xf32> to vector<3x128xf32>
    %cst_43 = arith.constant dense<0xFF800000> : vector<128xf32>
    %81 = vector.multi_reduction <maximumf>, %80, %cst_43 [0] : vector<3x128xf32> to vector<128xf32>
    %82 = vector.shape_cast %81 : vector<128xf32> to vector<1x128xf32>
    %83 = vector.extract_strided_slice %76 {offsets = [4, 0], sizes = [3, 128], strides = [1, 1]} : vector<15x128xf32> to vector<3x128xf32>
    %cst_44 = arith.constant dense<0xFF800000> : vector<128xf32>
    %84 = vector.multi_reduction <maximumf>, %83, %cst_44 [0] : vector<3x128xf32> to vector<128xf32>
    %85 = vector.shape_cast %84 : vector<128xf32> to vector<1x128xf32>
    %86 = vector.extract_strided_slice %76 {offsets = [6, 0], sizes = [3, 128], strides = [1, 1]} : vector<15x128xf32> to vector<3x128xf32>
    %cst_45 = arith.constant dense<0xFF800000> : vector<128xf32>
    %87 = vector.multi_reduction <maximumf>, %86, %cst_45 [0] : vector<3x128xf32> to vector<128xf32>
    %88 = vector.shape_cast %87 : vector<128xf32> to vector<1x128xf32>
    %89 = vector.extract_strided_slice %76 {offsets = [8, 0], sizes = [3, 128], strides = [1, 1]} : vector<15x128xf32> to vector<3x128xf32>
    %cst_46 = arith.constant dense<0xFF800000> : vector<128xf32>
    %90 = vector.multi_reduction <maximumf>, %89, %cst_46 [0] : vector<3x128xf32> to vector<128xf32>
    %91 = vector.shape_cast %90 : vector<128xf32> to vector<1x128xf32>
    %92 = vector.extract_strided_slice %76 {offsets = [10, 0], sizes = [3, 128], strides = [1, 1]} : vector<15x128xf32> to vector<3x128xf32>
    %cst_47 = arith.constant dense<0xFF800000> : vector<128xf32>
    %93 = vector.multi_reduction <maximumf>, %92, %cst_47 [0] : vector<3x128xf32> to vector<128xf32>
    %94 = vector.shape_cast %93 : vector<128xf32> to vector<1x128xf32>
    %95 = vector.extract_strided_slice %76 {offsets = [12, 0], sizes = [3, 128], strides = [1, 1]} : vector<15x128xf32> to vector<3x128xf32>
    %cst_48 = arith.constant dense<0xFF800000> : vector<128xf32>
    %96 = vector.multi_reduction <maximumf>, %95, %cst_48 [0] : vector<3x128xf32> to vector<128xf32>
    %97 = vector.shape_cast %96 : vector<128xf32> to vector<1x128xf32>
    %98 = tpu.concatenate %79, %82, %85, %88, %91, %94, %97 in 0 : vector<1x128xf32>, vector<1x128xf32>, vector<1x128xf32>, vector<1x128xf32>, vector<1x128xf32>, vector<1x128xf32>, vector<1x128xf32> -> vector<7x128xf32>
    %99 = arith.truncf %98 : vector<7x128xf32> to vector<7x128xbf16>
    %c0_49 = arith.constant 0 : index
    %c2 = arith.constant 2 : index
    %c0_50 = arith.constant 0 : index
    %c0_51 = arith.constant 0 : index
    %100 = vector.load %arg4[%c0_49, %c2, %c0_50, %c0_51] : memref<1x7x7x128xbf16, #tpu.memory_space<vmem>>, vector<1x1x7x128xbf16>
    %101 = vector.shape_cast %100 : vector<1x1x7x128xbf16> to vector<7x128xbf16>
    %102 = vector.shape_cast %99 : vector<7x128xbf16> to vector<1x1x7x128xbf16>
    tpu.vector_store %arg4[%c0_49, %c2, %c0_50, %c0_51], %102 {strides = array<i32>} : memref<1x7x7x128xbf16, #tpu.memory_space<vmem>>, vector<1x1x7x128xbf16>,
    %c90_52 = arith.constant 90 : index
    %c0_53 = arith.constant 0 : index
    %103 = vector.load %arg5[%c90_52, %c0_53] : memref<225x128xf32, #tpu.memory_space<vmem>>, vector<15x128xf32>
    %c105 = arith.constant 105 : index
    %c0_54 = arith.constant 0 : index
    %104 = vector.load %arg5[%c105, %c0_54] : memref<225x128xf32, #tpu.memory_space<vmem>>, vector<15x128xf32>
    %105 = arith.maximumf %103, %104 : vector<15x128xf32>
    %c120 = arith.constant 120 : index
    %c0_55 = arith.constant 0 : index
    %106 = vector.load %arg5[%c120, %c0_55] : memref<225x128xf32, #tpu.memory_space<vmem>>, vector<15x128xf32>
    %107 = arith.maximumf %105, %106 : vector<15x128xf32>
    %108 = vector.extract_strided_slice %107 {offsets = [0, 0], sizes = [3, 128], strides = [1, 1]} : vector<15x128xf32> to vector<3x128xf32>
    %cst_56 = arith.constant dense<0xFF800000> : vector<128xf32>
    %109 = vector.multi_reduction <maximumf>, %108, %cst_56 [0] : vector<3x128xf32> to vector<128xf32>
    %110 = vector.shape_cast %109 : vector<128xf32> to vector<1x128xf32>
    %111 = vector.extract_strided_slice %107 {offsets = [2, 0], sizes = [3, 128], strides = [1, 1]} : vector<15x128xf32> to vector<3x128xf32>
    %cst_57 = arith.constant dense<0xFF800000> : vector<128xf32>
    %112 = vector.multi_reduction <maximumf>, %111, %cst_57 [0] : vector<3x128xf32> to vector<128xf32>
    %113 = vector.shape_cast %112 : vector<128xf32> to vector<1x128xf32>
    %114 = vector.extract_strided_slice %107 {offsets = [4, 0], sizes = [3, 128], strides = [1, 1]} : vector<15x128xf32> to vector<3x128xf32>
    %cst_58 = arith.constant dense<0xFF800000> : vector<128xf32>
    %115 = vector.multi_reduction <maximumf>, %114, %cst_58 [0] : vector<3x128xf32> to vector<128xf32>
    %116 = vector.shape_cast %115 : vector<128xf32> to vector<1x128xf32>
    %117 = vector.extract_strided_slice %107 {offsets = [6, 0], sizes = [3, 128], strides = [1, 1]} : vector<15x128xf32> to vector<3x128xf32>
    %cst_59 = arith.constant dense<0xFF800000> : vector<128xf32>
    %118 = vector.multi_reduction <maximumf>, %117, %cst_59 [0] : vector<3x128xf32> to vector<128xf32>
    %119 = vector.shape_cast %118 : vector<128xf32> to vector<1x128xf32>
    %120 = vector.extract_strided_slice %107 {offsets = [8, 0], sizes = [3, 128], strides = [1, 1]} : vector<15x128xf32> to vector<3x128xf32>
    %cst_60 = arith.constant dense<0xFF800000> : vector<128xf32>
    %121 = vector.multi_reduction <maximumf>, %120, %cst_60 [0] : vector<3x128xf32> to vector<128xf32>
    %122 = vector.shape_cast %121 : vector<128xf32> to vector<1x128xf32>
    %123 = vector.extract_strided_slice %107 {offsets = [10, 0], sizes = [3, 128], strides = [1, 1]} : vector<15x128xf32> to vector<3x128xf32>
    %cst_61 = arith.constant dense<0xFF800000> : vector<128xf32>
    %124 = vector.multi_reduction <maximumf>, %123, %cst_61 [0] : vector<3x128xf32> to vector<128xf32>
    %125 = vector.shape_cast %124 : vector<128xf32> to vector<1x128xf32>
    %126 = vector.extract_strided_slice %107 {offsets = [12, 0], sizes = [3, 128], strides = [1, 1]} : vector<15x128xf32> to vector<3x128xf32>
    %cst_62 = arith.constant dense<0xFF800000> : vector<128xf32>
    %127 = vector.multi_reduction <maximumf>, %126, %cst_62 [0] : vector<3x128xf32> to vector<128xf32>
    %128 = vector.shape_cast %127 : vector<128xf32> to vector<1x128xf32>
    %129 = tpu.concatenate %110, %113, %116, %119, %122, %125, %128 in 0 : vector<1x128xf32>, vector<1x128xf32>, vector<1x128xf32>, vector<1x128xf32>, vector<1x128xf32>, vector<1x128xf32>, vector<1x128xf32> -> vector<7x128xf32>
    %130 = arith.truncf %129 : vector<7x128xf32> to vector<7x128xbf16>
    %c0_63 = arith.constant 0 : index
    %c3 = arith.constant 3 : index
    %c0_64 = arith.constant 0 : index
    %c0_65 = arith.constant 0 : index
    %131 = vector.load %arg4[%c0_63, %c3, %c0_64, %c0_65] : memref<1x7x7x128xbf16, #tpu.memory_space<vmem>>, vector<1x1x7x128xbf16>
    %132 = vector.shape_cast %131 : vector<1x1x7x128xbf16> to vector<7x128xbf16>
    %133 = vector.shape_cast %130 : vector<7x128xbf16> to vector<1x1x7x128xbf16>
    tpu.vector_store %arg4[%c0_63, %c3, %c0_64, %c0_65], %133 {strides = array<i32>} : memref<1x7x7x128xbf16, #tpu.memory_space<vmem>>, vector<1x1x7x128xbf16>,
    %c120_66 = arith.constant 120 : index
    %c0_67 = arith.constant 0 : index
    %134 = vector.load %arg5[%c120_66, %c0_67] : memref<225x128xf32, #tpu.memory_space<vmem>>, vector<15x128xf32>
    %c135 = arith.constant 135 : index
    %c0_68 = arith.constant 0 : index
    %135 = vector.load %arg5[%c135, %c0_68] : memref<225x128xf32, #tpu.memory_space<vmem>>, vector<15x128xf32>
    %136 = arith.maximumf %134, %135 : vector<15x128xf32>
    %c150 = arith.constant 150 : index
    %c0_69 = arith.constant 0 : index
    %137 = vector.load %arg5[%c150, %c0_69] : memref<225x128xf32, #tpu.memory_space<vmem>>, vector<15x128xf32>
    %138 = arith.maximumf %136, %137 : vector<15x128xf32>
    %139 = vector.extract_strided_slice %138 {offsets = [0, 0], sizes = [3, 128], strides = [1, 1]} : vector<15x128xf32> to vector<3x128xf32>
    %cst_70 = arith.constant dense<0xFF800000> : vector<128xf32>
    %140 = vector.multi_reduction <maximumf>, %139, %cst_70 [0] : vector<3x128xf32> to vector<128xf32>
    %141 = vector.shape_cast %140 : vector<128xf32> to vector<1x128xf32>
    %142 = vector.extract_strided_slice %138 {offsets = [2, 0], sizes = [3, 128], strides = [1, 1]} : vector<15x128xf32> to vector<3x128xf32>
    %cst_71 = arith.constant dense<0xFF800000> : vector<128xf32>
    %143 = vector.multi_reduction <maximumf>, %142, %cst_71 [0] : vector<3x128xf32> to vector<128xf32>
    %144 = vector.shape_cast %143 : vector<128xf32> to vector<1x128xf32>
    %145 = vector.extract_strided_slice %138 {offsets = [4, 0], sizes = [3, 128], strides = [1, 1]} : vector<15x128xf32> to vector<3x128xf32>
    %cst_72 = arith.constant dense<0xFF800000> : vector<128xf32>
    %146 = vector.multi_reduction <maximumf>, %145, %cst_72 [0] : vector<3x128xf32> to vector<128xf32>
    %147 = vector.shape_cast %146 : vector<128xf32> to vector<1x128xf32>
    %148 = vector.extract_strided_slice %138 {offsets = [6, 0], sizes = [3, 128], strides = [1, 1]} : vector<15x128xf32> to vector<3x128xf32>
    %cst_73 = arith.constant dense<0xFF800000> : vector<128xf32>
    %149 = vector.multi_reduction <maximumf>, %148, %cst_73 [0] : vector<3x128xf32> to vector<128xf32>
    %150 = vector.shape_cast %149 : vector<128xf32> to vector<1x128xf32>
    %151 = vector.extract_strided_slice %138 {offsets = [8, 0], sizes = [3, 128], strides = [1, 1]} : vector<15x128xf32> to vector<3x128xf32>
    %cst_74 = arith.constant dense<0xFF800000> : vector<128xf32>
    %152 = vector.multi_reduction <maximumf>, %151, %cst_74 [0] : vector<3x128xf32> to vector<128xf32>
    %153 = vector.shape_cast %152 : vector<128xf32> to vector<1x128xf32>
    %154 = vector.extract_strided_slice %138 {offsets = [10, 0], sizes = [3, 128], strides = [1, 1]} : vector<15x128xf32> to vector<3x128xf32>
    %cst_75 = arith.constant dense<0xFF800000> : vector<128xf32>
    %155 = vector.multi_reduction <maximumf>, %154, %cst_75 [0] : vector<3x128xf32> to vector<128xf32>
    %156 = vector.shape_cast %155 : vector<128xf32> to vector<1x128xf32>
    %157 = vector.extract_strided_slice %138 {offsets = [12, 0], sizes = [3, 128], strides = [1, 1]} : vector<15x128xf32> to vector<3x128xf32>
    %cst_76 = arith.constant dense<0xFF800000> : vector<128xf32>
    %158 = vector.multi_reduction <maximumf>, %157, %cst_76 [0] : vector<3x128xf32> to vector<128xf32>
    %159 = vector.shape_cast %158 : vector<128xf32> to vector<1x128xf32>
    %160 = tpu.concatenate %141, %144, %147, %150, %153, %156, %159 in 0 : vector<1x128xf32>, vector<1x128xf32>, vector<1x128xf32>, vector<1x128xf32>, vector<1x128xf32>, vector<1x128xf32>, vector<1x128xf32> -> vector<7x128xf32>
    %161 = arith.truncf %160 : vector<7x128xf32> to vector<7x128xbf16>
    %c0_77 = arith.constant 0 : index
    %c4 = arith.constant 4 : index
    %c0_78 = arith.constant 0 : index
    %c0_79 = arith.constant 0 : index
    %162 = vector.load %arg4[%c0_77, %c4, %c0_78, %c0_79] : memref<1x7x7x128xbf16, #tpu.memory_space<vmem>>, vector<1x1x7x128xbf16>
    %163 = vector.shape_cast %162 : vector<1x1x7x128xbf16> to vector<7x128xbf16>
    %164 = vector.shape_cast %161 : vector<7x128xbf16> to vector<1x1x7x128xbf16>
    tpu.vector_store %arg4[%c0_77, %c4, %c0_78, %c0_79], %164 {strides = array<i32>} : memref<1x7x7x128xbf16, #tpu.memory_space<vmem>>, vector<1x1x7x128xbf16>,
    %c150_80 = arith.constant 150 : index
    %c0_81 = arith.constant 0 : index
    %165 = vector.load %arg5[%c150_80, %c0_81] : memref<225x128xf32, #tpu.memory_space<vmem>>, vector<15x128xf32>
    %c165 = arith.constant 165 : index
    %c0_82 = arith.constant 0 : index
    %166 = vector.load %arg5[%c165, %c0_82] : memref<225x128xf32, #tpu.memory_space<vmem>>, vector<15x128xf32>
    %167 = arith.maximumf %165, %166 : vector<15x128xf32>
    %c180 = arith.constant 180 : index
    %c0_83 = arith.constant 0 : index
    %168 = vector.load %arg5[%c180, %c0_83] : memref<225x128xf32, #tpu.memory_space<vmem>>, vector<15x128xf32>
    %169 = arith.maximumf %167, %168 : vector<15x128xf32>
    %170 = vector.extract_strided_slice %169 {offsets = [0, 0], sizes = [3, 128], strides = [1, 1]} : vector<15x128xf32> to vector<3x128xf32>
    %cst_84 = arith.constant dense<0xFF800000> : vector<128xf32>
    %171 = vector.multi_reduction <maximumf>, %170, %cst_84 [0] : vector<3x128xf32> to vector<128xf32>
    %172 = vector.shape_cast %171 : vector<128xf32> to vector<1x128xf32>
    %173 = vector.extract_strided_slice %169 {offsets = [2, 0], sizes = [3, 128], strides = [1, 1]} : vector<15x128xf32> to vector<3x128xf32>
    %cst_85 = arith.constant dense<0xFF800000> : vector<128xf32>
    %174 = vector.multi_reduction <maximumf>, %173, %cst_85 [0] : vector<3x128xf32> to vector<128xf32>
    %175 = vector.shape_cast %174 : vector<128xf32> to vector<1x128xf32>
    %176 = vector.extract_strided_slice %169 {offsets = [4, 0], sizes = [3, 128], strides = [1, 1]} : vector<15x128xf32> to vector<3x128xf32>
    %cst_86 = arith.constant dense<0xFF800000> : vector<128xf32>
    %177 = vector.multi_reduction <maximumf>, %176, %cst_86 [0] : vector<3x128xf32> to vector<128xf32>
    %178 = vector.shape_cast %177 : vector<128xf32> to vector<1x128xf32>
    %179 = vector.extract_strided_slice %169 {offsets = [6, 0], sizes = [3, 128], strides = [1, 1]} : vector<15x128xf32> to vector<3x128xf32>
    %cst_87 = arith.constant dense<0xFF800000> : vector<128xf32>
    %180 = vector.multi_reduction <maximumf>, %179, %cst_87 [0] : vector<3x128xf32> to vector<128xf32>
    %181 = vector.shape_cast %180 : vector<128xf32> to vector<1x128xf32>
    %182 = vector.extract_strided_slice %169 {offsets = [8, 0], sizes = [3, 128], strides = [1, 1]} : vector<15x128xf32> to vector<3x128xf32>
    %cst_88 = arith.constant dense<0xFF800000> : vector<128xf32>
    %183 = vector.multi_reduction <maximumf>, %182, %cst_88 [0] : vector<3x128xf32> to vector<128xf32>
    %184 = vector.shape_cast %183 : vector<128xf32> to vector<1x128xf32>
    %185 = vector.extract_strided_slice %169 {offsets = [10, 0], sizes = [3, 128], strides = [1, 1]} : vector<15x128xf32> to vector<3x128xf32>
    %cst_89 = arith.constant dense<0xFF800000> : vector<128xf32>
    %186 = vector.multi_reduction <maximumf>, %185, %cst_89 [0] : vector<3x128xf32> to vector<128xf32>
    %187 = vector.shape_cast %186 : vector<128xf32> to vector<1x128xf32>
    %188 = vector.extract_strided_slice %169 {offsets = [12, 0], sizes = [3, 128], strides = [1, 1]} : vector<15x128xf32> to vector<3x128xf32>
    %cst_90 = arith.constant dense<0xFF800000> : vector<128xf32>
    %189 = vector.multi_reduction <maximumf>, %188, %cst_90 [0] : vector<3x128xf32> to vector<128xf32>
    %190 = vector.shape_cast %189 : vector<128xf32> to vector<1x128xf32>
    %191 = tpu.concatenate %172, %175, %178, %181, %184, %187, %190 in 0 : vector<1x128xf32>, vector<1x128xf32>, vector<1x128xf32>, vector<1x128xf32>, vector<1x128xf32>, vector<1x128xf32>, vector<1x128xf32> -> vector<7x128xf32>
    %192 = arith.truncf %191 : vector<7x128xf32> to vector<7x128xbf16>
    %c0_91 = arith.constant 0 : index
    %c5 = arith.constant 5 : index
    %c0_92 = arith.constant 0 : index
    %c0_93 = arith.constant 0 : index
    %193 = vector.load %arg4[%c0_91, %c5, %c0_92, %c0_93] : memref<1x7x7x128xbf16, #tpu.memory_space<vmem>>, vector<1x1x7x128xbf16>
    %194 = vector.shape_cast %193 : vector<1x1x7x128xbf16> to vector<7x128xbf16>
    %195 = vector.shape_cast %192 : vector<7x128xbf16> to vector<1x1x7x128xbf16>
    tpu.vector_store %arg4[%c0_91, %c5, %c0_92, %c0_93], %195 {strides = array<i32>} : memref<1x7x7x128xbf16, #tpu.memory_space<vmem>>, vector<1x1x7x128xbf16>,
    %c180_94 = arith.constant 180 : index
    %c0_95 = arith.constant 0 : index
    %196 = vector.load %arg5[%c180_94, %c0_95] : memref<225x128xf32, #tpu.memory_space<vmem>>, vector<15x128xf32>
    %c195 = arith.constant 195 : index
    %c0_96 = arith.constant 0 : index
    %197 = vector.load %arg5[%c195, %c0_96] : memref<225x128xf32, #tpu.memory_space<vmem>>, vector<15x128xf32>
    %198 = arith.maximumf %196, %197 : vector<15x128xf32>
    %c210 = arith.constant 210 : index
    %c0_97 = arith.constant 0 : index
    %199 = vector.load %arg5[%c210, %c0_97] : memref<225x128xf32, #tpu.memory_space<vmem>>, vector<15x128xf32>
    %200 = arith.maximumf %198, %199 : vector<15x128xf32>
    %201 = vector.extract_strided_slice %200 {offsets = [0, 0], sizes = [3, 128], strides = [1, 1]} : vector<15x128xf32> to vector<3x128xf32>
    %cst_98 = arith.constant dense<0xFF800000> : vector<128xf32>
    %202 = vector.multi_reduction <maximumf>, %201, %cst_98 [0] : vector<3x128xf32> to vector<128xf32>
    %203 = vector.shape_cast %202 : vector<128xf32> to vector<1x128xf32>
    %204 = vector.extract_strided_slice %200 {offsets = [2, 0], sizes = [3, 128], strides = [1, 1]} : vector<15x128xf32> to vector<3x128xf32>
    %cst_99 = arith.constant dense<0xFF800000> : vector<128xf32>
    %205 = vector.multi_reduction <maximumf>, %204, %cst_99 [0] : vector<3x128xf32> to vector<128xf32>
    %206 = vector.shape_cast %205 : vector<128xf32> to vector<1x128xf32>
    %207 = vector.extract_strided_slice %200 {offsets = [4, 0], sizes = [3, 128], strides = [1, 1]} : vector<15x128xf32> to vector<3x128xf32>
    %cst_100 = arith.constant dense<0xFF800000> : vector<128xf32>
    %208 = vector.multi_reduction <maximumf>, %207, %cst_100 [0] : vector<3x128xf32> to vector<128xf32>
    %209 = vector.shape_cast %208 : vector<128xf32> to vector<1x128xf32>
    %210 = vector.extract_strided_slice %200 {offsets = [6, 0], sizes = [3, 128], strides = [1, 1]} : vector<15x128xf32> to vector<3x128xf32>
    %cst_101 = arith.constant dense<0xFF800000> : vector<128xf32>
    %211 = vector.multi_reduction <maximumf>, %210, %cst_101 [0] : vector<3x128xf32> to vector<128xf32>
    %212 = vector.shape_cast %211 : vector<128xf32> to vector<1x128xf32>
    %213 = vector.extract_strided_slice %200 {offsets = [8, 0], sizes = [3, 128], strides = [1, 1]} : vector<15x128xf32> to vector<3x128xf32>
    %cst_102 = arith.constant dense<0xFF800000> : vector<128xf32>
    %214 = vector.multi_reduction <maximumf>, %213, %cst_102 [0] : vector<3x128xf32> to vector<128xf32>
    %215 = vector.shape_cast %214 : vector<128xf32> to vector<1x128xf32>
    %216 = vector.extract_strided_slice %200 {offsets = [10, 0], sizes = [3, 128], strides = [1, 1]} : vector<15x128xf32> to vector<3x128xf32>
    %cst_103 = arith.constant dense<0xFF800000> : vector<128xf32>
    %217 = vector.multi_reduction <maximumf>, %216, %cst_103 [0] : vector<3x128xf32> to vector<128xf32>
    %218 = vector.shape_cast %217 : vector<128xf32> to vector<1x128xf32>
    %219 = vector.extract_strided_slice %200 {offsets = [12, 0], sizes = [3, 128], strides = [1, 1]} : vector<15x128xf32> to vector<3x128xf32>
    %cst_104 = arith.constant dense<0xFF800000> : vector<128xf32>
    %220 = vector.multi_reduction <maximumf>, %219, %cst_104 [0] : vector<3x128xf32> to vector<128xf32>
    %221 = vector.shape_cast %220 : vector<128xf32> to vector<1x128xf32>
    %222 = tpu.concatenate %203, %206, %209, %212, %215, %218, %221 in 0 : vector<1x128xf32>, vector<1x128xf32>, vector<1x128xf32>, vector<1x128xf32>, vector<1x128xf32>, vector<1x128xf32>, vector<1x128xf32> -> vector<7x128xf32>
    %223 = arith.truncf %222 : vector<7x128xf32> to vector<7x128xbf16>
    %c0_105 = arith.constant 0 : index
    %c6 = arith.constant 6 : index
    %c0_106 = arith.constant 0 : index
    %c0_107 = arith.constant 0 : index
    %224 = vector.load %arg4[%c0_105, %c6, %c0_106, %c0_107] : memref<1x7x7x128xbf16, #tpu.memory_space<vmem>>, vector<1x1x7x128xbf16>
    %225 = vector.shape_cast %224 : vector<1x1x7x128xbf16> to vector<7x128xbf16>
    %226 = vector.shape_cast %223 : vector<7x128xbf16> to vector<1x1x7x128xbf16>
    tpu.vector_store %arg4[%c0_105, %c6, %c0_106, %c0_107], %226 {strides = array<i32>} : memref<1x7x7x128xbf16, #tpu.memory_space<vmem>>, vector<1x1x7x128xbf16>,
    return
  }
  func.func @transform_0(%arg0: i32) -> (i32, i32, i32) {
    %c0_i32 = arith.constant 0 : i32
    %c0_i32_0 = arith.constant 0 : i32
    %c0_i32_1 = arith.constant 0 : i32
    return %arg0, %c0_i32, %c0_i32_0 : i32, i32, i32
  }
  func.func @transform_1(%arg0: i32) -> (i32, i32) {
    %c0_i32 = arith.constant 0 : i32
    %c0_i32_0 = arith.constant 0 : i32
    %c0_i32_1 = arith.constant 0 : i32
    return %c0_i32, %c0_i32_0 : i32, i32
  }
  func.func @transform_2(%arg0: i32) -> (i32, i32) {
    %c0_i32 = arith.constant 0 : i32
    %c0_i32_0 = arith.constant 0 : i32
    %c0_i32_1 = arith.constant 0 : i32
    return %c0_i32, %c0_i32_0 : i32, i32
  }
  func.func @transform_3(%arg0: i32) -> (i32, i32, i32, i32) {
    %c0_i32 = arith.constant 0 : i32
    %c0_i32_0 = arith.constant 0 : i32
    %c0_i32_1 = arith.constant 0 : i32
    %c0_i32_2 = arith.constant 0 : i32
    return %arg0, %c0_i32, %c0_i32_0, %c0_i32_1 : i32, i32, i32, i32
  }
}

module attributes {stable_mosaic.version = 11 : i64} {
  func.func @_conv_tap_kernel(%arg0: i32, %arg1: memref<1x121x128xbf16, #tpu.memory_space<vmem>>, %arg2: memref<25x128x128xbf16, #tpu.memory_space<vmem>>, %arg3: memref<1x128xf32, #tpu.memory_space<vmem>>, %arg4: memref<1x3x3x128xbf16, #tpu.memory_space<vmem>>, %arg5: memref<73x128xf32, #tpu.memory_space<vmem>>) attributes {dimension_semantics = [#tpu.dimension_semantics<parallel>], iteration_bounds = array<i64: 2>, scalar_prefetch = 0 : i64, scratch_operands = 1 : i64, tpu.core_type = #tpu.core_type<tc>, window_params = [{transform_indices = @transform_0, window_bounds = array<i64: 1, 121, 128>}, {pipeline_mode = #tpu.pipeline_mode<synchronous>, transform_indices = @transform_1, window_bounds = array<i64: 25, 128, 128>}, {pipeline_mode = #tpu.pipeline_mode<synchronous>, transform_indices = @transform_2, window_bounds = array<i64: 1, 128>}, {transform_indices = @transform_3, window_bounds = array<i64: 1, 3, 3, 128>}]} {
    %c0 = arith.constant 0 : index
    %c0_0 = arith.constant 0 : index
    %0 = vector.load %arg3[%c0, %c0_0] : memref<1x128xf32, #tpu.memory_space<vmem>>, vector<1x128xf32>
    %1 = vector.shape_cast %0 : vector<1x128xf32> to vector<1x128xf32>
    %2 = vector.broadcast %1 : vector<1x128xf32> to vector<73x128xf32>
    %c0_1 = arith.constant 0 : index
    %c0_2 = arith.constant 0 : index
    %c0_3 = arith.constant 0 : index
    %3 = vector.load %arg1[%c0_1, %c0_2, %c0_3] : memref<1x121x128xbf16, #tpu.memory_space<vmem>>, vector<1x73x128xbf16>
    %4 = vector.shape_cast %3 : vector<1x73x128xbf16> to vector<73x128xbf16>
    %c0_4 = arith.constant 0 : index
    %c0_5 = arith.constant 0 : index
    %c0_6 = arith.constant 0 : index
    %5 = vector.load %arg2[%c0_4, %c0_5, %c0_6] : memref<25x128x128xbf16, #tpu.memory_space<vmem>>, vector<1x128x128xbf16>
    %6 = vector.shape_cast %5 : vector<1x128x128xbf16> to vector<128x128xbf16>
    %cst = arith.constant dense<0.000000e+00> : vector<73x128xf32>
    %7 = tpu.matmul %4, %6, %cst {dimension_numbers = #tpu.dot_dimension_numbers<[1], [0], [0], [1], [0, 0, 1, 1], [], []>} : vector<73x128xbf16>, vector<128x128xbf16>, vector<73x128xf32> -> vector<73x128xf32>
    %8 = arith.addf %2, %7 : vector<73x128xf32>
    %c0_7 = arith.constant 0 : index
    %c1 = arith.constant 1 : index
    %c0_8 = arith.constant 0 : index
    %9 = vector.load %arg1[%c0_7, %c1, %c0_8] : memref<1x121x128xbf16, #tpu.memory_space<vmem>>, vector<1x73x128xbf16>
    %10 = vector.shape_cast %9 : vector<1x73x128xbf16> to vector<73x128xbf16>
    %c1_9 = arith.constant 1 : index
    %c0_10 = arith.constant 0 : index
    %c0_11 = arith.constant 0 : index
    %11 = vector.load %arg2[%c1_9, %c0_10, %c0_11] : memref<25x128x128xbf16, #tpu.memory_space<vmem>>, vector<1x128x128xbf16>
    %12 = vector.shape_cast %11 : vector<1x128x128xbf16> to vector<128x128xbf16>
    %cst_12 = arith.constant dense<0.000000e+00> : vector<73x128xf32>
    %13 = tpu.matmul %10, %12, %cst_12 {dimension_numbers = #tpu.dot_dimension_numbers<[1], [0], [0], [1], [0, 0, 1, 1], [], []>} : vector<73x128xbf16>, vector<128x128xbf16>, vector<73x128xf32> -> vector<73x128xf32>
    %14 = arith.addf %8, %13 : vector<73x128xf32>
    %c0_13 = arith.constant 0 : index
    %c2 = arith.constant 2 : index
    %c0_14 = arith.constant 0 : index
    %15 = vector.load %arg1[%c0_13, %c2, %c0_14] : memref<1x121x128xbf16, #tpu.memory_space<vmem>>, vector<1x73x128xbf16>
    %16 = vector.shape_cast %15 : vector<1x73x128xbf16> to vector<73x128xbf16>
    %c2_15 = arith.constant 2 : index
    %c0_16 = arith.constant 0 : index
    %c0_17 = arith.constant 0 : index
    %17 = vector.load %arg2[%c2_15, %c0_16, %c0_17] : memref<25x128x128xbf16, #tpu.memory_space<vmem>>, vector<1x128x128xbf16>
    %18 = vector.shape_cast %17 : vector<1x128x128xbf16> to vector<128x128xbf16>
    %cst_18 = arith.constant dense<0.000000e+00> : vector<73x128xf32>
    %19 = tpu.matmul %16, %18, %cst_18 {dimension_numbers = #tpu.dot_dimension_numbers<[1], [0], [0], [1], [0, 0, 1, 1], [], []>} : vector<73x128xbf16>, vector<128x128xbf16>, vector<73x128xf32> -> vector<73x128xf32>
    %20 = arith.addf %14, %19 : vector<73x128xf32>
    %c0_19 = arith.constant 0 : index
    %c3 = arith.constant 3 : index
    %c0_20 = arith.constant 0 : index
    %21 = vector.load %arg1[%c0_19, %c3, %c0_20] : memref<1x121x128xbf16, #tpu.memory_space<vmem>>, vector<1x73x128xbf16>
    %22 = vector.shape_cast %21 : vector<1x73x128xbf16> to vector<73x128xbf16>
    %c3_21 = arith.constant 3 : index
    %c0_22 = arith.constant 0 : index
    %c0_23 = arith.constant 0 : index
    %23 = vector.load %arg2[%c3_21, %c0_22, %c0_23] : memref<25x128x128xbf16, #tpu.memory_space<vmem>>, vector<1x128x128xbf16>
    %24 = vector.shape_cast %23 : vector<1x128x128xbf16> to vector<128x128xbf16>
    %cst_24 = arith.constant dense<0.000000e+00> : vector<73x128xf32>
    %25 = tpu.matmul %22, %24, %cst_24 {dimension_numbers = #tpu.dot_dimension_numbers<[1], [0], [0], [1], [0, 0, 1, 1], [], []>} : vector<73x128xbf16>, vector<128x128xbf16>, vector<73x128xf32> -> vector<73x128xf32>
    %26 = arith.addf %20, %25 : vector<73x128xf32>
    %c0_25 = arith.constant 0 : index
    %c4 = arith.constant 4 : index
    %c0_26 = arith.constant 0 : index
    %27 = vector.load %arg1[%c0_25, %c4, %c0_26] : memref<1x121x128xbf16, #tpu.memory_space<vmem>>, vector<1x73x128xbf16>
    %28 = vector.shape_cast %27 : vector<1x73x128xbf16> to vector<73x128xbf16>
    %c4_27 = arith.constant 4 : index
    %c0_28 = arith.constant 0 : index
    %c0_29 = arith.constant 0 : index
    %29 = vector.load %arg2[%c4_27, %c0_28, %c0_29] : memref<25x128x128xbf16, #tpu.memory_space<vmem>>, vector<1x128x128xbf16>
    %30 = vector.shape_cast %29 : vector<1x128x128xbf16> to vector<128x128xbf16>
    %cst_30 = arith.constant dense<0.000000e+00> : vector<73x128xf32>
    %31 = tpu.matmul %28, %30, %cst_30 {dimension_numbers = #tpu.dot_dimension_numbers<[1], [0], [0], [1], [0, 0, 1, 1], [], []>} : vector<73x128xbf16>, vector<128x128xbf16>, vector<73x128xf32> -> vector<73x128xf32>
    %32 = arith.addf %26, %31 : vector<73x128xf32>
    %c0_31 = arith.constant 0 : index
    %c11 = arith.constant 11 : index
    %c0_32 = arith.constant 0 : index
    %33 = vector.load %arg1[%c0_31, %c11, %c0_32] : memref<1x121x128xbf16, #tpu.memory_space<vmem>>, vector<1x73x128xbf16>
    %34 = vector.shape_cast %33 : vector<1x73x128xbf16> to vector<73x128xbf16>
    %c5 = arith.constant 5 : index
    %c0_33 = arith.constant 0 : index
    %c0_34 = arith.constant 0 : index
    %35 = vector.load %arg2[%c5, %c0_33, %c0_34] : memref<25x128x128xbf16, #tpu.memory_space<vmem>>, vector<1x128x128xbf16>
    %36 = vector.shape_cast %35 : vector<1x128x128xbf16> to vector<128x128xbf16>
    %cst_35 = arith.constant dense<0.000000e+00> : vector<73x128xf32>
    %37 = tpu.matmul %34, %36, %cst_35 {dimension_numbers = #tpu.dot_dimension_numbers<[1], [0], [0], [1], [0, 0, 1, 1], [], []>} : vector<73x128xbf16>, vector<128x128xbf16>, vector<73x128xf32> -> vector<73x128xf32>
    %38 = arith.addf %32, %37 : vector<73x128xf32>
    %c0_36 = arith.constant 0 : index
    %c12 = arith.constant 12 : index
    %c0_37 = arith.constant 0 : index
    %39 = vector.load %arg1[%c0_36, %c12, %c0_37] : memref<1x121x128xbf16, #tpu.memory_space<vmem>>, vector<1x73x128xbf16>
    %40 = vector.shape_cast %39 : vector<1x73x128xbf16> to vector<73x128xbf16>
    %c6 = arith.constant 6 : index
    %c0_38 = arith.constant 0 : index
    %c0_39 = arith.constant 0 : index
    %41 = vector.load %arg2[%c6, %c0_38, %c0_39] : memref<25x128x128xbf16, #tpu.memory_space<vmem>>, vector<1x128x128xbf16>
    %42 = vector.shape_cast %41 : vector<1x128x128xbf16> to vector<128x128xbf16>
    %cst_40 = arith.constant dense<0.000000e+00> : vector<73x128xf32>
    %43 = tpu.matmul %40, %42, %cst_40 {dimension_numbers = #tpu.dot_dimension_numbers<[1], [0], [0], [1], [0, 0, 1, 1], [], []>} : vector<73x128xbf16>, vector<128x128xbf16>, vector<73x128xf32> -> vector<73x128xf32>
    %44 = arith.addf %38, %43 : vector<73x128xf32>
    %c0_41 = arith.constant 0 : index
    %c13 = arith.constant 13 : index
    %c0_42 = arith.constant 0 : index
    %45 = vector.load %arg1[%c0_41, %c13, %c0_42] : memref<1x121x128xbf16, #tpu.memory_space<vmem>>, vector<1x73x128xbf16>
    %46 = vector.shape_cast %45 : vector<1x73x128xbf16> to vector<73x128xbf16>
    %c7 = arith.constant 7 : index
    %c0_43 = arith.constant 0 : index
    %c0_44 = arith.constant 0 : index
    %47 = vector.load %arg2[%c7, %c0_43, %c0_44] : memref<25x128x128xbf16, #tpu.memory_space<vmem>>, vector<1x128x128xbf16>
    %48 = vector.shape_cast %47 : vector<1x128x128xbf16> to vector<128x128xbf16>
    %cst_45 = arith.constant dense<0.000000e+00> : vector<73x128xf32>
    %49 = tpu.matmul %46, %48, %cst_45 {dimension_numbers = #tpu.dot_dimension_numbers<[1], [0], [0], [1], [0, 0, 1, 1], [], []>} : vector<73x128xbf16>, vector<128x128xbf16>, vector<73x128xf32> -> vector<73x128xf32>
    %50 = arith.addf %44, %49 : vector<73x128xf32>
    %c0_46 = arith.constant 0 : index
    %c14 = arith.constant 14 : index
    %c0_47 = arith.constant 0 : index
    %51 = vector.load %arg1[%c0_46, %c14, %c0_47] : memref<1x121x128xbf16, #tpu.memory_space<vmem>>, vector<1x73x128xbf16>
    %52 = vector.shape_cast %51 : vector<1x73x128xbf16> to vector<73x128xbf16>
    %c8 = arith.constant 8 : index
    %c0_48 = arith.constant 0 : index
    %c0_49 = arith.constant 0 : index
    %53 = vector.load %arg2[%c8, %c0_48, %c0_49] : memref<25x128x128xbf16, #tpu.memory_space<vmem>>, vector<1x128x128xbf16>
    %54 = vector.shape_cast %53 : vector<1x128x128xbf16> to vector<128x128xbf16>
    %cst_50 = arith.constant dense<0.000000e+00> : vector<73x128xf32>
    %55 = tpu.matmul %52, %54, %cst_50 {dimension_numbers = #tpu.dot_dimension_numbers<[1], [0], [0], [1], [0, 0, 1, 1], [], []>} : vector<73x128xbf16>, vector<128x128xbf16>, vector<73x128xf32> -> vector<73x128xf32>
    %56 = arith.addf %50, %55 : vector<73x128xf32>
    %c0_51 = arith.constant 0 : index
    %c15 = arith.constant 15 : index
    %c0_52 = arith.constant 0 : index
    %57 = vector.load %arg1[%c0_51, %c15, %c0_52] : memref<1x121x128xbf16, #tpu.memory_space<vmem>>, vector<1x73x128xbf16>
    %58 = vector.shape_cast %57 : vector<1x73x128xbf16> to vector<73x128xbf16>
    %c9 = arith.constant 9 : index
    %c0_53 = arith.constant 0 : index
    %c0_54 = arith.constant 0 : index
    %59 = vector.load %arg2[%c9, %c0_53, %c0_54] : memref<25x128x128xbf16, #tpu.memory_space<vmem>>, vector<1x128x128xbf16>
    %60 = vector.shape_cast %59 : vector<1x128x128xbf16> to vector<128x128xbf16>
    %cst_55 = arith.constant dense<0.000000e+00> : vector<73x128xf32>
    %61 = tpu.matmul %58, %60, %cst_55 {dimension_numbers = #tpu.dot_dimension_numbers<[1], [0], [0], [1], [0, 0, 1, 1], [], []>} : vector<73x128xbf16>, vector<128x128xbf16>, vector<73x128xf32> -> vector<73x128xf32>
    %62 = arith.addf %56, %61 : vector<73x128xf32>
    %c0_56 = arith.constant 0 : index
    %c22 = arith.constant 22 : index
    %c0_57 = arith.constant 0 : index
    %63 = vector.load %arg1[%c0_56, %c22, %c0_57] : memref<1x121x128xbf16, #tpu.memory_space<vmem>>, vector<1x73x128xbf16>
    %64 = vector.shape_cast %63 : vector<1x73x128xbf16> to vector<73x128xbf16>
    %c10 = arith.constant 10 : index
    %c0_58 = arith.constant 0 : index
    %c0_59 = arith.constant 0 : index
    %65 = vector.load %arg2[%c10, %c0_58, %c0_59] : memref<25x128x128xbf16, #tpu.memory_space<vmem>>, vector<1x128x128xbf16>
    %66 = vector.shape_cast %65 : vector<1x128x128xbf16> to vector<128x128xbf16>
    %cst_60 = arith.constant dense<0.000000e+00> : vector<73x128xf32>
    %67 = tpu.matmul %64, %66, %cst_60 {dimension_numbers = #tpu.dot_dimension_numbers<[1], [0], [0], [1], [0, 0, 1, 1], [], []>} : vector<73x128xbf16>, vector<128x128xbf16>, vector<73x128xf32> -> vector<73x128xf32>
    %68 = arith.addf %62, %67 : vector<73x128xf32>
    %c0_61 = arith.constant 0 : index
    %c23 = arith.constant 23 : index
    %c0_62 = arith.constant 0 : index
    %69 = vector.load %arg1[%c0_61, %c23, %c0_62] : memref<1x121x128xbf16, #tpu.memory_space<vmem>>, vector<1x73x128xbf16>
    %70 = vector.shape_cast %69 : vector<1x73x128xbf16> to vector<73x128xbf16>
    %c11_63 = arith.constant 11 : index
    %c0_64 = arith.constant 0 : index
    %c0_65 = arith.constant 0 : index
    %71 = vector.load %arg2[%c11_63, %c0_64, %c0_65] : memref<25x128x128xbf16, #tpu.memory_space<vmem>>, vector<1x128x128xbf16>
    %72 = vector.shape_cast %71 : vector<1x128x128xbf16> to vector<128x128xbf16>
    %cst_66 = arith.constant dense<0.000000e+00> : vector<73x128xf32>
    %73 = tpu.matmul %70, %72, %cst_66 {dimension_numbers = #tpu.dot_dimension_numbers<[1], [0], [0], [1], [0, 0, 1, 1], [], []>} : vector<73x128xbf16>, vector<128x128xbf16>, vector<73x128xf32> -> vector<73x128xf32>
    %74 = arith.addf %68, %73 : vector<73x128xf32>
    %c0_67 = arith.constant 0 : index
    %c24 = arith.constant 24 : index
    %c0_68 = arith.constant 0 : index
    %75 = vector.load %arg1[%c0_67, %c24, %c0_68] : memref<1x121x128xbf16, #tpu.memory_space<vmem>>, vector<1x73x128xbf16>
    %76 = vector.shape_cast %75 : vector<1x73x128xbf16> to vector<73x128xbf16>
    %c12_69 = arith.constant 12 : index
    %c0_70 = arith.constant 0 : index
    %c0_71 = arith.constant 0 : index
    %77 = vector.load %arg2[%c12_69, %c0_70, %c0_71] : memref<25x128x128xbf16, #tpu.memory_space<vmem>>, vector<1x128x128xbf16>
    %78 = vector.shape_cast %77 : vector<1x128x128xbf16> to vector<128x128xbf16>
    %cst_72 = arith.constant dense<0.000000e+00> : vector<73x128xf32>
    %79 = tpu.matmul %76, %78, %cst_72 {dimension_numbers = #tpu.dot_dimension_numbers<[1], [0], [0], [1], [0, 0, 1, 1], [], []>} : vector<73x128xbf16>, vector<128x128xbf16>, vector<73x128xf32> -> vector<73x128xf32>
    %80 = arith.addf %74, %79 : vector<73x128xf32>
    %c0_73 = arith.constant 0 : index
    %c25 = arith.constant 25 : index
    %c0_74 = arith.constant 0 : index
    %81 = vector.load %arg1[%c0_73, %c25, %c0_74] : memref<1x121x128xbf16, #tpu.memory_space<vmem>>, vector<1x73x128xbf16>
    %82 = vector.shape_cast %81 : vector<1x73x128xbf16> to vector<73x128xbf16>
    %c13_75 = arith.constant 13 : index
    %c0_76 = arith.constant 0 : index
    %c0_77 = arith.constant 0 : index
    %83 = vector.load %arg2[%c13_75, %c0_76, %c0_77] : memref<25x128x128xbf16, #tpu.memory_space<vmem>>, vector<1x128x128xbf16>
    %84 = vector.shape_cast %83 : vector<1x128x128xbf16> to vector<128x128xbf16>
    %cst_78 = arith.constant dense<0.000000e+00> : vector<73x128xf32>
    %85 = tpu.matmul %82, %84, %cst_78 {dimension_numbers = #tpu.dot_dimension_numbers<[1], [0], [0], [1], [0, 0, 1, 1], [], []>} : vector<73x128xbf16>, vector<128x128xbf16>, vector<73x128xf32> -> vector<73x128xf32>
    %86 = arith.addf %80, %85 : vector<73x128xf32>
    %c0_79 = arith.constant 0 : index
    %c26 = arith.constant 26 : index
    %c0_80 = arith.constant 0 : index
    %87 = vector.load %arg1[%c0_79, %c26, %c0_80] : memref<1x121x128xbf16, #tpu.memory_space<vmem>>, vector<1x73x128xbf16>
    %88 = vector.shape_cast %87 : vector<1x73x128xbf16> to vector<73x128xbf16>
    %c14_81 = arith.constant 14 : index
    %c0_82 = arith.constant 0 : index
    %c0_83 = arith.constant 0 : index
    %89 = vector.load %arg2[%c14_81, %c0_82, %c0_83] : memref<25x128x128xbf16, #tpu.memory_space<vmem>>, vector<1x128x128xbf16>
    %90 = vector.shape_cast %89 : vector<1x128x128xbf16> to vector<128x128xbf16>
    %cst_84 = arith.constant dense<0.000000e+00> : vector<73x128xf32>
    %91 = tpu.matmul %88, %90, %cst_84 {dimension_numbers = #tpu.dot_dimension_numbers<[1], [0], [0], [1], [0, 0, 1, 1], [], []>} : vector<73x128xbf16>, vector<128x128xbf16>, vector<73x128xf32> -> vector<73x128xf32>
    %92 = arith.addf %86, %91 : vector<73x128xf32>
    %c0_85 = arith.constant 0 : index
    %c33 = arith.constant 33 : index
    %c0_86 = arith.constant 0 : index
    %93 = vector.load %arg1[%c0_85, %c33, %c0_86] : memref<1x121x128xbf16, #tpu.memory_space<vmem>>, vector<1x73x128xbf16>
    %94 = vector.shape_cast %93 : vector<1x73x128xbf16> to vector<73x128xbf16>
    %c15_87 = arith.constant 15 : index
    %c0_88 = arith.constant 0 : index
    %c0_89 = arith.constant 0 : index
    %95 = vector.load %arg2[%c15_87, %c0_88, %c0_89] : memref<25x128x128xbf16, #tpu.memory_space<vmem>>, vector<1x128x128xbf16>
    %96 = vector.shape_cast %95 : vector<1x128x128xbf16> to vector<128x128xbf16>
    %cst_90 = arith.constant dense<0.000000e+00> : vector<73x128xf32>
    %97 = tpu.matmul %94, %96, %cst_90 {dimension_numbers = #tpu.dot_dimension_numbers<[1], [0], [0], [1], [0, 0, 1, 1], [], []>} : vector<73x128xbf16>, vector<128x128xbf16>, vector<73x128xf32> -> vector<73x128xf32>
    %98 = arith.addf %92, %97 : vector<73x128xf32>
    %c0_91 = arith.constant 0 : index
    %c34 = arith.constant 34 : index
    %c0_92 = arith.constant 0 : index
    %99 = vector.load %arg1[%c0_91, %c34, %c0_92] : memref<1x121x128xbf16, #tpu.memory_space<vmem>>, vector<1x73x128xbf16>
    %100 = vector.shape_cast %99 : vector<1x73x128xbf16> to vector<73x128xbf16>
    %c16 = arith.constant 16 : index
    %c0_93 = arith.constant 0 : index
    %c0_94 = arith.constant 0 : index
    %101 = vector.load %arg2[%c16, %c0_93, %c0_94] : memref<25x128x128xbf16, #tpu.memory_space<vmem>>, vector<1x128x128xbf16>
    %102 = vector.shape_cast %101 : vector<1x128x128xbf16> to vector<128x128xbf16>
    %cst_95 = arith.constant dense<0.000000e+00> : vector<73x128xf32>
    %103 = tpu.matmul %100, %102, %cst_95 {dimension_numbers = #tpu.dot_dimension_numbers<[1], [0], [0], [1], [0, 0, 1, 1], [], []>} : vector<73x128xbf16>, vector<128x128xbf16>, vector<73x128xf32> -> vector<73x128xf32>
    %104 = arith.addf %98, %103 : vector<73x128xf32>
    %c0_96 = arith.constant 0 : index
    %c35 = arith.constant 35 : index
    %c0_97 = arith.constant 0 : index
    %105 = vector.load %arg1[%c0_96, %c35, %c0_97] : memref<1x121x128xbf16, #tpu.memory_space<vmem>>, vector<1x73x128xbf16>
    %106 = vector.shape_cast %105 : vector<1x73x128xbf16> to vector<73x128xbf16>
    %c17 = arith.constant 17 : index
    %c0_98 = arith.constant 0 : index
    %c0_99 = arith.constant 0 : index
    %107 = vector.load %arg2[%c17, %c0_98, %c0_99] : memref<25x128x128xbf16, #tpu.memory_space<vmem>>, vector<1x128x128xbf16>
    %108 = vector.shape_cast %107 : vector<1x128x128xbf16> to vector<128x128xbf16>
    %cst_100 = arith.constant dense<0.000000e+00> : vector<73x128xf32>
    %109 = tpu.matmul %106, %108, %cst_100 {dimension_numbers = #tpu.dot_dimension_numbers<[1], [0], [0], [1], [0, 0, 1, 1], [], []>} : vector<73x128xbf16>, vector<128x128xbf16>, vector<73x128xf32> -> vector<73x128xf32>
    %110 = arith.addf %104, %109 : vector<73x128xf32>
    %c0_101 = arith.constant 0 : index
    %c36 = arith.constant 36 : index
    %c0_102 = arith.constant 0 : index
    %111 = vector.load %arg1[%c0_101, %c36, %c0_102] : memref<1x121x128xbf16, #tpu.memory_space<vmem>>, vector<1x73x128xbf16>
    %112 = vector.shape_cast %111 : vector<1x73x128xbf16> to vector<73x128xbf16>
    %c18 = arith.constant 18 : index
    %c0_103 = arith.constant 0 : index
    %c0_104 = arith.constant 0 : index
    %113 = vector.load %arg2[%c18, %c0_103, %c0_104] : memref<25x128x128xbf16, #tpu.memory_space<vmem>>, vector<1x128x128xbf16>
    %114 = vector.shape_cast %113 : vector<1x128x128xbf16> to vector<128x128xbf16>
    %cst_105 = arith.constant dense<0.000000e+00> : vector<73x128xf32>
    %115 = tpu.matmul %112, %114, %cst_105 {dimension_numbers = #tpu.dot_dimension_numbers<[1], [0], [0], [1], [0, 0, 1, 1], [], []>} : vector<73x128xbf16>, vector<128x128xbf16>, vector<73x128xf32> -> vector<73x128xf32>
    %116 = arith.addf %110, %115 : vector<73x128xf32>
    %c0_106 = arith.constant 0 : index
    %c37 = arith.constant 37 : index
    %c0_107 = arith.constant 0 : index
    %117 = vector.load %arg1[%c0_106, %c37, %c0_107] : memref<1x121x128xbf16, #tpu.memory_space<vmem>>, vector<1x73x128xbf16>
    %118 = vector.shape_cast %117 : vector<1x73x128xbf16> to vector<73x128xbf16>
    %c19 = arith.constant 19 : index
    %c0_108 = arith.constant 0 : index
    %c0_109 = arith.constant 0 : index
    %119 = vector.load %arg2[%c19, %c0_108, %c0_109] : memref<25x128x128xbf16, #tpu.memory_space<vmem>>, vector<1x128x128xbf16>
    %120 = vector.shape_cast %119 : vector<1x128x128xbf16> to vector<128x128xbf16>
    %cst_110 = arith.constant dense<0.000000e+00> : vector<73x128xf32>
    %121 = tpu.matmul %118, %120, %cst_110 {dimension_numbers = #tpu.dot_dimension_numbers<[1], [0], [0], [1], [0, 0, 1, 1], [], []>} : vector<73x128xbf16>, vector<128x128xbf16>, vector<73x128xf32> -> vector<73x128xf32>
    %122 = arith.addf %116, %121 : vector<73x128xf32>
    %c0_111 = arith.constant 0 : index
    %c44 = arith.constant 44 : index
    %c0_112 = arith.constant 0 : index
    %123 = vector.load %arg1[%c0_111, %c44, %c0_112] : memref<1x121x128xbf16, #tpu.memory_space<vmem>>, vector<1x73x128xbf16>
    %124 = vector.shape_cast %123 : vector<1x73x128xbf16> to vector<73x128xbf16>
    %c20 = arith.constant 20 : index
    %c0_113 = arith.constant 0 : index
    %c0_114 = arith.constant 0 : index
    %125 = vector.load %arg2[%c20, %c0_113, %c0_114] : memref<25x128x128xbf16, #tpu.memory_space<vmem>>, vector<1x128x128xbf16>
    %126 = vector.shape_cast %125 : vector<1x128x128xbf16> to vector<128x128xbf16>
    %cst_115 = arith.constant dense<0.000000e+00> : vector<73x128xf32>
    %127 = tpu.matmul %124, %126, %cst_115 {dimension_numbers = #tpu.dot_dimension_numbers<[1], [0], [0], [1], [0, 0, 1, 1], [], []>} : vector<73x128xbf16>, vector<128x128xbf16>, vector<73x128xf32> -> vector<73x128xf32>
    %128 = arith.addf %122, %127 : vector<73x128xf32>
    %c0_116 = arith.constant 0 : index
    %c45 = arith.constant 45 : index
    %c0_117 = arith.constant 0 : index
    %129 = vector.load %arg1[%c0_116, %c45, %c0_117] : memref<1x121x128xbf16, #tpu.memory_space<vmem>>, vector<1x73x128xbf16>
    %130 = vector.shape_cast %129 : vector<1x73x128xbf16> to vector<73x128xbf16>
    %c21 = arith.constant 21 : index
    %c0_118 = arith.constant 0 : index
    %c0_119 = arith.constant 0 : index
    %131 = vector.load %arg2[%c21, %c0_118, %c0_119] : memref<25x128x128xbf16, #tpu.memory_space<vmem>>, vector<1x128x128xbf16>
    %132 = vector.shape_cast %131 : vector<1x128x128xbf16> to vector<128x128xbf16>
    %cst_120 = arith.constant dense<0.000000e+00> : vector<73x128xf32>
    %133 = tpu.matmul %130, %132, %cst_120 {dimension_numbers = #tpu.dot_dimension_numbers<[1], [0], [0], [1], [0, 0, 1, 1], [], []>} : vector<73x128xbf16>, vector<128x128xbf16>, vector<73x128xf32> -> vector<73x128xf32>
    %134 = arith.addf %128, %133 : vector<73x128xf32>
    %c0_121 = arith.constant 0 : index
    %c46 = arith.constant 46 : index
    %c0_122 = arith.constant 0 : index
    %135 = vector.load %arg1[%c0_121, %c46, %c0_122] : memref<1x121x128xbf16, #tpu.memory_space<vmem>>, vector<1x73x128xbf16>
    %136 = vector.shape_cast %135 : vector<1x73x128xbf16> to vector<73x128xbf16>
    %c22_123 = arith.constant 22 : index
    %c0_124 = arith.constant 0 : index
    %c0_125 = arith.constant 0 : index
    %137 = vector.load %arg2[%c22_123, %c0_124, %c0_125] : memref<25x128x128xbf16, #tpu.memory_space<vmem>>, vector<1x128x128xbf16>
    %138 = vector.shape_cast %137 : vector<1x128x128xbf16> to vector<128x128xbf16>
    %cst_126 = arith.constant dense<0.000000e+00> : vector<73x128xf32>
    %139 = tpu.matmul %136, %138, %cst_126 {dimension_numbers = #tpu.dot_dimension_numbers<[1], [0], [0], [1], [0, 0, 1, 1], [], []>} : vector<73x128xbf16>, vector<128x128xbf16>, vector<73x128xf32> -> vector<73x128xf32>
    %140 = arith.addf %134, %139 : vector<73x128xf32>
    %c0_127 = arith.constant 0 : index
    %c47 = arith.constant 47 : index
    %c0_128 = arith.constant 0 : index
    %141 = vector.load %arg1[%c0_127, %c47, %c0_128] : memref<1x121x128xbf16, #tpu.memory_space<vmem>>, vector<1x73x128xbf16>
    %142 = vector.shape_cast %141 : vector<1x73x128xbf16> to vector<73x128xbf16>
    %c23_129 = arith.constant 23 : index
    %c0_130 = arith.constant 0 : index
    %c0_131 = arith.constant 0 : index
    %143 = vector.load %arg2[%c23_129, %c0_130, %c0_131] : memref<25x128x128xbf16, #tpu.memory_space<vmem>>, vector<1x128x128xbf16>
    %144 = vector.shape_cast %143 : vector<1x128x128xbf16> to vector<128x128xbf16>
    %cst_132 = arith.constant dense<0.000000e+00> : vector<73x128xf32>
    %145 = tpu.matmul %142, %144, %cst_132 {dimension_numbers = #tpu.dot_dimension_numbers<[1], [0], [0], [1], [0, 0, 1, 1], [], []>} : vector<73x128xbf16>, vector<128x128xbf16>, vector<73x128xf32> -> vector<73x128xf32>
    %146 = arith.addf %140, %145 : vector<73x128xf32>
    %c0_133 = arith.constant 0 : index
    %c48 = arith.constant 48 : index
    %c0_134 = arith.constant 0 : index
    %147 = vector.load %arg1[%c0_133, %c48, %c0_134] : memref<1x121x128xbf16, #tpu.memory_space<vmem>>, vector<1x73x128xbf16>
    %148 = vector.shape_cast %147 : vector<1x73x128xbf16> to vector<73x128xbf16>
    %c24_135 = arith.constant 24 : index
    %c0_136 = arith.constant 0 : index
    %c0_137 = arith.constant 0 : index
    %149 = vector.load %arg2[%c24_135, %c0_136, %c0_137] : memref<25x128x128xbf16, #tpu.memory_space<vmem>>, vector<1x128x128xbf16>
    %150 = vector.shape_cast %149 : vector<1x128x128xbf16> to vector<128x128xbf16>
    %cst_138 = arith.constant dense<0.000000e+00> : vector<73x128xf32>
    %151 = tpu.matmul %148, %150, %cst_138 {dimension_numbers = #tpu.dot_dimension_numbers<[1], [0], [0], [1], [0, 0, 1, 1], [], []>} : vector<73x128xbf16>, vector<128x128xbf16>, vector<73x128xf32> -> vector<73x128xf32>
    %152 = arith.addf %146, %151 : vector<73x128xf32>
    %cst_139 = arith.constant 0.000000e+00 : f32
    %153 = vector.broadcast %cst_139 : f32 to vector<73x128xf32>
    %154 = arith.maximumf %152, %153 : vector<73x128xf32>
    %c0_140 = arith.constant 0 : index
    %c0_141 = arith.constant 0 : index
    %155 = vector.load %arg5[%c0_140, %c0_141] : memref<73x128xf32, #tpu.memory_space<vmem>>, vector<73x128xf32>
    tpu.vector_store %arg5[%c0_140, %c0_141], %154 {strides = array<i32>} : memref<73x128xf32, #tpu.memory_space<vmem>>, vector<73x128xf32>,
    %c0_142 = arith.constant 0 : index
    %c0_143 = arith.constant 0 : index
    %156 = vector.load %arg5[%c0_142, %c0_143] : memref<73x128xf32, #tpu.memory_space<vmem>>, vector<7x128xf32>
    %c11_144 = arith.constant 11 : index
    %c0_145 = arith.constant 0 : index
    %157 = vector.load %arg5[%c11_144, %c0_145] : memref<73x128xf32, #tpu.memory_space<vmem>>, vector<7x128xf32>
    %158 = arith.maximumf %156, %157 : vector<7x128xf32>
    %c22_146 = arith.constant 22 : index
    %c0_147 = arith.constant 0 : index
    %159 = vector.load %arg5[%c22_146, %c0_147] : memref<73x128xf32, #tpu.memory_space<vmem>>, vector<7x128xf32>
    %160 = arith.maximumf %158, %159 : vector<7x128xf32>
    %161 = vector.extract_strided_slice %160 {offsets = [0, 0], sizes = [3, 128], strides = [1, 1]} : vector<7x128xf32> to vector<3x128xf32>
    %cst_148 = arith.constant dense<0xFF800000> : vector<128xf32>
    %162 = vector.multi_reduction <maximumf>, %161, %cst_148 [0] : vector<3x128xf32> to vector<128xf32>
    %163 = vector.shape_cast %162 : vector<128xf32> to vector<1x128xf32>
    %164 = vector.extract_strided_slice %160 {offsets = [2, 0], sizes = [3, 128], strides = [1, 1]} : vector<7x128xf32> to vector<3x128xf32>
    %cst_149 = arith.constant dense<0xFF800000> : vector<128xf32>
    %165 = vector.multi_reduction <maximumf>, %164, %cst_149 [0] : vector<3x128xf32> to vector<128xf32>
    %166 = vector.shape_cast %165 : vector<128xf32> to vector<1x128xf32>
    %167 = vector.extract_strided_slice %160 {offsets = [4, 0], sizes = [3, 128], strides = [1, 1]} : vector<7x128xf32> to vector<3x128xf32>
    %cst_150 = arith.constant dense<0xFF800000> : vector<128xf32>
    %168 = vector.multi_reduction <maximumf>, %167, %cst_150 [0] : vector<3x128xf32> to vector<128xf32>
    %169 = vector.shape_cast %168 : vector<128xf32> to vector<1x128xf32>
    %170 = tpu.concatenate %163, %166, %169 in 0 : vector<1x128xf32>, vector<1x128xf32>, vector<1x128xf32> -> vector<3x128xf32>
    %171 = arith.truncf %170 : vector<3x128xf32> to vector<3x128xbf16>
    %c0_151 = arith.constant 0 : index
    %c0_152 = arith.constant 0 : index
    %c0_153 = arith.constant 0 : index
    %c0_154 = arith.constant 0 : index
    %172 = vector.load %arg4[%c0_151, %c0_152, %c0_153, %c0_154] : memref<1x3x3x128xbf16, #tpu.memory_space<vmem>>, vector<1x1x3x128xbf16>
    %173 = vector.shape_cast %172 : vector<1x1x3x128xbf16> to vector<3x128xbf16>
    %174 = vector.shape_cast %171 : vector<3x128xbf16> to vector<1x1x3x128xbf16>
    tpu.vector_store %arg4[%c0_151, %c0_152, %c0_153, %c0_154], %174 {strides = array<i32>} : memref<1x3x3x128xbf16, #tpu.memory_space<vmem>>, vector<1x1x3x128xbf16>,
    %c22_155 = arith.constant 22 : index
    %c0_156 = arith.constant 0 : index
    %175 = vector.load %arg5[%c22_155, %c0_156] : memref<73x128xf32, #tpu.memory_space<vmem>>, vector<7x128xf32>
    %c33_157 = arith.constant 33 : index
    %c0_158 = arith.constant 0 : index
    %176 = vector.load %arg5[%c33_157, %c0_158] : memref<73x128xf32, #tpu.memory_space<vmem>>, vector<7x128xf32>
    %177 = arith.maximumf %175, %176 : vector<7x128xf32>
    %c44_159 = arith.constant 44 : index
    %c0_160 = arith.constant 0 : index
    %178 = vector.load %arg5[%c44_159, %c0_160] : memref<73x128xf32, #tpu.memory_space<vmem>>, vector<7x128xf32>
    %179 = arith.maximumf %177, %178 : vector<7x128xf32>
    %180 = vector.extract_strided_slice %179 {offsets = [0, 0], sizes = [3, 128], strides = [1, 1]} : vector<7x128xf32> to vector<3x128xf32>
    %cst_161 = arith.constant dense<0xFF800000> : vector<128xf32>
    %181 = vector.multi_reduction <maximumf>, %180, %cst_161 [0] : vector<3x128xf32> to vector<128xf32>
    %182 = vector.shape_cast %181 : vector<128xf32> to vector<1x128xf32>
    %183 = vector.extract_strided_slice %179 {offsets = [2, 0], sizes = [3, 128], strides = [1, 1]} : vector<7x128xf32> to vector<3x128xf32>
    %cst_162 = arith.constant dense<0xFF800000> : vector<128xf32>
    %184 = vector.multi_reduction <maximumf>, %183, %cst_162 [0] : vector<3x128xf32> to vector<128xf32>
    %185 = vector.shape_cast %184 : vector<128xf32> to vector<1x128xf32>
    %186 = vector.extract_strided_slice %179 {offsets = [4, 0], sizes = [3, 128], strides = [1, 1]} : vector<7x128xf32> to vector<3x128xf32>
    %cst_163 = arith.constant dense<0xFF800000> : vector<128xf32>
    %187 = vector.multi_reduction <maximumf>, %186, %cst_163 [0] : vector<3x128xf32> to vector<128xf32>
    %188 = vector.shape_cast %187 : vector<128xf32> to vector<1x128xf32>
    %189 = tpu.concatenate %182, %185, %188 in 0 : vector<1x128xf32>, vector<1x128xf32>, vector<1x128xf32> -> vector<3x128xf32>
    %190 = arith.truncf %189 : vector<3x128xf32> to vector<3x128xbf16>
    %c0_164 = arith.constant 0 : index
    %c1_165 = arith.constant 1 : index
    %c0_166 = arith.constant 0 : index
    %c0_167 = arith.constant 0 : index
    %191 = vector.load %arg4[%c0_164, %c1_165, %c0_166, %c0_167] : memref<1x3x3x128xbf16, #tpu.memory_space<vmem>>, vector<1x1x3x128xbf16>
    %192 = vector.shape_cast %191 : vector<1x1x3x128xbf16> to vector<3x128xbf16>
    %193 = vector.shape_cast %190 : vector<3x128xbf16> to vector<1x1x3x128xbf16>
    tpu.vector_store %arg4[%c0_164, %c1_165, %c0_166, %c0_167], %193 {strides = array<i32>} : memref<1x3x3x128xbf16, #tpu.memory_space<vmem>>, vector<1x1x3x128xbf16>,
    %c44_168 = arith.constant 44 : index
    %c0_169 = arith.constant 0 : index
    %194 = vector.load %arg5[%c44_168, %c0_169] : memref<73x128xf32, #tpu.memory_space<vmem>>, vector<7x128xf32>
    %c55 = arith.constant 55 : index
    %c0_170 = arith.constant 0 : index
    %195 = vector.load %arg5[%c55, %c0_170] : memref<73x128xf32, #tpu.memory_space<vmem>>, vector<7x128xf32>
    %196 = arith.maximumf %194, %195 : vector<7x128xf32>
    %c66 = arith.constant 66 : index
    %c0_171 = arith.constant 0 : index
    %197 = vector.load %arg5[%c66, %c0_171] : memref<73x128xf32, #tpu.memory_space<vmem>>, vector<7x128xf32>
    %198 = arith.maximumf %196, %197 : vector<7x128xf32>
    %199 = vector.extract_strided_slice %198 {offsets = [0, 0], sizes = [3, 128], strides = [1, 1]} : vector<7x128xf32> to vector<3x128xf32>
    %cst_172 = arith.constant dense<0xFF800000> : vector<128xf32>
    %200 = vector.multi_reduction <maximumf>, %199, %cst_172 [0] : vector<3x128xf32> to vector<128xf32>
    %201 = vector.shape_cast %200 : vector<128xf32> to vector<1x128xf32>
    %202 = vector.extract_strided_slice %198 {offsets = [2, 0], sizes = [3, 128], strides = [1, 1]} : vector<7x128xf32> to vector<3x128xf32>
    %cst_173 = arith.constant dense<0xFF800000> : vector<128xf32>
    %203 = vector.multi_reduction <maximumf>, %202, %cst_173 [0] : vector<3x128xf32> to vector<128xf32>
    %204 = vector.shape_cast %203 : vector<128xf32> to vector<1x128xf32>
    %205 = vector.extract_strided_slice %198 {offsets = [4, 0], sizes = [3, 128], strides = [1, 1]} : vector<7x128xf32> to vector<3x128xf32>
    %cst_174 = arith.constant dense<0xFF800000> : vector<128xf32>
    %206 = vector.multi_reduction <maximumf>, %205, %cst_174 [0] : vector<3x128xf32> to vector<128xf32>
    %207 = vector.shape_cast %206 : vector<128xf32> to vector<1x128xf32>
    %208 = tpu.concatenate %201, %204, %207 in 0 : vector<1x128xf32>, vector<1x128xf32>, vector<1x128xf32> -> vector<3x128xf32>
    %209 = arith.truncf %208 : vector<3x128xf32> to vector<3x128xbf16>
    %c0_175 = arith.constant 0 : index
    %c2_176 = arith.constant 2 : index
    %c0_177 = arith.constant 0 : index
    %c0_178 = arith.constant 0 : index
    %210 = vector.load %arg4[%c0_175, %c2_176, %c0_177, %c0_178] : memref<1x3x3x128xbf16, #tpu.memory_space<vmem>>, vector<1x1x3x128xbf16>
    %211 = vector.shape_cast %210 : vector<1x1x3x128xbf16> to vector<3x128xbf16>
    %212 = vector.shape_cast %209 : vector<3x128xbf16> to vector<1x1x3x128xbf16>
    tpu.vector_store %arg4[%c0_175, %c2_176, %c0_177, %c0_178], %212 {strides = array<i32>} : memref<1x3x3x128xbf16, #tpu.memory_space<vmem>>, vector<1x1x3x128xbf16>,
    return
  }
  func.func @transform_0(%arg0: i32) -> (i32, i32, i32) {
    %c0_i32 = arith.constant 0 : i32
    %c0_i32_0 = arith.constant 0 : i32
    %c0_i32_1 = arith.constant 0 : i32
    return %arg0, %c0_i32, %c0_i32_0 : i32, i32, i32
  }
  func.func @transform_1(%arg0: i32) -> (i32, i32, i32) {
    %c0_i32 = arith.constant 0 : i32
    %c0_i32_0 = arith.constant 0 : i32
    %c0_i32_1 = arith.constant 0 : i32
    %c0_i32_2 = arith.constant 0 : i32
    return %c0_i32, %c0_i32_0, %c0_i32_1 : i32, i32, i32
  }
  func.func @transform_2(%arg0: i32) -> (i32, i32) {
    %c0_i32 = arith.constant 0 : i32
    %c0_i32_0 = arith.constant 0 : i32
    %c0_i32_1 = arith.constant 0 : i32
    return %c0_i32, %c0_i32_0 : i32, i32
  }
  func.func @transform_3(%arg0: i32) -> (i32, i32, i32, i32) {
    %c0_i32 = arith.constant 0 : i32
    %c0_i32_0 = arith.constant 0 : i32
    %c0_i32_1 = arith.constant 0 : i32
    %c0_i32_2 = arith.constant 0 : i32
    return %arg0, %c0_i32, %c0_i32_0, %c0_i32_1 : i32, i32, i32, i32
  }
}

module attributes {stable_mosaic.version = 11 : i64} {
  func.func @_conv_tap_kernel(%arg0: i32, %arg1: memref<1x25x128xbf16, #tpu.memory_space<vmem>>, %arg2: memref<9x128x128xbf16, #tpu.memory_space<vmem>>, %arg3: memref<1x128xf32, #tpu.memory_space<vmem>>, %arg4: memref<1x3x3x128xbf16, #tpu.memory_space<vmem>>) attributes {dimension_semantics = [#tpu.dimension_semantics<parallel>], iteration_bounds = array<i64: 2>, scalar_prefetch = 0 : i64, scratch_operands = 0 : i64, tpu.core_type = #tpu.core_type<tc>, window_params = [{transform_indices = @transform_0, window_bounds = array<i64: 1, 25, 128>}, {pipeline_mode = #tpu.pipeline_mode<synchronous>, transform_indices = @transform_1, window_bounds = array<i64: 9, 128, 128>}, {pipeline_mode = #tpu.pipeline_mode<synchronous>, transform_indices = @transform_2, window_bounds = array<i64: 1, 128>}, {transform_indices = @transform_3, window_bounds = array<i64: 1, 3, 3, 128>}]} {
    %c0 = arith.constant 0 : index
    %c0_0 = arith.constant 0 : index
    %0 = vector.load %arg3[%c0, %c0_0] : memref<1x128xf32, #tpu.memory_space<vmem>>, vector<1x128xf32>
    %1 = vector.shape_cast %0 : vector<1x128xf32> to vector<1x128xf32>
    %2 = vector.broadcast %1 : vector<1x128xf32> to vector<13x128xf32>
    %c0_1 = arith.constant 0 : index
    %c0_2 = arith.constant 0 : index
    %c0_3 = arith.constant 0 : index
    %3 = vector.load %arg1[%c0_1, %c0_2, %c0_3] : memref<1x25x128xbf16, #tpu.memory_space<vmem>>, vector<1x13x128xbf16>
    %4 = vector.shape_cast %3 : vector<1x13x128xbf16> to vector<13x128xbf16>
    %c0_4 = arith.constant 0 : index
    %c0_5 = arith.constant 0 : index
    %c0_6 = arith.constant 0 : index
    %5 = vector.load %arg2[%c0_4, %c0_5, %c0_6] : memref<9x128x128xbf16, #tpu.memory_space<vmem>>, vector<1x128x128xbf16>
    %6 = vector.shape_cast %5 : vector<1x128x128xbf16> to vector<128x128xbf16>
    %cst = arith.constant dense<0.000000e+00> : vector<13x128xf32>
    %7 = tpu.matmul %4, %6, %cst {dimension_numbers = #tpu.dot_dimension_numbers<[1], [0], [0], [1], [0, 0, 1, 1], [], []>} : vector<13x128xbf16>, vector<128x128xbf16>, vector<13x128xf32> -> vector<13x128xf32>
    %8 = arith.addf %2, %7 : vector<13x128xf32>
    %c0_7 = arith.constant 0 : index
    %c1 = arith.constant 1 : index
    %c0_8 = arith.constant 0 : index
    %9 = vector.load %arg1[%c0_7, %c1, %c0_8] : memref<1x25x128xbf16, #tpu.memory_space<vmem>>, vector<1x13x128xbf16>
    %10 = vector.shape_cast %9 : vector<1x13x128xbf16> to vector<13x128xbf16>
    %c1_9 = arith.constant 1 : index
    %c0_10 = arith.constant 0 : index
    %c0_11 = arith.constant 0 : index
    %11 = vector.load %arg2[%c1_9, %c0_10, %c0_11] : memref<9x128x128xbf16, #tpu.memory_space<vmem>>, vector<1x128x128xbf16>
    %12 = vector.shape_cast %11 : vector<1x128x128xbf16> to vector<128x128xbf16>
    %cst_12 = arith.constant dense<0.000000e+00> : vector<13x128xf32>
    %13 = tpu.matmul %10, %12, %cst_12 {dimension_numbers = #tpu.dot_dimension_numbers<[1], [0], [0], [1], [0, 0, 1, 1], [], []>} : vector<13x128xbf16>, vector<128x128xbf16>, vector<13x128xf32> -> vector<13x128xf32>
    %14 = arith.addf %8, %13 : vector<13x128xf32>
    %c0_13 = arith.constant 0 : index
    %c2 = arith.constant 2 : index
    %c0_14 = arith.constant 0 : index
    %15 = vector.load %arg1[%c0_13, %c2, %c0_14] : memref<1x25x128xbf16, #tpu.memory_space<vmem>>, vector<1x13x128xbf16>
    %16 = vector.shape_cast %15 : vector<1x13x128xbf16> to vector<13x128xbf16>
    %c2_15 = arith.constant 2 : index
    %c0_16 = arith.constant 0 : index
    %c0_17 = arith.constant 0 : index
    %17 = vector.load %arg2[%c2_15, %c0_16, %c0_17] : memref<9x128x128xbf16, #tpu.memory_space<vmem>>, vector<1x128x128xbf16>
    %18 = vector.shape_cast %17 : vector<1x128x128xbf16> to vector<128x128xbf16>
    %cst_18 = arith.constant dense<0.000000e+00> : vector<13x128xf32>
    %19 = tpu.matmul %16, %18, %cst_18 {dimension_numbers = #tpu.dot_dimension_numbers<[1], [0], [0], [1], [0, 0, 1, 1], [], []>} : vector<13x128xbf16>, vector<128x128xbf16>, vector<13x128xf32> -> vector<13x128xf32>
    %20 = arith.addf %14, %19 : vector<13x128xf32>
    %c0_19 = arith.constant 0 : index
    %c5 = arith.constant 5 : index
    %c0_20 = arith.constant 0 : index
    %21 = vector.load %arg1[%c0_19, %c5, %c0_20] : memref<1x25x128xbf16, #tpu.memory_space<vmem>>, vector<1x13x128xbf16>
    %22 = vector.shape_cast %21 : vector<1x13x128xbf16> to vector<13x128xbf16>
    %c3 = arith.constant 3 : index
    %c0_21 = arith.constant 0 : index
    %c0_22 = arith.constant 0 : index
    %23 = vector.load %arg2[%c3, %c0_21, %c0_22] : memref<9x128x128xbf16, #tpu.memory_space<vmem>>, vector<1x128x128xbf16>
    %24 = vector.shape_cast %23 : vector<1x128x128xbf16> to vector<128x128xbf16>
    %cst_23 = arith.constant dense<0.000000e+00> : vector<13x128xf32>
    %25 = tpu.matmul %22, %24, %cst_23 {dimension_numbers = #tpu.dot_dimension_numbers<[1], [0], [0], [1], [0, 0, 1, 1], [], []>} : vector<13x128xbf16>, vector<128x128xbf16>, vector<13x128xf32> -> vector<13x128xf32>
    %26 = arith.addf %20, %25 : vector<13x128xf32>
    %c0_24 = arith.constant 0 : index
    %c6 = arith.constant 6 : index
    %c0_25 = arith.constant 0 : index
    %27 = vector.load %arg1[%c0_24, %c6, %c0_25] : memref<1x25x128xbf16, #tpu.memory_space<vmem>>, vector<1x13x128xbf16>
    %28 = vector.shape_cast %27 : vector<1x13x128xbf16> to vector<13x128xbf16>
    %c4 = arith.constant 4 : index
    %c0_26 = arith.constant 0 : index
    %c0_27 = arith.constant 0 : index
    %29 = vector.load %arg2[%c4, %c0_26, %c0_27] : memref<9x128x128xbf16, #tpu.memory_space<vmem>>, vector<1x128x128xbf16>
    %30 = vector.shape_cast %29 : vector<1x128x128xbf16> to vector<128x128xbf16>
    %cst_28 = arith.constant dense<0.000000e+00> : vector<13x128xf32>
    %31 = tpu.matmul %28, %30, %cst_28 {dimension_numbers = #tpu.dot_dimension_numbers<[1], [0], [0], [1], [0, 0, 1, 1], [], []>} : vector<13x128xbf16>, vector<128x128xbf16>, vector<13x128xf32> -> vector<13x128xf32>
    %32 = arith.addf %26, %31 : vector<13x128xf32>
    %c0_29 = arith.constant 0 : index
    %c7 = arith.constant 7 : index
    %c0_30 = arith.constant 0 : index
    %33 = vector.load %arg1[%c0_29, %c7, %c0_30] : memref<1x25x128xbf16, #tpu.memory_space<vmem>>, vector<1x13x128xbf16>
    %34 = vector.shape_cast %33 : vector<1x13x128xbf16> to vector<13x128xbf16>
    %c5_31 = arith.constant 5 : index
    %c0_32 = arith.constant 0 : index
    %c0_33 = arith.constant 0 : index
    %35 = vector.load %arg2[%c5_31, %c0_32, %c0_33] : memref<9x128x128xbf16, #tpu.memory_space<vmem>>, vector<1x128x128xbf16>
    %36 = vector.shape_cast %35 : vector<1x128x128xbf16> to vector<128x128xbf16>
    %cst_34 = arith.constant dense<0.000000e+00> : vector<13x128xf32>
    %37 = tpu.matmul %34, %36, %cst_34 {dimension_numbers = #tpu.dot_dimension_numbers<[1], [0], [0], [1], [0, 0, 1, 1], [], []>} : vector<13x128xbf16>, vector<128x128xbf16>, vector<13x128xf32> -> vector<13x128xf32>
    %38 = arith.addf %32, %37 : vector<13x128xf32>
    %c0_35 = arith.constant 0 : index
    %c10 = arith.constant 10 : index
    %c0_36 = arith.constant 0 : index
    %39 = vector.load %arg1[%c0_35, %c10, %c0_36] : memref<1x25x128xbf16, #tpu.memory_space<vmem>>, vector<1x13x128xbf16>
    %40 = vector.shape_cast %39 : vector<1x13x128xbf16> to vector<13x128xbf16>
    %c6_37 = arith.constant 6 : index
    %c0_38 = arith.constant 0 : index
    %c0_39 = arith.constant 0 : index
    %41 = vector.load %arg2[%c6_37, %c0_38, %c0_39] : memref<9x128x128xbf16, #tpu.memory_space<vmem>>, vector<1x128x128xbf16>
    %42 = vector.shape_cast %41 : vector<1x128x128xbf16> to vector<128x128xbf16>
    %cst_40 = arith.constant dense<0.000000e+00> : vector<13x128xf32>
    %43 = tpu.matmul %40, %42, %cst_40 {dimension_numbers = #tpu.dot_dimension_numbers<[1], [0], [0], [1], [0, 0, 1, 1], [], []>} : vector<13x128xbf16>, vector<128x128xbf16>, vector<13x128xf32> -> vector<13x128xf32>
    %44 = arith.addf %38, %43 : vector<13x128xf32>
    %c0_41 = arith.constant 0 : index
    %c11 = arith.constant 11 : index
    %c0_42 = arith.constant 0 : index
    %45 = vector.load %arg1[%c0_41, %c11, %c0_42] : memref<1x25x128xbf16, #tpu.memory_space<vmem>>, vector<1x13x128xbf16>
    %46 = vector.shape_cast %45 : vector<1x13x128xbf16> to vector<13x128xbf16>
    %c7_43 = arith.constant 7 : index
    %c0_44 = arith.constant 0 : index
    %c0_45 = arith.constant 0 : index
    %47 = vector.load %arg2[%c7_43, %c0_44, %c0_45] : memref<9x128x128xbf16, #tpu.memory_space<vmem>>, vector<1x128x128xbf16>
    %48 = vector.shape_cast %47 : vector<1x128x128xbf16> to vector<128x128xbf16>
    %cst_46 = arith.constant dense<0.000000e+00> : vector<13x128xf32>
    %49 = tpu.matmul %46, %48, %cst_46 {dimension_numbers = #tpu.dot_dimension_numbers<[1], [0], [0], [1], [0, 0, 1, 1], [], []>} : vector<13x128xbf16>, vector<128x128xbf16>, vector<13x128xf32> -> vector<13x128xf32>
    %50 = arith.addf %44, %49 : vector<13x128xf32>
    %c0_47 = arith.constant 0 : index
    %c12 = arith.constant 12 : index
    %c0_48 = arith.constant 0 : index
    %51 = vector.load %arg1[%c0_47, %c12, %c0_48] : memref<1x25x128xbf16, #tpu.memory_space<vmem>>, vector<1x13x128xbf16>
    %52 = vector.shape_cast %51 : vector<1x13x128xbf16> to vector<13x128xbf16>
    %c8 = arith.constant 8 : index
    %c0_49 = arith.constant 0 : index
    %c0_50 = arith.constant 0 : index
    %53 = vector.load %arg2[%c8, %c0_49, %c0_50] : memref<9x128x128xbf16, #tpu.memory_space<vmem>>, vector<1x128x128xbf16>
    %54 = vector.shape_cast %53 : vector<1x128x128xbf16> to vector<128x128xbf16>
    %cst_51 = arith.constant dense<0.000000e+00> : vector<13x128xf32>
    %55 = tpu.matmul %52, %54, %cst_51 {dimension_numbers = #tpu.dot_dimension_numbers<[1], [0], [0], [1], [0, 0, 1, 1], [], []>} : vector<13x128xbf16>, vector<128x128xbf16>, vector<13x128xf32> -> vector<13x128xf32>
    %56 = arith.addf %50, %55 : vector<13x128xf32>
    %cst_52 = arith.constant 0.000000e+00 : f32
    %57 = vector.broadcast %cst_52 : f32 to vector<13x128xf32>
    %58 = arith.maximumf %56, %57 : vector<13x128xf32>
    %59 = vector.extract_strided_slice %58 {offsets = [0, 0], sizes = [3, 128], strides = [1, 1]} : vector<13x128xf32> to vector<3x128xf32>
    %60 = arith.truncf %59 : vector<3x128xf32> to vector<3x128xbf16>
    %c0_53 = arith.constant 0 : index
    %c0_54 = arith.constant 0 : index
    %c0_55 = arith.constant 0 : index
    %c0_56 = arith.constant 0 : index
    %61 = vector.load %arg4[%c0_53, %c0_54, %c0_55, %c0_56] : memref<1x3x3x128xbf16, #tpu.memory_space<vmem>>, vector<1x1x3x128xbf16>
    %62 = vector.shape_cast %61 : vector<1x1x3x128xbf16> to vector<3x128xbf16>
    %63 = vector.shape_cast %60 : vector<3x128xbf16> to vector<1x1x3x128xbf16>
    tpu.vector_store %arg4[%c0_53, %c0_54, %c0_55, %c0_56], %63 {strides = array<i32>} : memref<1x3x3x128xbf16, #tpu.memory_space<vmem>>, vector<1x1x3x128xbf16>,
    %64 = vector.extract_strided_slice %58 {offsets = [5, 0], sizes = [3, 128], strides = [1, 1]} : vector<13x128xf32> to vector<3x128xf32>
    %65 = arith.truncf %64 : vector<3x128xf32> to vector<3x128xbf16>
    %c0_57 = arith.constant 0 : index
    %c1_58 = arith.constant 1 : index
    %c0_59 = arith.constant 0 : index
    %c0_60 = arith.constant 0 : index
    %66 = vector.load %arg4[%c0_57, %c1_58, %c0_59, %c0_60] : memref<1x3x3x128xbf16, #tpu.memory_space<vmem>>, vector<1x1x3x128xbf16>
    %67 = vector.shape_cast %66 : vector<1x1x3x128xbf16> to vector<3x128xbf16>
    %68 = vector.shape_cast %65 : vector<3x128xbf16> to vector<1x1x3x128xbf16>
    tpu.vector_store %arg4[%c0_57, %c1_58, %c0_59, %c0_60], %68 {strides = array<i32>} : memref<1x3x3x128xbf16, #tpu.memory_space<vmem>>, vector<1x1x3x128xbf16>,
    %69 = vector.extract_strided_slice %58 {offsets = [10, 0], sizes = [3, 128], strides = [1, 1]} : vector<13x128xf32> to vector<3x128xf32>
    %70 = arith.truncf %69 : vector<3x128xf32> to vector<3x128xbf16>
    %c0_61 = arith.constant 0 : index
    %c2_62 = arith.constant 2 : index
    %c0_63 = arith.constant 0 : index
    %c0_64 = arith.constant 0 : index
    %71 = vector.load %arg4[%c0_61, %c2_62, %c0_63, %c0_64] : memref<1x3x3x128xbf16, #tpu.memory_space<vmem>>, vector<1x1x3x128xbf16>
    %72 = vector.shape_cast %71 : vector<1x1x3x128xbf16> to vector<3x128xbf16>
    %73 = vector.shape_cast %70 : vector<3x128xbf16> to vector<1x1x3x128xbf16>
    tpu.vector_store %arg4[%c0_61, %c2_62, %c0_63, %c0_64], %73 {strides = array<i32>} : memref<1x3x3x128xbf16, #tpu.memory_space<vmem>>, vector<1x1x3x128xbf16>,
    return
  }
  func.func @transform_0(%arg0: i32) -> (i32, i32, i32) {
    %c0_i32 = arith.constant 0 : i32
    %c0_i32_0 = arith.constant 0 : i32
    %c0_i32_1 = arith.constant 0 : i32
    return %arg0, %c0_i32, %c0_i32_0 : i32, i32, i32
  }
  func.func @transform_1(%arg0: i32) -> (i32, i32, i32) {
    %c0_i32 = arith.constant 0 : i32
    %c0_i32_0 = arith.constant 0 : i32
    %c0_i32_1 = arith.constant 0 : i32
    %c0_i32_2 = arith.constant 0 : i32
    return %c0_i32, %c0_i32_0, %c0_i32_1 : i32, i32, i32
  }
  func.func @transform_2(%arg0: i32) -> (i32, i32) {
    %c0_i32 = arith.constant 0 : i32
    %c0_i32_0 = arith.constant 0 : i32
    %c0_i32_1 = arith.constant 0 : i32
    return %c0_i32, %c0_i32_0 : i32, i32
  }
  func.func @transform_3(%arg0: i32) -> (i32, i32, i32, i32) {
    %c0_i32 = arith.constant 0 : i32
    %c0_i32_0 = arith.constant 0 : i32
    %c0_i32_1 = arith.constant 0 : i32
    %c0_i32_2 = arith.constant 0 : i32
    return %arg0, %c0_i32, %c0_i32_0, %c0_i32_1 : i32, i32, i32, i32
  }
}

module attributes {stable_mosaic.version = 11 : i64} {
  func.func @_conv_tap_kernel(%arg0: i32, %arg1: memref<1x25x128xbf16, #tpu.memory_space<vmem>>, %arg2: memref<9x128x128xbf16, #tpu.memory_space<vmem>>, %arg3: memref<1x128xf32, #tpu.memory_space<vmem>>, %arg4: memref<1x1x1x128xbf16, #tpu.memory_space<vmem>>, %arg5: memref<13x128xf32, #tpu.memory_space<vmem>>) attributes {dimension_semantics = [#tpu.dimension_semantics<parallel>], iteration_bounds = array<i64: 2>, scalar_prefetch = 0 : i64, scratch_operands = 1 : i64, tpu.core_type = #tpu.core_type<tc>, window_params = [{transform_indices = @transform_0, window_bounds = array<i64: 1, 25, 128>}, {pipeline_mode = #tpu.pipeline_mode<synchronous>, transform_indices = @transform_1, window_bounds = array<i64: 9, 128, 128>}, {pipeline_mode = #tpu.pipeline_mode<synchronous>, transform_indices = @transform_2, window_bounds = array<i64: 1, 128>}, {transform_indices = @transform_3, window_bounds = array<i64: 1, 1, 1, 128>}]} {
    %c0 = arith.constant 0 : index
    %c0_0 = arith.constant 0 : index
    %0 = vector.load %arg3[%c0, %c0_0] : memref<1x128xf32, #tpu.memory_space<vmem>>, vector<1x128xf32>
    %1 = vector.shape_cast %0 : vector<1x128xf32> to vector<1x128xf32>
    %2 = vector.broadcast %1 : vector<1x128xf32> to vector<13x128xf32>
    %c0_1 = arith.constant 0 : index
    %c0_2 = arith.constant 0 : index
    %c0_3 = arith.constant 0 : index
    %3 = vector.load %arg1[%c0_1, %c0_2, %c0_3] : memref<1x25x128xbf16, #tpu.memory_space<vmem>>, vector<1x13x128xbf16>
    %4 = vector.shape_cast %3 : vector<1x13x128xbf16> to vector<13x128xbf16>
    %c0_4 = arith.constant 0 : index
    %c0_5 = arith.constant 0 : index
    %c0_6 = arith.constant 0 : index
    %5 = vector.load %arg2[%c0_4, %c0_5, %c0_6] : memref<9x128x128xbf16, #tpu.memory_space<vmem>>, vector<1x128x128xbf16>
    %6 = vector.shape_cast %5 : vector<1x128x128xbf16> to vector<128x128xbf16>
    %cst = arith.constant dense<0.000000e+00> : vector<13x128xf32>
    %7 = tpu.matmul %4, %6, %cst {dimension_numbers = #tpu.dot_dimension_numbers<[1], [0], [0], [1], [0, 0, 1, 1], [], []>} : vector<13x128xbf16>, vector<128x128xbf16>, vector<13x128xf32> -> vector<13x128xf32>
    %8 = arith.addf %2, %7 : vector<13x128xf32>
    %c0_7 = arith.constant 0 : index
    %c1 = arith.constant 1 : index
    %c0_8 = arith.constant 0 : index
    %9 = vector.load %arg1[%c0_7, %c1, %c0_8] : memref<1x25x128xbf16, #tpu.memory_space<vmem>>, vector<1x13x128xbf16>
    %10 = vector.shape_cast %9 : vector<1x13x128xbf16> to vector<13x128xbf16>
    %c1_9 = arith.constant 1 : index
    %c0_10 = arith.constant 0 : index
    %c0_11 = arith.constant 0 : index
    %11 = vector.load %arg2[%c1_9, %c0_10, %c0_11] : memref<9x128x128xbf16, #tpu.memory_space<vmem>>, vector<1x128x128xbf16>
    %12 = vector.shape_cast %11 : vector<1x128x128xbf16> to vector<128x128xbf16>
    %cst_12 = arith.constant dense<0.000000e+00> : vector<13x128xf32>
    %13 = tpu.matmul %10, %12, %cst_12 {dimension_numbers = #tpu.dot_dimension_numbers<[1], [0], [0], [1], [0, 0, 1, 1], [], []>} : vector<13x128xbf16>, vector<128x128xbf16>, vector<13x128xf32> -> vector<13x128xf32>
    %14 = arith.addf %8, %13 : vector<13x128xf32>
    %c0_13 = arith.constant 0 : index
    %c2 = arith.constant 2 : index
    %c0_14 = arith.constant 0 : index
    %15 = vector.load %arg1[%c0_13, %c2, %c0_14] : memref<1x25x128xbf16, #tpu.memory_space<vmem>>, vector<1x13x128xbf16>
    %16 = vector.shape_cast %15 : vector<1x13x128xbf16> to vector<13x128xbf16>
    %c2_15 = arith.constant 2 : index
    %c0_16 = arith.constant 0 : index
    %c0_17 = arith.constant 0 : index
    %17 = vector.load %arg2[%c2_15, %c0_16, %c0_17] : memref<9x128x128xbf16, #tpu.memory_space<vmem>>, vector<1x128x128xbf16>
    %18 = vector.shape_cast %17 : vector<1x128x128xbf16> to vector<128x128xbf16>
    %cst_18 = arith.constant dense<0.000000e+00> : vector<13x128xf32>
    %19 = tpu.matmul %16, %18, %cst_18 {dimension_numbers = #tpu.dot_dimension_numbers<[1], [0], [0], [1], [0, 0, 1, 1], [], []>} : vector<13x128xbf16>, vector<128x128xbf16>, vector<13x128xf32> -> vector<13x128xf32>
    %20 = arith.addf %14, %19 : vector<13x128xf32>
    %c0_19 = arith.constant 0 : index
    %c5 = arith.constant 5 : index
    %c0_20 = arith.constant 0 : index
    %21 = vector.load %arg1[%c0_19, %c5, %c0_20] : memref<1x25x128xbf16, #tpu.memory_space<vmem>>, vector<1x13x128xbf16>
    %22 = vector.shape_cast %21 : vector<1x13x128xbf16> to vector<13x128xbf16>
    %c3 = arith.constant 3 : index
    %c0_21 = arith.constant 0 : index
    %c0_22 = arith.constant 0 : index
    %23 = vector.load %arg2[%c3, %c0_21, %c0_22] : memref<9x128x128xbf16, #tpu.memory_space<vmem>>, vector<1x128x128xbf16>
    %24 = vector.shape_cast %23 : vector<1x128x128xbf16> to vector<128x128xbf16>
    %cst_23 = arith.constant dense<0.000000e+00> : vector<13x128xf32>
    %25 = tpu.matmul %22, %24, %cst_23 {dimension_numbers = #tpu.dot_dimension_numbers<[1], [0], [0], [1], [0, 0, 1, 1], [], []>} : vector<13x128xbf16>, vector<128x128xbf16>, vector<13x128xf32> -> vector<13x128xf32>
    %26 = arith.addf %20, %25 : vector<13x128xf32>
    %c0_24 = arith.constant 0 : index
    %c6 = arith.constant 6 : index
    %c0_25 = arith.constant 0 : index
    %27 = vector.load %arg1[%c0_24, %c6, %c0_25] : memref<1x25x128xbf16, #tpu.memory_space<vmem>>, vector<1x13x128xbf16>
    %28 = vector.shape_cast %27 : vector<1x13x128xbf16> to vector<13x128xbf16>
    %c4 = arith.constant 4 : index
    %c0_26 = arith.constant 0 : index
    %c0_27 = arith.constant 0 : index
    %29 = vector.load %arg2[%c4, %c0_26, %c0_27] : memref<9x128x128xbf16, #tpu.memory_space<vmem>>, vector<1x128x128xbf16>
    %30 = vector.shape_cast %29 : vector<1x128x128xbf16> to vector<128x128xbf16>
    %cst_28 = arith.constant dense<0.000000e+00> : vector<13x128xf32>
    %31 = tpu.matmul %28, %30, %cst_28 {dimension_numbers = #tpu.dot_dimension_numbers<[1], [0], [0], [1], [0, 0, 1, 1], [], []>} : vector<13x128xbf16>, vector<128x128xbf16>, vector<13x128xf32> -> vector<13x128xf32>
    %32 = arith.addf %26, %31 : vector<13x128xf32>
    %c0_29 = arith.constant 0 : index
    %c7 = arith.constant 7 : index
    %c0_30 = arith.constant 0 : index
    %33 = vector.load %arg1[%c0_29, %c7, %c0_30] : memref<1x25x128xbf16, #tpu.memory_space<vmem>>, vector<1x13x128xbf16>
    %34 = vector.shape_cast %33 : vector<1x13x128xbf16> to vector<13x128xbf16>
    %c5_31 = arith.constant 5 : index
    %c0_32 = arith.constant 0 : index
    %c0_33 = arith.constant 0 : index
    %35 = vector.load %arg2[%c5_31, %c0_32, %c0_33] : memref<9x128x128xbf16, #tpu.memory_space<vmem>>, vector<1x128x128xbf16>
    %36 = vector.shape_cast %35 : vector<1x128x128xbf16> to vector<128x128xbf16>
    %cst_34 = arith.constant dense<0.000000e+00> : vector<13x128xf32>
    %37 = tpu.matmul %34, %36, %cst_34 {dimension_numbers = #tpu.dot_dimension_numbers<[1], [0], [0], [1], [0, 0, 1, 1], [], []>} : vector<13x128xbf16>, vector<128x128xbf16>, vector<13x128xf32> -> vector<13x128xf32>
    %38 = arith.addf %32, %37 : vector<13x128xf32>
    %c0_35 = arith.constant 0 : index
    %c10 = arith.constant 10 : index
    %c0_36 = arith.constant 0 : index
    %39 = vector.load %arg1[%c0_35, %c10, %c0_36] : memref<1x25x128xbf16, #tpu.memory_space<vmem>>, vector<1x13x128xbf16>
    %40 = vector.shape_cast %39 : vector<1x13x128xbf16> to vector<13x128xbf16>
    %c6_37 = arith.constant 6 : index
    %c0_38 = arith.constant 0 : index
    %c0_39 = arith.constant 0 : index
    %41 = vector.load %arg2[%c6_37, %c0_38, %c0_39] : memref<9x128x128xbf16, #tpu.memory_space<vmem>>, vector<1x128x128xbf16>
    %42 = vector.shape_cast %41 : vector<1x128x128xbf16> to vector<128x128xbf16>
    %cst_40 = arith.constant dense<0.000000e+00> : vector<13x128xf32>
    %43 = tpu.matmul %40, %42, %cst_40 {dimension_numbers = #tpu.dot_dimension_numbers<[1], [0], [0], [1], [0, 0, 1, 1], [], []>} : vector<13x128xbf16>, vector<128x128xbf16>, vector<13x128xf32> -> vector<13x128xf32>
    %44 = arith.addf %38, %43 : vector<13x128xf32>
    %c0_41 = arith.constant 0 : index
    %c11 = arith.constant 11 : index
    %c0_42 = arith.constant 0 : index
    %45 = vector.load %arg1[%c0_41, %c11, %c0_42] : memref<1x25x128xbf16, #tpu.memory_space<vmem>>, vector<1x13x128xbf16>
    %46 = vector.shape_cast %45 : vector<1x13x128xbf16> to vector<13x128xbf16>
    %c7_43 = arith.constant 7 : index
    %c0_44 = arith.constant 0 : index
    %c0_45 = arith.constant 0 : index
    %47 = vector.load %arg2[%c7_43, %c0_44, %c0_45] : memref<9x128x128xbf16, #tpu.memory_space<vmem>>, vector<1x128x128xbf16>
    %48 = vector.shape_cast %47 : vector<1x128x128xbf16> to vector<128x128xbf16>
    %cst_46 = arith.constant dense<0.000000e+00> : vector<13x128xf32>
    %49 = tpu.matmul %46, %48, %cst_46 {dimension_numbers = #tpu.dot_dimension_numbers<[1], [0], [0], [1], [0, 0, 1, 1], [], []>} : vector<13x128xbf16>, vector<128x128xbf16>, vector<13x128xf32> -> vector<13x128xf32>
    %50 = arith.addf %44, %49 : vector<13x128xf32>
    %c0_47 = arith.constant 0 : index
    %c12 = arith.constant 12 : index
    %c0_48 = arith.constant 0 : index
    %51 = vector.load %arg1[%c0_47, %c12, %c0_48] : memref<1x25x128xbf16, #tpu.memory_space<vmem>>, vector<1x13x128xbf16>
    %52 = vector.shape_cast %51 : vector<1x13x128xbf16> to vector<13x128xbf16>
    %c8 = arith.constant 8 : index
    %c0_49 = arith.constant 0 : index
    %c0_50 = arith.constant 0 : index
    %53 = vector.load %arg2[%c8, %c0_49, %c0_50] : memref<9x128x128xbf16, #tpu.memory_space<vmem>>, vector<1x128x128xbf16>
    %54 = vector.shape_cast %53 : vector<1x128x128xbf16> to vector<128x128xbf16>
    %cst_51 = arith.constant dense<0.000000e+00> : vector<13x128xf32>
    %55 = tpu.matmul %52, %54, %cst_51 {dimension_numbers = #tpu.dot_dimension_numbers<[1], [0], [0], [1], [0, 0, 1, 1], [], []>} : vector<13x128xbf16>, vector<128x128xbf16>, vector<13x128xf32> -> vector<13x128xf32>
    %56 = arith.addf %50, %55 : vector<13x128xf32>
    %cst_52 = arith.constant 0.000000e+00 : f32
    %57 = vector.broadcast %cst_52 : f32 to vector<13x128xf32>
    %58 = arith.maximumf %56, %57 : vector<13x128xf32>
    %c0_53 = arith.constant 0 : index
    %c0_54 = arith.constant 0 : index
    %59 = vector.load %arg5[%c0_53, %c0_54] : memref<13x128xf32, #tpu.memory_space<vmem>>, vector<13x128xf32>
    tpu.vector_store %arg5[%c0_53, %c0_54], %58 {strides = array<i32>} : memref<13x128xf32, #tpu.memory_space<vmem>>, vector<13x128xf32>,
    %c0_55 = arith.constant 0 : index
    %c0_56 = arith.constant 0 : index
    %60 = vector.load %arg5[%c0_55, %c0_56] : memref<13x128xf32, #tpu.memory_space<vmem>>, vector<3x128xf32>
    %c5_57 = arith.constant 5 : index
    %c0_58 = arith.constant 0 : index
    %61 = vector.load %arg5[%c5_57, %c0_58] : memref<13x128xf32, #tpu.memory_space<vmem>>, vector<3x128xf32>
    %62 = arith.maximumf %60, %61 : vector<3x128xf32>
    %c10_59 = arith.constant 10 : index
    %c0_60 = arith.constant 0 : index
    %63 = vector.load %arg5[%c10_59, %c0_60] : memref<13x128xf32, #tpu.memory_space<vmem>>, vector<3x128xf32>
    %64 = arith.maximumf %62, %63 : vector<3x128xf32>
    %cst_61 = arith.constant dense<0xFF800000> : vector<128xf32>
    %65 = vector.multi_reduction <maximumf>, %64, %cst_61 [0] : vector<3x128xf32> to vector<128xf32>
    %66 = vector.shape_cast %65 : vector<128xf32> to vector<1x128xf32>
    %67 = arith.truncf %66 : vector<1x128xf32> to vector<1x128xbf16>
    %c0_62 = arith.constant 0 : index
    %c0_63 = arith.constant 0 : index
    %c0_64 = arith.constant 0 : index
    %c0_65 = arith.constant 0 : index
    %68 = vector.load %arg4[%c0_62, %c0_63, %c0_64, %c0_65] : memref<1x1x1x128xbf16, #tpu.memory_space<vmem>>, vector<1x1x1x128xbf16>
    %69 = vector.shape_cast %68 : vector<1x1x1x128xbf16> to vector<1x128xbf16>
    %70 = vector.shape_cast %67 : vector<1x128xbf16> to vector<1x1x1x128xbf16>
    tpu.vector_store %arg4[%c0_62, %c0_63, %c0_64, %c0_65], %70 {strides = array<i32>} : memref<1x1x1x128xbf16, #tpu.memory_space<vmem>>, vector<1x1x1x128xbf16>,
    return
  }
  func.func @transform_0(%arg0: i32) -> (i32, i32, i32) {
    %c0_i32 = arith.constant 0 : i32
    %c0_i32_0 = arith.constant 0 : i32
    %c0_i32_1 = arith.constant 0 : i32
    return %arg0, %c0_i32, %c0_i32_0 : i32, i32, i32
  }
  func.func @transform_1(%arg0: i32) -> (i32, i32, i32) {
    %c0_i32 = arith.constant 0 : i32
    %c0_i32_0 = arith.constant 0 : i32
    %c0_i32_1 = arith.constant 0 : i32
    %c0_i32_2 = arith.constant 0 : i32
    return %c0_i32, %c0_i32_0, %c0_i32_1 : i32, i32, i32
  }
  func.func @transform_2(%arg0: i32) -> (i32, i32) {
    %c0_i32 = arith.constant 0 : i32
    %c0_i32_0 = arith.constant 0 : i32
    %c0_i32_1 = arith.constant 0 : i32
    return %c0_i32, %c0_i32_0 : i32, i32
  }
  func.func @transform_3(%arg0: i32) -> (i32, i32, i32, i32) {
    %c0_i32 = arith.constant 0 : i32
    %c0_i32_0 = arith.constant 0 : i32
    %c0_i32_1 = arith.constant 0 : i32
    %c0_i32_2 = arith.constant 0 : i32
    return %arg0, %c0_i32, %c0_i32_0, %c0_i32_1 : i32, i32, i32, i32
  }
}

module attributes {stable_mosaic.version = 11 : i64} {
  func.func @_fc_chain_kernel(%arg0: memref<8x128xbf16, #tpu.memory_space<vmem>>, %arg1: memref<128x128xbf16, #tpu.memory_space<vmem>>, %arg2: memref<1x128xf32, #tpu.memory_space<vmem>>, %arg3: memref<128x128xbf16, #tpu.memory_space<vmem>>, %arg4: memref<1x128xf32, #tpu.memory_space<vmem>>, %arg5: memref<8x128xf32, #tpu.memory_space<vmem>>, %arg6: memref<8x128xf32, #tpu.memory_space<vmem>>, %arg7: memref<8x128xf32, #tpu.memory_space<vmem>>) attributes {dimension_semantics = [], scalar_prefetch = 0 : i64, scratch_operands = 0 : i64, tpu.core_type = #tpu.core_type<tc>} {
    %c0 = arith.constant 0 : index
    %c0_0 = arith.constant 0 : index
    %0 = vector.load %arg0[%c0, %c0_0] : memref<8x128xbf16, #tpu.memory_space<vmem>>, vector<8x128xbf16>
    %c0_1 = arith.constant 0 : index
    %c0_2 = arith.constant 0 : index
    %1 = vector.load %arg1[%c0_1, %c0_2] : memref<128x128xbf16, #tpu.memory_space<vmem>>, vector<128x128xbf16>
    %cst = arith.constant dense<0.000000e+00> : vector<8x128xf32>
    %2 = tpu.matmul %0, %1, %cst {dimension_numbers = #tpu.dot_dimension_numbers<[1], [0], [0], [1], [0, 0, 1, 1], [], []>} : vector<8x128xbf16>, vector<128x128xbf16>, vector<8x128xf32> -> vector<8x128xf32>
    %c0_3 = arith.constant 0 : index
    %c0_4 = arith.constant 0 : index
    %3 = vector.load %arg2[%c0_3, %c0_4] : memref<1x128xf32, #tpu.memory_space<vmem>>, vector<1x128xf32>
    %4 = vector.broadcast %3 : vector<1x128xf32> to vector<8x128xf32>
    %5 = arith.addf %2, %4 : vector<8x128xf32>
    %cst_5 = arith.constant 0.000000e+00 : f32
    %6 = vector.broadcast %cst_5 : f32 to vector<8x128xf32>
    %7 = arith.maximumf %5, %6 : vector<8x128xf32>
    %8 = arith.truncf %7 : vector<8x128xf32> to vector<8x128xbf16>
    %c0_6 = arith.constant 0 : index
    %c0_7 = arith.constant 0 : index
    %9 = vector.load %arg3[%c0_6, %c0_7] : memref<128x128xbf16, #tpu.memory_space<vmem>>, vector<128x128xbf16>
    %cst_8 = arith.constant dense<0.000000e+00> : vector<8x128xf32>
    %10 = tpu.matmul %8, %9, %cst_8 {dimension_numbers = #tpu.dot_dimension_numbers<[1], [0], [0], [1], [0, 0, 1, 1], [], []>} : vector<8x128xbf16>, vector<128x128xbf16>, vector<8x128xf32> -> vector<8x128xf32>
    %c0_9 = arith.constant 0 : index
    %c0_10 = arith.constant 0 : index
    %11 = vector.load %arg4[%c0_9, %c0_10] : memref<1x128xf32, #tpu.memory_space<vmem>>, vector<1x128xf32>
    %12 = vector.broadcast %11 : vector<1x128xf32> to vector<8x128xf32>
    %13 = arith.addf %10, %12 : vector<8x128xf32>
    %cst_11 = arith.constant 0.000000e+00 : f32
    %14 = vector.broadcast %cst_11 : f32 to vector<8x128xf32>
    %15 = arith.maximumf %13, %14 : vector<8x128xf32>
    %16 = arith.truncf %15 : vector<8x128xf32> to vector<8x128xbf16>
    %c0_12 = arith.constant 0 : index
    %c0_13 = arith.constant 0 : index
    %17 = vector.load %arg3[%c0_12, %c0_13] : memref<128x128xbf16, #tpu.memory_space<vmem>>, vector<128x128xbf16>
    %cst_14 = arith.constant dense<0.000000e+00> : vector<8x128xf32>
    %18 = tpu.matmul %16, %17, %cst_14 {dimension_numbers = #tpu.dot_dimension_numbers<[1], [0], [0], [1], [0, 0, 1, 1], [], []>} : vector<8x128xbf16>, vector<128x128xbf16>, vector<8x128xf32> -> vector<8x128xf32>
    %c0_15 = arith.constant 0 : index
    %c0_16 = arith.constant 0 : index
    %19 = vector.load %arg4[%c0_15, %c0_16] : memref<1x128xf32, #tpu.memory_space<vmem>>, vector<1x128xf32>
    %20 = vector.broadcast %19 : vector<1x128xf32> to vector<8x128xf32>
    %21 = arith.addf %18, %20 : vector<8x128xf32>
    %cst_17 = arith.constant 0.000000e+00 : f32
    %22 = vector.broadcast %cst_17 : f32 to vector<8x128xf32>
    %23 = arith.maximumf %21, %22 : vector<8x128xf32>
    %c0_18 = arith.constant 0 : index
    %c0_19 = arith.constant 0 : index
    %24 = vector.load %arg5[%c0_18, %c0_19] : memref<8x128xf32, #tpu.memory_space<vmem>>, vector<8x128xf32>
    tpu.vector_store %arg5[%c0_18, %c0_19], %7 {strides = array<i32>} : memref<8x128xf32, #tpu.memory_space<vmem>>, vector<8x128xf32>,
    %c0_20 = arith.constant 0 : index
    %c0_21 = arith.constant 0 : index
    %25 = vector.load %arg6[%c0_20, %c0_21] : memref<8x128xf32, #tpu.memory_space<vmem>>, vector<8x128xf32>
    tpu.vector_store %arg6[%c0_20, %c0_21], %15 {strides = array<i32>} : memref<8x128xf32, #tpu.memory_space<vmem>>, vector<8x128xf32>,
    %c0_22 = arith.constant 0 : index
    %c0_23 = arith.constant 0 : index
    %26 = vector.load %arg7[%c0_22, %c0_23] : memref<8x128xf32, #tpu.memory_space<vmem>>, vector<8x128xf32>
    tpu.vector_store %arg7[%c0_22, %c0_23], %23 {strides = array<i32>} : memref<8x128xf32, #tpu.memory_space<vmem>>, vector<8x128xf32>,
    return
  }
}

</mosaic_0001>

<llo_original>
// kernel: alexnet_embeddings.6
$region0: #{alexnet_embeddings.6}
  #allocation0 [shape = 'u32[]', space=smem, size = 0x4, offset = 0x4, fixed_abs, tag = 'smem constant byte address 0x4 - core index']
  #allocation1 [shape = 'u32[144,128]{1,0:T(1,128)}', space=vmem, size = 0x12000, scoped, tag = 'internal scratch']
  #allocation2 [shape = 'f32[225,128]{1,0:T(8,128)}', space=vmem, size = 0x1d000, scoped, tag = 'scratch operand']
  %s0 = inlined_call_operand.vmem [shape: bf16[2,225,384], index: 0, kind: input, shape index: {}]
  %s1 = inlined_call_operand.vmem [shape: bf16[384,128], index: 1, kind: input, shape index: {}]
  %s2 = inlined_call_operand.vmem [shape: f32[1,128], index: 2, kind: input, shape index: {}]
  %s3 = inlined_call_operand.vmem [shape: bf16[2,7,7,128], index: 3, kind: output, shape index: {}]
  %s4 = sld [smem:[#allocation0]]
  $region45: #{alexnet_embeddings.6} parent=0
    _
  %s6 = ssub.s32 1, %s4
  %s7 = scalar_select 0, %s6, %s4
  loop: start=0, step=1, limit=4
  $region2: #{alexnet_embeddings.6} parent=0 // loop_pre_header
    _
  $region3: #{alexnet_embeddings.6} parent=0 // loop_header
    %s9 = sphi 0, %s13
    %p10 = scmp.ge.s32.totalorder %s9, 4
    %s19 = sphi 0, %s21
    %s22 = sphi 0, %s19
    %s23 = sphi 0, %s22
    %s39 = sphi 0, %s23
    %s43 = sphi 0, %s43
    %s45 = sphi 0, %s43
    %s46 = sphi 0, %s45
    %s60 = sphi 0, %s46
    %s64 = sphi 0, %s64
    %s66 = sphi 0, %s64
    %s67 = sphi 0, %s66
    %s81 = sphi 0, %s67
    %s87 = sphi 0, %s89
    %s90 = sphi 0, %s87
    %s91 = sphi 0, %s90
    %s107 = sphi 0, %s91
  $region4: #{alexnet_embeddings.6} parent=0 // loop_header_branch
    %12 = sbr.rel (%p10) target = $region8
  $region5: #{alexnet_embeddings.6} parent=0 // loop_body
    %s14 = ssub.s32 %s9, 1
    %s15 = ssub.s32 %s9, 2
    %s16 = sadd.s32 %s9, 1
    %s17 = ssub.s32 %s9, %s16
    %p18 = scmp.eq.s32.totalorder %s17, 0
    %s20 = sadd.s32 %s19, 1
    %s21 = scalar_select %p18, %s19, %s20
    %p24 = pneg %p18
    %p25 = scmp.eq.s32.totalorder %s9, 1
    %p26 = por %p24, %p25
    %p27 = scmp.ne.s32.totalorder %s19, %s22
    %p28 = scmp.eq.s32.totalorder %s9, 0
    %p29 = por %p27, %p28
    %p30 = scmp.ne.s32.totalorder %s19, %s22
    %p31 = scmp.eq.s32.totalorder %s14, 1
    %p32 = por %p30, %p31
    %p33 = scmp.ne.s32.totalorder %s22, %s23
    %p34 = scmp.eq.s32.totalorder %s14, 0
    %p35 = por %p33, %p34
    %p36 = scmp.ne.s32.totalorder %s22, %s23
    %p37 = scmp.eq.s32.totalorder %s15, 1
    %p38 = por %p36, %p37
    %p40 = scmp.ne.s32.totalorder %s23, %s39
    %p41 = scmp.eq.s32.totalorder %s15, 0
    %p42 = por %p40, %p41
    %s44 = sadd.s32 %s43, 1
    %p47 = scmp.eq.s32.totalorder %s9, 1
    %p48 = scmp.ne.s32.totalorder %s43, %s45
    %p49 = scmp.eq.s32.totalorder %s9, 0
    %p50 = por %p48, %p49
    %p51 = scmp.ne.s32.totalorder %s43, %s45
    %p52 = scmp.eq.s32.totalorder %s14, 1
    %p53 = por %p51, %p52
    %p54 = scmp.ne.s32.totalorder %s45, %s46
    %p55 = scmp.eq.s32.totalorder %s14, 0
    %p56 = por %p54, %p55
    %p57 = scmp.ne.s32.totalorder %s45, %s46
    %p58 = scmp.eq.s32.totalorder %s15, 1
    %p59 = por %p57, %p58
    %p61 = scmp.ne.s32.totalorder %s46, %s60
    %p62 = scmp.eq.s32.totalorder %s15, 0
    %p63 = por %p61, %p62
    %s65 = sadd.s32 %s64, 1
    %p68 = scmp.eq.s32.totalorder %s9, 1
    %p69 = scmp.ne.s32.totalorder %s64, %s66
    %p70 = scmp.eq.s32.totalorder %s9, 0
    %p71 = por %p69, %p70
    %p72 = scmp.ne.s32.totalorder %s64, %s66
    %p73 = scmp.eq.s32.totalorder %s14, 1
    %p74 = por %p72, %p73
    %p75 = scmp.ne.s32.totalorder %s66, %s67
    %p76 = scmp.eq.s32.totalorder %s14, 0
    %p77 = por %p75, %p76
    %p78 = scmp.ne.s32.totalorder %s66, %s67
    %p79 = scmp.eq.s32.totalorder %s15, 1
    %p80 = por %p78, %p79
    %p82 = scmp.ne.s32.totalorder %s67, %s81
    %p83 = scmp.eq.s32.totalorder %s15, 0
    %p84 = por %p82, %p83
    %s85 = ssub.s32 %s9, %s16
    %p86 = scmp.eq.s32.totalorder %s85, 0
    %s88 = sadd.s32 %s87, 1
    %s89 = scalar_select %p86, %s87, %s88
    %p92 = pneg %p86
    %p93 = scmp.eq.s32.totalorder %s9, 1
    %p94 = por %p92, %p93
    %p95 = scmp.ne.s32.totalorder %s87, %s90
    %p96 = scmp.eq.s32.totalorder %s9, 0
    %p97 = por %p95, %p96
    %p98 = scmp.ne.s32.totalorder %s87, %s90
    %p99 = scmp.eq.s32.totalorder %s14, 1
    %p100 = por %p98, %p99
    %p101 = scmp.ne.s32.totalorder %s90, %s91
    %p102 = scmp.eq.s32.totalorder %s14, 0
    %p103 = por %p101, %p102
    %p104 = scmp.ne.s32.totalorder %s90, %s91
    %p105 = scmp.eq.s32.totalorder %s15, 1
    %p106 = por %p104, %p105
    %p108 = scmp.ne.s32.totalorder %s91, %s107
    %p109 = scmp.eq.s32.totalorder %s15, 0
    %p110 = por %p108, %p109
    %p111 = scmp.le.s32.totalorder 1, %s9
    %p112 = scmp.lt.s32.totalorder %s9, 3
    %p113 = pnand %p111, %p112
    %p114 = pneg %p113
    // Predicated region
    $region9: #{alexnet_embeddings.6} parent=5 // pred_check
      _
    $region10: #{alexnet_embeddings.6} parent=5 // pred_check_branch
      %116 = sbr.rel (%p113) target = $region12
    $region11: #{alexnet_embeddings.6} parent=5 // pred_region
      %s117 = ssub.s32 %s9, 1
      // Predicated region
      $region13: #{alexnet_embeddings.6} parent=11 // pred_check
        %p118 = pneg %p56
      $region14: #{alexnet_embeddings.6} parent=11 // pred_check_branch
        %120 = sbr.rel (%p118) target = $region16
      $region15: #{alexnet_embeddings.6} parent=11 // pred_region
        _
      $region16: #{alexnet_embeddings.6} parent=11 // pred_fallthru
        _
      // Predicated region
      $region17: #{alexnet_embeddings.6} parent=11 // pred_check
        %p121 = pneg %p77
      $region18: #{alexnet_embeddings.6} parent=11 // pred_check_branch
        %123 = sbr.rel (%p121) target = $region20
      $region19: #{alexnet_embeddings.6} parent=11 // pred_region
        _
      $region20: #{alexnet_embeddings.6} parent=11 // pred_fallthru
        _
    $region12: #{alexnet_embeddings.6} parent=5 // pred_fallthru
      _
    %p124 = scmp.lt.s32.totalorder %s9, 2
    // Predicated region
    $region21: #{alexnet_embeddings.6} parent=5 // pred_check
      %p125 = pneg %p124
    $region22: #{alexnet_embeddings.6} parent=5 // pred_check_branch
      %127 = sbr.rel (%p125) target = $region24
    $region23: #{alexnet_embeddings.6} parent=5 // pred_region
      // Predicated region
      $region25: #{alexnet_embeddings.6} parent=23 // pred_check
        %p128 = pneg %p29
      $region26: #{alexnet_embeddings.6} parent=23 // pred_check_branch
        %130 = sbr.rel (%p128) target = $region28
      $region27: #{alexnet_embeddings.6} parent=23 // pred_region
        %p131 = scmp.lt.s32.totalorder %s9, 1
        %s132 = scalar_select %p131, %s9, 1
        %s133 = smul.addr %s132, 87
        %s134 = smul.addr %s133, 4
        %s135 = scalar_lea.vmem %s0, %s134
      $region28: #{alexnet_embeddings.6} parent=23 // pred_fallthru
        _
    $region24: #{alexnet_embeddings.6} parent=5 // pred_fallthru
      _
    %p136 = scmp.le.s32.totalorder 1, %s9
    %p137 = scmp.lt.s32.totalorder %s9, 3
    %p138 = pnand %p136, %p137
    %p139 = pneg %p138
    // Predicated region
    $region29: #{alexnet_embeddings.6} parent=5 // pred_check
      _
    $region30: #{alexnet_embeddings.6} parent=5 // pred_check_branch
      %141 = sbr.rel (%p138) target = $region32
    $region31: #{alexnet_embeddings.6} parent=5 // pred_region
      %s142 = ssub.s32 %s9, 1
      %p143 = scmp.lt.s32.totalorder %s14, 1
      %s144 = scalar_select %p143, %s14, 1
      %s145 = smul.addr %s144, 87
      %s146 = smul.addr %s145, 4
      %s147 = scalar_lea.vmem %s0, %s146
      %p148 = pneg %p35
      %p149 = pneg %p32
      %p150 = pneg %p56
      %p151 = pneg %p53
      %p152 = pneg %p77
      %p153 = pneg %p74
      %p154 = pneg %p103
      %p155 = pneg %p100
      %p156 = scmp.lt.s32.totalorder %s14, 1
      %s157 = scalar_select %p156, %s14, 1
      %s158 = smul.addr %s157, 7
      %s159 = smul.addr %s158, 4
      %s160 = scalar_lea.vmem %s3, %s159
      %p161 = scmp.lt.s32.totalorder %s14, 1
      %s162 = scalar_select %p161, %s14, 1
      %s163 = smul.addr %s162, 87
      %s164 = smul.addr %s163, 4
      %s165 = scalar_lea.vmem %s0, %s164
      %p166 = scmp.lt.s32.totalorder %s14, 1
      %s167 = scalar_select %p166, %s14, 1
      %s168 = smul.addr %s167, 7
      %s169 = smul.addr %s168, 4
      %s170 = scalar_lea.vmem %s3, %s169
      %v172 = vld [vmem:[%s165] sm:$0xff]
      %v173 = vld [vmem:[%s165 + $0x8] sm:$0xf]
      %v174 = vld [vmem:[%s165 + $0xc] sm:$0xff]
      %v175 = vld [vmem:[%s165 + $0x14] sm:$0xf]
      %v176 = vld [vmem:[%s165 + $0x18] sm:$0xff]
      %v177 = vld [vmem:[%s165 + $0x20] sm:$0xf]
      %v178 = vld [vmem:[%s165 + $0x24] sm:$0xff]
      %v179 = vld [vmem:[%s165 + $0x2c] sm:$0xf]
      %v180 = vld [vmem:[%s165 + $0x30] sm:$0xff]
      %v181 = vld [vmem:[%s165 + $0x38] sm:$0xf]
      %v182 = vld [vmem:[%s165 + $0x3c] sm:$0xff]
      %v183 = vld [vmem:[%s165 + $0x44] sm:$0xf]
      %v184 = vld [vmem:[%s165 + $0x48] sm:$0xff]
      %v185 = vld [vmem:[%s165 + $0x50] sm:$0xf]
      %v186 = vld [vmem:[%s165 + $0x54] sm:$0xff]
      %v187 = vld [vmem:[%s165 + $0x5c] sm:$0xf]
      %v188 = vld [vmem:[%s165 + $0x60] sm:$0xff]
      %v189 = vld [vmem:[%s165 + $0x68] sm:$0xf]
      %v190 = vld [vmem:[%s165 + $0x6c] sm:$0xff]
      %v191 = vld [vmem:[%s165 + $0x74] sm:$0xf]
      %v192 = vld [vmem:[%s165 + $0x78] sm:$0xff]
      %v193 = vld [vmem:[%s165 + $0x80] sm:$0xf]
      %v194 = vld [vmem:[%s165 + $0x84] sm:$0xff]
      %v195 = vld [vmem:[%s165 + $0x8c] sm:$0xf]
      %v196 = vld [vmem:[%s165 + $0x90] sm:$0xff]
      %v197 = vld [vmem:[%s165 + $0x98] sm:$0xf]
      %v198 = vld [vmem:[%s165 + $0x9c] sm:$0xff]
      %v199 = vld [vmem:[%s165 + $0xa4] sm:$0xf]
      %v200 = vld [vmem:[%s165 + $0xa8] sm:$0xff]
      %v201 = vld [vmem:[%s165 + $0xb0] sm:$0xf]
      %v202 = vld [vmem:[%s165 + $0xb4] sm:$0xff]
      %v203 = vld [vmem:[%s165 + $0xbc] sm:$0xf]
      %v204 = vld [vmem:[%s165 + $0xc0] sm:$0xff]
      %v205 = vld [vmem:[%s165 + $0xc8] sm:$0xf]
      %v206 = vld [vmem:[%s165 + $0xcc] sm:$0xff]
      %v207 = vld [vmem:[%s165 + $0xd4] sm:$0xf]
      %v208 = vld [vmem:[%s165 + $0xd8] sm:$0xff]
      %v209 = vld [vmem:[%s165 + $0xe0] sm:$0xf]
      %v210 = vld [vmem:[%s165 + $0xe4] sm:$0xff]
      %v211 = vld [vmem:[%s165 + $0xec] sm:$0xf]
      %v212 = vld [vmem:[%s165 + $0xf0] sm:$0xff]
      %v213 = vld [vmem:[%s165 + $0xf8] sm:$0xf]
      %v214 = vld [vmem:[%s165 + $0xfc] sm:$0xff]
      %v215 = vld [vmem:[%s165 + $0x104] sm:$0xf]
      %v216 = vld [vmem:[%s165 + $0x108] sm:$0xff]
      %v217 = vld [vmem:[%s165 + $0x110] sm:$0xf]
      %v218 = vld [vmem:[%s165 + $0x114] sm:$0xff]
      %v219 = vld [vmem:[%s165 + $0x11c] sm:$0xf]
      %v220 = vld [vmem:[%s165 + $0x120] sm:$0xff]
      %v221 = vld [vmem:[%s165 + $0x128] sm:$0xf]
      %v222 = vld [vmem:[%s165 + $0x12c] sm:$0xff]
      %v223 = vld [vmem:[%s165 + $0x134] sm:$0xf]
      %v224 = vld [vmem:[%s165 + $0x138] sm:$0xff]
      %v225 = vld [vmem:[%s165 + $0x140] sm:$0xf]
      %v226 = vld [vmem:[%s165 + $0x144] sm:$0xff]
      %v227 = vld [vmem:[%s165 + $0x14c] sm:$0xf]
      %v228 = vld [vmem:[%s165 + $0x150] sm:$0x11]
      %v229 = vld [vmem:[%s165 + $0x158] sm:$0x1]
      %v230 = vld [vmem:[%s1] sm:$0xf]
      %v231 = vld [vmem:[%s1 + $0x4] sm:$0xf]
      %v232 = vld [vmem:[%s1 + $0x8] sm:$0xf]
      %v233 = vld [vmem:[%s1 + $0xc] sm:$0xf]
      %v234 = vld [vmem:[%s1 + $0x10] sm:$0xf]
      %v235 = vld [vmem:[%s1 + $0x14] sm:$0xf]
      %v236 = vld [vmem:[%s1 + $0x18] sm:$0xf]
      %v237 = vld [vmem:[%s1 + $0x1c] sm:$0xf]
      %v238 = vld [vmem:[%s1 + $0x20] sm:$0xf]
      %v239 = vld [vmem:[%s1 + $0x24] sm:$0xf]
      %v240 = vld [vmem:[%s1 + $0x28] sm:$0xf]
      %v241 = vld [vmem:[%s1 + $0x2c] sm:$0xf]
      %v242 = vld [vmem:[%s1 + $0x30] sm:$0xf]
      %v243 = vld [vmem:[%s1 + $0x34] sm:$0xf]
      %v244 = vld [vmem:[%s1 + $0x38] sm:$0xf]
      %v245 = vld [vmem:[%s1 + $0x3c] sm:$0xf]
      %v246 = vld [vmem:[%s1 + $0x40] sm:$0xf]
      %v247 = vld [vmem:[%s1 + $0x44] sm:$0xf]
      %v248 = vld [vmem:[%s1 + $0x48] sm:$0xf]
      %v249 = vld [vmem:[%s1 + $0x4c] sm:$0xf]
      %v250 = vld [vmem:[%s1 + $0x50] sm:$0xf]
      %v251 = vld [vmem:[%s1 + $0x54] sm:$0xf]
      %v252 = vld [vmem:[%s1 + $0x58] sm:$0xf]
      %v253 = vld [vmem:[%s1 + $0x5c] sm:$0xf]
      %v254 = vld [vmem:[%s1 + $0x60] sm:$0xf]
      %v255 = vld [vmem:[%s1 + $0x64] sm:$0xf]
      %v256 = vld [vmem:[%s1 + $0x68] sm:$0xf]
      %v257 = vld [vmem:[%s1 + $0x6c] sm:$0xf]
      %v258 = vld [vmem:[%s1 + $0x70] sm:$0xf]
      %v259 = vld [vmem:[%s1 + $0x74] sm:$0xf]
      %v260 = vld [vmem:[%s1 + $0x78] sm:$0xf]
      %v261 = vld [vmem:[%s1 + $0x7c] sm:$0xf]
      %v262 = vld [vmem:[%s1 + $0x80] sm:$0xf]
      %v263 = vld [vmem:[%s1 + $0x84] sm:$0xf]
      %v264 = vld [vmem:[%s1 + $0x88] sm:$0xf]
      %v265 = vld [vmem:[%s1 + $0x8c] sm:$0xf]
      %v266 = vld [vmem:[%s1 + $0x90] sm:$0xf]
      %v267 = vld [vmem:[%s1 + $0x94] sm:$0xf]
      %v268 = vld [vmem:[%s1 + $0x98] sm:$0xf]
      %v269 = vld [vmem:[%s1 + $0x9c] sm:$0xf]
      %v270 = vld [vmem:[%s1 + $0xa0] sm:$0xf]
      %v271 = vld [vmem:[%s1 + $0xa4] sm:$0xf]
      %v272 = vld [vmem:[%s1 + $0xa8] sm:$0xf]
      %v273 = vld [vmem:[%s1 + $0xac] sm:$0xf]
      %v274 = vld [vmem:[%s1 + $0xb0] sm:$0xf]
      %v275 = vld [vmem:[%s1 + $0xb4] sm:$0xf]
      %v276 = vld [vmem:[%s1 + $0xb8] sm:$0xf]
      %v277 = vld [vmem:[%s1 + $0xbc] sm:$0xf]
      %v278 = vld [vmem:[%s2] sm:$0x1]
      %v280 = vlaneseq
      %v281 = vshrl.u32 %v280, 7
      %v282 = vsub.s32 0, %v281
      %v283 = vrot.slane %v278, %v282
      %v343 = vunpack.c.l.b16 %v172
      %v344 = vunpack.c.h.b16 %v172
      %v345 = vunpack.c.l.b16 %v173
      %v346 = vunpack.c.l.b16 %v174
      %v347 = vunpack.c.h.b16 %v174
      %v348 = vunpack.c.l.b16 %v175
      %v349 = vunpack.c.l.b16 %v176
      %v350 = vunpack.c.h.b16 %v176
      %v351 = vunpack.c.l.b16 %v177
      %v352 = vunpack.c.l.b16 %v178
      %v353 = vunpack.c.h.b16 %v178
      %v354 = vunpack.c.l.b16 %v179
      %v355 = vunpack.c.l.b16 %v180
      %v356 = vunpack.c.h.b16 %v180
      %v357 = vunpack.c.l.b16 %v181
      %v358 = vunpack.c.l.b16 %v182
      %v359 = vunpack.c.h.b16 %v182
      %v360 = vunpack.c.l.b16 %v183
      %v361 = vunpack.c.l.b16 %v184
      %v362 = vunpack.c.h.b16 %v184
      %v363 = vunpack.c.l.b16 %v185
      %v364 = vunpack.c.l.b16 %v186
      %v365 = vunpack.c.h.b16 %v186
      %v366 = vunpack.c.l.b16 %v187
      %v367 = vunpack.c.l.b16 %v188
      %v368 = vunpack.c.h.b16 %v188
      %v369 = vunpack.c.l.b16 %v189
      %v370 = vunpack.c.l.b16 %v190
      %v371 = vunpack.c.h.b16 %v190
      %v372 = vunpack.c.l.b16 %v191
      %v373 = vunpack.c.l.b16 %v192
      %v374 = vunpack.c.h.b16 %v192
      %v375 = vunpack.c.l.b16 %v193
      %v376 = vunpack.c.l.b16 %v194
      %v377 = vunpack.c.h.b16 %v194
      %v378 = vunpack.c.l.b16 %v195
      %v379 = vunpack.c.l.b16 %v196
      %v380 = vunpack.c.h.b16 %v196
      %v381 = vunpack.c.l.b16 %v197
      %v382 = vunpack.c.l.b16 %v198
      %v383 = vunpack.c.h.b16 %v198
      %v384 = vunpack.c.l.b16 %v199
      %v385 = vunpack.c.l.b16 %v200
      %v386 = vunpack.c.h.b16 %v200
      %v387 = vunpack.c.l.b16 %v201
      %v388 = vunpack.c.l.b16 %v202
      %v389 = vunpack.c.h.b16 %v202
      %v390 = vunpack.c.l.b16 %v203
      %v391 = vunpack.c.l.b16 %v204
      %v392 = vunpack.c.h.b16 %v204
      %v393 = vunpack.c.l.b16 %v205
      %v394 = vunpack.c.l.b16 %v206
      %v395 = vunpack.c.h.b16 %v206
      %v396 = vunpack.c.l.b16 %v207
      %v397 = vunpack.c.l.b16 %v208
      %v398 = vunpack.c.h.b16 %v208
      %v399 = vunpack.c.l.b16 %v209
      %v400 = vunpack.c.l.b16 %v210
      %v401 = vunpack.c.h.b16 %v210
      %v402 = vunpack.c.l.b16 %v211
      %v403 = vunpack.c.l.b16 %v212
      %v404 = vunpack.c.h.b16 %v212
      %v405 = vunpack.c.l.b16 %v213
      %v406 = vunpack.c.l.b16 %v214
      %v407 = vunpack.c.h.b16 %v214
      %v408 = vunpack.c.l.b16 %v215
      %v409 = vunpack.c.l.b16 %v216
      %v410 = vunpack.c.h.b16 %v216
      %v411 = vunpack.c.l.b16 %v217
      %v412 = vunpack.c.l.b16 %v218
      %v413 = vunpack.c.h.b16 %v218
      %v414 = vunpack.c.l.b16 %v219
      %v415 = vunpack.c.l.b16 %v220
      %v416 = vunpack.c.h.b16 %v220
      %v417 = vunpack.c.l.b16 %v221
      %v418 = vunpack.c.l.b16 %v222
      %v419 = vunpack.c.h.b16 %v222
      %v420 = vunpack.c.l.b16 %v223
      %v421 = vunpack.c.l.b16 %v224
      %v422 = vunpack.c.h.b16 %v224
      %v423 = vunpack.c.l.b16 %v225
      %v424 = vunpack.c.l.b16 %v226
      %v425 = vunpack.c.h.b16 %v226
      %v426 = vunpack.c.l.b16 %v227
      %v427 = vunpack.c.l.b16 %v228
      %v428 = vunpack.c.h.b16 %v228
      %v429 = vunpack.c.l.b16 %v229
      %v430 = vpack.c.b16 %v346, %v343
      %v431 = vpack.c.b16 %v347, %v344
      %v432 = vpack.c.b16 %v348, %v345
      %v433 = vpack.c.b16 %v352, %v349
      %v434 = vpack.c.b16 %v353, %v350
      %v435 = vpack.c.b16 %v354, %v351
      %v436 = vpack.c.b16 %v358, %v355
      %v437 = vpack.c.b16 %v359, %v356
      %v438 = vpack.c.b16 %v360, %v357
      %v439 = vpack.c.b16 %v364, %v361
      %v440 = vpack.c.b16 %v365, %v362
      %v441 = vpack.c.b16 %v366, %v363
      %v442 = vpack.c.b16 %v370, %v367
      %v443 = vpack.c.b16 %v371, %v368
      %v444 = vpack.c.b16 %v372, %v369
      %v445 = vpack.c.b16 %v376, %v373
      %v446 = vpack.c.b16 %v377, %v374
      %v447 = vpack.c.b16 %v378, %v375
      %v448 = vpack.c.b16 %v382, %v379
      %v449 = vpack.c.b16 %v383, %v380
      %v450 = vpack.c.b16 %v384, %v381
      %v451 = vpack.c.b16 %v388, %v385
      %v452 = vpack.c.b16 %v389, %v386
      %v453 = vpack.c.b16 %v390, %v387
      %v454 = vpack.c.b16 %v394, %v391
      %v455 = vpack.c.b16 %v395, %v392
      %v456 = vpack.c.b16 %v396, %v393
      %v457 = vpack.c.b16 %v400, %v397
      %v458 = vpack.c.b16 %v401, %v398
      %v459 = vpack.c.b16 %v402, %v399
      %v460 = vpack.c.b16 %v406, %v403
      %v461 = vpack.c.b16 %v407, %v404
      %v462 = vpack.c.b16 %v408, %v405
      %v463 = vpack.c.b16 %v412, %v409
      %v464 = vpack.c.b16 %v413, %v410
      %v465 = vpack.c.b16 %v414, %v411
      %v466 = vpack.c.b16 %v418, %v415
      %v467 = vpack.c.b16 %v419, %v416
      %v468 = vpack.c.b16 %v420, %v417
      %v469 = vpack.c.b16 %v424, %v421
      %v470 = vpack.c.b16 %v425, %v422
      %v471 = vpack.c.b16 %v426, %v423
      %v472 = vpack.c.b16 %v427, %v427
      %v473 = vpack.c.b16 %v428, %v428
      %v474 = vpack.c.b16 %v429, %v429
      %v568 = vunpack.c.l.b16 %v230
      %v569 = vunpack.c.l.b16 %v231
      %v570 = vunpack.c.l.b16 %v232
      %v571 = vunpack.c.l.b16 %v233
      %v572 = vunpack.c.l.b16 %v234
      %v573 = vunpack.c.l.b16 %v235
      %v574 = vunpack.c.l.b16 %v236
      %v575 = vunpack.c.l.b16 %v237
      %v576 = vunpack.c.l.b16 %v238
      %v577 = vunpack.c.l.b16 %v239
      %v578 = vunpack.c.l.b16 %v240
      %v579 = vunpack.c.l.b16 %v241
      %v580 = vunpack.c.l.b16 %v242
      %v581 = vunpack.c.l.b16 %v243
      %v582 = vunpack.c.l.b16 %v244
      %v583 = vunpack.c.l.b16 %v245
      %v584 = vunpack.c.l.b16 %v246
      %v585 = vunpack.c.l.b16 %v247
      %v586 = vunpack.c.l.b16 %v248
      %v587 = vunpack.c.l.b16 %v249
      %v588 = vunpack.c.l.b16 %v250
      %v589 = vunpack.c.l.b16 %v251
      %v590 = vunpack.c.l.b16 %v252
      %v591 = vunpack.c.l.b16 %v253
      %v592 = vunpack.c.l.b16 %v254
      %v593 = vunpack.c.l.b16 %v255
      %v594 = vunpack.c.l.b16 %v256
      %v595 = vunpack.c.l.b16 %v257
      %v596 = vunpack.c.l.b16 %v258
      %v597 = vunpack.c.l.b16 %v259
      %v598 = vunpack.c.l.b16 %v260
      %v599 = vunpack.c.l.b16 %v261
      %v600 = vunpack.c.l.b16 %v262
      %v601 = vunpack.c.l.b16 %v263
      %v602 = vunpack.c.l.b16 %v264
      %v603 = vunpack.c.l.b16 %v265
      %v604 = vunpack.c.l.b16 %v266
      %v605 = vunpack.c.l.b16 %v267
      %v606 = vunpack.c.l.b16 %v268
      %v607 = vunpack.c.l.b16 %v269
      %v608 = vunpack.c.l.b16 %v270
      %v609 = vunpack.c.l.b16 %v271
      %v610 = vunpack.c.l.b16 %v272
      %v611 = vunpack.c.l.b16 %v273
      %v612 = vunpack.c.l.b16 %v274
      %v613 = vunpack.c.l.b16 %v275
      %v614 = vunpack.c.l.b16 %v276
      %v615 = vunpack.c.l.b16 %v277
      %v616 = vpack.c.b16 %v569, %v568
      %v617 = vpack.c.b16 %v571, %v570
      %v618 = vpack.c.b16 %v573, %v572
      %v619 = vpack.c.b16 %v575, %v574
      %v620 = vpack.c.b16 %v577, %v576
      %v621 = vpack.c.b16 %v579, %v578
      %v622 = vpack.c.b16 %v581, %v580
      %v623 = vpack.c.b16 %v583, %v582
      %v624 = vpack.c.b16 %v585, %v584
      %v625 = vpack.c.b16 %v587, %v586
      %v626 = vpack.c.b16 %v589, %v588
      %v627 = vpack.c.b16 %v591, %v590
      %v628 = vpack.c.b16 %v593, %v592
      %v629 = vpack.c.b16 %v595, %v594
      %v630 = vpack.c.b16 %v597, %v596
      %v631 = vpack.c.b16 %v599, %v598
      %v632 = vpack.c.b16 %v601, %v600
      %v633 = vpack.c.b16 %v603, %v602
      %v634 = vpack.c.b16 %v605, %v604
      %v635 = vpack.c.b16 %v607, %v606
      %v636 = vpack.c.b16 %v609, %v608
      %v637 = vpack.c.b16 %v611, %v610
      %v638 = vpack.c.b16 %v613, %v612
      %v639 = vpack.c.b16 %v615, %v614
      %664 = vmatprep.subr.bf16.mxu0 0
      %665 = vmatpush1.bf16.msra.mxu0 %v623
      %666 = vmatprep.subr.bf16.mxu0 0
      %667 = vmatpush1.bf16.msra.mxu0 %v622
      %668 = vmatprep.subr.bf16.mxu0 0
      %669 = vmatpush1.bf16.msra.mxu0 %v621
      %670 = vmatprep.subr.bf16.mxu0 0
      %671 = vmatpush1.bf16.msra.mxu0 %v620
      %672 = vmatprep.subr.bf16.mxu0 0
      %673 = vmatpush1.bf16.msra.mxu0 %v619
      %674 = vmatprep.subr.bf16.mxu0 0
      %675 = vmatpush1.bf16.msra.mxu0 %v618
      %676 = vmatprep.subr.bf16.mxu0 0
      %677 = vmatpush1.bf16.msra.mxu0 %v617
      %678 = vmatprep.subr.bf16.mxu0 0
      %679 = vmatpush1.bf16.msra.mxu0 %v616
      %680 = vmatprep.subr.bf16.mxu0 0
      %681 = vmatpush2.bf16.msra.mxu0 %v631
      %682 = vmatprep.subr.bf16.mxu0 0
      %683 = vmatpush2.bf16.msra.mxu0 %v630
      %684 = vmatprep.subr.bf16.mxu0 0
      %685 = vmatpush2.bf16.msra.mxu0 %v629
      %686 = vmatprep.subr.bf16.mxu0 0
      %687 = vmatpush2.bf16.msra.mxu0 %v628
      %688 = vmatprep.subr.bf16.mxu0 0
      %689 = vmatpush2.bf16.msra.mxu0 %v627
      %690 = vmatprep.subr.bf16.mxu0 0
      %691 = vmatpush2.bf16.msra.mxu0 %v626
      %692 = vmatprep.subr.bf16.mxu0 0
      %693 = vmatpush2.bf16.msra.mxu0 %v625
      %694 = vmatprep.subr.bf16.mxu0 0
      %695 = vmatpush2.bf16.msra.mxu0 %v624
      %696 = vmatprep.mubr.bf16.mxu0 %v431
      %697 = vmatmul.mubr.bf16.gmra.mxu0 %v430
      %v698 = vpop.f32.mrf.mxu0
      %v699 = vadd.f32 %v283, %v698
      %v700 = vpop.f32.mrf.mxu0
      %v701 = vpop.f32.mrf.mxu0
      %v702 = vadd.f32 %v283, %v701
      %v703 = vpop.f32.mrf.mxu0
      %704 = vmatprep.mubr.bf16.mxu0 %v434
      %705 = vmatmul.mubr.bf16.gmra.mxu0 %v433
      %v706 = vpop.f32.mrf.mxu0
      %v707 = vadd.f32 %v283, %v706
      %v708 = vpop.f32.mrf.mxu0
      %v709 = vpop.f32.mrf.mxu0
      %v710 = vadd.f32 %v283, %v709
      %v711 = vpop.f32.mrf.mxu0
      %712 = vmatprep.mubr.bf16.mxu0 %v437
      %713 = vmatmul.mubr.bf16.gmra.mxu0 %v436
      %v714 = vpop.f32.mrf.mxu0
      %v715 = vadd.f32 %v283, %v714
      %v716 = vpop.f32.mrf.mxu0
      %v717 = vpop.f32.mrf.mxu0
      %v718 = vadd.f32 %v283, %v717
      %v719 = vpop.f32.mrf.mxu0
      %720 = vmatprep.mubr.bf16.mxu0 %v440
      %721 = vmatmul.mubr.bf16.gmra.mxu0 %v439
      %v722 = vpop.f32.mrf.mxu0
      %v723 = vadd.f32 %v283, %v722
      %v724 = vpop.f32.mrf.mxu0
      %v725 = vpop.f32.mrf.mxu0
      %v726 = vadd.f32 %v283, %v725
      %v727 = vpop.f32.mrf.mxu0
      %728 = vmatprep.mubr.bf16.mxu0 %v443
      %729 = vmatmul.mubr.bf16.gmra.mxu0 %v442
      %v730 = vpop.f32.mrf.mxu0
      %v731 = vadd.f32 %v283, %v730
      %v732 = vpop.f32.mrf.mxu0
      %v733 = vpop.f32.mrf.mxu0
      %v734 = vadd.f32 %v283, %v733
      %v735 = vpop.f32.mrf.mxu0
      %736 = vmatprep.mubr.bf16.mxu0 %v446
      %737 = vmatmul.mubr.bf16.gmra.mxu0 %v445
      %v738 = vpop.f32.mrf.mxu0
      %v739 = vadd.f32 %v283, %v738
      %v740 = vpop.f32.mrf.mxu0
      %v741 = vpop.f32.mrf.mxu0
      %v742 = vadd.f32 %v283, %v741
      %v743 = vpop.f32.mrf.mxu0
      %744 = vmatprep.mubr.bf16.mxu0 %v449
      %745 = vmatmul.mubr.bf16.gmra.mxu0 %v448
      %v746 = vpop.f32.mrf.mxu0
      %v747 = vadd.f32 %v283, %v746
      %v748 = vpop.f32.mrf.mxu0
      %v749 = vpop.f32.mrf.mxu0
      %v750 = vadd.f32 %v283, %v749
      %v751 = vpop.f32.mrf.mxu0
      %752 = vmatprep.mubr.bf16.mxu0 %v452
      %753 = vmatmul.mubr.bf16.gmra.mxu0 %v451
      %v754 = vpop.f32.mrf.mxu0
      %v755 = vadd.f32 %v283, %v754
      %v756 = vpop.f32.mrf.mxu0
      %v757 = vpop.f32.mrf.mxu0
      %v758 = vadd.f32 %v283, %v757
      %v759 = vpop.f32.mrf.mxu0
      %760 = vmatprep.mubr.bf16.mxu0 %v455
      %761 = vmatmul.mubr.bf16.gmra.mxu0 %v454
      %v762 = vpop.f32.mrf.mxu0
      %v763 = vadd.f32 %v283, %v762
      %v764 = vpop.f32.mrf.mxu0
      %v765 = vpop.f32.mrf.mxu0
      %v766 = vadd.f32 %v283, %v765
      %v767 = vpop.f32.mrf.mxu0
      %768 = vmatprep.mubr.bf16.mxu0 %v458
      %769 = vmatmul.mubr.bf16.gmra.mxu0 %v457
      %v770 = vpop.f32.mrf.mxu0
      %v771 = vadd.f32 %v283, %v770
      %v772 = vpop.f32.mrf.mxu0
      %v773 = vpop.f32.mrf.mxu0
      %v774 = vadd.f32 %v283, %v773
      %v775 = vpop.f32.mrf.mxu0
      %776 = vmatprep.mubr.bf16.mxu0 %v461
      %777 = vmatmul.mubr.bf16.gmra.mxu0 %v460
      %v778 = vpop.f32.mrf.mxu0
      %v779 = vadd.f32 %v283, %v778
      %v780 = vpop.f32.mrf.mxu0
      %v781 = vpop.f32.mrf.mxu0
      %v782 = vadd.f32 %v283, %v781
      %v783 = vpop.f32.mrf.mxu0
      %784 = vmatprep.mubr.bf16.mxu0 %v464
      %785 = vmatmul.mubr.bf16.gmra.mxu0 %v463
      %v786 = vpop.f32.mrf.mxu0
      %v787 = vadd.f32 %v283, %v786
      %v788 = vpop.f32.mrf.mxu0
      %v789 = vpop.f32.mrf.mxu0
      %v790 = vadd.f32 %v283, %v789
      %v791 = vpop.f32.mrf.mxu0
      %792 = vmatprep.mubr.bf16.mxu0 %v467
      %793 = vmatmul.mubr.bf16.gmra.mxu0 %v466
      %v794 = vpop.f32.mrf.mxu0
      %v795 = vadd.f32 %v283, %v794
      %v796 = vpop.f32.mrf.mxu0
      %v797 = vpop.f32.mrf.mxu0
      %v798 = vadd.f32 %v283, %v797
      %v799 = vpop.f32.mrf.mxu0
      %800 = vmatprep.mubr.bf16.mxu0 %v470
      %801 = vmatmul.mubr.bf16.gmra.mxu0 %v469
      %v802 = vpop.f32.mrf.mxu0
      %v803 = vadd.f32 %v283, %v802
      %v804 = vpop.f32.mrf.mxu0
      %v805 = vpop.f32.mrf.mxu0
      %v806 = vadd.f32 %v283, %v805
      %v807 = vpop.f32.mrf.mxu0
      %808 = vmatprep.mubr.bf16.mxu0 %v473
      %809 = vmatmul.mubr.bf16.gmra.mxu0 %v472
      %v810 = vpop.f32.mrf.mxu0
      %v811 = vadd.f32 %v283, %v810
      %v812 = vpop.f32.mrf.mxu0
      %v813 = vpop.f32.mrf.mxu0
      %v814 = vpop.f32.mrf.mxu0
      %815 = vdwg.mxu0
      %816 = vmatprep.subr.bf16.mxu0 0
      %817 = vmatpush1.bf16.msra.mxu0 %v639
      %818 = vmatprep.subr.bf16.mxu0 0
      %819 = vmatpush1.bf16.msra.mxu0 %v638
      %820 = vmatprep.subr.bf16.mxu0 0
      %821 = vmatpush1.bf16.msra.mxu0 %v637
      %822 = vmatprep.subr.bf16.mxu0 0
      %823 = vmatpush1.bf16.msra.mxu0 %v636
      %824 = vmatprep.subr.bf16.mxu0 0
      %825 = vmatpush1.bf16.msra.mxu0 %v635
      %826 = vmatprep.subr.bf16.mxu0 0
      %827 = vmatpush1.bf16.msra.mxu0 %v634
      %828 = vmatprep.subr.bf16.mxu0 0
      %829 = vmatpush1.bf16.msra.mxu0 %v633
      %830 = vmatprep.subr.bf16.mxu0 0
      %831 = vmatpush1.bf16.msra.mxu0 %v632
      %832 = vmatprep.subr.bf16.mxu0 0
      %833 = vmatpush2.bf16.msra.mxu0 0
      %834 = vmatprep.subr.bf16.mxu0 0
      %835 = vmatpush2.bf16.msra.mxu0 0
      %836 = vmatprep.subr.bf16.mxu0 0
      %837 = vmatpush2.bf16.msra.mxu0 0
      %838 = vmatprep.subr.bf16.mxu0 0
      %839 = vmatpush2.bf16.msra.mxu0 0
      %840 = vmatprep.subr.bf16.mxu0 0
      %841 = vmatpush2.bf16.msra.mxu0 0
      %842 = vmatprep.subr.bf16.mxu0 0
      %843 = vmatpush2.bf16.msra.mxu0 0
      %844 = vmatprep.subr.bf16.mxu0 0
      %845 = vmatpush2.bf16.msra.mxu0 0
      %846 = vmatprep.subr.bf16.mxu0 0
      %847 = vmatpush2.bf16.msra.mxu0 0
      %848 = vmatprep.mubr.bf16.mxu0 0
      %849 = vmatmul.mubr.bf16.gmra.mxu0 %v432
      %v850 = vpop.f32.mrf.mxu0
      %v851 = vadd.f32 %v699, %v850
      %v852 = vpop.f32.mrf.mxu0
      %v853 = vpop.f32.mrf.mxu0
      %v854 = vadd.f32 %v702, %v853
      %v855 = vpop.f32.mrf.mxu0
      %856 = vmatprep.mubr.bf16.mxu0 0
      %857 = vmatmul.mubr.bf16.gmra.mxu0 %v435
      %v858 = vpop.f32.mrf.mxu0
      %v859 = vadd.f32 %v707, %v858
      %v860 = vpop.f32.mrf.mxu0
      %v861 = vpop.f32.mrf.mxu0
      %v862 = vadd.f32 %v710, %v861
      %v863 = vpop.f32.mrf.mxu0
      %864 = vmatprep.mubr.bf16.mxu0 0
      %865 = vmatmul.mubr.bf16.gmra.mxu0 %v438
      %v866 = vpop.f32.mrf.mxu0
      %v867 = vadd.f32 %v715, %v866
      %v868 = vpop.f32.mrf.mxu0
      %v869 = vpop.f32.mrf.mxu0
      %v870 = vadd.f32 %v718, %v869
      %v871 = vpop.f32.mrf.mxu0
      %872 = vmatprep.mubr.bf16.mxu0 0
      %873 = vmatmul.mubr.bf16.gmra.mxu0 %v441
      %v874 = vpop.f32.mrf.mxu0
      %v875 = vadd.f32 %v723, %v874
      %v876 = vpop.f32.mrf.mxu0
      %v877 = vpop.f32.mrf.mxu0
      %v878 = vadd.f32 %v726, %v877
      %v879 = vpop.f32.mrf.mxu0
      %880 = vmatprep.mubr.bf16.mxu0 0
      %881 = vmatmul.mubr.bf16.gmra.mxu0 %v444
      %v882 = vpop.f32.mrf.mxu0
      %v883 = vadd.f32 %v731, %v882
      %v884 = vpop.f32.mrf.mxu0
      %v885 = vpop.f32.mrf.mxu0
      %v886 = vadd.f32 %v734, %v885
      %v887 = vpop.f32.mrf.mxu0
      %888 = vmatprep.mubr.bf16.mxu0 0
      %889 = vmatmul.mubr.bf16.gmra.mxu0 %v447
      %v890 = vpop.f32.mrf.mxu0
      %v891 = vadd.f32 %v739, %v890
      %v892 = vpop.f32.mrf.mxu0
      %v893 = vpop.f32.mrf.mxu0
      %v894 = vadd.f32 %v742, %v893
      %v895 = vpop.f32.mrf.mxu0
      %896 = vmatprep.mubr.bf16.mxu0 0
      %897 = vmatmul.mubr.bf16.gmra.mxu0 %v450
      %v898 = vpop.f32.mrf.mxu0
      %v899 = vadd.f32 %v747, %v898
      %v900 = vpop.f32.mrf.mxu0
      %v901 = vpop.f32.mrf.mxu0
      %v902 = vadd.f32 %v750, %v901
      %v903 = vpop.f32.mrf.mxu0
      %904 = vmatprep.mubr.bf16.mxu0 0
      %905 = vmatmul.mubr.bf16.gmra.mxu0 %v453
      %v906 = vpop.f32.mrf.mxu0
      %v907 = vadd.f32 %v755, %v906
      %v908 = vpop.f32.mrf.mxu0
      %v909 = vpop.f32.mrf.mxu0
      %v910 = vadd.f32 %v758, %v909
      %v911 = vpop.f32.mrf.mxu0
      %912 = vmatprep.mubr.bf16.mxu0 0
      %913 = vmatmul.mubr.bf16.gmra.mxu0 %v456
      %v914 = vpop.f32.mrf.mxu0
      %v915 = vadd.f32 %v763, %v914
      %v916 = vpop.f32.mrf.mxu0
      %v917 = vpop.f32.mrf.mxu0
      %v918 = vadd.f32 %v766, %v917
      %v919 = vpop.f32.mrf.mxu0
      %920 = vmatprep.mubr.bf16.mxu0 0
      %921 = vmatmul.mubr.bf16.gmra.mxu0 %v459
      %v922 = vpop.f32.mrf.mxu0
      %v923 = vadd.f32 %v771, %v922
      %v924 = vpop.f32.mrf.mxu0
      %v925 = vpop.f32.mrf.mxu0
      %v926 = vadd.f32 %v774, %v925
      %v927 = vpop.f32.mrf.mxu0
      %928 = vmatprep.mubr.bf16.mxu0 0
      %929 = vmatmul.mubr.bf16.gmra.mxu0 %v462
      %v930 = vpop.f32.mrf.mxu0
      %v931 = vadd.f32 %v779, %v930
      %v932 = vpop.f32.mrf.mxu0
      %v933 = vpop.f32.mrf.mxu0
      %v934 = vadd.f32 %v782, %v933
      %v935 = vpop.f32.mrf.mxu0
      %936 = vmatprep.mubr.bf16.mxu0 0
      %937 = vmatmul.mubr.bf16.gmra.mxu0 %v465
      %v938 = vpop.f32.mrf.mxu0
      %v939 = vadd.f32 %v787, %v938
      %v940 = vpop.f32.mrf.mxu0
      %v941 = vpop.f32.mrf.mxu0
      %v942 = vadd.f32 %v790, %v941
      %v943 = vpop.f32.mrf.mxu0
      %944 = vmatprep.mubr.bf16.mxu0 0
      %945 = vmatmul.mubr.bf16.gmra.mxu0 %v468
      %v946 = vpop.f32.mrf.mxu0
      %v947 = vadd.f32 %v795, %v946
      %v948 = vpop.f32.mrf.mxu0
      %v949 = vpop.f32.mrf.mxu0
      %v950 = vadd.f32 %v798, %v949
      %v951 = vpop.f32.mrf.mxu0
      %952 = vmatprep.mubr.bf16.mxu0 0
      %953 = vmatmul.mubr.bf16.gmra.mxu0 %v471
      %v954 = vpop.f32.mrf.mxu0
      %v955 = vadd.f32 %v803, %v954
      %v956 = vpop.f32.mrf.mxu0
      %v957 = vpop.f32.mrf.mxu0
      %v958 = vadd.f32 %v806, %v957
      %v959 = vpop.f32.mrf.mxu0
      %960 = vmatprep.mubr.bf16.mxu0 0
      %961 = vmatmul.mubr.bf16.gmra.mxu0 %v474
      %v962 = vpop.f32.mrf.mxu0
      %v963 = vadd.f32 %v811, %v962
      %v964 = vpop.f32.mrf.mxu0
      %v965 = vpop.f32.mrf.mxu0
      %v966 = vpop.f32.mrf.mxu0
      %967 = vdwg.mxu0
      %v968 = vmax.f32 %v851, 0.0
      %v969 = vmax.f32 %v854, 0.0
      %v970 = vmax.f32 %v859, 0.0
      %v971 = vmax.f32 %v862, 0.0
      %v972 = vmax.f32 %v867, 0.0
      %v973 = vmax.f32 %v870, 0.0
      %v974 = vmax.f32 %v875, 0.0
      %v975 = vmax.f32 %v878, 0.0
      %v976 = vmax.f32 %v883, 0.0
      %v977 = vmax.f32 %v886, 0.0
      %v978 = vmax.f32 %v891, 0.0
      %v979 = vmax.f32 %v894, 0.0
      %v980 = vmax.f32 %v899, 0.0
      %v981 = vmax.f32 %v902, 0.0
      %v982 = vmax.f32 %v907, 0.0
      %v983 = vmax.f32 %v910, 0.0
      %v984 = vmax.f32 %v915, 0.0
      %v985 = vmax.f32 %v918, 0.0
      %v986 = vmax.f32 %v923, 0.0
      %v987 = vmax.f32 %v926, 0.0
      %v988 = vmax.f32 %v931, 0.0
      %v989 = vmax.f32 %v934, 0.0
      %v990 = vmax.f32 %v939, 0.0
      %v991 = vmax.f32 %v942, 0.0
      %v992 = vmax.f32 %v947, 0.0
      %v993 = vmax.f32 %v950, 0.0
      %v994 = vmax.f32 %v955, 0.0
      %v995 = vmax.f32 %v958, 0.0
      %v996 = vmax.f32 %v963, 0.0
      %997 = vst [vmem:[#allocation2] sm:$0xff] %v968
      %998 = vst [vmem:[#allocation2 + $0x8] sm:$0xff] %v969
      %999 = vst [vmem:[#allocation2 + $0x10] sm:$0xff] %v970
      %1000 = vst [vmem:[#allocation2 + $0x18] sm:$0xff] %v971
      %1001 = vst [vmem:[#allocation2 + $0x20] sm:$0xff] %v972
      %1002 = vst [vmem:[#allocation2 + $0x28] sm:$0xff] %v973
      %1003 = vst [vmem:[#allocation2 + $0x30] sm:$0xff] %v974
      %1004 = vst [vmem:[#allocation2 + $0x38] sm:$0xff] %v975
      %1005 = vst [vmem:[#allocation2 + $0x40] sm:$0xff] %v976
      %1006 = vst [vmem:[#allocation2 + $0x48] sm:$0xff] %v977
      %1007 = vst [vmem:[#allocation2 + $0x50] sm:$0xff] %v978
      %1008 = vst [vmem:[#allocation2 + $0x58] sm:$0xff] %v979
      %1009 = vst [vmem:[#allocation2 + $0x60] sm:$0xff] %v980
      %1010 = vst [vmem:[#allocation2 + $0x68] sm:$0xff] %v981
      %1011 = vst [vmem:[#allocation2 + $0x70] sm:$0xff] %v982
      %1012 = vst [vmem:[#allocation2 + $0x78] sm:$0xff] %v983
      %1013 = vst [vmem:[#allocation2 + $0x80] sm:$0xff] %v984
      %1014 = vst [vmem:[#allocation2 + $0x88] sm:$0xff] %v985
      %1015 = vst [vmem:[#allocation2 + $0x90] sm:$0xff] %v986
      %1016 = vst [vmem:[#allocation2 + $0x98] sm:$0xff] %v987
      %1017 = vst [vmem:[#allocation2 + $0xa0] sm:$0xff] %v988
      %1018 = vst [vmem:[#allocation2 + $0xa8] sm:$0xff] %v989
      %1019 = vst [vmem:[#allocation2 + $0xb0] sm:$0xff] %v990
      %1020 = vst [vmem:[#allocation2 + $0xb8] sm:$0xff] %v991
      %1021 = vst [vmem:[#allocation2 + $0xc0] sm:$0xff] %v992
      %1022 = vst [vmem:[#allocation2 + $0xc8] sm:$0xff] %v993
      %1023 = vst [vmem:[#allocation2 + $0xd0] sm:$0xff] %v994
      %1024 = vst [vmem:[#allocation2 + $0xd8] sm:$0xff] %v995
      %1025 = vst [vmem:[#allocation2 + $0xe0] sm:$0x1] %v996
      %v1026 = vld [vmem:[#allocation2] sm:$0xff]
      %v1027 = vld [vmem:[#allocation2 + $0x8] sm:$0x7f]
      %v1028 = vld [vmem:[#allocation2 + $0xf] sm:$0xff]
      %v1029 = vld [vmem:[#allocation2 + $0x17] sm:$0x7f]
      %v1030 = vmax.f32 %v1026, %v1028
      %v1031 = vmax.f32 %v1027, %v1029
      %v1032 = vld [vmem:[#allocation2 + $0x1e] sm:$0xff]
      %v1033 = vld [vmem:[#allocation2 + $0x26] sm:$0x7f]
      %v1034 = vmax.f32 %v1030, %v1032
      %v1035 = vmax.f32 %v1031, %v1033
      %vm1036 = vcmask 1042432
      %v1037 = vsel %vm1036, %v1034, -inf
      %v1038 = vrot.slane %v1037, 4
      %v1039 = vmax.f32 %v1037, %v1038
      %v1040 = vrot.slane %v1039, 2
      %v1041 = vmax.f32 %v1039, %v1040
      %v1042 = vrot.slane %v1041, 1
      %v1043 = vmax.f32 %v1041, %v1042
      %vm1044 = vcmask 1044482
      %v1045 = vsel %vm1044, %v1034, -inf
      %v1046 = vrot.slane %v1045, 4
      %v1047 = vmax.f32 %v1045, %v1046
      %v1048 = vrot.slane %v1047, 2
      %v1049 = vmax.f32 %v1047, %v1048
      %v1050 = vrot.slane %v1049, 1
      %v1051 = vmax.f32 %v1049, %v1050
      %vm1052 = vcmask 1046532
      %v1053 = vsel %vm1052, %v1034, -inf
      %v1054 = vrot.slane %v1053, 4
      %v1055 = vmax.f32 %v1053, %v1054
      %v1056 = vrot.slane %v1055, 2
      %v1057 = vmax.f32 %v1055, %v1056
      %v1058 = vrot.slane %v1057, 1
      %v1059 = vmax.f32 %v1057, %v1058
      %vm1060 = vcmask 1047558
      %v1061 = vsel %vm1060, %v1034, -inf
      %vm1062 = vcmask 1040384
      %v1063 = vsel %vm1062, %v1035, -inf
      %v1064 = vmax.f32 %v1061, %v1063
      %v1065 = vrot.slane %v1064, 4
      %v1066 = vmax.f32 %v1064, %v1065
      %v1067 = vrot.slane %v1066, 2
      %v1068 = vmax.f32 %v1066, %v1067
      %v1069 = vrot.slane %v1068, 1
      %v1070 = vmax.f32 %v1068, %v1069
      %v1071 = vsel %vm1036, %v1035, -inf
      %v1072 = vrot.slane %v1071, 4
      %v1073 = vmax.f32 %v1071, %v1072
      %v1074 = vrot.slane %v1073, 2
      %v1075 = vmax.f32 %v1073, %v1074
      %v1076 = vrot.slane %v1075, 1
      %v1077 = vmax.f32 %v1075, %v1076
      %v1078 = vsel %vm1044, %v1035, -inf
      %v1079 = vrot.slane %v1078, 4
      %v1080 = vmax.f32 %v1078, %v1079
      %v1081 = vrot.slane %v1080, 2
      %v1082 = vmax.f32 %v1080, %v1081
      %v1083 = vrot.slane %v1082, 1
      %v1084 = vmax.f32 %v1082, %v1083
      %v1085 = vsel %vm1052, %v1035, -inf
      %v1086 = vrot.slane %v1085, 4
      %v1087 = vmax.f32 %v1085, %v1086
      %v1088 = vrot.slane %v1087, 2
      %v1089 = vmax.f32 %v1087, %v1088
      %v1090 = vrot.slane %v1089, 1
      %v1091 = vmax.f32 %v1089, %v1090
      %v1092 = vsel %vm1062, %v1043, %v1051
      %vm1093 = vcmask 1041408
      %v1094 = vsel %vm1093, %v1092, %v1059
      %v1095 = vsel %vm1036, %v1094, %v1070
      %vm1096 = vcmask 1043456
      %v1097 = vsel %vm1096, %v1095, %v1077
      %vm1098 = vcmask 1044480
      %v1099 = vsel %vm1098, %v1097, %v1084
      %vm1100 = vcmask 1045504
      %v1101 = vsel %vm1100, %v1099, %v1091
      %v1102 = vpack.c.bf16 %v1101, %v1101
      %vm1103 = vcmask 1043456
      %vm1104 = vsmask.f32 3328
      %vm1105 = vmand %vm1103, %vm1104
      %v1106 = vld [vmem:[%s170] sm:$0xf]
      %v1107 = vsel %vm1105, %v1102, %v1106
      %1108 = vst [vmem:[%s170] sm:$0xf] %v1107
      %v1109 = vld [vmem:[#allocation2 + $0x1e] sm:$0xff]
      %v1110 = vld [vmem:[#allocation2 + $0x26] sm:$0x7f]
      %v1111 = vld [vmem:[#allocation2 + $0x2d] sm:$0xff]
      %v1112 = vld [vmem:[#allocation2 + $0x35] sm:$0x7f]
      %v1113 = vmax.f32 %v1109, %v1111
      %v1114 = vmax.f32 %v1110, %v1112
      %v1115 = vld [vmem:[#allocation2 + $0x3c] sm:$0xff]
      %v1116 = vld [vmem:[#allocation2 + $0x44] sm:$0x7f]
      %v1117 = vmax.f32 %v1113, %v1115
      %v1118 = vmax.f32 %v1114, %v1116
      %v1119 = vsel %vm1036, %v1117, -inf
      %v1120 = vrot.slane %v1119, 4
      %v1121 = vmax.f32 %v1119, %v1120
      %v1122 = vrot.slane %v1121, 2
      %v1123 = vmax.f32 %v1121, %v1122
      %v1124 = vrot.slane %v1123, 1
      %v1125 = vmax.f32 %v1123, %v1124
      %v1126 = vsel %vm1044, %v1117, -inf
      %v1127 = vrot.slane %v1126, 4
      %v1128 = vmax.f32 %v1126, %v1127
      %v1129 = vrot.slane %v1128, 2
      %v1130 = vmax.f32 %v1128, %v1129
      %v1131 = vrot.slane %v1130, 1
      %v1132 = vmax.f32 %v1130, %v1131
      %v1133 = vsel %vm1052, %v1117, -inf
      %v1134 = vrot.slane %v1133, 4
      %v1135 = vmax.f32 %v1133, %v1134
      %v1136 = vrot.slane %v1135, 2
      %v1137 = vmax.f32 %v1135, %v1136
      %v1138 = vrot.slane %v1137, 1
      %v1139 = vmax.f32 %v1137, %v1138
      %v1140 = vsel %vm1060, %v1117, -inf
      %v1141 = vsel %vm1062, %v1118, -inf
      %v1142 = vmax.f32 %v1140, %v1141
      %v1143 = vrot.slane %v1142, 4
      %v1144 = vmax.f32 %v1142, %v1143
      %v1145 = vrot.slane %v1144, 2
      %v1146 = vmax.f32 %v1144, %v1145
      %v1147 = vrot.slane %v1146, 1
      %v1148 = vmax.f32 %v1146, %v1147
      %v1149 = vsel %vm1036, %v1118, -inf
      %v1150 = vrot.slane %v1149, 4
      %v1151 = vmax.f32 %v1149, %v1150
      %v1152 = vrot.slane %v1151, 2
      %v1153 = vmax.f32 %v1151, %v1152
      %v1154 = vrot.slane %v1153, 1
      %v1155 = vmax.f32 %v1153, %v1154
      %v1156 = vsel %vm1044, %v1118, -inf
      %v1157 = vrot.slane %v1156, 4
      %v1158 = vmax.f32 %v1156, %v1157
      %v1159 = vrot.slane %v1158, 2
      %v1160 = vmax.f32 %v1158, %v1159
      %v1161 = vrot.slane %v1160, 1
      %v1162 = vmax.f32 %v1160, %v1161
      %v1163 = vsel %vm1052, %v1118, -inf
      %v1164 = vrot.slane %v1163, 4
      %v1165 = vmax.f32 %v1163, %v1164
      %v1166 = vrot.slane %v1165, 2
      %v1167 = vmax.f32 %v1165, %v1166
      %v1168 = vrot.slane %v1167, 1
      %v1169 = vmax.f32 %v1167, %v1168
      %v1170 = vsel %vm1062, %v1125, %v1132
      %v1171 = vsel %vm1093, %v1170, %v1139
      %v1172 = vsel %vm1036, %v1171, %v1148
      %v1173 = vsel %vm1096, %v1172, %v1155
      %v1174 = vsel %vm1098, %v1173, %v1162
      %v1175 = vsel %vm1100, %v1174, %v1169
      %v1176 = vpack.c.bf16 %v1175, %v1175
      %s1177 = scalar_lea.vmem %s170, 4
      %v1178 = vld [vmem:[%s1177] sm:$0xf]
      %v1179 = vsel %vm1105, %v1176, %v1178
      %1180 = vst [vmem:[%s1177] sm:$0xf] %v1179
      %v1181 = vld [vmem:[#allocation2 + $0x3c] sm:$0xff]
      %v1182 = vld [vmem:[#allocation2 + $0x44] sm:$0x7f]
      %v1183 = vld [vmem:[#allocation2 + $0x4b] sm:$0xff]
      %v1184 = vld [vmem:[#allocation2 + $0x53] sm:$0x7f]
      %v1185 = vmax.f32 %v1181, %v1183
      %v1186 = vmax.f32 %v1182, %v1184
      %v1187 = vld [vmem:[#allocation2 + $0x5a] sm:$0xff]
      %v1188 = vld [vmem:[#allocation2 + $0x62] sm:$0x7f]
      %v1189 = vmax.f32 %v1185, %v1187
      %v1190 = vmax.f32 %v1186, %v1188
      %v1191 = vsel %vm1036, %v1189, -inf
      %v1192 = vrot.slane %v1191, 4
      %v1193 = vmax.f32 %v1191, %v1192
      %v1194 = vrot.slane %v1193, 2
      %v1195 = vmax.f32 %v1193, %v1194
      %v1196 = vrot.slane %v1195, 1
      %v1197 = vmax.f32 %v1195, %v1196
      %v1198 = vsel %vm1044, %v1189, -inf
      %v1199 = vrot.slane %v1198, 4
      %v1200 = vmax.f32 %v1198, %v1199
      %v1201 = vrot.slane %v1200, 2
      %v1202 = vmax.f32 %v1200, %v1201
      %v1203 = vrot.slane %v1202, 1
      %v1204 = vmax.f32 %v1202, %v1203
      %v1205 = vsel %vm1052, %v1189, -inf
      %v1206 = vrot.slane %v1205, 4
      %v1207 = vmax.f32 %v1205, %v1206
      %v1208 = vrot.slane %v1207, 2
      %v1209 = vmax.f32 %v1207, %v1208
      %v1210 = vrot.slane %v1209, 1
      %v1211 = vmax.f32 %v1209, %v1210
      %v1212 = vsel %vm1060, %v1189, -inf
      %v1213 = vsel %vm1062, %v1190, -inf
      %v1214 = vmax.f32 %v1212, %v1213
      %v1215 = vrot.slane %v1214, 4
      %v1216 = vmax.f32 %v1214, %v1215
      %v1217 = vrot.slane %v1216, 2
      %v1218 = vmax.f32 %v1216, %v1217
      %v1219 = vrot.slane %v1218, 1
      %v1220 = vmax.f32 %v1218, %v1219
      %v1221 = vsel %vm1036, %v1190, -inf
      %v1222 = vrot.slane %v1221, 4
      %v1223 = vmax.f32 %v1221, %v1222
      %v1224 = vrot.slane %v1223, 2
      %v1225 = vmax.f32 %v1223, %v1224
      %v1226 = vrot.slane %v1225, 1
      %v1227 = vmax.f32 %v1225, %v1226
      %v1228 = vsel %vm1044, %v1190, -inf
      %v1229 = vrot.slane %v1228, 4
      %v1230 = vmax.f32 %v1228, %v1229
      %v1231 = vrot.slane %v1230, 2
      %v1232 = vmax.f32 %v1230, %v1231
      %v1233 = vrot.slane %v1232, 1
      %v1234 = vmax.f32 %v1232, %v1233
      %v1235 = vsel %vm1052, %v1190, -inf
      %v1236 = vrot.slane %v1235, 4
      %v1237 = vmax.f32 %v1235, %v1236
      %v1238 = vrot.slane %v1237, 2
      %v1239 = vmax.f32 %v1237, %v1238
      %v1240 = vrot.slane %v1239, 1
      %v1241 = vmax.f32 %v1239, %v1240
      %v1242 = vsel %vm1062, %v1197, %v1204
      %v1243 = vsel %vm1093, %v1242, %v1211
      %v1244 = vsel %vm1036, %v1243, %v1220
      %v1245 = vsel %vm1096, %v1244, %v1227
      %v1246 = vsel %vm1098, %v1245, %v1234
      %v1247 = vsel %vm1100, %v1246, %v1241
      %v1248 = vpack.c.bf16 %v1247, %v1247
      %s1249 = scalar_lea.vmem %s170, 8
      %v1250 = vld [vmem:[%s1249] sm:$0xf]
      %v1251 = vsel %vm1105, %v1248, %v1250
      %1252 = vst [vmem:[%s1249] sm:$0xf] %v1251
      %v1253 = vld [vmem:[#allocation2 + $0x5a] sm:$0xff]
      %v1254 = vld [vmem:[#allocation2 + $0x62] sm:$0x7f]
      %v1255 = vld [vmem:[#allocation2 + $0x69] sm:$0xff]
      %v1256 = vld [vmem:[#allocation2 + $0x71] sm:$0x7f]
      %v1257 = vmax.f32 %v1253, %v1255
      %v1258 = vmax.f32 %v1254, %v1256
      %v1259 = vld [vmem:[#allocation2 + $0x78] sm:$0xff]
      %v1260 = vld [vmem:[#allocation2 + $0x80] sm:$0x7f]
      %v1261 = vmax.f32 %v1257, %v1259
      %v1262 = vmax.f32 %v1258, %v1260
      %v1263 = vsel %vm1036, %v1261, -inf
      %v1264 = vrot.slane %v1263, 4
      %v1265 = vmax.f32 %v1263, %v1264
      %v1266 = vrot.slane %v1265, 2
      %v1267 = vmax.f32 %v1265, %v1266
      %v1268 = vrot.slane %v1267, 1
      %v1269 = vmax.f32 %v1267, %v1268
      %v1270 = vsel %vm1044, %v1261, -inf
      %v1271 = vrot.slane %v1270, 4
      %v1272 = vmax.f32 %v1270, %v1271
      %v1273 = vrot.slane %v1272, 2
      %v1274 = vmax.f32 %v1272, %v1273
      %v1275 = vrot.slane %v1274, 1
      %v1276 = vmax.f32 %v1274, %v1275
      %v1277 = vsel %vm1052, %v1261, -inf
      %v1278 = vrot.slane %v1277, 4
      %v1279 = vmax.f32 %v1277, %v1278
      %v1280 = vrot.slane %v1279, 2
      %v1281 = vmax.f32 %v1279, %v1280
      %v1282 = vrot.slane %v1281, 1
      %v1283 = vmax.f32 %v1281, %v1282
      %v1284 = vsel %vm1060, %v1261, -inf
      %v1285 = vsel %vm1062, %v1262, -inf
      %v1286 = vmax.f32 %v1284, %v1285
      %v1287 = vrot.slane %v1286, 4
      %v1288 = vmax.f32 %v1286, %v1287
      %v1289 = vrot.slane %v1288, 2
      %v1290 = vmax.f32 %v1288, %v1289
      %v1291 = vrot.slane %v1290, 1
      %v1292 = vmax.f32 %v1290, %v1291
      %v1293 = vsel %vm1036, %v1262, -inf
      %v1294 = vrot.slane %v1293, 4
      %v1295 = vmax.f32 %v1293, %v1294
      %v1296 = vrot.slane %v1295, 2
      %v1297 = vmax.f32 %v1295, %v1296
      %v1298 = vrot.slane %v1297, 1
      %v1299 = vmax.f32 %v1297, %v1298
      %v1300 = vsel %vm1044, %v1262, -inf
      %v1301 = vrot.slane %v1300, 4
      %v1302 = vmax.f32 %v1300, %v1301
      %v1303 = vrot.slane %v1302, 2
      %v1304 = vmax.f32 %v1302, %v1303
      %v1305 = vrot.slane %v1304, 1
      %v1306 = vmax.f32 %v1304, %v1305
      %v1307 = vsel %vm1052, %v1262, -inf
      %v1308 = vrot.slane %v1307, 4
      %v1309 = vmax.f32 %v1307, %v1308
      %v1310 = vrot.slane %v1309, 2
      %v1311 = vmax.f32 %v1309, %v1310
      %v1312 = vrot.slane %v1311, 1
      %v1313 = vmax.f32 %v1311, %v1312
      %v1314 = vsel %vm1062, %v1269, %v1276
      %v1315 = vsel %vm1093, %v1314, %v1283
      %v1316 = vsel %vm1036, %v1315, %v1292
      %v1317 = vsel %vm1096, %v1316, %v1299
      %v1318 = vsel %vm1098, %v1317, %v1306
      %v1319 = vsel %vm1100, %v1318, %v1313
      %v1320 = vpack.c.bf16 %v1319, %v1319
      %s1321 = scalar_lea.vmem %s170, 12
      %v1322 = vld [vmem:[%s1321] sm:$0xf]
      %v1323 = vsel %vm1105, %v1320, %v1322
      %1324 = vst [vmem:[%s1321] sm:$0xf] %v1323
      %v1325 = vld [vmem:[#allocation2 + $0x78] sm:$0xff]
      %v1326 = vld [vmem:[#allocation2 + $0x80] sm:$0x7f]
      %v1327 = vld [vmem:[#allocation2 + $0x87] sm:$0xff]
      %v1328 = vld [vmem:[#allocation2 + $0x8f] sm:$0x7f]
      %v1329 = vmax.f32 %v1325, %v1327
      %v1330 = vmax.f32 %v1326, %v1328
      %v1331 = vld [vmem:[#allocation2 + $0x96] sm:$0xff]
      %v1332 = vld [vmem:[#allocation2 + $0x9e] sm:$0x7f]
      %v1333 = vmax.f32 %v1329, %v1331
      %v1334 = vmax.f32 %v1330, %v1332
      %v1335 = vsel %vm1036, %v1333, -inf
      %v1336 = vrot.slane %v1335, 4
      %v1337 = vmax.f32 %v1335, %v1336
      %v1338 = vrot.slane %v1337, 2
      %v1339 = vmax.f32 %v1337, %v1338
      %v1340 = vrot.slane %v1339, 1
      %v1341 = vmax.f32 %v1339, %v1340
      %v1342 = vsel %vm1044, %v1333, -inf
      %v1343 = vrot.slane %v1342, 4
      %v1344 = vmax.f32 %v1342, %v1343
      %v1345 = vrot.slane %v1344, 2
      %v1346 = vmax.f32 %v1344, %v1345
      %v1347 = vrot.slane %v1346, 1
      %v1348 = vmax.f32 %v1346, %v1347
      %v1349 = vsel %vm1052, %v1333, -inf
      %v1350 = vrot.slane %v1349, 4
      %v1351 = vmax.f32 %v1349, %v1350
      %v1352 = vrot.slane %v1351, 2
      %v1353 = vmax.f32 %v1351, %v1352
      %v1354 = vrot.slane %v1353, 1
      %v1355 = vmax.f32 %v1353, %v1354
      %v1356 = vsel %vm1060, %v1333, -inf
      %v1357 = vsel %vm1062, %v1334, -inf
      %v1358 = vmax.f32 %v1356, %v1357
      %v1359 = vrot.slane %v1358, 4
      %v1360 = vmax.f32 %v1358, %v1359
      %v1361 = vrot.slane %v1360, 2
      %v1362 = vmax.f32 %v1360, %v1361
      %v1363 = vrot.slane %v1362, 1
      %v1364 = vmax.f32 %v1362, %v1363
      %v1365 = vsel %vm1036, %v1334, -inf
      %v1366 = vrot.slane %v1365, 4
      %v1367 = vmax.f32 %v1365, %v1366
      %v1368 = vrot.slane %v1367, 2
      %v1369 = vmax.f32 %v1367, %v1368
      %v1370 = vrot.slane %v1369, 1
      %v1371 = vmax.f32 %v1369, %v1370
      %v1372 = vsel %vm1044, %v1334, -inf
      %v1373 = vrot.slane %v1372, 4
      %v1374 = vmax.f32 %v1372, %v1373
      %v1375 = vrot.slane %v1374, 2
      %v1376 = vmax.f32 %v1374, %v1375
      %v1377 = vrot.slane %v1376, 1
      %v1378 = vmax.f32 %v1376, %v1377
      %v1379 = vsel %vm1052, %v1334, -inf
      %v1380 = vrot.slane %v1379, 4
      %v1381 = vmax.f32 %v1379, %v1380
      %v1382 = vrot.slane %v1381, 2
      %v1383 = vmax.f32 %v1381, %v1382
      %v1384 = vrot.slane %v1383, 1
      %v1385 = vmax.f32 %v1383, %v1384
      %v1386 = vsel %vm1062, %v1341, %v1348
      %v1387 = vsel %vm1093, %v1386, %v1355
      %v1388 = vsel %vm1036, %v1387, %v1364
      %v1389 = vsel %vm1096, %v1388, %v1371
      %v1390 = vsel %vm1098, %v1389, %v1378
      %v1391 = vsel %vm1100, %v1390, %v1385
      %v1392 = vpack.c.bf16 %v1391, %v1391
      %s1393 = scalar_lea.vmem %s170, 16
      %v1394 = vld [vmem:[%s1393] sm:$0xf]
      %v1395 = vsel %vm1105, %v1392, %v1394
      %1396 = vst [vmem:[%s1393] sm:$0xf] %v1395
      %v1397 = vld [vmem:[#allocation2 + $0x96] sm:$0xff]
      %v1398 = vld [vmem:[#allocation2 + $0x9e] sm:$0x7f]
      %v1399 = vld [vmem:[#allocation2 + $0xa5] sm:$0xff]
      %v1400 = vld [vmem:[#allocation2 + $0xad] sm:$0x7f]
      %v1401 = vmax.f32 %v1397, %v1399
      %v1402 = vmax.f32 %v1398, %v1400
      %v1403 = vld [vmem:[#allocation2 + $0xb4] sm:$0xff]
      %v1404 = vld [vmem:[#allocation2 + $0xbc] sm:$0x7f]
      %v1405 = vmax.f32 %v1401, %v1403
      %v1406 = vmax.f32 %v1402, %v1404
      %v1407 = vsel %vm1036, %v1405, -inf
      %v1408 = vrot.slane %v1407, 4
      %v1409 = vmax.f32 %v1407, %v1408
      %v1410 = vrot.slane %v1409, 2
      %v1411 = vmax.f32 %v1409, %v1410
      %v1412 = vrot.slane %v1411, 1
      %v1413 = vmax.f32 %v1411, %v1412
      %v1414 = vsel %vm1044, %v1405, -inf
      %v1415 = vrot.slane %v1414, 4
      %v1416 = vmax.f32 %v1414, %v1415
      %v1417 = vrot.slane %v1416, 2
      %v1418 = vmax.f32 %v1416, %v1417
      %v1419 = vrot.slane %v1418, 1
      %v1420 = vmax.f32 %v1418, %v1419
      %v1421 = vsel %vm1052, %v1405, -inf
      %v1422 = vrot.slane %v1421, 4
      %v1423 = vmax.f32 %v1421, %v1422
      %v1424 = vrot.slane %v1423, 2
      %v1425 = vmax.f32 %v1423, %v1424
      %v1426 = vrot.slane %v1425, 1
      %v1427 = vmax.f32 %v1425, %v1426
      %v1428 = vsel %vm1060, %v1405, -inf
      %v1429 = vsel %vm1062, %v1406, -inf
      %v1430 = vmax.f32 %v1428, %v1429
      %v1431 = vrot.slane %v1430, 4
      %v1432 = vmax.f32 %v1430, %v1431
      %v1433 = vrot.slane %v1432, 2
      %v1434 = vmax.f32 %v1432, %v1433
      %v1435 = vrot.slane %v1434, 1
      %v1436 = vmax.f32 %v1434, %v1435
      %v1437 = vsel %vm1036, %v1406, -inf
      %v1438 = vrot.slane %v1437, 4
      %v1439 = vmax.f32 %v1437, %v1438
      %v1440 = vrot.slane %v1439, 2
      %v1441 = vmax.f32 %v1439, %v1440
      %v1442 = vrot.slane %v1441, 1
      %v1443 = vmax.f32 %v1441, %v1442
      %v1444 = vsel %vm1044, %v1406, -inf
      %v1445 = vrot.slane %v1444, 4
      %v1446 = vmax.f32 %v1444, %v1445
      %v1447 = vrot.slane %v1446, 2
      %v1448 = vmax.f32 %v1446, %v1447
      %v1449 = vrot.slane %v1448, 1
      %v1450 = vmax.f32 %v1448, %v1449
      %v1451 = vsel %vm1052, %v1406, -inf
      %v1452 = vrot.slane %v1451, 4
      %v1453 = vmax.f32 %v1451, %v1452
      %v1454 = vrot.slane %v1453, 2
      %v1455 = vmax.f32 %v1453, %v1454
      %v1456 = vrot.slane %v1455, 1
      %v1457 = vmax.f32 %v1455, %v1456
      %v1458 = vsel %vm1062, %v1413, %v1420
      %v1459 = vsel %vm1093, %v1458, %v1427
      %v1460 = vsel %vm1036, %v1459, %v1436
      %v1461 = vsel %vm1096, %v1460, %v1443
      %v1462 = vsel %vm1098, %v1461, %v1450
      %v1463 = vsel %vm1100, %v1462, %v1457
      %v1464 = vpack.c.bf16 %v1463, %v1463
      %s1465 = scalar_lea.vmem %s170, 20
      %v1466 = vld [vmem:[%s1465] sm:$0xf]
      %v1467 = vsel %vm1105, %v1464, %v1466
      %1468 = vst [vmem:[%s1465] sm:$0xf] %v1467
      %v1469 = vld [vmem:[#allocation2 + $0xb4] sm:$0xff]
      %v1470 = vld [vmem:[#allocation2 + $0xbc] sm:$0x7f]
      %v1471 = vld [vmem:[#allocation2 + $0xc3] sm:$0xff]
      %v1472 = vld [vmem:[#allocation2 + $0xcb] sm:$0x7f]
      %v1473 = vmax.f32 %v1469, %v1471
      %v1474 = vmax.f32 %v1470, %v1472
      %v1475 = vld [vmem:[#allocation2 + $0xd2] sm:$0xff]
      %v1476 = vld [vmem:[#allocation2 + $0xda] sm:$0x7f]
      %v1477 = vmax.f32 %v1473, %v1475
      %v1478 = vmax.f32 %v1474, %v1476
      %v1479 = vsel %vm1036, %v1477, -inf
      %v1480 = vrot.slane %v1479, 4
      %v1481 = vmax.f32 %v1479, %v1480
      %v1482 = vrot.slane %v1481, 2
      %v1483 = vmax.f32 %v1481, %v1482
      %v1484 = vrot.slane %v1483, 1
      %v1485 = vmax.f32 %v1483, %v1484
      %v1486 = vsel %vm1044, %v1477, -inf
      %v1487 = vrot.slane %v1486, 4
      %v1488 = vmax.f32 %v1486, %v1487
      %v1489 = vrot.slane %v1488, 2
      %v1490 = vmax.f32 %v1488, %v1489
      %v1491 = vrot.slane %v1490, 1
      %v1492 = vmax.f32 %v1490, %v1491
      %v1493 = vsel %vm1052, %v1477, -inf
      %v1494 = vrot.slane %v1493, 4
      %v1495 = vmax.f32 %v1493, %v1494
      %v1496 = vrot.slane %v1495, 2
      %v1497 = vmax.f32 %v1495, %v1496
      %v1498 = vrot.slane %v1497, 1
      %v1499 = vmax.f32 %v1497, %v1498
      %v1500 = vsel %vm1060, %v1477, -inf
      %v1501 = vsel %vm1062, %v1478, -inf
      %v1502 = vmax.f32 %v1500, %v1501
      %v1503 = vrot.slane %v1502, 4
      %v1504 = vmax.f32 %v1502, %v1503
      %v1505 = vrot.slane %v1504, 2
      %v1506 = vmax.f32 %v1504, %v1505
      %v1507 = vrot.slane %v1506, 1
      %v1508 = vmax.f32 %v1506, %v1507
      %v1509 = vsel %vm1036, %v1478, -inf
      %v1510 = vrot.slane %v1509, 4
      %v1511 = vmax.f32 %v1509, %v1510
      %v1512 = vrot.slane %v1511, 2
      %v1513 = vmax.f32 %v1511, %v1512
      %v1514 = vrot.slane %v1513, 1
      %v1515 = vmax.f32 %v1513, %v1514
      %v1516 = vsel %vm1044, %v1478, -inf
      %v1517 = vrot.slane %v1516, 4
      %v1518 = vmax.f32 %v1516, %v1517
      %v1519 = vrot.slane %v1518, 2
      %v1520 = vmax.f32 %v1518, %v1519
      %v1521 = vrot.slane %v1520, 1
      %v1522 = vmax.f32 %v1520, %v1521
      %v1523 = vsel %vm1052, %v1478, -inf
      %v1524 = vrot.slane %v1523, 4
      %v1525 = vmax.f32 %v1523, %v1524
      %v1526 = vrot.slane %v1525, 2
      %v1527 = vmax.f32 %v1525, %v1526
      %v1528 = vrot.slane %v1527, 1
      %v1529 = vmax.f32 %v1527, %v1528
      %v1530 = vsel %vm1062, %v1485, %v1492
      %v1531 = vsel %vm1093, %v1530, %v1499
      %v1532 = vsel %vm1036, %v1531, %v1508
      %v1533 = vsel %vm1096, %v1532, %v1515
      %v1534 = vsel %vm1098, %v1533, %v1522
      %v1535 = vsel %vm1100, %v1534, %v1529
      %v1536 = vpack.c.bf16 %v1535, %v1535
      %s1537 = scalar_lea.vmem %s170, 24
      %v1538 = vld [vmem:[%s1537] sm:$0xf]
      %v1539 = vsel %vm1105, %v1536, %v1538
      %1540 = vst [vmem:[%s1537] sm:$0xf] %v1539
      %p1541 = scmp.lt.s32.totalorder %s14, 1
      %s1542 = scalar_select %p1541, %s14, 1
      %s1543 = smul.addr %s1542, 7
      %s1544 = smul.addr %s1543, 4
      %s1545 = scalar_lea.vmem %s3, %s1544
      // Predicated region
      $region33: #{alexnet_embeddings.6} parent=31 // pred_check
        %p1546 = pneg %p100
      $region34: #{alexnet_embeddings.6} parent=31 // pred_check_branch
        %1548 = sbr.rel (%p1546) target = $region36
      $region35: #{alexnet_embeddings.6} parent=31 // pred_region
        _
      $region36: #{alexnet_embeddings.6} parent=31 // pred_fallthru
        _
    $region32: #{alexnet_embeddings.6} parent=5 // pred_fallthru
      _
    %p1549 = scmp.le.s32.totalorder 2, %s9
    // Predicated region
    $region37: #{alexnet_embeddings.6} parent=5 // pred_check
      %p1550 = pneg %p1549
    $region38: #{alexnet_embeddings.6} parent=5 // pred_check_branch
      %1552 = sbr.rel (%p1550) target = $region40
    $region39: #{alexnet_embeddings.6} parent=5 // pred_region
      %s1553 = ssub.s32 %s9, 2
      // Predicated region
      $region41: #{alexnet_embeddings.6} parent=39 // pred_check
        %p1554 = pneg %p106
      $region42: #{alexnet_embeddings.6} parent=39 // pred_check_branch
        %1556 = sbr.rel (%p1554) target = $region44
      $region43: #{alexnet_embeddings.6} parent=39 // pred_region
        %p1557 = scmp.lt.s32.totalorder %s15, 1
        %s1558 = scalar_select %p1557, %s15, 1
        %s1559 = smul.addr %s1558, 7
        %s1560 = smul.addr %s1559, 4
        %s1561 = scalar_lea.vmem %s3, %s1560
      $region44: #{alexnet_embeddings.6} parent=39 // pred_fallthru
        _
    $region40: #{alexnet_embeddings.6} parent=5 // pred_fallthru
      _
  $region6: #{alexnet_embeddings.6} parent=0 // loop_footer
    %s13 = sadd.s32 1, %s9
  $region7: #{alexnet_embeddings.6} parent=0 // loop_footer_branch
    %8 = sbr.rel target = $region3
  $region8: #{alexnet_embeddings.6} parent=0 // loop_exit
    _

// kernel: alexnet_embeddings.7
$region0: #{alexnet_embeddings.7}
  #allocation0 [shape = 'u32[]', space=smem, size = 0x4, offset = 0x4, fixed_abs, tag = 'smem constant byte address 0x4 - core index']
  #allocation1 [shape = 'u32[144,128]{1,0:T(1,128)}', space=vmem, size = 0x12000, scoped, tag = 'internal scratch']
  #allocation2 [shape = 'f32[73,128]{1,0:T(8,128)}', space=vmem, size = 0xa000, scoped, tag = 'scratch operand']
  %s0 = inlined_call_operand.vmem [shape: bf16[2,121,128], index: 0, kind: input, shape index: {}]
  %s1 = inlined_call_operand.vmem [shape: bf16[25,128,128], index: 1, kind: input, shape index: {}]
  %s2 = inlined_call_operand.vmem [shape: f32[1,128], index: 2, kind: input, shape index: {}]
  %s3 = inlined_call_operand.vmem [shape: bf16[2,3,3,128], index: 3, kind: output, shape index: {}]
  %s4 = sld [smem:[#allocation0]]
  $region45: #{alexnet_embeddings.7} parent=0
    _
  %s6 = ssub.s32 1, %s4
  %s7 = scalar_select 0, %s6, %s4
  loop: start=0, step=1, limit=4
  $region2: #{alexnet_embeddings.7} parent=0 // loop_pre_header
    _
  $region3: #{alexnet_embeddings.7} parent=0 // loop_header
    %s9 = sphi 0, %s13
    %p10 = scmp.ge.s32.totalorder %s9, 4
    %s19 = sphi 0, %s21
    %s22 = sphi 0, %s19
    %s23 = sphi 0, %s22
    %s39 = sphi 0, %s23
    %s43 = sphi 0, %s43
    %s45 = sphi 0, %s43
    %s46 = sphi 0, %s45
    %s60 = sphi 0, %s46
    %s64 = sphi 0, %s64
    %s66 = sphi 0, %s64
    %s67 = sphi 0, %s66
    %s81 = sphi 0, %s67
    %s87 = sphi 0, %s89
    %s90 = sphi 0, %s87
    %s91 = sphi 0, %s90
    %s107 = sphi 0, %s91
  $region4: #{alexnet_embeddings.7} parent=0 // loop_header_branch
    %12 = sbr.rel (%p10) target = $region8
  $region5: #{alexnet_embeddings.7} parent=0 // loop_body
    %s14 = ssub.s32 %s9, 1
    %s15 = ssub.s32 %s9, 2
    %s16 = sadd.s32 %s9, 1
    %s17 = ssub.s32 %s9, %s16
    %p18 = scmp.eq.s32.totalorder %s17, 0
    %s20 = sadd.s32 %s19, 1
    %s21 = scalar_select %p18, %s19, %s20
    %p24 = pneg %p18
    %p25 = scmp.eq.s32.totalorder %s9, 1
    %p26 = por %p24, %p25
    %p27 = scmp.ne.s32.totalorder %s19, %s22
    %p28 = scmp.eq.s32.totalorder %s9, 0
    %p29 = por %p27, %p28
    %p30 = scmp.ne.s32.totalorder %s19, %s22
    %p31 = scmp.eq.s32.totalorder %s14, 1
    %p32 = por %p30, %p31
    %p33 = scmp.ne.s32.totalorder %s22, %s23
    %p34 = scmp.eq.s32.totalorder %s14, 0
    %p35 = por %p33, %p34
    %p36 = scmp.ne.s32.totalorder %s22, %s23
    %p37 = scmp.eq.s32.totalorder %s15, 1
    %p38 = por %p36, %p37
    %p40 = scmp.ne.s32.totalorder %s23, %s39
    %p41 = scmp.eq.s32.totalorder %s15, 0
    %p42 = por %p40, %p41
    %s44 = sadd.s32 %s43, 1
    %p47 = scmp.eq.s32.totalorder %s9, 1
    %p48 = scmp.ne.s32.totalorder %s43, %s45
    %p49 = scmp.eq.s32.totalorder %s9, 0
    %p50 = por %p48, %p49
    %p51 = scmp.ne.s32.totalorder %s43, %s45
    %p52 = scmp.eq.s32.totalorder %s14, 1
    %p53 = por %p51, %p52
    %p54 = scmp.ne.s32.totalorder %s45, %s46
    %p55 = scmp.eq.s32.totalorder %s14, 0
    %p56 = por %p54, %p55
    %p57 = scmp.ne.s32.totalorder %s45, %s46
    %p58 = scmp.eq.s32.totalorder %s15, 1
    %p59 = por %p57, %p58
    %p61 = scmp.ne.s32.totalorder %s46, %s60
    %p62 = scmp.eq.s32.totalorder %s15, 0
    %p63 = por %p61, %p62
    %s65 = sadd.s32 %s64, 1
    %p68 = scmp.eq.s32.totalorder %s9, 1
    %p69 = scmp.ne.s32.totalorder %s64, %s66
    %p70 = scmp.eq.s32.totalorder %s9, 0
    %p71 = por %p69, %p70
    %p72 = scmp.ne.s32.totalorder %s64, %s66
    %p73 = scmp.eq.s32.totalorder %s14, 1
    %p74 = por %p72, %p73
    %p75 = scmp.ne.s32.totalorder %s66, %s67
    %p76 = scmp.eq.s32.totalorder %s14, 0
    %p77 = por %p75, %p76
    %p78 = scmp.ne.s32.totalorder %s66, %s67
    %p79 = scmp.eq.s32.totalorder %s15, 1
    %p80 = por %p78, %p79
    %p82 = scmp.ne.s32.totalorder %s67, %s81
    %p83 = scmp.eq.s32.totalorder %s15, 0
    %p84 = por %p82, %p83
    %s85 = ssub.s32 %s9, %s16
    %p86 = scmp.eq.s32.totalorder %s85, 0
    %s88 = sadd.s32 %s87, 1
    %s89 = scalar_select %p86, %s87, %s88
    %p92 = pneg %p86
    %p93 = scmp.eq.s32.totalorder %s9, 1
    %p94 = por %p92, %p93
    %p95 = scmp.ne.s32.totalorder %s87, %s90
    %p96 = scmp.eq.s32.totalorder %s9, 0
    %p97 = por %p95, %p96
    %p98 = scmp.ne.s32.totalorder %s87, %s90
    %p99 = scmp.eq.s32.totalorder %s14, 1
    %p100 = por %p98, %p99
    %p101 = scmp.ne.s32.totalorder %s90, %s91
    %p102 = scmp.eq.s32.totalorder %s14, 0
    %p103 = por %p101, %p102
    %p104 = scmp.ne.s32.totalorder %s90, %s91
    %p105 = scmp.eq.s32.totalorder %s15, 1
    %p106 = por %p104, %p105
    %p108 = scmp.ne.s32.totalorder %s91, %s107
    %p109 = scmp.eq.s32.totalorder %s15, 0
    %p110 = por %p108, %p109
    %p111 = scmp.le.s32.totalorder 1, %s9
    %p112 = scmp.lt.s32.totalorder %s9, 3
    %p113 = pnand %p111, %p112
    %p114 = pneg %p113
    // Predicated region
    $region9: #{alexnet_embeddings.7} parent=5 // pred_check
      _
    $region10: #{alexnet_embeddings.7} parent=5 // pred_check_branch
      %116 = sbr.rel (%p113) target = $region12
    $region11: #{alexnet_embeddings.7} parent=5 // pred_region
      %s117 = ssub.s32 %s9, 1
      // Predicated region
      $region13: #{alexnet_embeddings.7} parent=11 // pred_check
        %p118 = pneg %p56
      $region14: #{alexnet_embeddings.7} parent=11 // pred_check_branch
        %120 = sbr.rel (%p118) target = $region16
      $region15: #{alexnet_embeddings.7} parent=11 // pred_region
        _
      $region16: #{alexnet_embeddings.7} parent=11 // pred_fallthru
        _
      // Predicated region
      $region17: #{alexnet_embeddings.7} parent=11 // pred_check
        %p121 = pneg %p77
      $region18: #{alexnet_embeddings.7} parent=11 // pred_check_branch
        %123 = sbr.rel (%p121) target = $region20
      $region19: #{alexnet_embeddings.7} parent=11 // pred_region
        _
      $region20: #{alexnet_embeddings.7} parent=11 // pred_fallthru
        _
    $region12: #{alexnet_embeddings.7} parent=5 // pred_fallthru
      _
    %p124 = scmp.lt.s32.totalorder %s9, 2
    // Predicated region
    $region21: #{alexnet_embeddings.7} parent=5 // pred_check
      %p125 = pneg %p124
    $region22: #{alexnet_embeddings.7} parent=5 // pred_check_branch
      %127 = sbr.rel (%p125) target = $region24
    $region23: #{alexnet_embeddings.7} parent=5 // pred_region
      // Predicated region
      $region25: #{alexnet_embeddings.7} parent=23 // pred_check
        %p128 = pneg %p29
      $region26: #{alexnet_embeddings.7} parent=23 // pred_check_branch
        %130 = sbr.rel (%p128) target = $region28
      $region27: #{alexnet_embeddings.7} parent=23 // pred_region
        %p131 = scmp.lt.s32.totalorder %s9, 1
        %s132 = scalar_select %p131, %s9, 1
        %s133 = smul.addr %s132, 16
        %s134 = smul.addr %s133, 4
        %s135 = scalar_lea.vmem %s0, %s134
      $region28: #{alexnet_embeddings.7} parent=23 // pred_fallthru
        _
    $region24: #{alexnet_embeddings.7} parent=5 // pred_fallthru
      _
    %p136 = scmp.le.s32.totalorder 1, %s9
    %p137 = scmp.lt.s32.totalorder %s9, 3
    %p138 = pnand %p136, %p137
    %p139 = pneg %p138
    // Predicated region
    $region29: #{alexnet_embeddings.7} parent=5 // pred_check
      _
    $region30: #{alexnet_embeddings.7} parent=5 // pred_check_branch
      %141 = sbr.rel (%p138) target = $region32
    $region31: #{alexnet_embeddings.7} parent=5 // pred_region
      %s142 = ssub.s32 %s9, 1
      %p143 = scmp.lt.s32.totalorder %s14, 1
      %s144 = scalar_select %p143, %s14, 1
      %s145 = smul.addr %s144, 16
      %s146 = smul.addr %s145, 4
      %s147 = scalar_lea.vmem %s0, %s146
      %p148 = pneg %p35
      %p149 = pneg %p32
      %p150 = pneg %p56
      %p151 = pneg %p53
      %p152 = pneg %p77
      %p153 = pneg %p74
      %p154 = pneg %p103
      %p155 = pneg %p100
      %p156 = scmp.lt.s32.totalorder %s14, 1
      %s157 = scalar_select %p156, %s14, 1
      %s158 = smul.addr %s157, 3
      %s159 = smul.addr %s158, 2
      %s160 = scalar_lea.vmem %s3, %s159
      %p161 = scmp.lt.s32.totalorder %s14, 1
      %s162 = scalar_select %p161, %s14, 1
      %s163 = smul.addr %s162, 16
      %s164 = smul.addr %s163, 4
      %s165 = scalar_lea.vmem %s0, %s164
      %p166 = scmp.lt.s32.totalorder %s14, 1
      %s167 = scalar_select %p166, %s14, 1
      %s168 = smul.addr %s167, 3
      %s169 = smul.addr %s168, 2
      %s170 = scalar_lea.vmem %s3, %s169
      %v172 = vld [vmem:[%s2] sm:$0x1]
      %v174 = vlaneseq
      %v175 = vshrl.u32 %v174, 7
      %v176 = vsub.s32 0, %v175
      %v177 = vrot.slane %v172, %v176
      %v179 = vld [vmem:[%s165] sm:$0xf]
      %v180 = vld [vmem:[%s165 + $0x4] sm:$0xf]
      %v181 = vld [vmem:[%s165 + $0x8] sm:$0xf]
      %v182 = vld [vmem:[%s165 + $0xc] sm:$0xf]
      %v183 = vld [vmem:[%s165 + $0x10] sm:$0xf]
      %v184 = vld [vmem:[%s165 + $0x14] sm:$0xf]
      %v185 = vld [vmem:[%s165 + $0x18] sm:$0xf]
      %v186 = vld [vmem:[%s165 + $0x1c] sm:$0xf]
      %v187 = vld [vmem:[%s165 + $0x20] sm:$0xf]
      %v188 = vld [vmem:[%s165 + $0x24] sm:$0x1]
      %v189 = vld [vmem:[%s1] sm:$0xf]
      %v190 = vld [vmem:[%s1 + $0x4] sm:$0xf]
      %v191 = vld [vmem:[%s1 + $0x8] sm:$0xf]
      %v192 = vld [vmem:[%s1 + $0xc] sm:$0xf]
      %v193 = vld [vmem:[%s1 + $0x10] sm:$0xf]
      %v194 = vld [vmem:[%s1 + $0x14] sm:$0xf]
      %v195 = vld [vmem:[%s1 + $0x18] sm:$0xf]
      %v196 = vld [vmem:[%s1 + $0x1c] sm:$0xf]
      %v197 = vld [vmem:[%s1 + $0x20] sm:$0xf]
      %v198 = vld [vmem:[%s1 + $0x24] sm:$0xf]
      %v199 = vld [vmem:[%s1 + $0x28] sm:$0xf]
      %v200 = vld [vmem:[%s1 + $0x2c] sm:$0xf]
      %v201 = vld [vmem:[%s1 + $0x30] sm:$0xf]
      %v202 = vld [vmem:[%s1 + $0x34] sm:$0xf]
      %v203 = vld [vmem:[%s1 + $0x38] sm:$0xf]
      %v204 = vld [vmem:[%s1 + $0x3c] sm:$0xf]
      %v215 = vunpack.c.l.b16 %v179
      %v216 = vunpack.c.l.b16 %v180
      %v217 = vunpack.c.l.b16 %v181
      %v218 = vunpack.c.l.b16 %v182
      %v219 = vunpack.c.l.b16 %v183
      %v220 = vunpack.c.l.b16 %v184
      %v221 = vunpack.c.l.b16 %v185
      %v222 = vunpack.c.l.b16 %v186
      %v223 = vunpack.c.l.b16 %v187
      %v224 = vunpack.c.l.b16 %v188
      %v225 = vpack.c.b16 %v216, %v215
      %v226 = vpack.c.b16 %v218, %v217
      %v227 = vpack.c.b16 %v220, %v219
      %v228 = vpack.c.b16 %v222, %v221
      %v229 = vpack.c.b16 %v224, %v223
      %v251 = vunpack.c.l.b16 %v189
      %v252 = vunpack.c.l.b16 %v190
      %v253 = vunpack.c.l.b16 %v191
      %v254 = vunpack.c.l.b16 %v192
      %v255 = vunpack.c.l.b16 %v193
      %v256 = vunpack.c.l.b16 %v194
      %v257 = vunpack.c.l.b16 %v195
      %v258 = vunpack.c.l.b16 %v196
      %v259 = vunpack.c.l.b16 %v197
      %v260 = vunpack.c.l.b16 %v198
      %v261 = vunpack.c.l.b16 %v199
      %v262 = vunpack.c.l.b16 %v200
      %v263 = vunpack.c.l.b16 %v201
      %v264 = vunpack.c.l.b16 %v202
      %v265 = vunpack.c.l.b16 %v203
      %v266 = vunpack.c.l.b16 %v204
      %v267 = vpack.c.b16 %v252, %v251
      %v268 = vpack.c.b16 %v254, %v253
      %v269 = vpack.c.b16 %v256, %v255
      %v270 = vpack.c.b16 %v258, %v257
      %v271 = vpack.c.b16 %v260, %v259
      %v272 = vpack.c.b16 %v262, %v261
      %v273 = vpack.c.b16 %v264, %v263
      %v274 = vpack.c.b16 %v266, %v265
      %283 = vmatprep.subr.bf16.mxu0 0
      %284 = vmatpush1.bf16.msra.mxu0 %v274
      %285 = vmatprep.subr.bf16.mxu0 0
      %286 = vmatpush1.bf16.msra.mxu0 %v273
      %287 = vmatprep.subr.bf16.mxu0 0
      %288 = vmatpush1.bf16.msra.mxu0 %v272
      %289 = vmatprep.subr.bf16.mxu0 0
      %290 = vmatpush1.bf16.msra.mxu0 %v271
      %291 = vmatprep.subr.bf16.mxu0 0
      %292 = vmatpush1.bf16.msra.mxu0 %v270
      %293 = vmatprep.subr.bf16.mxu0 0
      %294 = vmatpush1.bf16.msra.mxu0 %v269
      %295 = vmatprep.subr.bf16.mxu0 0
      %296 = vmatpush1.bf16.msra.mxu0 %v268
      %297 = vmatprep.subr.bf16.mxu0 0
      %298 = vmatpush1.bf16.msra.mxu0 %v267
      %299 = vmatprep.subr.bf16.mxu0 0
      %300 = vmatpush2.bf16.msra.mxu0 0
      %301 = vmatprep.subr.bf16.mxu0 0
      %302 = vmatpush2.bf16.msra.mxu0 0
      %303 = vmatprep.subr.bf16.mxu0 0
      %304 = vmatpush2.bf16.msra.mxu0 0
      %305 = vmatprep.subr.bf16.mxu0 0
      %306 = vmatpush2.bf16.msra.mxu0 0
      %307 = vmatprep.subr.bf16.mxu0 0
      %308 = vmatpush2.bf16.msra.mxu0 0
      %309 = vmatprep.subr.bf16.mxu0 0
      %310 = vmatpush2.bf16.msra.mxu0 0
      %311 = vmatprep.subr.bf16.mxu0 0
      %312 = vmatpush2.bf16.msra.mxu0 0
      %313 = vmatprep.subr.bf16.mxu0 0
      %314 = vmatpush2.bf16.msra.mxu0 0
      %315 = vmatprep.mubr.bf16.mxu0 0
      %316 = vmatmul.mubr.bf16.gmra.mxu0 %v225
      %v317 = vpop.f32.mrf.mxu0
      %v318 = vadd.f32 0.0, %v317
      %v319 = vpop.f32.mrf.mxu0
      %v320 = vpop.f32.mrf.mxu0
      %v321 = vadd.f32 0.0, %v320
      %v322 = vpop.f32.mrf.mxu0
      %323 = vmatprep.mubr.bf16.mxu0 0
      %324 = vmatmul.mubr.bf16.gmra.mxu0 %v226
      %v325 = vpop.f32.mrf.mxu0
      %v326 = vadd.f32 0.0, %v325
      %v327 = vpop.f32.mrf.mxu0
      %v328 = vpop.f32.mrf.mxu0
      %v329 = vadd.f32 0.0, %v328
      %v330 = vpop.f32.mrf.mxu0
      %331 = vmatprep.mubr.bf16.mxu0 0
      %332 = vmatmul.mubr.bf16.gmra.mxu0 %v227
      %v333 = vpop.f32.mrf.mxu0
      %v334 = vadd.f32 0.0, %v333
      %v335 = vpop.f32.mrf.mxu0
      %v336 = vpop.f32.mrf.mxu0
      %v337 = vadd.f32 0.0, %v336
      %v338 = vpop.f32.mrf.mxu0
      %339 = vmatprep.mubr.bf16.mxu0 0
      %340 = vmatmul.mubr.bf16.gmra.mxu0 %v228
      %v341 = vpop.f32.mrf.mxu0
      %v342 = vadd.f32 0.0, %v341
      %v343 = vpop.f32.mrf.mxu0
      %v344 = vpop.f32.mrf.mxu0
      %v345 = vadd.f32 0.0, %v344
      %v346 = vpop.f32.mrf.mxu0
      %347 = vmatprep.mubr.bf16.mxu0 0
      %348 = vmatmul.mubr.bf16.gmra.mxu0 %v229
      %v349 = vpop.f32.mrf.mxu0
      %v350 = vadd.f32 0.0, %v349
      %v351 = vpop.f32.mrf.mxu0
      %v352 = vpop.f32.mrf.mxu0
      %v353 = vadd.f32 0.0, %v352
      %v354 = vpop.f32.mrf.mxu0
      %355 = vdwg.mxu0
      %v356 = vadd.f32 %v177, %v318
      %v357 = vadd.f32 %v177, %v321
      %v358 = vadd.f32 %v177, %v326
      %v359 = vadd.f32 %v177, %v329
      %v360 = vadd.f32 %v177, %v334
      %v361 = vadd.f32 %v177, %v337
      %v362 = vadd.f32 %v177, %v342
      %v363 = vadd.f32 %v177, %v345
      %v364 = vadd.f32 %v177, %v350
      %v365 = vadd.f32 %v177, %v353
      %s366 = scalar_lea.vmem %s1, 64
      %v367 = vld [vmem:[%s366] sm:$0xf]
      %v368 = vld [vmem:[%s366 + $0x4] sm:$0xf]
      %v369 = vld [vmem:[%s366 + $0x8] sm:$0xf]
      %v370 = vld [vmem:[%s366 + $0xc] sm:$0xf]
      %v371 = vld [vmem:[%s366 + $0x10] sm:$0xf]
      %v372 = vld [vmem:[%s366 + $0x14] sm:$0xf]
      %v373 = vld [vmem:[%s366 + $0x18] sm:$0xf]
      %v374 = vld [vmem:[%s366 + $0x1c] sm:$0xf]
      %v375 = vld [vmem:[%s366 + $0x20] sm:$0xf]
      %v376 = vld [vmem:[%s366 + $0x24] sm:$0xf]
      %v377 = vld [vmem:[%s366 + $0x28] sm:$0xf]
      %v378 = vld [vmem:[%s366 + $0x2c] sm:$0xf]
      %v379 = vld [vmem:[%s366 + $0x30] sm:$0xf]
      %v380 = vld [vmem:[%s366 + $0x34] sm:$0xf]
      %v381 = vld [vmem:[%s366 + $0x38] sm:$0xf]
      %v382 = vld [vmem:[%s366 + $0x3c] sm:$0xf]
      %vm383 = vsmask.f32 7424
      %v385 = vshrl.u32 %v225, 16
      %v387 = vshll.u32 %v225, 16
      %v389 = vrot.slane %v387, 1
      %v390 = vor.u32 %v385, %v389
      %v392 = vshll.u32 %v226, 16
      %v394 = vrot.slane %v392, 1
      %v395 = vsel %vm383, %v390, %v394
      %v396 = vshrl.u32 %v226, 16
      %v398 = vor.u32 %v396, %v394
      %v400 = vshll.u32 %v227, 16
      %v402 = vrot.slane %v400, 1
      %v403 = vsel %vm383, %v398, %v402
      %v404 = vshrl.u32 %v227, 16
      %v406 = vor.u32 %v404, %v402
      %v408 = vshll.u32 %v228, 16
      %v410 = vrot.slane %v408, 1
      %v411 = vsel %vm383, %v406, %v410
      %v412 = vshrl.u32 %v228, 16
      %v414 = vor.u32 %v412, %v410
      %v416 = vshll.u32 %v229, 16
      %v418 = vrot.slane %v416, 1
      %v419 = vsel %vm383, %v414, %v418
      %v420 = vshrl.u32 %v229, 16
      %v422 = vor.u32 %v420, %v418
      %v444 = vunpack.c.l.b16 %v367
      %v445 = vunpack.c.l.b16 %v368
      %v446 = vunpack.c.l.b16 %v369
      %v447 = vunpack.c.l.b16 %v370
      %v448 = vunpack.c.l.b16 %v371
      %v449 = vunpack.c.l.b16 %v372
      %v450 = vunpack.c.l.b16 %v373
      %v451 = vunpack.c.l.b16 %v374
      %v452 = vunpack.c.l.b16 %v375
      %v453 = vunpack.c.l.b16 %v376
      %v454 = vunpack.c.l.b16 %v377
      %v455 = vunpack.c.l.b16 %v378
      %v456 = vunpack.c.l.b16 %v379
      %v457 = vunpack.c.l.b16 %v380
      %v458 = vunpack.c.l.b16 %v381
      %v459 = vunpack.c.l.b16 %v382
      %v460 = vpack.c.b16 %v445, %v444
      %v461 = vpack.c.b16 %v447, %v446
      %v462 = vpack.c.b16 %v449, %v448
      %v463 = vpack.c.b16 %v451, %v450
      %v464 = vpack.c.b16 %v453, %v452
      %v465 = vpack.c.b16 %v455, %v454
      %v466 = vpack.c.b16 %v457, %v456
      %v467 = vpack.c.b16 %v459, %v458
      %476 = vmatprep.subr.bf16.mxu0 0
      %477 = vmatpush1.bf16.msra.mxu0 %v467
      %478 = vmatprep.subr.bf16.mxu0 0
      %479 = vmatpush1.bf16.msra.mxu0 %v466
      %480 = vmatprep.subr.bf16.mxu0 0
      %481 = vmatpush1.bf16.msra.mxu0 %v465
      %482 = vmatprep.subr.bf16.mxu0 0
      %483 = vmatpush1.bf16.msra.mxu0 %v464
      %484 = vmatprep.subr.bf16.mxu0 0
      %485 = vmatpush1.bf16.msra.mxu0 %v463
      %486 = vmatprep.subr.bf16.mxu0 0
      %487 = vmatpush1.bf16.msra.mxu0 %v462
      %488 = vmatprep.subr.bf16.mxu0 0
      %489 = vmatpush1.bf16.msra.mxu0 %v461
      %490 = vmatprep.subr.bf16.mxu0 0
      %491 = vmatpush1.bf16.msra.mxu0 %v460
      %492 = vmatprep.subr.bf16.mxu0 0
      %493 = vmatpush2.bf16.msra.mxu0 0
      %494 = vmatprep.subr.bf16.mxu0 0
      %495 = vmatpush2.bf16.msra.mxu0 0
      %496 = vmatprep.subr.bf16.mxu0 0
      %497 = vmatpush2.bf16.msra.mxu0 0
      %498 = vmatprep.subr.bf16.mxu0 0
      %499 = vmatpush2.bf16.msra.mxu0 0
      %500 = vmatprep.subr.bf16.mxu0 0
      %501 = vmatpush2.bf16.msra.mxu0 0
      %502 = vmatprep.subr.bf16.mxu0 0
      %503 = vmatpush2.bf16.msra.mxu0 0
      %504 = vmatprep.subr.bf16.mxu0 0
      %505 = vmatpush2.bf16.msra.mxu0 0
      %506 = vmatprep.subr.bf16.mxu0 0
      %507 = vmatpush2.bf16.msra.mxu0 0
      %508 = vmatprep.mubr.bf16.mxu0 0
      %509 = vmatmul.mubr.bf16.gmra.mxu0 %v395
      %v510 = vpop.f32.mrf.mxu0
      %v511 = vadd.f32 0.0, %v510
      %v512 = vpop.f32.mrf.mxu0
      %v513 = vpop.f32.mrf.mxu0
      %v514 = vadd.f32 0.0, %v513
      %v515 = vpop.f32.mrf.mxu0
      %516 = vmatprep.mubr.bf16.mxu0 0
      %517 = vmatmul.mubr.bf16.gmra.mxu0 %v403
      %v518 = vpop.f32.mrf.mxu0
      %v519 = vadd.f32 0.0, %v518
      %v520 = vpop.f32.mrf.mxu0
      %v521 = vpop.f32.mrf.mxu0
      %v522 = vadd.f32 0.0, %v521
      %v523 = vpop.f32.mrf.mxu0
      %524 = vmatprep.mubr.bf16.mxu0 0
      %525 = vmatmul.mubr.bf16.gmra.mxu0 %v411
      %v526 = vpop.f32.mrf.mxu0
      %v527 = vadd.f32 0.0, %v526
      %v528 = vpop.f32.mrf.mxu0
      %v529 = vpop.f32.mrf.mxu0
      %v530 = vadd.f32 0.0, %v529
      %v531 = vpop.f32.mrf.mxu0
      %532 = vmatprep.mubr.bf16.mxu0 0
      %533 = vmatmul.mubr.bf16.gmra.mxu0 %v419
      %v534 = vpop.f32.mrf.mxu0
      %v535 = vadd.f32 0.0, %v534
      %v536 = vpop.f32.mrf.mxu0
      %v537 = vpop.f32.mrf.mxu0
      %v538 = vadd.f32 0.0, %v537
      %v539 = vpop.f32.mrf.mxu0
      %540 = vmatprep.mubr.bf16.mxu0 0
      %541 = vmatmul.mubr.bf16.gmra.mxu0 %v422
      %v542 = vpop.f32.mrf.mxu0
      %v543 = vadd.f32 0.0, %v542
      %v544 = vpop.f32.mrf.mxu0
      %v545 = vpop.f32.mrf.mxu0
      %v546 = vadd.f32 0.0, %v545
      %v547 = vpop.f32.mrf.mxu0
      %548 = vdwg.mxu0
      %v549 = vadd.f32 %v356, %v511
      %v550 = vadd.f32 %v357, %v514
      %v551 = vadd.f32 %v358, %v519
      %v552 = vadd.f32 %v359, %v522
      %v553 = vadd.f32 %v360, %v527
      %v554 = vadd.f32 %v361, %v530
      %v555 = vadd.f32 %v362, %v535
      %v556 = vadd.f32 %v363, %v538
      %v557 = vadd.f32 %v364, %v543
      %v558 = vadd.f32 %v365, %v546
      %v559 = vld [vmem:[%s165] sm:$0xe]
      %v560 = vld [vmem:[%s165 + $0x24] sm:$0x3]
      %s561 = scalar_lea.vmem %s1, 128
      %v562 = vld [vmem:[%s561] sm:$0xf]
      %v563 = vld [vmem:[%s561 + $0x4] sm:$0xf]
      %v564 = vld [vmem:[%s561 + $0x8] sm:$0xf]
      %v565 = vld [vmem:[%s561 + $0xc] sm:$0xf]
      %v566 = vld [vmem:[%s561 + $0x10] sm:$0xf]
      %v567 = vld [vmem:[%s561 + $0x14] sm:$0xf]
      %v568 = vld [vmem:[%s561 + $0x18] sm:$0xf]
      %v569 = vld [vmem:[%s561 + $0x1c] sm:$0xf]
      %v570 = vld [vmem:[%s561 + $0x20] sm:$0xf]
      %v571 = vld [vmem:[%s561 + $0x24] sm:$0xf]
      %v572 = vld [vmem:[%s561 + $0x28] sm:$0xf]
      %v573 = vld [vmem:[%s561 + $0x2c] sm:$0xf]
      %v574 = vld [vmem:[%s561 + $0x30] sm:$0xf]
      %v575 = vld [vmem:[%s561 + $0x34] sm:$0xf]
      %v576 = vld [vmem:[%s561 + $0x38] sm:$0xf]
      %v577 = vld [vmem:[%s561 + $0x3c] sm:$0xf]
      %v580 = vunpack.c.l.b16 %v559
      %v581 = vunpack.c.l.b16 %v560
      %v582 = vpack.c.b16 %v216, %v580
      %v583 = vpack.c.b16 %v581, %v223
      %vm584 = vcmask 1046528
      %v585 = vrot.slane %v582, 1
      %v586 = vrot.slane %v226, 1
      %v587 = vsel %vm584, %v585, %v586
      %v588 = vrot.slane %v227, 1
      %v589 = vsel %vm584, %v586, %v588
      %v590 = vrot.slane %v228, 1
      %v591 = vsel %vm584, %v588, %v590
      %v592 = vrot.slane %v583, 1
      %v593 = vsel %vm584, %v590, %v592
      %v615 = vunpack.c.l.b16 %v562
      %v616 = vunpack.c.l.b16 %v563
      %v617 = vunpack.c.l.b16 %v564
      %v618 = vunpack.c.l.b16 %v565
      %v619 = vunpack.c.l.b16 %v566
      %v620 = vunpack.c.l.b16 %v567
      %v621 = vunpack.c.l.b16 %v568
      %v622 = vunpack.c.l.b16 %v569
      %v623 = vunpack.c.l.b16 %v570
      %v624 = vunpack.c.l.b16 %v571
      %v625 = vunpack.c.l.b16 %v572
      %v626 = vunpack.c.l.b16 %v573
      %v627 = vunpack.c.l.b16 %v574
      %v628 = vunpack.c.l.b16 %v575
      %v629 = vunpack.c.l.b16 %v576
      %v630 = vunpack.c.l.b16 %v577
      %v631 = vpack.c.b16 %v616, %v615
      %v632 = vpack.c.b16 %v618, %v617
      %v633 = vpack.c.b16 %v620, %v619
      %v634 = vpack.c.b16 %v622, %v621
      %v635 = vpack.c.b16 %v624, %v623
      %v636 = vpack.c.b16 %v626, %v625
      %v637 = vpack.c.b16 %v628, %v627
      %v638 = vpack.c.b16 %v630, %v629
      %647 = vmatprep.subr.bf16.mxu0 0
      %648 = vmatpush1.bf16.msra.mxu0 %v638
      %649 = vmatprep.subr.bf16.mxu0 0
      %650 = vmatpush1.bf16.msra.mxu0 %v637
      %651 = vmatprep.subr.bf16.mxu0 0
      %652 = vmatpush1.bf16.msra.mxu0 %v636
      %653 = vmatprep.subr.bf16.mxu0 0
      %654 = vmatpush1.bf16.msra.mxu0 %v635
      %655 = vmatprep.subr.bf16.mxu0 0
      %656 = vmatpush1.bf16.msra.mxu0 %v634
      %657 = vmatprep.subr.bf16.mxu0 0
      %658 = vmatpush1.bf16.msra.mxu0 %v633
      %659 = vmatprep.subr.bf16.mxu0 0
      %660 = vmatpush1.bf16.msra.mxu0 %v632
      %661 = vmatprep.subr.bf16.mxu0 0
      %662 = vmatpush1.bf16.msra.mxu0 %v631
      %663 = vmatprep.subr.bf16.mxu0 0
      %664 = vmatpush2.bf16.msra.mxu0 0
      %665 = vmatprep.subr.bf16.mxu0 0
      %666 = vmatpush2.bf16.msra.mxu0 0
      %667 = vmatprep.subr.bf16.mxu0 0
      %668 = vmatpush2.bf16.msra.mxu0 0
      %669 = vmatprep.subr.bf16.mxu0 0
      %670 = vmatpush2.bf16.msra.mxu0 0
      %671 = vmatprep.subr.bf16.mxu0 0
      %672 = vmatpush2.bf16.msra.mxu0 0
      %673 = vmatprep.subr.bf16.mxu0 0
      %674 = vmatpush2.bf16.msra.mxu0 0
      %675 = vmatprep.subr.bf16.mxu0 0
      %676 = vmatpush2.bf16.msra.mxu0 0
      %677 = vmatprep.subr.bf16.mxu0 0
      %678 = vmatpush2.bf16.msra.mxu0 0
      %679 = vmatprep.mubr.bf16.mxu0 0
      %680 = vmatmul.mubr.bf16.gmra.mxu0 %v587
      %v681 = vpop.f32.mrf.mxu0
      %v682 = vadd.f32 0.0, %v681
      %v683 = vpop.f32.mrf.mxu0
      %v684 = vpop.f32.mrf.mxu0
      %v685 = vadd.f32 0.0, %v684
      %v686 = vpop.f32.mrf.mxu0
      %687 = vmatprep.mubr.bf16.mxu0 0
      %688 = vmatmul.mubr.bf16.gmra.mxu0 %v589
      %v689 = vpop.f32.mrf.mxu0
      %v690 = vadd.f32 0.0, %v689
      %v691 = vpop.f32.mrf.mxu0
      %v692 = vpop.f32.mrf.mxu0
      %v693 = vadd.f32 0.0, %v692
      %v694 = vpop.f32.mrf.mxu0
      %695 = vmatprep.mubr.bf16.mxu0 0
      %696 = vmatmul.mubr.bf16.gmra.mxu0 %v591
      %v697 = vpop.f32.mrf.mxu0
      %v698 = vadd.f32 0.0, %v697
      %v699 = vpop.f32.mrf.mxu0
      %v700 = vpop.f32.mrf.mxu0
      %v701 = vadd.f32 0.0, %v700
      %v702 = vpop.f32.mrf.mxu0
      %703 = vmatprep.mubr.bf16.mxu0 0
      %704 = vmatmul.mubr.bf16.gmra.mxu0 %v593
      %v705 = vpop.f32.mrf.mxu0
      %v706 = vadd.f32 0.0, %v705
      %v707 = vpop.f32.mrf.mxu0
      %v708 = vpop.f32.mrf.mxu0
      %v709 = vadd.f32 0.0, %v708
      %v710 = vpop.f32.mrf.mxu0
      %711 = vmatprep.mubr.bf16.mxu0 0
      %712 = vmatmul.mubr.bf16.gmra.mxu0 %v592
      %v713 = vpop.f32.mrf.mxu0
      %v714 = vadd.f32 0.0, %v713
      %v715 = vpop.f32.mrf.mxu0
      %v716 = vpop.f32.mrf.mxu0
      %v717 = vadd.f32 0.0, %v716
      %v718 = vpop.f32.mrf.mxu0
      %719 = vdwg.mxu0
      %v720 = vadd.f32 %v549, %v682
      %v721 = vadd.f32 %v550, %v685
      %v722 = vadd.f32 %v551, %v690
      %v723 = vadd.f32 %v552, %v693
      %v724 = vadd.f32 %v553, %v698
      %v725 = vadd.f32 %v554, %v701
      %v726 = vadd.f32 %v555, %v706
      %v727 = vadd.f32 %v556, %v709
      %v728 = vadd.f32 %v557, %v714
      %v729 = vadd.f32 %v558, %v717
      %s730 = scalar_lea.vmem %s1, 192
      %v731 = vld [vmem:[%s730] sm:$0xf]
      %v732 = vld [vmem:[%s730 + $0x4] sm:$0xf]
      %v733 = vld [vmem:[%s730 + $0x8] sm:$0xf]
      %v734 = vld [vmem:[%s730 + $0xc] sm:$0xf]
      %v735 = vld [vmem:[%s730 + $0x10] sm:$0xf]
      %v736 = vld [vmem:[%s730 + $0x14] sm:$0xf]
      %v737 = vld [vmem:[%s730 + $0x18] sm:$0xf]
      %v738 = vld [vmem:[%s730 + $0x1c] sm:$0xf]
      %v739 = vld [vmem:[%s730 + $0x20] sm:$0xf]
      %v740 = vld [vmem:[%s730 + $0x24] sm:$0xf]
      %v741 = vld [vmem:[%s730 + $0x28] sm:$0xf]
      %v742 = vld [vmem:[%s730 + $0x2c] sm:$0xf]
      %v743 = vld [vmem:[%s730 + $0x30] sm:$0xf]
      %v744 = vld [vmem:[%s730 + $0x34] sm:$0xf]
      %v745 = vld [vmem:[%s730 + $0x38] sm:$0xf]
      %v746 = vld [vmem:[%s730 + $0x3c] sm:$0xf]
      %vm747 = vsmask.f32 6400
      %v749 = vshrl.u32 %v582, 16
      %v751 = vrot.slane %v749, 1
      %v752 = vshll.u32 %v582, 16
      %v754 = vrot.slane %v752, 2
      %v755 = vor.u32 %v751, %v754
      %v756 = vrot.slane %v396, 1
      %v757 = vrot.slane %v392, 2
      %v758 = vor.u32 %v756, %v757
      %v759 = vsel %vm747, %v755, %v758
      %v760 = vrot.slane %v404, 1
      %v761 = vrot.slane %v400, 2
      %v762 = vor.u32 %v760, %v761
      %v763 = vsel %vm747, %v758, %v762
      %v764 = vrot.slane %v412, 1
      %v765 = vrot.slane %v408, 2
      %v766 = vor.u32 %v764, %v765
      %v767 = vsel %vm747, %v762, %v766
      %v769 = vshrl.u32 %v583, 16
      %v771 = vrot.slane %v769, 1
      %v772 = vshll.u32 %v583, 16
      %v774 = vrot.slane %v772, 2
      %v775 = vor.u32 %v771, %v774
      %v776 = vsel %vm747, %v766, %v775
      %v798 = vunpack.c.l.b16 %v731
      %v799 = vunpack.c.l.b16 %v732
      %v800 = vunpack.c.l.b16 %v733
      %v801 = vunpack.c.l.b16 %v734
      %v802 = vunpack.c.l.b16 %v735
      %v803 = vunpack.c.l.b16 %v736
      %v804 = vunpack.c.l.b16 %v737
      %v805 = vunpack.c.l.b16 %v738
      %v806 = vunpack.c.l.b16 %v739
      %v807 = vunpack.c.l.b16 %v740
      %v808 = vunpack.c.l.b16 %v741
      %v809 = vunpack.c.l.b16 %v742
      %v810 = vunpack.c.l.b16 %v743
      %v811 = vunpack.c.l.b16 %v744
      %v812 = vunpack.c.l.b16 %v745
      %v813 = vunpack.c.l.b16 %v746
      %v814 = vpack.c.b16 %v799, %v798
      %v815 = vpack.c.b16 %v801, %v800
      %v816 = vpack.c.b16 %v803, %v802
      %v817 = vpack.c.b16 %v805, %v804
      %v818 = vpack.c.b16 %v807, %v806
      %v819 = vpack.c.b16 %v809, %v808
      %v820 = vpack.c.b16 %v811, %v810
      %v821 = vpack.c.b16 %v813, %v812
      %830 = vmatprep.subr.bf16.mxu0 0
      %831 = vmatpush1.bf16.msra.mxu0 %v821
      %832 = vmatprep.subr.bf16.mxu0 0
      %833 = vmatpush1.bf16.msra.mxu0 %v820
      %834 = vmatprep.subr.bf16.mxu0 0
      %835 = vmatpush1.bf16.msra.mxu0 %v819
      %836 = vmatprep.subr.bf16.mxu0 0
      %837 = vmatpush1.bf16.msra.mxu0 %v818
      %838 = vmatprep.subr.bf16.mxu0 0
      %839 = vmatpush1.bf16.msra.mxu0 %v817
      %840 = vmatprep.subr.bf16.mxu0 0
      %841 = vmatpush1.bf16.msra.mxu0 %v816
      %842 = vmatprep.subr.bf16.mxu0 0
      %843 = vmatpush1.bf16.msra.mxu0 %v815
      %844 = vmatprep.subr.bf16.mxu0 0
      %845 = vmatpush1.bf16.msra.mxu0 %v814
      %846 = vmatprep.subr.bf16.mxu0 0
      %847 = vmatpush2.bf16.msra.mxu0 0
      %848 = vmatprep.subr.bf16.mxu0 0
      %849 = vmatpush2.bf16.msra.mxu0 0
      %850 = vmatprep.subr.bf16.mxu0 0
      %851 = vmatpush2.bf16.msra.mxu0 0
      %852 = vmatprep.subr.bf16.mxu0 0
      %853 = vmatpush2.bf16.msra.mxu0 0
      %854 = vmatprep.subr.bf16.mxu0 0
      %855 = vmatpush2.bf16.msra.mxu0 0
      %856 = vmatprep.subr.bf16.mxu0 0
      %857 = vmatpush2.bf16.msra.mxu0 0
      %858 = vmatprep.subr.bf16.mxu0 0
      %859 = vmatpush2.bf16.msra.mxu0 0
      %860 = vmatprep.subr.bf16.mxu0 0
      %861 = vmatpush2.bf16.msra.mxu0 0
      %862 = vmatprep.mubr.bf16.mxu0 0
      %863 = vmatmul.mubr.bf16.gmra.mxu0 %v759
      %v864 = vpop.f32.mrf.mxu0
      %v865 = vadd.f32 0.0, %v864
      %v866 = vpop.f32.mrf.mxu0
      %v867 = vpop.f32.mrf.mxu0
      %v868 = vadd.f32 0.0, %v867
      %v869 = vpop.f32.mrf.mxu0
      %870 = vmatprep.mubr.bf16.mxu0 0
      %871 = vmatmul.mubr.bf16.gmra.mxu0 %v763
      %v872 = vpop.f32.mrf.mxu0
      %v873 = vadd.f32 0.0, %v872
      %v874 = vpop.f32.mrf.mxu0
      %v875 = vpop.f32.mrf.mxu0
      %v876 = vadd.f32 0.0, %v875
      %v877 = vpop.f32.mrf.mxu0
      %878 = vmatprep.mubr.bf16.mxu0 0
      %879 = vmatmul.mubr.bf16.gmra.mxu0 %v767
      %v880 = vpop.f32.mrf.mxu0
      %v881 = vadd.f32 0.0, %v880
      %v882 = vpop.f32.mrf.mxu0
      %v883 = vpop.f32.mrf.mxu0
      %v884 = vadd.f32 0.0, %v883
      %v885 = vpop.f32.mrf.mxu0
      %886 = vmatprep.mubr.bf16.mxu0 0
      %887 = vmatmul.mubr.bf16.gmra.mxu0 %v776
      %v888 = vpop.f32.mrf.mxu0
      %v889 = vadd.f32 0.0, %v888
      %v890 = vpop.f32.mrf.mxu0
      %v891 = vpop.f32.mrf.mxu0
      %v892 = vadd.f32 0.0, %v891
      %v893 = vpop.f32.mrf.mxu0
      %894 = vmatprep.mubr.bf16.mxu0 0
      %895 = vmatmul.mubr.bf16.gmra.mxu0 %v775
      %v896 = vpop.f32.mrf.mxu0
      %v897 = vadd.f32 0.0, %v896
      %v898 = vpop.f32.mrf.mxu0
      %v899 = vpop.f32.mrf.mxu0
      %v900 = vadd.f32 0.0, %v899
      %v901 = vpop.f32.mrf.mxu0
      %902 = vdwg.mxu0
      %v903 = vadd.f32 %v720, %v865
      %v904 = vadd.f32 %v721, %v868
      %v905 = vadd.f32 %v722, %v873
      %v906 = vadd.f32 %v723, %v876
      %v907 = vadd.f32 %v724, %v881
      %v908 = vadd.f32 %v725, %v884
      %v909 = vadd.f32 %v726, %v889
      %v910 = vadd.f32 %v727, %v892
      %v911 = vadd.f32 %v728, %v897
      %v912 = vadd.f32 %v729, %v900
      %v913 = vld [vmem:[%s165] sm:$0xc]
      %v914 = vld [vmem:[%s165 + $0x24] sm:$0x7]
      %s915 = scalar_lea.vmem %s1, 256
      %v916 = vld [vmem:[%s915] sm:$0xf]
      %v917 = vld [vmem:[%s915 + $0x4] sm:$0xf]
      %v918 = vld [vmem:[%s915 + $0x8] sm:$0xf]
      %v919 = vld [vmem:[%s915 + $0xc] sm:$0xf]
      %v920 = vld [vmem:[%s915 + $0x10] sm:$0xf]
      %v921 = vld [vmem:[%s915 + $0x14] sm:$0xf]
      %v922 = vld [vmem:[%s915 + $0x18] sm:$0xf]
      %v923 = vld [vmem:[%s915 + $0x1c] sm:$0xf]
      %v924 = vld [vmem:[%s915 + $0x20] sm:$0xf]
      %v925 = vld [vmem:[%s915 + $0x24] sm:$0xf]
      %v926 = vld [vmem:[%s915 + $0x28] sm:$0xf]
      %v927 = vld [vmem:[%s915 + $0x2c] sm:$0xf]
      %v928 = vld [vmem:[%s915 + $0x30] sm:$0xf]
      %v929 = vld [vmem:[%s915 + $0x34] sm:$0xf]
      %v930 = vld [vmem:[%s915 + $0x38] sm:$0xf]
      %v931 = vld [vmem:[%s915 + $0x3c] sm:$0xf]
      %v934 = vunpack.c.l.b16 %v913
      %v935 = vunpack.c.l.b16 %v914
      %v936 = vpack.c.b16 %v216, %v934
      %v937 = vpack.c.b16 %v935, %v223
      %vm938 = vcmask 1045504
      %v939 = vrot.slane %v936, 2
      %v940 = vrot.slane %v226, 2
      %v941 = vsel %vm938, %v939, %v940
      %v942 = vrot.slane %v227, 2
      %v943 = vsel %vm938, %v940, %v942
      %v944 = vrot.slane %v228, 2
      %v945 = vsel %vm938, %v942, %v944
      %v946 = vrot.slane %v937, 2
      %v947 = vsel %vm938, %v944, %v946
      %v969 = vunpack.c.l.b16 %v916
      %v970 = vunpack.c.l.b16 %v917
      %v971 = vunpack.c.l.b16 %v918
      %v972 = vunpack.c.l.b16 %v919
      %v973 = vunpack.c.l.b16 %v920
      %v974 = vunpack.c.l.b16 %v921
      %v975 = vunpack.c.l.b16 %v922
      %v976 = vunpack.c.l.b16 %v923
      %v977 = vunpack.c.l.b16 %v924
      %v978 = vunpack.c.l.b16 %v925
      %v979 = vunpack.c.l.b16 %v926
      %v980 = vunpack.c.l.b16 %v927
      %v981 = vunpack.c.l.b16 %v928
      %v982 = vunpack.c.l.b16 %v929
      %v983 = vunpack.c.l.b16 %v930
      %v984 = vunpack.c.l.b16 %v931
      %v985 = vpack.c.b16 %v970, %v969
      %v986 = vpack.c.b16 %v972, %v971
      %v987 = vpack.c.b16 %v974, %v973
      %v988 = vpack.c.b16 %v976, %v975
      %v989 = vpack.c.b16 %v978, %v977
      %v990 = vpack.c.b16 %v980, %v979
      %v991 = vpack.c.b16 %v982, %v981
      %v992 = vpack.c.b16 %v984, %v983
      %1001 = vmatprep.subr.bf16.mxu0 0
      %1002 = vmatpush1.bf16.msra.mxu0 %v992
      %1003 = vmatprep.subr.bf16.mxu0 0
      %1004 = vmatpush1.bf16.msra.mxu0 %v991
      %1005 = vmatprep.subr.bf16.mxu0 0
      %1006 = vmatpush1.bf16.msra.mxu0 %v990
      %1007 = vmatprep.subr.bf16.mxu0 0
      %1008 = vmatpush1.bf16.msra.mxu0 %v989
      %1009 = vmatprep.subr.bf16.mxu0 0
      %1010 = vmatpush1.bf16.msra.mxu0 %v988
      %1011 = vmatprep.subr.bf16.mxu0 0
      %1012 = vmatpush1.bf16.msra.mxu0 %v987
      %1013 = vmatprep.subr.bf16.mxu0 0
      %1014 = vmatpush1.bf16.msra.mxu0 %v986
      %1015 = vmatprep.subr.bf16.mxu0 0
      %1016 = vmatpush1.bf16.msra.mxu0 %v985
      %1017 = vmatprep.subr.bf16.mxu0 0
      %1018 = vmatpush2.bf16.msra.mxu0 0
      %1019 = vmatprep.subr.bf16.mxu0 0
      %1020 = vmatpush2.bf16.msra.mxu0 0
      %1021 = vmatprep.subr.bf16.mxu0 0
      %1022 = vmatpush2.bf16.msra.mxu0 0
      %1023 = vmatprep.subr.bf16.mxu0 0
      %1024 = vmatpush2.bf16.msra.mxu0 0
      %1025 = vmatprep.subr.bf16.mxu0 0
      %1026 = vmatpush2.bf16.msra.mxu0 0
      %1027 = vmatprep.subr.bf16.mxu0 0
      %1028 = vmatpush2.bf16.msra.mxu0 0
      %1029 = vmatprep.subr.bf16.mxu0 0
      %1030 = vmatpush2.bf16.msra.mxu0 0
      %1031 = vmatprep.subr.bf16.mxu0 0
      %1032 = vmatpush2.bf16.msra.mxu0 0
      %1033 = vmatprep.mubr.bf16.mxu0 0
      %1034 = vmatmul.mubr.bf16.gmra.mxu0 %v941
      %v1035 = vpop.f32.mrf.mxu0
      %v1036 = vadd.f32 0.0, %v1035
      %v1037 = vpop.f32.mrf.mxu0
      %v1038 = vpop.f32.mrf.mxu0
      %v1039 = vadd.f32 0.0, %v1038
      %v1040 = vpop.f32.mrf.mxu0
      %1041 = vmatprep.mubr.bf16.mxu0 0
      %1042 = vmatmul.mubr.bf16.gmra.mxu0 %v943
      %v1043 = vpop.f32.mrf.mxu0
      %v1044 = vadd.f32 0.0, %v1043
      %v1045 = vpop.f32.mrf.mxu0
      %v1046 = vpop.f32.mrf.mxu0
      %v1047 = vadd.f32 0.0, %v1046
      %v1048 = vpop.f32.mrf.mxu0
      %1049 = vmatprep.mubr.bf16.mxu0 0
      %1050 = vmatmul.mubr.bf16.gmra.mxu0 %v945
      %v1051 = vpop.f32.mrf.mxu0
      %v1052 = vadd.f32 0.0, %v1051
      %v1053 = vpop.f32.mrf.mxu0
      %v1054 = vpop.f32.mrf.mxu0
      %v1055 = vadd.f32 0.0, %v1054
      %v1056 = vpop.f32.mrf.mxu0
      %1057 = vmatprep.mubr.bf16.mxu0 0
      %1058 = vmatmul.mubr.bf16.gmra.mxu0 %v947
      %v1059 = vpop.f32.mrf.mxu0
      %v1060 = vadd.f32 0.0, %v1059
      %v1061 = vpop.f32.mrf.mxu0
      %v1062 = vpop.f32.mrf.mxu0
      %v1063 = vadd.f32 0.0, %v1062
      %v1064 = vpop.f32.mrf.mxu0
      %1065 = vmatprep.mubr.bf16.mxu0 0
      %1066 = vmatmul.mubr.bf16.gmra.mxu0 %v946
      %v1067 = vpop.f32.mrf.mxu0
      %v1068 = vadd.f32 0.0, %v1067
      %v1069 = vpop.f32.mrf.mxu0
      %v1070 = vpop.f32.mrf.mxu0
      %v1071 = vadd.f32 0.0, %v1070
      %v1072 = vpop.f32.mrf.mxu0
      %1073 = vdwg.mxu0
      %v1074 = vadd.f32 %v903, %v1036
      %v1075 = vadd.f32 %v904, %v1039
      %v1076 = vadd.f32 %v905, %v1044
      %v1077 = vadd.f32 %v906, %v1047
      %v1078 = vadd.f32 %v907, %v1052
      %v1079 = vadd.f32 %v908, %v1055
      %v1080 = vadd.f32 %v909, %v1060
      %v1081 = vadd.f32 %v910, %v1063
      %v1082 = vadd.f32 %v911, %v1068
      %v1083 = vadd.f32 %v912, %v1071
      %v1084 = vld [vmem:[%s165 + $0x4] sm:$0xe]
      %v1085 = vld [vmem:[%s165 + $0x8] sm:$0xf]
      %v1086 = vld [vmem:[%s165 + $0xc] sm:$0xf]
      %v1087 = vld [vmem:[%s165 + $0x10] sm:$0xf]
      %v1088 = vld [vmem:[%s165 + $0x14] sm:$0xf]
      %v1089 = vld [vmem:[%s165 + $0x18] sm:$0xf]
      %v1090 = vld [vmem:[%s165 + $0x1c] sm:$0xf]
      %v1091 = vld [vmem:[%s165 + $0x20] sm:$0xf]
      %v1092 = vld [vmem:[%s165 + $0x24] sm:$0xf]
      %v1093 = vld [vmem:[%s165 + $0x28] sm:$0x3]
      %s1094 = scalar_lea.vmem %s1, 320
      %v1095 = vld [vmem:[%s1094] sm:$0xf]
      %v1096 = vld [vmem:[%s1094 + $0x4] sm:$0xf]
      %v1097 = vld [vmem:[%s1094 + $0x8] sm:$0xf]
      %v1098 = vld [vmem:[%s1094 + $0xc] sm:$0xf]
      %v1099 = vld [vmem:[%s1094 + $0x10] sm:$0xf]
      %v1100 = vld [vmem:[%s1094 + $0x14] sm:$0xf]
      %v1101 = vld [vmem:[%s1094 + $0x18] sm:$0xf]
      %v1102 = vld [vmem:[%s1094 + $0x1c] sm:$0xf]
      %v1103 = vld [vmem:[%s1094 + $0x20] sm:$0xf]
      %v1104 = vld [vmem:[%s1094 + $0x24] sm:$0xf]
      %v1105 = vld [vmem:[%s1094 + $0x28] sm:$0xf]
      %v1106 = vld [vmem:[%s1094 + $0x2c] sm:$0xf]
      %v1107 = vld [vmem:[%s1094 + $0x30] sm:$0xf]
      %v1108 = vld [vmem:[%s1094 + $0x34] sm:$0xf]
      %v1109 = vld [vmem:[%s1094 + $0x38] sm:$0xf]
      %v1110 = vld [vmem:[%s1094 + $0x3c] sm:$0xf]
      %v1121 = vunpack.c.l.b16 %v1084
      %v1122 = vunpack.c.l.b16 %v1085
      %v1123 = vunpack.c.l.b16 %v1086
      %v1124 = vunpack.c.l.b16 %v1087
      %v1125 = vunpack.c.l.b16 %v1088
      %v1126 = vunpack.c.l.b16 %v1089
      %v1127 = vunpack.c.l.b16 %v1090
      %v1128 = vunpack.c.l.b16 %v1091
      %v1129 = vunpack.c.l.b16 %v1092
      %v1130 = vunpack.c.l.b16 %v1093
      %v1131 = vpack.c.b16 %v1122, %v1121
      %v1132 = vpack.c.b16 %v1124, %v1123
      %v1133 = vpack.c.b16 %v1126, %v1125
      %v1134 = vpack.c.b16 %v1128, %v1127
      %v1135 = vpack.c.b16 %v1130, %v1129
      %v1137 = vshrl.u32 %v1131, 16
      %v1139 = vrot.slane %v1137, 1
      %v1140 = vshll.u32 %v1131, 16
      %v1142 = vrot.slane %v1140, 2
      %v1143 = vor.u32 %v1139, %v1142
      %v1145 = vshrl.u32 %v1132, 16
      %v1147 = vrot.slane %v1145, 1
      %v1148 = vshll.u32 %v1132, 16
      %v1150 = vrot.slane %v1148, 2
      %v1151 = vor.u32 %v1147, %v1150
      %v1152 = vsel %vm747, %v1143, %v1151
      %v1154 = vshrl.u32 %v1133, 16
      %v1156 = vrot.slane %v1154, 1
      %v1157 = vshll.u32 %v1133, 16
      %v1159 = vrot.slane %v1157, 2
      %v1160 = vor.u32 %v1156, %v1159
      %v1161 = vsel %vm747, %v1151, %v1160
      %v1163 = vshrl.u32 %v1134, 16
      %v1165 = vrot.slane %v1163, 1
      %v1166 = vshll.u32 %v1134, 16
      %v1168 = vrot.slane %v1166, 2
      %v1169 = vor.u32 %v1165, %v1168
      %v1170 = vsel %vm747, %v1160, %v1169
      %v1172 = vshrl.u32 %v1135, 16
      %v1174 = vrot.slane %v1172, 1
      %v1175 = vshll.u32 %v1135, 16
      %v1177 = vrot.slane %v1175, 2
      %v1178 = vor.u32 %v1174, %v1177
      %v1179 = vsel %vm747, %v1169, %v1178
      %v1201 = vunpack.c.l.b16 %v1095
      %v1202 = vunpack.c.l.b16 %v1096
      %v1203 = vunpack.c.l.b16 %v1097
      %v1204 = vunpack.c.l.b16 %v1098
      %v1205 = vunpack.c.l.b16 %v1099
      %v1206 = vunpack.c.l.b16 %v1100
      %v1207 = vunpack.c.l.b16 %v1101
      %v1208 = vunpack.c.l.b16 %v1102
      %v1209 = vunpack.c.l.b16 %v1103
      %v1210 = vunpack.c.l.b16 %v1104
      %v1211 = vunpack.c.l.b16 %v1105
      %v1212 = vunpack.c.l.b16 %v1106
      %v1213 = vunpack.c.l.b16 %v1107
      %v1214 = vunpack.c.l.b16 %v1108
      %v1215 = vunpack.c.l.b16 %v1109
      %v1216 = vunpack.c.l.b16 %v1110
      %v1217 = vpack.c.b16 %v1202, %v1201
      %v1218 = vpack.c.b16 %v1204, %v1203
      %v1219 = vpack.c.b16 %v1206, %v1205
      %v1220 = vpack.c.b16 %v1208, %v1207
      %v1221 = vpack.c.b16 %v1210, %v1209
      %v1222 = vpack.c.b16 %v1212, %v1211
      %v1223 = vpack.c.b16 %v1214, %v1213
      %v1224 = vpack.c.b16 %v1216, %v1215
      %1233 = vmatprep.subr.bf16.mxu0 0
      %1234 = vmatpush1.bf16.msra.mxu0 %v1224
      %1235 = vmatprep.subr.bf16.mxu0 0
      %1236 = vmatpush1.bf16.msra.mxu0 %v1223
      %1237 = vmatprep.subr.bf16.mxu0 0
      %1238 = vmatpush1.bf16.msra.mxu0 %v1222
      %1239 = vmatprep.subr.bf16.mxu0 0
      %1240 = vmatpush1.bf16.msra.mxu0 %v1221
      %1241 = vmatprep.subr.bf16.mxu0 0
      %1242 = vmatpush1.bf16.msra.mxu0 %v1220
      %1243 = vmatprep.subr.bf16.mxu0 0
      %1244 = vmatpush1.bf16.msra.mxu0 %v1219
      %1245 = vmatprep.subr.bf16.mxu0 0
      %1246 = vmatpush1.bf16.msra.mxu0 %v1218
      %1247 = vmatprep.subr.bf16.mxu0 0
      %1248 = vmatpush1.bf16.msra.mxu0 %v1217
      %1249 = vmatprep.subr.bf16.mxu0 0
      %1250 = vmatpush2.bf16.msra.mxu0 0
      %1251 = vmatprep.subr.bf16.mxu0 0
      %1252 = vmatpush2.bf16.msra.mxu0 0
      %1253 = vmatprep.subr.bf16.mxu0 0
      %1254 = vmatpush2.bf16.msra.mxu0 0
      %1255 = vmatprep.subr.bf16.mxu0 0
      %1256 = vmatpush2.bf16.msra.mxu0 0
      %1257 = vmatprep.subr.bf16.mxu0 0
      %1258 = vmatpush2.bf16.msra.mxu0 0
      %1259 = vmatprep.subr.bf16.mxu0 0
      %1260 = vmatpush2.bf16.msra.mxu0 0
      %1261 = vmatprep.subr.bf16.mxu0 0
      %1262 = vmatpush2.bf16.msra.mxu0 0
      %1263 = vmatprep.subr.bf16.mxu0 0
      %1264 = vmatpush2.bf16.msra.mxu0 0
      %1265 = vmatprep.mubr.bf16.mxu0 0
      %1266 = vmatmul.mubr.bf16.gmra.mxu0 %v1152
      %v1267 = vpop.f32.mrf.mxu0
      %v1268 = vadd.f32 0.0, %v1267
      %v1269 = vpop.f32.mrf.mxu0
      %v1270 = vpop.f32.mrf.mxu0
      %v1271 = vadd.f32 0.0, %v1270
      %v1272 = vpop.f32.mrf.mxu0
      %1273 = vmatprep.mubr.bf16.mxu0 0
      %1274 = vmatmul.mubr.bf16.gmra.mxu0 %v1161
      %v1275 = vpop.f32.mrf.mxu0
      %v1276 = vadd.f32 0.0, %v1275
      %v1277 = vpop.f32.mrf.mxu0
      %v1278 = vpop.f32.mrf.mxu0
      %v1279 = vadd.f32 0.0, %v1278
      %v1280 = vpop.f32.mrf.mxu0
      %1281 = vmatprep.mubr.bf16.mxu0 0
      %1282 = vmatmul.mubr.bf16.gmra.mxu0 %v1170
      %v1283 = vpop.f32.mrf.mxu0
      %v1284 = vadd.f32 0.0, %v1283
      %v1285 = vpop.f32.mrf.mxu0
      %v1286 = vpop.f32.mrf.mxu0
      %v1287 = vadd.f32 0.0, %v1286
      %v1288 = vpop.f32.mrf.mxu0
      %1289 = vmatprep.mubr.bf16.mxu0 0
      %1290 = vmatmul.mubr.bf16.gmra.mxu0 %v1179
      %v1291 = vpop.f32.mrf.mxu0
      %v1292 = vadd.f32 0.0, %v1291
      %v1293 = vpop.f32.mrf.mxu0
      %v1294 = vpop.f32.mrf.mxu0
      %v1295 = vadd.f32 0.0, %v1294
      %v1296 = vpop.f32.mrf.mxu0
      %1297 = vmatprep.mubr.bf16.mxu0 0
      %1298 = vmatmul.mubr.bf16.gmra.mxu0 %v1178
      %v1299 = vpop.f32.mrf.mxu0
      %v1300 = vadd.f32 0.0, %v1299
      %v1301 = vpop.f32.mrf.mxu0
      %v1302 = vpop.f32.mrf.mxu0
      %v1303 = vadd.f32 0.0, %v1302
      %v1304 = vpop.f32.mrf.mxu0
      %1305 = vdwg.mxu0
      %v1306 = vadd.f32 %v1074, %v1268
      %v1307 = vadd.f32 %v1075, %v1271
      %v1308 = vadd.f32 %v1076, %v1276
      %v1309 = vadd.f32 %v1077, %v1279
      %v1310 = vadd.f32 %v1078, %v1284
      %v1311 = vadd.f32 %v1079, %v1287
      %v1312 = vadd.f32 %v1080, %v1292
      %v1313 = vadd.f32 %v1081, %v1295
      %v1314 = vadd.f32 %v1082, %v1300
      %v1315 = vadd.f32 %v1083, %v1303
      %v1316 = vld [vmem:[%s165 + $0x4] sm:$0xc]
      %v1317 = vld [vmem:[%s165 + $0x28] sm:$0x7]
      %s1318 = scalar_lea.vmem %s1, 384
      %v1319 = vld [vmem:[%s1318] sm:$0xf]
      %v1320 = vld [vmem:[%s1318 + $0x4] sm:$0xf]
      %v1321 = vld [vmem:[%s1318 + $0x8] sm:$0xf]
      %v1322 = vld [vmem:[%s1318 + $0xc] sm:$0xf]
      %v1323 = vld [vmem:[%s1318 + $0x10] sm:$0xf]
      %v1324 = vld [vmem:[%s1318 + $0x14] sm:$0xf]
      %v1325 = vld [vmem:[%s1318 + $0x18] sm:$0xf]
      %v1326 = vld [vmem:[%s1318 + $0x1c] sm:$0xf]
      %v1327 = vld [vmem:[%s1318 + $0x20] sm:$0xf]
      %v1328 = vld [vmem:[%s1318 + $0x24] sm:$0xf]
      %v1329 = vld [vmem:[%s1318 + $0x28] sm:$0xf]
      %v1330 = vld [vmem:[%s1318 + $0x2c] sm:$0xf]
      %v1331 = vld [vmem:[%s1318 + $0x30] sm:$0xf]
      %v1332 = vld [vmem:[%s1318 + $0x34] sm:$0xf]
      %v1333 = vld [vmem:[%s1318 + $0x38] sm:$0xf]
      %v1334 = vld [vmem:[%s1318 + $0x3c] sm:$0xf]
      %v1337 = vunpack.c.l.b16 %v1316
      %v1338 = vunpack.c.l.b16 %v1317
      %v1339 = vpack.c.b16 %v1122, %v1337
      %v1340 = vpack.c.b16 %v1338, %v1129
      %v1341 = vrot.slane %v1339, 2
      %v1342 = vrot.slane %v1132, 2
      %v1343 = vsel %vm938, %v1341, %v1342
      %v1344 = vrot.slane %v1133, 2
      %v1345 = vsel %vm938, %v1342, %v1344
      %v1346 = vrot.slane %v1134, 2
      %v1347 = vsel %vm938, %v1344, %v1346
      %v1348 = vrot.slane %v1340, 2
      %v1349 = vsel %vm938, %v1346, %v1348
      %v1371 = vunpack.c.l.b16 %v1319
      %v1372 = vunpack.c.l.b16 %v1320
      %v1373 = vunpack.c.l.b16 %v1321
      %v1374 = vunpack.c.l.b16 %v1322
      %v1375 = vunpack.c.l.b16 %v1323
      %v1376 = vunpack.c.l.b16 %v1324
      %v1377 = vunpack.c.l.b16 %v1325
      %v1378 = vunpack.c.l.b16 %v1326
      %v1379 = vunpack.c.l.b16 %v1327
      %v1380 = vunpack.c.l.b16 %v1328
      %v1381 = vunpack.c.l.b16 %v1329
      %v1382 = vunpack.c.l.b16 %v1330
      %v1383 = vunpack.c.l.b16 %v1331
      %v1384 = vunpack.c.l.b16 %v1332
      %v1385 = vunpack.c.l.b16 %v1333
      %v1386 = vunpack.c.l.b16 %v1334
      %v1387 = vpack.c.b16 %v1372, %v1371
      %v1388 = vpack.c.b16 %v1374, %v1373
      %v1389 = vpack.c.b16 %v1376, %v1375
      %v1390 = vpack.c.b16 %v1378, %v1377
      %v1391 = vpack.c.b16 %v1380, %v1379
      %v1392 = vpack.c.b16 %v1382, %v1381
      %v1393 = vpack.c.b16 %v1384, %v1383
      %v1394 = vpack.c.b16 %v1386, %v1385
      %1403 = vmatprep.subr.bf16.mxu0 0
      %1404 = vmatpush1.bf16.msra.mxu0 %v1394
      %1405 = vmatprep.subr.bf16.mxu0 0
      %1406 = vmatpush1.bf16.msra.mxu0 %v1393
      %1407 = vmatprep.subr.bf16.mxu0 0
      %1408 = vmatpush1.bf16.msra.mxu0 %v1392
      %1409 = vmatprep.subr.bf16.mxu0 0
      %1410 = vmatpush1.bf16.msra.mxu0 %v1391
      %1411 = vmatprep.subr.bf16.mxu0 0
      %1412 = vmatpush1.bf16.msra.mxu0 %v1390
      %1413 = vmatprep.subr.bf16.mxu0 0
      %1414 = vmatpush1.bf16.msra.mxu0 %v1389
      %1415 = vmatprep.subr.bf16.mxu0 0
      %1416 = vmatpush1.bf16.msra.mxu0 %v1388
      %1417 = vmatprep.subr.bf16.mxu0 0
      %1418 = vmatpush1.bf16.msra.mxu0 %v1387
      %1419 = vmatprep.subr.bf16.mxu0 0
      %1420 = vmatpush2.bf16.msra.mxu0 0
      %1421 = vmatprep.subr.bf16.mxu0 0
      %1422 = vmatpush2.bf16.msra.mxu0 0
      %1423 = vmatprep.subr.bf16.mxu0 0
      %1424 = vmatpush2.bf16.msra.mxu0 0
      %1425 = vmatprep.subr.bf16.mxu0 0
      %1426 = vmatpush2.bf16.msra.mxu0 0
      %1427 = vmatprep.subr.bf16.mxu0 0
      %1428 = vmatpush2.bf16.msra.mxu0 0
      %1429 = vmatprep.subr.bf16.mxu0 0
      %1430 = vmatpush2.bf16.msra.mxu0 0
      %1431 = vmatprep.subr.bf16.mxu0 0
      %1432 = vmatpush2.bf16.msra.mxu0 0
      %1433 = vmatprep.subr.bf16.mxu0 0
      %1434 = vmatpush2.bf16.msra.mxu0 0
      %1435 = vmatprep.mubr.bf16.mxu0 0
      %1436 = vmatmul.mubr.bf16.gmra.mxu0 %v1343
      %v1437 = vpop.f32.mrf.mxu0
      %v1438 = vadd.f32 0.0, %v1437
      %v1439 = vpop.f32.mrf.mxu0
      %v1440 = vpop.f32.mrf.mxu0
      %v1441 = vadd.f32 0.0, %v1440
      %v1442 = vpop.f32.mrf.mxu0
      %1443 = vmatprep.mubr.bf16.mxu0 0
      %1444 = vmatmul.mubr.bf16.gmra.mxu0 %v1345
      %v1445 = vpop.f32.mrf.mxu0
      %v1446 = vadd.f32 0.0, %v1445
      %v1447 = vpop.f32.mrf.mxu0
      %v1448 = vpop.f32.mrf.mxu0
      %v1449 = vadd.f32 0.0, %v1448
      %v1450 = vpop.f32.mrf.mxu0
      %1451 = vmatprep.mubr.bf16.mxu0 0
      %1452 = vmatmul.mubr.bf16.gmra.mxu0 %v1347
      %v1453 = vpop.f32.mrf.mxu0
      %v1454 = vadd.f32 0.0, %v1453
      %v1455 = vpop.f32.mrf.mxu0
      %v1456 = vpop.f32.mrf.mxu0
      %v1457 = vadd.f32 0.0, %v1456
      %v1458 = vpop.f32.mrf.mxu0
      %1459 = vmatprep.mubr.bf16.mxu0 0
      %1460 = vmatmul.mubr.bf16.gmra.mxu0 %v1349
      %v1461 = vpop.f32.mrf.mxu0
      %v1462 = vadd.f32 0.0, %v1461
      %v1463 = vpop.f32.mrf.mxu0
      %v1464 = vpop.f32.mrf.mxu0
      %v1465 = vadd.f32 0.0, %v1464
      %v1466 = vpop.f32.mrf.mxu0
      %1467 = vmatprep.mubr.bf16.mxu0 0
      %1468 = vmatmul.mubr.bf16.gmra.mxu0 %v1348
      %v1469 = vpop.f32.mrf.mxu0
      %v1470 = vadd.f32 0.0, %v1469
      %v1471 = vpop.f32.mrf.mxu0
      %v1472 = vpop.f32.mrf.mxu0
      %v1473 = vadd.f32 0.0, %v1472
      %v1474 = vpop.f32.mrf.mxu0
      %1475 = vdwg.mxu0
      %v1476 = vadd.f32 %v1306, %v1438
      %v1477 = vadd.f32 %v1307, %v1441
      %v1478 = vadd.f32 %v1308, %v1446
      %v1479 = vadd.f32 %v1309, %v1449
      %v1480 = vadd.f32 %v1310, %v1454
      %v1481 = vadd.f32 %v1311, %v1457
      %v1482 = vadd.f32 %v1312, %v1462
      %v1483 = vadd.f32 %v1313, %v1465
      %v1484 = vadd.f32 %v1314, %v1470
      %v1485 = vadd.f32 %v1315, %v1473
      %s1486 = scalar_lea.vmem %s1, 448
      %v1487 = vld [vmem:[%s1486] sm:$0xf]
      %v1488 = vld [vmem:[%s1486 + $0x4] sm:$0xf]
      %v1489 = vld [vmem:[%s1486 + $0x8] sm:$0xf]
      %v1490 = vld [vmem:[%s1486 + $0xc] sm:$0xf]
      %v1491 = vld [vmem:[%s1486 + $0x10] sm:$0xf]
      %v1492 = vld [vmem:[%s1486 + $0x14] sm:$0xf]
      %v1493 = vld [vmem:[%s1486 + $0x18] sm:$0xf]
      %v1494 = vld [vmem:[%s1486 + $0x1c] sm:$0xf]
      %v1495 = vld [vmem:[%s1486 + $0x20] sm:$0xf]
      %v1496 = vld [vmem:[%s1486 + $0x24] sm:$0xf]
      %v1497 = vld [vmem:[%s1486 + $0x28] sm:$0xf]
      %v1498 = vld [vmem:[%s1486 + $0x2c] sm:$0xf]
      %v1499 = vld [vmem:[%s1486 + $0x30] sm:$0xf]
      %v1500 = vld [vmem:[%s1486 + $0x34] sm:$0xf]
      %v1501 = vld [vmem:[%s1486 + $0x38] sm:$0xf]
      %v1502 = vld [vmem:[%s1486 + $0x3c] sm:$0xf]
      %vm1503 = vsmask.f32 5376
      %v1505 = vshrl.u32 %v1339, 16
      %v1507 = vrot.slane %v1505, 2
      %v1508 = vshll.u32 %v1339, 16
      %v1510 = vrot.slane %v1508, 3
      %v1511 = vor.u32 %v1507, %v1510
      %v1512 = vrot.slane %v1145, 2
      %v1513 = vrot.slane %v1148, 3
      %v1514 = vor.u32 %v1512, %v1513
      %v1515 = vsel %vm1503, %v1511, %v1514
      %v1516 = vrot.slane %v1154, 2
      %v1517 = vrot.slane %v1157, 3
      %v1518 = vor.u32 %v1516, %v1517
      %v1519 = vsel %vm1503, %v1514, %v1518
      %v1520 = vrot.slane %v1163, 2
      %v1521 = vrot.slane %v1166, 3
      %v1522 = vor.u32 %v1520, %v1521
      %v1523 = vsel %vm1503, %v1518, %v1522
      %v1525 = vshrl.u32 %v1340, 16
      %v1527 = vrot.slane %v1525, 2
      %v1528 = vshll.u32 %v1340, 16
      %v1530 = vrot.slane %v1528, 3
      %v1531 = vor.u32 %v1527, %v1530
      %v1532 = vsel %vm1503, %v1522, %v1531
      %v1554 = vunpack.c.l.b16 %v1487
      %v1555 = vunpack.c.l.b16 %v1488
      %v1556 = vunpack.c.l.b16 %v1489
      %v1557 = vunpack.c.l.b16 %v1490
      %v1558 = vunpack.c.l.b16 %v1491
      %v1559 = vunpack.c.l.b16 %v1492
      %v1560 = vunpack.c.l.b16 %v1493
      %v1561 = vunpack.c.l.b16 %v1494
      %v1562 = vunpack.c.l.b16 %v1495
      %v1563 = vunpack.c.l.b16 %v1496
      %v1564 = vunpack.c.l.b16 %v1497
      %v1565 = vunpack.c.l.b16 %v1498
      %v1566 = vunpack.c.l.b16 %v1499
      %v1567 = vunpack.c.l.b16 %v1500
      %v1568 = vunpack.c.l.b16 %v1501
      %v1569 = vunpack.c.l.b16 %v1502
      %v1570 = vpack.c.b16 %v1555, %v1554
      %v1571 = vpack.c.b16 %v1557, %v1556
      %v1572 = vpack.c.b16 %v1559, %v1558
      %v1573 = vpack.c.b16 %v1561, %v1560
      %v1574 = vpack.c.b16 %v1563, %v1562
      %v1575 = vpack.c.b16 %v1565, %v1564
      %v1576 = vpack.c.b16 %v1567, %v1566
      %v1577 = vpack.c.b16 %v1569, %v1568
      %1586 = vmatprep.subr.bf16.mxu0 0
      %1587 = vmatpush1.bf16.msra.mxu0 %v1577
      %1588 = vmatprep.subr.bf16.mxu0 0
      %1589 = vmatpush1.bf16.msra.mxu0 %v1576
      %1590 = vmatprep.subr.bf16.mxu0 0
      %1591 = vmatpush1.bf16.msra.mxu0 %v1575
      %1592 = vmatprep.subr.bf16.mxu0 0
      %1593 = vmatpush1.bf16.msra.mxu0 %v1574
      %1594 = vmatprep.subr.bf16.mxu0 0
      %1595 = vmatpush1.bf16.msra.mxu0 %v1573
      %1596 = vmatprep.subr.bf16.mxu0 0
      %1597 = vmatpush1.bf16.msra.mxu0 %v1572
      %1598 = vmatprep.subr.bf16.mxu0 0
      %1599 = vmatpush1.bf16.msra.mxu0 %v1571
      %1600 = vmatprep.subr.bf16.mxu0 0
      %1601 = vmatpush1.bf16.msra.mxu0 %v1570
      %1602 = vmatprep.subr.bf16.mxu0 0
      %1603 = vmatpush2.bf16.msra.mxu0 0
      %1604 = vmatprep.subr.bf16.mxu0 0
      %1605 = vmatpush2.bf16.msra.mxu0 0
      %1606 = vmatprep.subr.bf16.mxu0 0
      %1607 = vmatpush2.bf16.msra.mxu0 0
      %1608 = vmatprep.subr.bf16.mxu0 0
      %1609 = vmatpush2.bf16.msra.mxu0 0
      %1610 = vmatprep.subr.bf16.mxu0 0
      %1611 = vmatpush2.bf16.msra.mxu0 0
      %1612 = vmatprep.subr.bf16.mxu0 0
      %1613 = vmatpush2.bf16.msra.mxu0 0
      %1614 = vmatprep.subr.bf16.mxu0 0
      %1615 = vmatpush2.bf16.msra.mxu0 0
      %1616 = vmatprep.subr.bf16.mxu0 0
      %1617 = vmatpush2.bf16.msra.mxu0 0
      %1618 = vmatprep.mubr.bf16.mxu0 0
      %1619 = vmatmul.mubr.bf16.gmra.mxu0 %v1515
      %v1620 = vpop.f32.mrf.mxu0
      %v1621 = vadd.f32 0.0, %v1620
      %v1622 = vpop.f32.mrf.mxu0
      %v1623 = vpop.f32.mrf.mxu0
      %v1624 = vadd.f32 0.0, %v1623
      %v1625 = vpop.f32.mrf.mxu0
      %1626 = vmatprep.mubr.bf16.mxu0 0
      %1627 = vmatmul.mubr.bf16.gmra.mxu0 %v1519
      %v1628 = vpop.f32.mrf.mxu0
      %v1629 = vadd.f32 0.0, %v1628
      %v1630 = vpop.f32.mrf.mxu0
      %v1631 = vpop.f32.mrf.mxu0
      %v1632 = vadd.f32 0.0, %v1631
      %v1633 = vpop.f32.mrf.mxu0
      %1634 = vmatprep.mubr.bf16.mxu0 0
      %1635 = vmatmul.mubr.bf16.gmra.mxu0 %v1523
      %v1636 = vpop.f32.mrf.mxu0
      %v1637 = vadd.f32 0.0, %v1636
      %v1638 = vpop.f32.mrf.mxu0
      %v1639 = vpop.f32.mrf.mxu0
      %v1640 = vadd.f32 0.0, %v1639
      %v1641 = vpop.f32.mrf.mxu0
      %1642 = vmatprep.mubr.bf16.mxu0 0
      %1643 = vmatmul.mubr.bf16.gmra.mxu0 %v1532
      %v1644 = vpop.f32.mrf.mxu0
      %v1645 = vadd.f32 0.0, %v1644
      %v1646 = vpop.f32.mrf.mxu0
      %v1647 = vpop.f32.mrf.mxu0
      %v1648 = vadd.f32 0.0, %v1647
      %v1649 = vpop.f32.mrf.mxu0
      %1650 = vmatprep.mubr.bf16.mxu0 0
      %1651 = vmatmul.mubr.bf16.gmra.mxu0 %v1531
      %v1652 = vpop.f32.mrf.mxu0
      %v1653 = vadd.f32 0.0, %v1652
      %v1654 = vpop.f32.mrf.mxu0
      %v1655 = vpop.f32.mrf.mxu0
      %v1656 = vadd.f32 0.0, %v1655
      %v1657 = vpop.f32.mrf.mxu0
      %1658 = vdwg.mxu0
      %v1659 = vadd.f32 %v1476, %v1621
      %v1660 = vadd.f32 %v1477, %v1624
      %v1661 = vadd.f32 %v1478, %v1629
      %v1662 = vadd.f32 %v1479, %v1632
      %v1663 = vadd.f32 %v1480, %v1637
      %v1664 = vadd.f32 %v1481, %v1640
      %v1665 = vadd.f32 %v1482, %v1645
      %v1666 = vadd.f32 %v1483, %v1648
      %v1667 = vadd.f32 %v1484, %v1653
      %v1668 = vadd.f32 %v1485, %v1656
      %v1669 = vld [vmem:[%s165 + $0x4] sm:$0x8]
      %v1670 = vld [vmem:[%s165 + $0x28] sm:$0xf]
      %s1671 = scalar_lea.vmem %s1, 512
      %v1672 = vld [vmem:[%s1671] sm:$0xf]
      %v1673 = vld [vmem:[%s1671 + $0x4] sm:$0xf]
      %v1674 = vld [vmem:[%s1671 + $0x8] sm:$0xf]
      %v1675 = vld [vmem:[%s1671 + $0xc] sm:$0xf]
      %v1676 = vld [vmem:[%s1671 + $0x10] sm:$0xf]
      %v1677 = vld [vmem:[%s1671 + $0x14] sm:$0xf]
      %v1678 = vld [vmem:[%s1671 + $0x18] sm:$0xf]
      %v1679 = vld [vmem:[%s1671 + $0x1c] sm:$0xf]
      %v1680 = vld [vmem:[%s1671 + $0x20] sm:$0xf]
      %v1681 = vld [vmem:[%s1671 + $0x24] sm:$0xf]
      %v1682 = vld [vmem:[%s1671 + $0x28] sm:$0xf]
      %v1683 = vld [vmem:[%s1671 + $0x2c] sm:$0xf]
      %v1684 = vld [vmem:[%s1671 + $0x30] sm:$0xf]
      %v1685 = vld [vmem:[%s1671 + $0x34] sm:$0xf]
      %v1686 = vld [vmem:[%s1671 + $0x38] sm:$0xf]
      %v1687 = vld [vmem:[%s1671 + $0x3c] sm:$0xf]
      %v1690 = vunpack.c.l.b16 %v1669
      %v1691 = vunpack.c.l.b16 %v1670
      %v1692 = vpack.c.b16 %v1122, %v1690
      %v1693 = vpack.c.b16 %v1691, %v1129
      %vm1694 = vcmask 1044480
      %v1695 = vrot.slane %v1692, 3
      %v1696 = vrot.slane %v1132, 3
      %v1697 = vsel %vm1694, %v1695, %v1696
      %v1698 = vrot.slane %v1133, 3
      %v1699 = vsel %vm1694, %v1696, %v1698
      %v1700 = vrot.slane %v1134, 3
      %v1701 = vsel %vm1694, %v1698, %v1700
      %v1702 = vrot.slane %v1693, 3
      %v1703 = vsel %vm1694, %v1700, %v1702
      %v1725 = vunpack.c.l.b16 %v1672
      %v1726 = vunpack.c.l.b16 %v1673
      %v1727 = vunpack.c.l.b16 %v1674
      %v1728 = vunpack.c.l.b16 %v1675
      %v1729 = vunpack.c.l.b16 %v1676
      %v1730 = vunpack.c.l.b16 %v1677
      %v1731 = vunpack.c.l.b16 %v1678
      %v1732 = vunpack.c.l.b16 %v1679
      %v1733 = vunpack.c.l.b16 %v1680
      %v1734 = vunpack.c.l.b16 %v1681
      %v1735 = vunpack.c.l.b16 %v1682
      %v1736 = vunpack.c.l.b16 %v1683
      %v1737 = vunpack.c.l.b16 %v1684
      %v1738 = vunpack.c.l.b16 %v1685
      %v1739 = vunpack.c.l.b16 %v1686
      %v1740 = vunpack.c.l.b16 %v1687
      %v1741 = vpack.c.b16 %v1726, %v1725
      %v1742 = vpack.c.b16 %v1728, %v1727
      %v1743 = vpack.c.b16 %v1730, %v1729
      %v1744 = vpack.c.b16 %v1732, %v1731
      %v1745 = vpack.c.b16 %v1734, %v1733
      %v1746 = vpack.c.b16 %v1736, %v1735
      %v1747 = vpack.c.b16 %v1738, %v1737
      %v1748 = vpack.c.b16 %v1740, %v1739
      %1757 = vmatprep.subr.bf16.mxu0 0
      %1758 = vmatpush1.bf16.msra.mxu0 %v1748
      %1759 = vmatprep.subr.bf16.mxu0 0
      %1760 = vmatpush1.bf16.msra.mxu0 %v1747
      %1761 = vmatprep.subr.bf16.mxu0 0
      %1762 = vmatpush1.bf16.msra.mxu0 %v1746
      %1763 = vmatprep.subr.bf16.mxu0 0
      %1764 = vmatpush1.bf16.msra.mxu0 %v1745
      %1765 = vmatprep.subr.bf16.mxu0 0
      %1766 = vmatpush1.bf16.msra.mxu0 %v1744
      %1767 = vmatprep.subr.bf16.mxu0 0
      %1768 = vmatpush1.bf16.msra.mxu0 %v1743
      %1769 = vmatprep.subr.bf16.mxu0 0
      %1770 = vmatpush1.bf16.msra.mxu0 %v1742
      %1771 = vmatprep.subr.bf16.mxu0 0
      %1772 = vmatpush1.bf16.msra.mxu0 %v1741
      %1773 = vmatprep.subr.bf16.mxu0 0
      %1774 = vmatpush2.bf16.msra.mxu0 0
      %1775 = vmatprep.subr.bf16.mxu0 0
      %1776 = vmatpush2.bf16.msra.mxu0 0
      %1777 = vmatprep.subr.bf16.mxu0 0
      %1778 = vmatpush2.bf16.msra.mxu0 0
      %1779 = vmatprep.subr.bf16.mxu0 0
      %1780 = vmatpush2.bf16.msra.mxu0 0
      %1781 = vmatprep.subr.bf16.mxu0 0
      %1782 = vmatpush2.bf16.msra.mxu0 0
      %1783 = vmatprep.subr.bf16.mxu0 0
      %1784 = vmatpush2.bf16.msra.mxu0 0
      %1785 = vmatprep.subr.bf16.mxu0 0
      %1786 = vmatpush2.bf16.msra.mxu0 0
      %1787 = vmatprep.subr.bf16.mxu0 0
      %1788 = vmatpush2.bf16.msra.mxu0 0
      %1789 = vmatprep.mubr.bf16.mxu0 0
      %1790 = vmatmul.mubr.bf16.gmra.mxu0 %v1697
      %v1791 = vpop.f32.mrf.mxu0
      %v1792 = vadd.f32 0.0, %v1791
      %v1793 = vpop.f32.mrf.mxu0
      %v1794 = vpop.f32.mrf.mxu0
      %v1795 = vadd.f32 0.0, %v1794
      %v1796 = vpop.f32.mrf.mxu0
      %1797 = vmatprep.mubr.bf16.mxu0 0
      %1798 = vmatmul.mubr.bf16.gmra.mxu0 %v1699
      %v1799 = vpop.f32.mrf.mxu0
      %v1800 = vadd.f32 0.0, %v1799
      %v1801 = vpop.f32.mrf.mxu0
      %v1802 = vpop.f32.mrf.mxu0
      %v1803 = vadd.f32 0.0, %v1802
      %v1804 = vpop.f32.mrf.mxu0
      %1805 = vmatprep.mubr.bf16.mxu0 0
      %1806 = vmatmul.mubr.bf16.gmra.mxu0 %v1701
      %v1807 = vpop.f32.mrf.mxu0
      %v1808 = vadd.f32 0.0, %v1807
      %v1809 = vpop.f32.mrf.mxu0
      %v1810 = vpop.f32.mrf.mxu0
      %v1811 = vadd.f32 0.0, %v1810
      %v1812 = vpop.f32.mrf.mxu0
      %1813 = vmatprep.mubr.bf16.mxu0 0
      %1814 = vmatmul.mubr.bf16.gmra.mxu0 %v1703
      %v1815 = vpop.f32.mrf.mxu0
      %v1816 = vadd.f32 0.0, %v1815
      %v1817 = vpop.f32.mrf.mxu0
      %v1818 = vpop.f32.mrf.mxu0
      %v1819 = vadd.f32 0.0, %v1818
      %v1820 = vpop.f32.mrf.mxu0
      %1821 = vmatprep.mubr.bf16.mxu0 0
      %1822 = vmatmul.mubr.bf16.gmra.mxu0 %v1702
      %v1823 = vpop.f32.mrf.mxu0
      %v1824 = vadd.f32 0.0, %v1823
      %v1825 = vpop.f32.mrf.mxu0
      %v1826 = vpop.f32.mrf.mxu0
      %v1827 = vadd.f32 0.0, %v1826
      %v1828 = vpop.f32.mrf.mxu0
      %1829 = vdwg.mxu0
      %v1830 = vadd.f32 %v1659, %v1792
      %v1831 = vadd.f32 %v1660, %v1795
      %v1832 = vadd.f32 %v1661, %v1800
      %v1833 = vadd.f32 %v1662, %v1803
      %v1834 = vadd.f32 %v1663, %v1808
      %v1835 = vadd.f32 %v1664, %v1811
      %v1836 = vadd.f32 %v1665, %v1816
      %v1837 = vadd.f32 %v1666, %v1819
      %v1838 = vadd.f32 %v1667, %v1824
      %v1839 = vadd.f32 %v1668, %v1827
      %s1840 = scalar_lea.vmem %s1, 576
      %v1841 = vld [vmem:[%s1840] sm:$0xf]
      %v1842 = vld [vmem:[%s1840 + $0x4] sm:$0xf]
      %v1843 = vld [vmem:[%s1840 + $0x8] sm:$0xf]
      %v1844 = vld [vmem:[%s1840 + $0xc] sm:$0xf]
      %v1845 = vld [vmem:[%s1840 + $0x10] sm:$0xf]
      %v1846 = vld [vmem:[%s1840 + $0x14] sm:$0xf]
      %v1847 = vld [vmem:[%s1840 + $0x18] sm:$0xf]
      %v1848 = vld [vmem:[%s1840 + $0x1c] sm:$0xf]
      %v1849 = vld [vmem:[%s1840 + $0x20] sm:$0xf]
      %v1850 = vld [vmem:[%s1840 + $0x24] sm:$0xf]
      %v1851 = vld [vmem:[%s1840 + $0x28] sm:$0xf]
      %v1852 = vld [vmem:[%s1840 + $0x2c] sm:$0xf]
      %v1853 = vld [vmem:[%s1840 + $0x30] sm:$0xf]
      %v1854 = vld [vmem:[%s1840 + $0x34] sm:$0xf]
      %v1855 = vld [vmem:[%s1840 + $0x38] sm:$0xf]
      %v1856 = vld [vmem:[%s1840 + $0x3c] sm:$0xf]
      %vm1857 = vsmask.f32 4352
      %v1859 = vshrl.u32 %v1692, 16
      %v1861 = vrot.slane %v1859, 3
      %v1862 = vshll.u32 %v1692, 16
      %v1864 = vrot.slane %v1862, 4
      %v1865 = vor.u32 %v1861, %v1864
      %v1866 = vrot.slane %v1145, 3
      %v1867 = vrot.slane %v1148, 4
      %v1868 = vor.u32 %v1866, %v1867
      %v1869 = vsel %vm1857, %v1865, %v1868
      %v1870 = vrot.slane %v1154, 3
      %v1871 = vrot.slane %v1157, 4
      %v1872 = vor.u32 %v1870, %v1871
      %v1873 = vsel %vm1857, %v1868, %v1872
      %v1874 = vrot.slane %v1163, 3
      %v1875 = vrot.slane %v1166, 4
      %v1876 = vor.u32 %v1874, %v1875
      %v1877 = vsel %vm1857, %v1872, %v1876
      %v1879 = vshrl.u32 %v1693, 16
      %v1881 = vrot.slane %v1879, 3
      %v1882 = vshll.u32 %v1693, 16
      %v1884 = vrot.slane %v1882, 4
      %v1885 = vor.u32 %v1881, %v1884
      %v1886 = vsel %vm1857, %v1876, %v1885
      %v1908 = vunpack.c.l.b16 %v1841
      %v1909 = vunpack.c.l.b16 %v1842
      %v1910 = vunpack.c.l.b16 %v1843
      %v1911 = vunpack.c.l.b16 %v1844
      %v1912 = vunpack.c.l.b16 %v1845
      %v1913 = vunpack.c.l.b16 %v1846
      %v1914 = vunpack.c.l.b16 %v1847
      %v1915 = vunpack.c.l.b16 %v1848
      %v1916 = vunpack.c.l.b16 %v1849
      %v1917 = vunpack.c.l.b16 %v1850
      %v1918 = vunpack.c.l.b16 %v1851
      %v1919 = vunpack.c.l.b16 %v1852
      %v1920 = vunpack.c.l.b16 %v1853
      %v1921 = vunpack.c.l.b16 %v1854
      %v1922 = vunpack.c.l.b16 %v1855
      %v1923 = vunpack.c.l.b16 %v1856
      %v1924 = vpack.c.b16 %v1909, %v1908
      %v1925 = vpack.c.b16 %v1911, %v1910
      %v1926 = vpack.c.b16 %v1913, %v1912
      %v1927 = vpack.c.b16 %v1915, %v1914
      %v1928 = vpack.c.b16 %v1917, %v1916
      %v1929 = vpack.c.b16 %v1919, %v1918
      %v1930 = vpack.c.b16 %v1921, %v1920
      %v1931 = vpack.c.b16 %v1923, %v1922
      %1940 = vmatprep.subr.bf16.mxu0 0
      %1941 = vmatpush1.bf16.msra.mxu0 %v1931
      %1942 = vmatprep.subr.bf16.mxu0 0
      %1943 = vmatpush1.bf16.msra.mxu0 %v1930
      %1944 = vmatprep.subr.bf16.mxu0 0
      %1945 = vmatpush1.bf16.msra.mxu0 %v1929
      %1946 = vmatprep.subr.bf16.mxu0 0
      %1947 = vmatpush1.bf16.msra.mxu0 %v1928
      %1948 = vmatprep.subr.bf16.mxu0 0
      %1949 = vmatpush1.bf16.msra.mxu0 %v1927
      %1950 = vmatprep.subr.bf16.mxu0 0
      %1951 = vmatpush1.bf16.msra.mxu0 %v1926
      %1952 = vmatprep.subr.bf16.mxu0 0
      %1953 = vmatpush1.bf16.msra.mxu0 %v1925
      %1954 = vmatprep.subr.bf16.mxu0 0
      %1955 = vmatpush1.bf16.msra.mxu0 %v1924
      %1956 = vmatprep.subr.bf16.mxu0 0
      %1957 = vmatpush2.bf16.msra.mxu0 0
      %1958 = vmatprep.subr.bf16.mxu0 0
      %1959 = vmatpush2.bf16.msra.mxu0 0
      %1960 = vmatprep.subr.bf16.mxu0 0
      %1961 = vmatpush2.bf16.msra.mxu0 0
      %1962 = vmatprep.subr.bf16.mxu0 0
      %1963 = vmatpush2.bf16.msra.mxu0 0
      %1964 = vmatprep.subr.bf16.mxu0 0
      %1965 = vmatpush2.bf16.msra.mxu0 0
      %1966 = vmatprep.subr.bf16.mxu0 0
      %1967 = vmatpush2.bf16.msra.mxu0 0
      %1968 = vmatprep.subr.bf16.mxu0 0
      %1969 = vmatpush2.bf16.msra.mxu0 0
      %1970 = vmatprep.subr.bf16.mxu0 0
      %1971 = vmatpush2.bf16.msra.mxu0 0
      %1972 = vmatprep.mubr.bf16.mxu0 0
      %1973 = vmatmul.mubr.bf16.gmra.mxu0 %v1869
      %v1974 = vpop.f32.mrf.mxu0
      %v1975 = vadd.f32 0.0, %v1974
      %v1976 = vpop.f32.mrf.mxu0
      %v1977 = vpop.f32.mrf.mxu0
      %v1978 = vadd.f32 0.0, %v1977
      %v1979 = vpop.f32.mrf.mxu0
      %1980 = vmatprep.mubr.bf16.mxu0 0
      %1981 = vmatmul.mubr.bf16.gmra.mxu0 %v1873
      %v1982 = vpop.f32.mrf.mxu0
      %v1983 = vadd.f32 0.0, %v1982
      %v1984 = vpop.f32.mrf.mxu0
      %v1985 = vpop.f32.mrf.mxu0
      %v1986 = vadd.f32 0.0, %v1985
      %v1987 = vpop.f32.mrf.mxu0
      %1988 = vmatprep.mubr.bf16.mxu0 0
      %1989 = vmatmul.mubr.bf16.gmra.mxu0 %v1877
      %v1990 = vpop.f32.mrf.mxu0
      %v1991 = vadd.f32 0.0, %v1990
      %v1992 = vpop.f32.mrf.mxu0
      %v1993 = vpop.f32.mrf.mxu0
      %v1994 = vadd.f32 0.0, %v1993
      %v1995 = vpop.f32.mrf.mxu0
      %1996 = vmatprep.mubr.bf16.mxu0 0
      %1997 = vmatmul.mubr.bf16.gmra.mxu0 %v1886
      %v1998 = vpop.f32.mrf.mxu0
      %v1999 = vadd.f32 0.0, %v1998
      %v2000 = vpop.f32.mrf.mxu0
      %v2001 = vpop.f32.mrf.mxu0
      %v2002 = vadd.f32 0.0, %v2001
      %v2003 = vpop.f32.mrf.mxu0
      %2004 = vmatprep.mubr.bf16.mxu0 0
      %2005 = vmatmul.mubr.bf16.gmra.mxu0 %v1885
      %v2006 = vpop.f32.mrf.mxu0
      %v2007 = vadd.f32 0.0, %v2006
      %v2008 = vpop.f32.mrf.mxu0
      %v2009 = vpop.f32.mrf.mxu0
      %v2010 = vadd.f32 0.0, %v2009
      %v2011 = vpop.f32.mrf.mxu0
      %2012 = vdwg.mxu0
      %v2013 = vadd.f32 %v1830, %v1975
      %v2014 = vadd.f32 %v1831, %v1978
      %v2015 = vadd.f32 %v1832, %v1983
      %v2016 = vadd.f32 %v1833, %v1986
      %v2017 = vadd.f32 %v1834, %v1991
      %v2018 = vadd.f32 %v1835, %v1994
      %v2019 = vadd.f32 %v1836, %v1999
      %v2020 = vadd.f32 %v1837, %v2002
      %v2021 = vadd.f32 %v1838, %v2007
      %v2022 = vadd.f32 %v1839, %v2010
      %v2023 = vld [vmem:[%s165 + $0x8] sm:$0x8]
      %v2024 = vld [vmem:[%s165 + $0xc] sm:$0xf]
      %v2025 = vld [vmem:[%s165 + $0x10] sm:$0xf]
      %v2026 = vld [vmem:[%s165 + $0x14] sm:$0xf]
      %v2027 = vld [vmem:[%s165 + $0x18] sm:$0xf]
      %v2028 = vld [vmem:[%s165 + $0x1c] sm:$0xf]
      %v2029 = vld [vmem:[%s165 + $0x20] sm:$0xf]
      %v2030 = vld [vmem:[%s165 + $0x24] sm:$0xf]
      %v2031 = vld [vmem:[%s165 + $0x28] sm:$0xf]
      %v2032 = vld [vmem:[%s165 + $0x2c] sm:$0xf]
      %s2033 = scalar_lea.vmem %s1, 640
      %v2034 = vld [vmem:[%s2033] sm:$0xf]
      %v2035 = vld [vmem:[%s2033 + $0x4] sm:$0xf]
      %v2036 = vld [vmem:[%s2033 + $0x8] sm:$0xf]
      %v2037 = vld [vmem:[%s2033 + $0xc] sm:$0xf]
      %v2038 = vld [vmem:[%s2033 + $0x10] sm:$0xf]
      %v2039 = vld [vmem:[%s2033 + $0x14] sm:$0xf]
      %v2040 = vld [vmem:[%s2033 + $0x18] sm:$0xf]
      %v2041 = vld [vmem:[%s2033 + $0x1c] sm:$0xf]
      %v2042 = vld [vmem:[%s2033 + $0x20] sm:$0xf]
      %v2043 = vld [vmem:[%s2033 + $0x24] sm:$0xf]
      %v2044 = vld [vmem:[%s2033 + $0x28] sm:$0xf]
      %v2045 = vld [vmem:[%s2033 + $0x2c] sm:$0xf]
      %v2046 = vld [vmem:[%s2033 + $0x30] sm:$0xf]
      %v2047 = vld [vmem:[%s2033 + $0x34] sm:$0xf]
      %v2048 = vld [vmem:[%s2033 + $0x38] sm:$0xf]
      %v2049 = vld [vmem:[%s2033 + $0x3c] sm:$0xf]
      %v2060 = vunpack.c.l.b16 %v2023
      %v2061 = vunpack.c.l.b16 %v2024
      %v2062 = vunpack.c.l.b16 %v2025
      %v2063 = vunpack.c.l.b16 %v2026
      %v2064 = vunpack.c.l.b16 %v2027
      %v2065 = vunpack.c.l.b16 %v2028
      %v2066 = vunpack.c.l.b16 %v2029
      %v2067 = vunpack.c.l.b16 %v2030
      %v2068 = vunpack.c.l.b16 %v2031
      %v2069 = vunpack.c.l.b16 %v2032
      %v2070 = vpack.c.b16 %v2061, %v2060
      %v2071 = vpack.c.b16 %v2063, %v2062
      %v2072 = vpack.c.b16 %v2065, %v2064
      %v2073 = vpack.c.b16 %v2067, %v2066
      %v2074 = vpack.c.b16 %v2069, %v2068
      %v2075 = vrot.slane %v2070, 3
      %v2076 = vrot.slane %v2071, 3
      %v2077 = vsel %vm1694, %v2075, %v2076
      %v2078 = vrot.slane %v2072, 3
      %v2079 = vsel %vm1694, %v2076, %v2078
      %v2080 = vrot.slane %v2073, 3
      %v2081 = vsel %vm1694, %v2078, %v2080
      %v2082 = vrot.slane %v2074, 3
      %v2083 = vsel %vm1694, %v2080, %v2082
      %v2105 = vunpack.c.l.b16 %v2034
      %v2106 = vunpack.c.l.b16 %v2035
      %v2107 = vunpack.c.l.b16 %v2036
      %v2108 = vunpack.c.l.b16 %v2037
      %v2109 = vunpack.c.l.b16 %v2038
      %v2110 = vunpack.c.l.b16 %v2039
      %v2111 = vunpack.c.l.b16 %v2040
      %v2112 = vunpack.c.l.b16 %v2041
      %v2113 = vunpack.c.l.b16 %v2042
      %v2114 = vunpack.c.l.b16 %v2043
      %v2115 = vunpack.c.l.b16 %v2044
      %v2116 = vunpack.c.l.b16 %v2045
      %v2117 = vunpack.c.l.b16 %v2046
      %v2118 = vunpack.c.l.b16 %v2047
      %v2119 = vunpack.c.l.b16 %v2048
      %v2120 = vunpack.c.l.b16 %v2049
      %v2121 = vpack.c.b16 %v2106, %v2105
      %v2122 = vpack.c.b16 %v2108, %v2107
      %v2123 = vpack.c.b16 %v2110, %v2109
      %v2124 = vpack.c.b16 %v2112, %v2111
      %v2125 = vpack.c.b16 %v2114, %v2113
      %v2126 = vpack.c.b16 %v2116, %v2115
      %v2127 = vpack.c.b16 %v2118, %v2117
      %v2128 = vpack.c.b16 %v2120, %v2119
      %2137 = vmatprep.subr.bf16.mxu0 0
      %2138 = vmatpush1.bf16.msra.mxu0 %v2128
      %2139 = vmatprep.subr.bf16.mxu0 0
      %2140 = vmatpush1.bf16.msra.mxu0 %v2127
      %2141 = vmatprep.subr.bf16.mxu0 0
      %2142 = vmatpush1.bf16.msra.mxu0 %v2126
      %2143 = vmatprep.subr.bf16.mxu0 0
      %2144 = vmatpush1.bf16.msra.mxu0 %v2125
      %2145 = vmatprep.subr.bf16.mxu0 0
      %2146 = vmatpush1.bf16.msra.mxu0 %v2124
      %2147 = vmatprep.subr.bf16.mxu0 0
      %2148 = vmatpush1.bf16.msra.mxu0 %v2123
      %2149 = vmatprep.subr.bf16.mxu0 0
      %2150 = vmatpush1.bf16.msra.mxu0 %v2122
      %2151 = vmatprep.subr.bf16.mxu0 0
      %2152 = vmatpush1.bf16.msra.mxu0 %v2121
      %2153 = vmatprep.subr.bf16.mxu0 0
      %2154 = vmatpush2.bf16.msra.mxu0 0
      %2155 = vmatprep.subr.bf16.mxu0 0
      %2156 = vmatpush2.bf16.msra.mxu0 0
      %2157 = vmatprep.subr.bf16.mxu0 0
      %2158 = vmatpush2.bf16.msra.mxu0 0
      %2159 = vmatprep.subr.bf16.mxu0 0
      %2160 = vmatpush2.bf16.msra.mxu0 0
      %2161 = vmatprep.subr.bf16.mxu0 0
      %2162 = vmatpush2.bf16.msra.mxu0 0
      %2163 = vmatprep.subr.bf16.mxu0 0
      %2164 = vmatpush2.bf16.msra.mxu0 0
      %2165 = vmatprep.subr.bf16.mxu0 0
      %2166 = vmatpush2.bf16.msra.mxu0 0
      %2167 = vmatprep.subr.bf16.mxu0 0
      %2168 = vmatpush2.bf16.msra.mxu0 0
      %2169 = vmatprep.mubr.bf16.mxu0 0
      %2170 = vmatmul.mubr.bf16.gmra.mxu0 %v2077
      %v2171 = vpop.f32.mrf.mxu0
      %v2172 = vadd.f32 0.0, %v2171
      %v2173 = vpop.f32.mrf.mxu0
      %v2174 = vpop.f32.mrf.mxu0
      %v2175 = vadd.f32 0.0, %v2174
      %v2176 = vpop.f32.mrf.mxu0
      %2177 = vmatprep.mubr.bf16.mxu0 0
      %2178 = vmatmul.mubr.bf16.gmra.mxu0 %v2079
      %v2179 = vpop.f32.mrf.mxu0
      %v2180 = vadd.f32 0.0, %v2179
      %v2181 = vpop.f32.mrf.mxu0
      %v2182 = vpop.f32.mrf.mxu0
      %v2183 = vadd.f32 0.0, %v2182
      %v2184 = vpop.f32.mrf.mxu0
      %2185 = vmatprep.mubr.bf16.mxu0 0
      %2186 = vmatmul.mubr.bf16.gmra.mxu0 %v2081
      %v2187 = vpop.f32.mrf.mxu0
      %v2188 = vadd.f32 0.0, %v2187
      %v2189 = vpop.f32.mrf.mxu0
      %v2190 = vpop.f32.mrf.mxu0
      %v2191 = vadd.f32 0.0, %v2190
      %v2192 = vpop.f32.mrf.mxu0
      %2193 = vmatprep.mubr.bf16.mxu0 0
      %2194 = vmatmul.mubr.bf16.gmra.mxu0 %v2083
      %v2195 = vpop.f32.mrf.mxu0
      %v2196 = vadd.f32 0.0, %v2195
      %v2197 = vpop.f32.mrf.mxu0
      %v2198 = vpop.f32.mrf.mxu0
      %v2199 = vadd.f32 0.0, %v2198
      %v2200 = vpop.f32.mrf.mxu0
      %2201 = vmatprep.mubr.bf16.mxu0 0
      %2202 = vmatmul.mubr.bf16.gmra.mxu0 %v2082
      %v2203 = vpop.f32.mrf.mxu0
      %v2204 = vadd.f32 0.0, %v2203
      %v2205 = vpop.f32.mrf.mxu0
      %v2206 = vpop.f32.mrf.mxu0
      %v2207 = vadd.f32 0.0, %v2206
      %v2208 = vpop.f32.mrf.mxu0
      %2209 = vdwg.mxu0
      %v2210 = vadd.f32 %v2013, %v2172
      %v2211 = vadd.f32 %v2014, %v2175
      %v2212 = vadd.f32 %v2015, %v2180
      %v2213 = vadd.f32 %v2016, %v2183
      %v2214 = vadd.f32 %v2017, %v2188
      %v2215 = vadd.f32 %v2018, %v2191
      %v2216 = vadd.f32 %v2019, %v2196
      %v2217 = vadd.f32 %v2020, %v2199
      %v2218 = vadd.f32 %v2021, %v2204
      %v2219 = vadd.f32 %v2022, %v2207
      %s2220 = scalar_lea.vmem %s1, 704
      %v2221 = vld [vmem:[%s2220] sm:$0xf]
      %v2222 = vld [vmem:[%s2220 + $0x4] sm:$0xf]
      %v2223 = vld [vmem:[%s2220 + $0x8] sm:$0xf]
      %v2224 = vld [vmem:[%s2220 + $0xc] sm:$0xf]
      %v2225 = vld [vmem:[%s2220 + $0x10] sm:$0xf]
      %v2226 = vld [vmem:[%s2220 + $0x14] sm:$0xf]
      %v2227 = vld [vmem:[%s2220 + $0x18] sm:$0xf]
      %v2228 = vld [vmem:[%s2220 + $0x1c] sm:$0xf]
      %v2229 = vld [vmem:[%s2220 + $0x20] sm:$0xf]
      %v2230 = vld [vmem:[%s2220 + $0x24] sm:$0xf]
      %v2231 = vld [vmem:[%s2220 + $0x28] sm:$0xf]
      %v2232 = vld [vmem:[%s2220 + $0x2c] sm:$0xf]
      %v2233 = vld [vmem:[%s2220 + $0x30] sm:$0xf]
      %v2234 = vld [vmem:[%s2220 + $0x34] sm:$0xf]
      %v2235 = vld [vmem:[%s2220 + $0x38] sm:$0xf]
      %v2236 = vld [vmem:[%s2220 + $0x3c] sm:$0xf]
      %v2238 = vshrl.u32 %v2070, 16
      %v2240 = vrot.slane %v2238, 3
      %v2241 = vshll.u32 %v2070, 16
      %v2243 = vrot.slane %v2241, 4
      %v2244 = vor.u32 %v2240, %v2243
      %v2246 = vshrl.u32 %v2071, 16
      %v2248 = vrot.slane %v2246, 3
      %v2249 = vshll.u32 %v2071, 16
      %v2251 = vrot.slane %v2249, 4
      %v2252 = vor.u32 %v2248, %v2251
      %v2253 = vsel %vm1857, %v2244, %v2252
      %v2255 = vshrl.u32 %v2072, 16
      %v2257 = vrot.slane %v2255, 3
      %v2258 = vshll.u32 %v2072, 16
      %v2260 = vrot.slane %v2258, 4
      %v2261 = vor.u32 %v2257, %v2260
      %v2262 = vsel %vm1857, %v2252, %v2261
      %v2264 = vshrl.u32 %v2073, 16
      %v2266 = vrot.slane %v2264, 3
      %v2267 = vshll.u32 %v2073, 16
      %v2269 = vrot.slane %v2267, 4
      %v2270 = vor.u32 %v2266, %v2269
      %v2271 = vsel %vm1857, %v2261, %v2270
      %v2273 = vshrl.u32 %v2074, 16
      %v2275 = vrot.slane %v2273, 3
      %v2276 = vshll.u32 %v2074, 16
      %v2278 = vrot.slane %v2276, 4
      %v2279 = vor.u32 %v2275, %v2278
      %v2280 = vsel %vm1857, %v2270, %v2279
      %v2302 = vunpack.c.l.b16 %v2221
      %v2303 = vunpack.c.l.b16 %v2222
      %v2304 = vunpack.c.l.b16 %v2223
      %v2305 = vunpack.c.l.b16 %v2224
      %v2306 = vunpack.c.l.b16 %v2225
      %v2307 = vunpack.c.l.b16 %v2226
      %v2308 = vunpack.c.l.b16 %v2227
      %v2309 = vunpack.c.l.b16 %v2228
      %v2310 = vunpack.c.l.b16 %v2229
      %v2311 = vunpack.c.l.b16 %v2230
      %v2312 = vunpack.c.l.b16 %v2231
      %v2313 = vunpack.c.l.b16 %v2232
      %v2314 = vunpack.c.l.b16 %v2233
      %v2315 = vunpack.c.l.b16 %v2234
      %v2316 = vunpack.c.l.b16 %v2235
      %v2317 = vunpack.c.l.b16 %v2236
      %v2318 = vpack.c.b16 %v2303, %v2302
      %v2319 = vpack.c.b16 %v2305, %v2304
      %v2320 = vpack.c.b16 %v2307, %v2306
      %v2321 = vpack.c.b16 %v2309, %v2308
      %v2322 = vpack.c.b16 %v2311, %v2310
      %v2323 = vpack.c.b16 %v2313, %v2312
      %v2324 = vpack.c.b16 %v2315, %v2314
      %v2325 = vpack.c.b16 %v2317, %v2316
      %2334 = vmatprep.subr.bf16.mxu0 0
      %2335 = vmatpush1.bf16.msra.mxu0 %v2325
      %2336 = vmatprep.subr.bf16.mxu0 0
      %2337 = vmatpush1.bf16.msra.mxu0 %v2324
      %2338 = vmatprep.subr.bf16.mxu0 0
      %2339 = vmatpush1.bf16.msra.mxu0 %v2323
      %2340 = vmatprep.subr.bf16.mxu0 0
      %2341 = vmatpush1.bf16.msra.mxu0 %v2322
      %2342 = vmatprep.subr.bf16.mxu0 0
      %2343 = vmatpush1.bf16.msra.mxu0 %v2321
      %2344 = vmatprep.subr.bf16.mxu0 0
      %2345 = vmatpush1.bf16.msra.mxu0 %v2320
      %2346 = vmatprep.subr.bf16.mxu0 0
      %2347 = vmatpush1.bf16.msra.mxu0 %v2319
      %2348 = vmatprep.subr.bf16.mxu0 0
      %2349 = vmatpush1.bf16.msra.mxu0 %v2318
      %2350 = vmatprep.subr.bf16.mxu0 0
      %2351 = vmatpush2.bf16.msra.mxu0 0
      %2352 = vmatprep.subr.bf16.mxu0 0
      %2353 = vmatpush2.bf16.msra.mxu0 0
      %2354 = vmatprep.subr.bf16.mxu0 0
      %2355 = vmatpush2.bf16.msra.mxu0 0
      %2356 = vmatprep.subr.bf16.mxu0 0
      %2357 = vmatpush2.bf16.msra.mxu0 0
      %2358 = vmatprep.subr.bf16.mxu0 0
      %2359 = vmatpush2.bf16.msra.mxu0 0
      %2360 = vmatprep.subr.bf16.mxu0 0
      %2361 = vmatpush2.bf16.msra.mxu0 0
      %2362 = vmatprep.subr.bf16.mxu0 0
      %2363 = vmatpush2.bf16.msra.mxu0 0
      %2364 = vmatprep.subr.bf16.mxu0 0
      %2365 = vmatpush2.bf16.msra.mxu0 0
      %2366 = vmatprep.mubr.bf16.mxu0 0
      %2367 = vmatmul.mubr.bf16.gmra.mxu0 %v2253
      %v2368 = vpop.f32.mrf.mxu0
      %v2369 = vadd.f32 0.0, %v2368
      %v2370 = vpop.f32.mrf.mxu0
      %v2371 = vpop.f32.mrf.mxu0
      %v2372 = vadd.f32 0.0, %v2371
      %v2373 = vpop.f32.mrf.mxu0
      %2374 = vmatprep.mubr.bf16.mxu0 0
      %2375 = vmatmul.mubr.bf16.gmra.mxu0 %v2262
      %v2376 = vpop.f32.mrf.mxu0
      %v2377 = vadd.f32 0.0, %v2376
      %v2378 = vpop.f32.mrf.mxu0
      %v2379 = vpop.f32.mrf.mxu0
      %v2380 = vadd.f32 0.0, %v2379
      %v2381 = vpop.f32.mrf.mxu0
      %2382 = vmatprep.mubr.bf16.mxu0 0
      %2383 = vmatmul.mubr.bf16.gmra.mxu0 %v2271
      %v2384 = vpop.f32.mrf.mxu0
      %v2385 = vadd.f32 0.0, %v2384
      %v2386 = vpop.f32.mrf.mxu0
      %v2387 = vpop.f32.mrf.mxu0
      %v2388 = vadd.f32 0.0, %v2387
      %v2389 = vpop.f32.mrf.mxu0
      %2390 = vmatprep.mubr.bf16.mxu0 0
      %2391 = vmatmul.mubr.bf16.gmra.mxu0 %v2280
      %v2392 = vpop.f32.mrf.mxu0
      %v2393 = vadd.f32 0.0, %v2392
      %v2394 = vpop.f32.mrf.mxu0
      %v2395 = vpop.f32.mrf.mxu0
      %v2396 = vadd.f32 0.0, %v2395
      %v2397 = vpop.f32.mrf.mxu0
      %2398 = vmatprep.mubr.bf16.mxu0 0
      %2399 = vmatmul.mubr.bf16.gmra.mxu0 %v2279
      %v2400 = vpop.f32.mrf.mxu0
      %v2401 = vadd.f32 0.0, %v2400
      %v2402 = vpop.f32.mrf.mxu0
      %v2403 = vpop.f32.mrf.mxu0
      %v2404 = vadd.f32 0.0, %v2403
      %v2405 = vpop.f32.mrf.mxu0
      %2406 = vdwg.mxu0
      %v2407 = vadd.f32 %v2210, %v2369
      %v2408 = vadd.f32 %v2211, %v2372
      %v2409 = vadd.f32 %v2212, %v2377
      %v2410 = vadd.f32 %v2213, %v2380
      %v2411 = vadd.f32 %v2214, %v2385
      %v2412 = vadd.f32 %v2215, %v2388
      %v2413 = vadd.f32 %v2216, %v2393
      %v2414 = vadd.f32 %v2217, %v2396
      %v2415 = vadd.f32 %v2218, %v2401
      %v2416 = vadd.f32 %v2219, %v2404
      %v2417 = vld [vmem:[%s165 + $0xc] sm:$0xf]
      %v2418 = vld [vmem:[%s165 + $0x10] sm:$0xf]
      %v2419 = vld [vmem:[%s165 + $0x14] sm:$0xf]
      %v2420 = vld [vmem:[%s165 + $0x18] sm:$0xf]
      %v2421 = vld [vmem:[%s165 + $0x1c] sm:$0xf]
      %v2422 = vld [vmem:[%s165 + $0x20] sm:$0xf]
      %v2423 = vld [vmem:[%s165 + $0x24] sm:$0xf]
      %v2424 = vld [vmem:[%s165 + $0x28] sm:$0xf]
      %v2425 = vld [vmem:[%s165 + $0x2c] sm:$0xf]
      %v2426 = vld [vmem:[%s165 + $0x30] sm:$0x1]
      %s2427 = scalar_lea.vmem %s1, 768
      %v2428 = vld [vmem:[%s2427] sm:$0xf]
      %v2429 = vld [vmem:[%s2427 + $0x4] sm:$0xf]
      %v2430 = vld [vmem:[%s2427 + $0x8] sm:$0xf]
      %v2431 = vld [vmem:[%s2427 + $0xc] sm:$0xf]
      %v2432 = vld [vmem:[%s2427 + $0x10] sm:$0xf]
      %v2433 = vld [vmem:[%s2427 + $0x14] sm:$0xf]
      %v2434 = vld [vmem:[%s2427 + $0x18] sm:$0xf]
      %v2435 = vld [vmem:[%s2427 + $0x1c] sm:$0xf]
      %v2436 = vld [vmem:[%s2427 + $0x20] sm:$0xf]
      %v2437 = vld [vmem:[%s2427 + $0x24] sm:$0xf]
      %v2438 = vld [vmem:[%s2427 + $0x28] sm:$0xf]
      %v2439 = vld [vmem:[%s2427 + $0x2c] sm:$0xf]
      %v2440 = vld [vmem:[%s2427 + $0x30] sm:$0xf]
      %v2441 = vld [vmem:[%s2427 + $0x34] sm:$0xf]
      %v2442 = vld [vmem:[%s2427 + $0x38] sm:$0xf]
      %v2443 = vld [vmem:[%s2427 + $0x3c] sm:$0xf]
      %v2454 = vunpack.c.l.b16 %v2417
      %v2455 = vunpack.c.l.b16 %v2418
      %v2456 = vunpack.c.l.b16 %v2419
      %v2457 = vunpack.c.l.b16 %v2420
      %v2458 = vunpack.c.l.b16 %v2421
      %v2459 = vunpack.c.l.b16 %v2422
      %v2460 = vunpack.c.l.b16 %v2423
      %v2461 = vunpack.c.l.b16 %v2424
      %v2462 = vunpack.c.l.b16 %v2425
      %v2463 = vunpack.c.l.b16 %v2426
      %v2464 = vpack.c.b16 %v2455, %v2454
      %v2465 = vpack.c.b16 %v2457, %v2456
      %v2466 = vpack.c.b16 %v2459, %v2458
      %v2467 = vpack.c.b16 %v2461, %v2460
      %v2468 = vpack.c.b16 %v2463, %v2462
      %v2490 = vunpack.c.l.b16 %v2428
      %v2491 = vunpack.c.l.b16 %v2429
      %v2492 = vunpack.c.l.b16 %v2430
      %v2493 = vunpack.c.l.b16 %v2431
      %v2494 = vunpack.c.l.b16 %v2432
      %v2495 = vunpack.c.l.b16 %v2433
      %v2496 = vunpack.c.l.b16 %v2434
      %v2497 = vunpack.c.l.b16 %v2435
      %v2498 = vunpack.c.l.b16 %v2436
      %v2499 = vunpack.c.l.b16 %v2437
      %v2500 = vunpack.c.l.b16 %v2438
      %v2501 = vunpack.c.l.b16 %v2439
      %v2502 = vunpack.c.l.b16 %v2440
      %v2503 = vunpack.c.l.b16 %v2441
      %v2504 = vunpack.c.l.b16 %v2442
      %v2505 = vunpack.c.l.b16 %v2443
      %v2506 = vpack.c.b16 %v2491, %v2490
      %v2507 = vpack.c.b16 %v2493, %v2492
      %v2508 = vpack.c.b16 %v2495, %v2494
      %v2509 = vpack.c.b16 %v2497, %v2496
      %v2510 = vpack.c.b16 %v2499, %v2498
      %v2511 = vpack.c.b16 %v2501, %v2500
      %v2512 = vpack.c.b16 %v2503, %v2502
      %v2513 = vpack.c.b16 %v2505, %v2504
      %2522 = vmatprep.subr.bf16.mxu0 0
      %2523 = vmatpush1.bf16.msra.mxu0 %v2513
      %2524 = vmatprep.subr.bf16.mxu0 0
      %2525 = vmatpush1.bf16.msra.mxu0 %v2512
      %2526 = vmatprep.subr.bf16.mxu0 0
      %2527 = vmatpush1.bf16.msra.mxu0 %v2511
      %2528 = vmatprep.subr.bf16.mxu0 0
      %2529 = vmatpush1.bf16.msra.mxu0 %v2510
      %2530 = vmatprep.subr.bf16.mxu0 0
      %2531 = vmatpush1.bf16.msra.mxu0 %v2509
      %2532 = vmatprep.subr.bf16.mxu0 0
      %2533 = vmatpush1.bf16.msra.mxu0 %v2508
      %2534 = vmatprep.subr.bf16.mxu0 0
      %2535 = vmatpush1.bf16.msra.mxu0 %v2507
      %2536 = vmatprep.subr.bf16.mxu0 0
      %2537 = vmatpush1.bf16.msra.mxu0 %v2506
      %2538 = vmatprep.subr.bf16.mxu0 0
      %2539 = vmatpush2.bf16.msra.mxu0 0
      %2540 = vmatprep.subr.bf16.mxu0 0
      %2541 = vmatpush2.bf16.msra.mxu0 0
      %2542 = vmatprep.subr.bf16.mxu0 0
      %2543 = vmatpush2.bf16.msra.mxu0 0
      %2544 = vmatprep.subr.bf16.mxu0 0
      %2545 = vmatpush2.bf16.msra.mxu0 0
      %2546 = vmatprep.subr.bf16.mxu0 0
      %2547 = vmatpush2.bf16.msra.mxu0 0
      %2548 = vmatprep.subr.bf16.mxu0 0
      %2549 = vmatpush2.bf16.msra.mxu0 0
      %2550 = vmatprep.subr.bf16.mxu0 0
      %2551 = vmatpush2.bf16.msra.mxu0 0
      %2552 = vmatprep.subr.bf16.mxu0 0
      %2553 = vmatpush2.bf16.msra.mxu0 0
      %2554 = vmatprep.mubr.bf16.mxu0 0
      %2555 = vmatmul.mubr.bf16.gmra.mxu0 %v2464
      %v2556 = vpop.f32.mrf.mxu0
      %v2557 = vadd.f32 0.0, %v2556
      %v2558 = vpop.f32.mrf.mxu0
      %v2559 = vpop.f32.mrf.mxu0
      %v2560 = vadd.f32 0.0, %v2559
      %v2561 = vpop.f32.mrf.mxu0
      %2562 = vmatprep.mubr.bf16.mxu0 0
      %2563 = vmatmul.mubr.bf16.gmra.mxu0 %v2465
      %v2564 = vpop.f32.mrf.mxu0
      %v2565 = vadd.f32 0.0, %v2564
      %v2566 = vpop.f32.mrf.mxu0
      %v2567 = vpop.f32.mrf.mxu0
      %v2568 = vadd.f32 0.0, %v2567
      %v2569 = vpop.f32.mrf.mxu0
      %2570 = vmatprep.mubr.bf16.mxu0 0
      %2571 = vmatmul.mubr.bf16.gmra.mxu0 %v2466
      %v2572 = vpop.f32.mrf.mxu0
      %v2573 = vadd.f32 0.0, %v2572
      %v2574 = vpop.f32.mrf.mxu0
      %v2575 = vpop.f32.mrf.mxu0
      %v2576 = vadd.f32 0.0, %v2575
      %v2577 = vpop.f32.mrf.mxu0
      %2578 = vmatprep.mubr.bf16.mxu0 0
      %2579 = vmatmul.mubr.bf16.gmra.mxu0 %v2467
      %v2580 = vpop.f32.mrf.mxu0
      %v2581 = vadd.f32 0.0, %v2580
      %v2582 = vpop.f32.mrf.mxu0
      %v2583 = vpop.f32.mrf.mxu0
      %v2584 = vadd.f32 0.0, %v2583
      %v2585 = vpop.f32.mrf.mxu0
      %2586 = vmatprep.mubr.bf16.mxu0 0
      %2587 = vmatmul.mubr.bf16.gmra.mxu0 %v2468
      %v2588 = vpop.f32.mrf.mxu0
      %v2589 = vadd.f32 0.0, %v2588
      %v2590 = vpop.f32.mrf.mxu0
      %v2591 = vpop.f32.mrf.mxu0
      %v2592 = vadd.f32 0.0, %v2591
      %v2593 = vpop.f32.mrf.mxu0
      %2594 = vdwg.mxu0
      %v2595 = vadd.f32 %v2407, %v2557
      %v2596 = vadd.f32 %v2408, %v2560
      %v2597 = vadd.f32 %v2409, %v2565
      %v2598 = vadd.f32 %v2410, %v2568
      %v2599 = vadd.f32 %v2411, %v2573
      %v2600 = vadd.f32 %v2412, %v2576
      %v2601 = vadd.f32 %v2413, %v2581
      %v2602 = vadd.f32 %v2414, %v2584
      %v2603 = vadd.f32 %v2415, %v2589
      %v2604 = vadd.f32 %v2416, %v2592
      %s2605 = scalar_lea.vmem %s1, 832
      %v2606 = vld [vmem:[%s2605] sm:$0xf]
      %v2607 = vld [vmem:[%s2605 + $0x4] sm:$0xf]
      %v2608 = vld [vmem:[%s2605 + $0x8] sm:$0xf]
      %v2609 = vld [vmem:[%s2605 + $0xc] sm:$0xf]
      %v2610 = vld [vmem:[%s2605 + $0x10] sm:$0xf]
      %v2611 = vld [vmem:[%s2605 + $0x14] sm:$0xf]
      %v2612 = vld [vmem:[%s2605 + $0x18] sm:$0xf]
      %v2613 = vld [vmem:[%s2605 + $0x1c] sm:$0xf]
      %v2614 = vld [vmem:[%s2605 + $0x20] sm:$0xf]
      %v2615 = vld [vmem:[%s2605 + $0x24] sm:$0xf]
      %v2616 = vld [vmem:[%s2605 + $0x28] sm:$0xf]
      %v2617 = vld [vmem:[%s2605 + $0x2c] sm:$0xf]
      %v2618 = vld [vmem:[%s2605 + $0x30] sm:$0xf]
      %v2619 = vld [vmem:[%s2605 + $0x34] sm:$0xf]
      %v2620 = vld [vmem:[%s2605 + $0x38] sm:$0xf]
      %v2621 = vld [vmem:[%s2605 + $0x3c] sm:$0xf]
      %v2623 = vshrl.u32 %v2464, 16
      %v2625 = vshll.u32 %v2464, 16
      %v2627 = vrot.slane %v2625, 1
      %v2628 = vor.u32 %v2623, %v2627
      %v2630 = vshll.u32 %v2465, 16
      %v2632 = vrot.slane %v2630, 1
      %v2633 = vsel %vm383, %v2628, %v2632
      %v2634 = vshrl.u32 %v2465, 16
      %v2636 = vor.u32 %v2634, %v2632
      %v2638 = vshll.u32 %v2466, 16
      %v2640 = vrot.slane %v2638, 1
      %v2641 = vsel %vm383, %v2636, %v2640
      %v2642 = vshrl.u32 %v2466, 16
      %v2644 = vor.u32 %v2642, %v2640
      %v2646 = vshll.u32 %v2467, 16
      %v2648 = vrot.slane %v2646, 1
      %v2649 = vsel %vm383, %v2644, %v2648
      %v2650 = vshrl.u32 %v2467, 16
      %v2652 = vor.u32 %v2650, %v2648
      %v2654 = vshll.u32 %v2468, 16
      %v2656 = vrot.slane %v2654, 1
      %v2657 = vsel %vm383, %v2652, %v2656
      %v2658 = vshrl.u32 %v2468, 16
      %v2660 = vor.u32 %v2658, %v2656
      %v2682 = vunpack.c.l.b16 %v2606
      %v2683 = vunpack.c.l.b16 %v2607
      %v2684 = vunpack.c.l.b16 %v2608
      %v2685 = vunpack.c.l.b16 %v2609
      %v2686 = vunpack.c.l.b16 %v2610
      %v2687 = vunpack.c.l.b16 %v2611
      %v2688 = vunpack.c.l.b16 %v2612
      %v2689 = vunpack.c.l.b16 %v2613
      %v2690 = vunpack.c.l.b16 %v2614
      %v2691 = vunpack.c.l.b16 %v2615
      %v2692 = vunpack.c.l.b16 %v2616
      %v2693 = vunpack.c.l.b16 %v2617
      %v2694 = vunpack.c.l.b16 %v2618
      %v2695 = vunpack.c.l.b16 %v2619
      %v2696 = vunpack.c.l.b16 %v2620
      %v2697 = vunpack.c.l.b16 %v2621
      %v2698 = vpack.c.b16 %v2683, %v2682
      %v2699 = vpack.c.b16 %v2685, %v2684
      %v2700 = vpack.c.b16 %v2687, %v2686
      %v2701 = vpack.c.b16 %v2689, %v2688
      %v2702 = vpack.c.b16 %v2691, %v2690
      %v2703 = vpack.c.b16 %v2693, %v2692
      %v2704 = vpack.c.b16 %v2695, %v2694
      %v2705 = vpack.c.b16 %v2697, %v2696
      %2714 = vmatprep.subr.bf16.mxu0 0
      %2715 = vmatpush1.bf16.msra.mxu0 %v2705
      %2716 = vmatprep.subr.bf16.mxu0 0
      %2717 = vmatpush1.bf16.msra.mxu0 %v2704
      %2718 = vmatprep.subr.bf16.mxu0 0
      %2719 = vmatpush1.bf16.msra.mxu0 %v2703
      %2720 = vmatprep.subr.bf16.mxu0 0
      %2721 = vmatpush1.bf16.msra.mxu0 %v2702
      %2722 = vmatprep.subr.bf16.mxu0 0
      %2723 = vmatpush1.bf16.msra.mxu0 %v2701
      %2724 = vmatprep.subr.bf16.mxu0 0
      %2725 = vmatpush1.bf16.msra.mxu0 %v2700
      %2726 = vmatprep.subr.bf16.mxu0 0
      %2727 = vmatpush1.bf16.msra.mxu0 %v2699
      %2728 = vmatprep.subr.bf16.mxu0 0
      %2729 = vmatpush1.bf16.msra.mxu0 %v2698
      %2730 = vmatprep.subr.bf16.mxu0 0
      %2731 = vmatpush2.bf16.msra.mxu0 0
      %2732 = vmatprep.subr.bf16.mxu0 0
      %2733 = vmatpush2.bf16.msra.mxu0 0
      %2734 = vmatprep.subr.bf16.mxu0 0
      %2735 = vmatpush2.bf16.msra.mxu0 0
      %2736 = vmatprep.subr.bf16.mxu0 0
      %2737 = vmatpush2.bf16.msra.mxu0 0
      %2738 = vmatprep.subr.bf16.mxu0 0
      %2739 = vmatpush2.bf16.msra.mxu0 0
      %2740 = vmatprep.subr.bf16.mxu0 0
      %2741 = vmatpush2.bf16.msra.mxu0 0
      %2742 = vmatprep.subr.bf16.mxu0 0
      %2743 = vmatpush2.bf16.msra.mxu0 0
      %2744 = vmatprep.subr.bf16.mxu0 0
      %2745 = vmatpush2.bf16.msra.mxu0 0
      %2746 = vmatprep.mubr.bf16.mxu0 0
      %2747 = vmatmul.mubr.bf16.gmra.mxu0 %v2633
      %v2748 = vpop.f32.mrf.mxu0
      %v2749 = vadd.f32 0.0, %v2748
      %v2750 = vpop.f32.mrf.mxu0
      %v2751 = vpop.f32.mrf.mxu0
      %v2752 = vadd.f32 0.0, %v2751
      %v2753 = vpop.f32.mrf.mxu0
      %2754 = vmatprep.mubr.bf16.mxu0 0
      %2755 = vmatmul.mubr.bf16.gmra.mxu0 %v2641
      %v2756 = vpop.f32.mrf.mxu0
      %v2757 = vadd.f32 0.0, %v2756
      %v2758 = vpop.f32.mrf.mxu0
      %v2759 = vpop.f32.mrf.mxu0
      %v2760 = vadd.f32 0.0, %v2759
      %v2761 = vpop.f32.mrf.mxu0
      %2762 = vmatprep.mubr.bf16.mxu0 0
      %2763 = vmatmul.mubr.bf16.gmra.mxu0 %v2649
      %v2764 = vpop.f32.mrf.mxu0
      %v2765 = vadd.f32 0.0, %v2764
      %v2766 = vpop.f32.mrf.mxu0
      %v2767 = vpop.f32.mrf.mxu0
      %v2768 = vadd.f32 0.0, %v2767
      %v2769 = vpop.f32.mrf.mxu0
      %2770 = vmatprep.mubr.bf16.mxu0 0
      %2771 = vmatmul.mubr.bf16.gmra.mxu0 %v2657
      %v2772 = vpop.f32.mrf.mxu0
      %v2773 = vadd.f32 0.0, %v2772
      %v2774 = vpop.f32.mrf.mxu0
      %v2775 = vpop.f32.mrf.mxu0
      %v2776 = vadd.f32 0.0, %v2775
      %v2777 = vpop.f32.mrf.mxu0
      %2778 = vmatprep.mubr.bf16.mxu0 0
      %2779 = vmatmul.mubr.bf16.gmra.mxu0 %v2660
      %v2780 = vpop.f32.mrf.mxu0
      %v2781 = vadd.f32 0.0, %v2780
      %v2782 = vpop.f32.mrf.mxu0
      %v2783 = vpop.f32.mrf.mxu0
      %v2784 = vadd.f32 0.0, %v2783
      %v2785 = vpop.f32.mrf.mxu0
      %2786 = vdwg.mxu0
      %v2787 = vadd.f32 %v2595, %v2749
      %v2788 = vadd.f32 %v2596, %v2752
      %v2789 = vadd.f32 %v2597, %v2757
      %v2790 = vadd.f32 %v2598, %v2760
      %v2791 = vadd.f32 %v2599, %v2765
      %v2792 = vadd.f32 %v2600, %v2768
      %v2793 = vadd.f32 %v2601, %v2773
      %v2794 = vadd.f32 %v2602, %v2776
      %v2795 = vadd.f32 %v2603, %v2781
      %v2796 = vadd.f32 %v2604, %v2784
      %v2797 = vld [vmem:[%s165 + $0xc] sm:$0xe]
      %v2798 = vld [vmem:[%s165 + $0x30] sm:$0x3]
      %s2799 = scalar_lea.vmem %s1, 896
      %v2800 = vld [vmem:[%s2799] sm:$0xf]
      %v2801 = vld [vmem:[%s2799 + $0x4] sm:$0xf]
      %v2802 = vld [vmem:[%s2799 + $0x8] sm:$0xf]
      %v2803 = vld [vmem:[%s2799 + $0xc] sm:$0xf]
      %v2804 = vld [vmem:[%s2799 + $0x10] sm:$0xf]
      %v2805 = vld [vmem:[%s2799 + $0x14] sm:$0xf]
      %v2806 = vld [vmem:[%s2799 + $0x18] sm:$0xf]
      %v2807 = vld [vmem:[%s2799 + $0x1c] sm:$0xf]
      %v2808 = vld [vmem:[%s2799 + $0x20] sm:$0xf]
      %v2809 = vld [vmem:[%s2799 + $0x24] sm:$0xf]
      %v2810 = vld [vmem:[%s2799 + $0x28] sm:$0xf]
      %v2811 = vld [vmem:[%s2799 + $0x2c] sm:$0xf]
      %v2812 = vld [vmem:[%s2799 + $0x30] sm:$0xf]
      %v2813 = vld [vmem:[%s2799 + $0x34] sm:$0xf]
      %v2814 = vld [vmem:[%s2799 + $0x38] sm:$0xf]
      %v2815 = vld [vmem:[%s2799 + $0x3c] sm:$0xf]
      %v2818 = vunpack.c.l.b16 %v2797
      %v2819 = vunpack.c.l.b16 %v2798
      %v2820 = vpack.c.b16 %v2455, %v2818
      %v2821 = vpack.c.b16 %v2819, %v2462
      %v2822 = vrot.slane %v2820, 1
      %v2823 = vrot.slane %v2465, 1
      %v2824 = vsel %vm584, %v2822, %v2823
      %v2825 = vrot.slane %v2466, 1
      %v2826 = vsel %vm584, %v2823, %v2825
      %v2827 = vrot.slane %v2467, 1
      %v2828 = vsel %vm584, %v2825, %v2827
      %v2829 = vrot.slane %v2821, 1
      %v2830 = vsel %vm584, %v2827, %v2829
      %v2852 = vunpack.c.l.b16 %v2800
      %v2853 = vunpack.c.l.b16 %v2801
      %v2854 = vunpack.c.l.b16 %v2802
      %v2855 = vunpack.c.l.b16 %v2803
      %v2856 = vunpack.c.l.b16 %v2804
      %v2857 = vunpack.c.l.b16 %v2805
      %v2858 = vunpack.c.l.b16 %v2806
      %v2859 = vunpack.c.l.b16 %v2807
      %v2860 = vunpack.c.l.b16 %v2808
      %v2861 = vunpack.c.l.b16 %v2809
      %v2862 = vunpack.c.l.b16 %v2810
      %v2863 = vunpack.c.l.b16 %v2811
      %v2864 = vunpack.c.l.b16 %v2812
      %v2865 = vunpack.c.l.b16 %v2813
      %v2866 = vunpack.c.l.b16 %v2814
      %v2867 = vunpack.c.l.b16 %v2815
      %v2868 = vpack.c.b16 %v2853, %v2852
      %v2869 = vpack.c.b16 %v2855, %v2854
      %v2870 = vpack.c.b16 %v2857, %v2856
      %v2871 = vpack.c.b16 %v2859, %v2858
      %v2872 = vpack.c.b16 %v2861, %v2860
      %v2873 = vpack.c.b16 %v2863, %v2862
      %v2874 = vpack.c.b16 %v2865, %v2864
      %v2875 = vpack.c.b16 %v2867, %v2866
      %2884 = vmatprep.subr.bf16.mxu0 0
      %2885 = vmatpush1.bf16.msra.mxu0 %v2875
      %2886 = vmatprep.subr.bf16.mxu0 0
      %2887 = vmatpush1.bf16.msra.mxu0 %v2874
      %2888 = vmatprep.subr.bf16.mxu0 0
      %2889 = vmatpush1.bf16.msra.mxu0 %v2873
      %2890 = vmatprep.subr.bf16.mxu0 0
      %2891 = vmatpush1.bf16.msra.mxu0 %v2872
      %2892 = vmatprep.subr.bf16.mxu0 0
      %2893 = vmatpush1.bf16.msra.mxu0 %v2871
      %2894 = vmatprep.subr.bf16.mxu0 0
      %2895 = vmatpush1.bf16.msra.mxu0 %v2870
      %2896 = vmatprep.subr.bf16.mxu0 0
      %2897 = vmatpush1.bf16.msra.mxu0 %v2869
      %2898 = vmatprep.subr.bf16.mxu0 0
      %2899 = vmatpush1.bf16.msra.mxu0 %v2868
      %2900 = vmatprep.subr.bf16.mxu0 0
      %2901 = vmatpush2.bf16.msra.mxu0 0
      %2902 = vmatprep.subr.bf16.mxu0 0
      %2903 = vmatpush2.bf16.msra.mxu0 0
      %2904 = vmatprep.subr.bf16.mxu0 0
      %2905 = vmatpush2.bf16.msra.mxu0 0
      %2906 = vmatprep.subr.bf16.mxu0 0
      %2907 = vmatpush2.bf16.msra.mxu0 0
      %2908 = vmatprep.subr.bf16.mxu0 0
      %2909 = vmatpush2.bf16.msra.mxu0 0
      %2910 = vmatprep.subr.bf16.mxu0 0
      %2911 = vmatpush2.bf16.msra.mxu0 0
      %2912 = vmatprep.subr.bf16.mxu0 0
      %2913 = vmatpush2.bf16.msra.mxu0 0
      %2914 = vmatprep.subr.bf16.mxu0 0
      %2915 = vmatpush2.bf16.msra.mxu0 0
      %2916 = vmatprep.mubr.bf16.mxu0 0
      %2917 = vmatmul.mubr.bf16.gmra.mxu0 %v2824
      %v2918 = vpop.f32.mrf.mxu0
      %v2919 = vadd.f32 0.0, %v2918
      %v2920 = vpop.f32.mrf.mxu0
      %v2921 = vpop.f32.mrf.mxu0
      %v2922 = vadd.f32 0.0, %v2921
      %v2923 = vpop.f32.mrf.mxu0
      %2924 = vmatprep.mubr.bf16.mxu0 0
      %2925 = vmatmul.mubr.bf16.gmra.mxu0 %v2826
      %v2926 = vpop.f32.mrf.mxu0
      %v2927 = vadd.f32 0.0, %v2926
      %v2928 = vpop.f32.mrf.mxu0
      %v2929 = vpop.f32.mrf.mxu0
      %v2930 = vadd.f32 0.0, %v2929
      %v2931 = vpop.f32.mrf.mxu0
      %2932 = vmatprep.mubr.bf16.mxu0 0
      %2933 = vmatmul.mubr.bf16.gmra.mxu0 %v2828
      %v2934 = vpop.f32.mrf.mxu0
      %v2935 = vadd.f32 0.0, %v2934
      %v2936 = vpop.f32.mrf.mxu0
      %v2937 = vpop.f32.mrf.mxu0
      %v2938 = vadd.f32 0.0, %v2937
      %v2939 = vpop.f32.mrf.mxu0
      %2940 = vmatprep.mubr.bf16.mxu0 0
      %2941 = vmatmul.mubr.bf16.gmra.mxu0 %v2830
      %v2942 = vpop.f32.mrf.mxu0
      %v2943 = vadd.f32 0.0, %v2942
      %v2944 = vpop.f32.mrf.mxu0
      %v2945 = vpop.f32.mrf.mxu0
      %v2946 = vadd.f32 0.0, %v2945
      %v2947 = vpop.f32.mrf.mxu0
      %2948 = vmatprep.mubr.bf16.mxu0 0
      %2949 = vmatmul.mubr.bf16.gmra.mxu0 %v2829
      %v2950 = vpop.f32.mrf.mxu0
      %v2951 = vadd.f32 0.0, %v2950
      %v2952 = vpop.f32.mrf.mxu0
      %v2953 = vpop.f32.mrf.mxu0
      %v2954 = vadd.f32 0.0, %v2953
      %v2955 = vpop.f32.mrf.mxu0
      %2956 = vdwg.mxu0
      %v2957 = vadd.f32 %v2787, %v2919
      %v2958 = vadd.f32 %v2788, %v2922
      %v2959 = vadd.f32 %v2789, %v2927
      %v2960 = vadd.f32 %v2790, %v2930
      %v2961 = vadd.f32 %v2791, %v2935
      %v2962 = vadd.f32 %v2792, %v2938
      %v2963 = vadd.f32 %v2793, %v2943
      %v2964 = vadd.f32 %v2794, %v2946
      %v2965 = vadd.f32 %v2795, %v2951
      %v2966 = vadd.f32 %v2796, %v2954
      %v2967 = vld [vmem:[%s165 + $0x10] sm:$0xf]
      %v2968 = vld [vmem:[%s165 + $0x14] sm:$0xf]
      %v2969 = vld [vmem:[%s165 + $0x18] sm:$0xf]
      %v2970 = vld [vmem:[%s165 + $0x1c] sm:$0xf]
      %v2971 = vld [vmem:[%s165 + $0x20] sm:$0xf]
      %v2972 = vld [vmem:[%s165 + $0x24] sm:$0xf]
      %v2973 = vld [vmem:[%s165 + $0x28] sm:$0xf]
      %v2974 = vld [vmem:[%s165 + $0x2c] sm:$0xf]
      %v2975 = vld [vmem:[%s165 + $0x30] sm:$0xf]
      %v2976 = vld [vmem:[%s165 + $0x34] sm:$0x1]
      %s2977 = scalar_lea.vmem %s1, 960
      %v2978 = vld [vmem:[%s2977] sm:$0xf]
      %v2979 = vld [vmem:[%s2977 + $0x4] sm:$0xf]
      %v2980 = vld [vmem:[%s2977 + $0x8] sm:$0xf]
      %v2981 = vld [vmem:[%s2977 + $0xc] sm:$0xf]
      %v2982 = vld [vmem:[%s2977 + $0x10] sm:$0xf]
      %v2983 = vld [vmem:[%s2977 + $0x14] sm:$0xf]
      %v2984 = vld [vmem:[%s2977 + $0x18] sm:$0xf]
      %v2985 = vld [vmem:[%s2977 + $0x1c] sm:$0xf]
      %v2986 = vld [vmem:[%s2977 + $0x20] sm:$0xf]
      %v2987 = vld [vmem:[%s2977 + $0x24] sm:$0xf]
      %v2988 = vld [vmem:[%s2977 + $0x28] sm:$0xf]
      %v2989 = vld [vmem:[%s2977 + $0x2c] sm:$0xf]
      %v2990 = vld [vmem:[%s2977 + $0x30] sm:$0xf]
      %v2991 = vld [vmem:[%s2977 + $0x34] sm:$0xf]
      %v2992 = vld [vmem:[%s2977 + $0x38] sm:$0xf]
      %v2993 = vld [vmem:[%s2977 + $0x3c] sm:$0xf]
      %v3004 = vunpack.c.l.b16 %v2967
      %v3005 = vunpack.c.l.b16 %v2968
      %v3006 = vunpack.c.l.b16 %v2969
      %v3007 = vunpack.c.l.b16 %v2970
      %v3008 = vunpack.c.l.b16 %v2971
      %v3009 = vunpack.c.l.b16 %v2972
      %v3010 = vunpack.c.l.b16 %v2973
      %v3011 = vunpack.c.l.b16 %v2974
      %v3012 = vunpack.c.l.b16 %v2975
      %v3013 = vunpack.c.l.b16 %v2976
      %v3014 = vpack.c.b16 %v3005, %v3004
      %v3015 = vpack.c.b16 %v3007, %v3006
      %v3016 = vpack.c.b16 %v3009, %v3008
      %v3017 = vpack.c.b16 %v3011, %v3010
      %v3018 = vpack.c.b16 %v3013, %v3012
      %v3020 = vshrl.u32 %v3014, 16
      %v3022 = vshll.u32 %v3014, 16
      %v3024 = vrot.slane %v3022, 1
      %v3025 = vor.u32 %v3020, %v3024
      %v3027 = vshll.u32 %v3015, 16
      %v3029 = vrot.slane %v3027, 1
      %v3030 = vsel %vm383, %v3025, %v3029
      %v3031 = vshrl.u32 %v3015, 16
      %v3033 = vor.u32 %v3031, %v3029
      %v3035 = vshll.u32 %v3016, 16
      %v3037 = vrot.slane %v3035, 1
      %v3038 = vsel %vm383, %v3033, %v3037
      %v3039 = vshrl.u32 %v3016, 16
      %v3041 = vor.u32 %v3039, %v3037
      %v3043 = vshll.u32 %v3017, 16
      %v3045 = vrot.slane %v3043, 1
      %v3046 = vsel %vm383, %v3041, %v3045
      %v3047 = vshrl.u32 %v3017, 16
      %v3049 = vor.u32 %v3047, %v3045
      %v3051 = vshll.u32 %v3018, 16
      %v3053 = vrot.slane %v3051, 1
      %v3054 = vsel %vm383, %v3049, %v3053
      %v3055 = vshrl.u32 %v3018, 16
      %v3057 = vor.u32 %v3055, %v3053
      %v3079 = vunpack.c.l.b16 %v2978
      %v3080 = vunpack.c.l.b16 %v2979
      %v3081 = vunpack.c.l.b16 %v2980
      %v3082 = vunpack.c.l.b16 %v2981
      %v3083 = vunpack.c.l.b16 %v2982
      %v3084 = vunpack.c.l.b16 %v2983
      %v3085 = vunpack.c.l.b16 %v2984
      %v3086 = vunpack.c.l.b16 %v2985
      %v3087 = vunpack.c.l.b16 %v2986
      %v3088 = vunpack.c.l.b16 %v2987
      %v3089 = vunpack.c.l.b16 %v2988
      %v3090 = vunpack.c.l.b16 %v2989
      %v3091 = vunpack.c.l.b16 %v2990
      %v3092 = vunpack.c.l.b16 %v2991
      %v3093 = vunpack.c.l.b16 %v2992
      %v3094 = vunpack.c.l.b16 %v2993
      %v3095 = vpack.c.b16 %v3080, %v3079
      %v3096 = vpack.c.b16 %v3082, %v3081
      %v3097 = vpack.c.b16 %v3084, %v3083
      %v3098 = vpack.c.b16 %v3086, %v3085
      %v3099 = vpack.c.b16 %v3088, %v3087
      %v3100 = vpack.c.b16 %v3090, %v3089
      %v3101 = vpack.c.b16 %v3092, %v3091
      %v3102 = vpack.c.b16 %v3094, %v3093
      %3111 = vmatprep.subr.bf16.mxu0 0
      %3112 = vmatpush1.bf16.msra.mxu0 %v3102
      %3113 = vmatprep.subr.bf16.mxu0 0
      %3114 = vmatpush1.bf16.msra.mxu0 %v3101
      %3115 = vmatprep.subr.bf16.mxu0 0
      %3116 = vmatpush1.bf16.msra.mxu0 %v3100
      %3117 = vmatprep.subr.bf16.mxu0 0
      %3118 = vmatpush1.bf16.msra.mxu0 %v3099
      %3119 = vmatprep.subr.bf16.mxu0 0
      %3120 = vmatpush1.bf16.msra.mxu0 %v3098
      %3121 = vmatprep.subr.bf16.mxu0 0
      %3122 = vmatpush1.bf16.msra.mxu0 %v3097
      %3123 = vmatprep.subr.bf16.mxu0 0
      %3124 = vmatpush1.bf16.msra.mxu0 %v3096
      %3125 = vmatprep.subr.bf16.mxu0 0
      %3126 = vmatpush1.bf16.msra.mxu0 %v3095
      %3127 = vmatprep.subr.bf16.mxu0 0
      %3128 = vmatpush2.bf16.msra.mxu0 0
      %3129 = vmatprep.subr.bf16.mxu0 0
      %3130 = vmatpush2.bf16.msra.mxu0 0
      %3131 = vmatprep.subr.bf16.mxu0 0
      %3132 = vmatpush2.bf16.msra.mxu0 0
      %3133 = vmatprep.subr.bf16.mxu0 0
      %3134 = vmatpush2.bf16.msra.mxu0 0
      %3135 = vmatprep.subr.bf16.mxu0 0
      %3136 = vmatpush2.bf16.msra.mxu0 0
      %3137 = vmatprep.subr.bf16.mxu0 0
      %3138 = vmatpush2.bf16.msra.mxu0 0
      %3139 = vmatprep.subr.bf16.mxu0 0
      %3140 = vmatpush2.bf16.msra.mxu0 0
      %3141 = vmatprep.subr.bf16.mxu0 0
      %3142 = vmatpush2.bf16.msra.mxu0 0
      %3143 = vmatprep.mubr.bf16.mxu0 0
      %3144 = vmatmul.mubr.bf16.gmra.mxu0 %v3030
      %v3145 = vpop.f32.mrf.mxu0
      %v3146 = vadd.f32 0.0, %v3145
      %v3147 = vpop.f32.mrf.mxu0
      %v3148 = vpop.f32.mrf.mxu0
      %v3149 = vadd.f32 0.0, %v3148
      %v3150 = vpop.f32.mrf.mxu0
      %3151 = vmatprep.mubr.bf16.mxu0 0
      %3152 = vmatmul.mubr.bf16.gmra.mxu0 %v3038
      %v3153 = vpop.f32.mrf.mxu0
      %v3154 = vadd.f32 0.0, %v3153
      %v3155 = vpop.f32.mrf.mxu0
      %v3156 = vpop.f32.mrf.mxu0
      %v3157 = vadd.f32 0.0, %v3156
      %v3158 = vpop.f32.mrf.mxu0
      %3159 = vmatprep.mubr.bf16.mxu0 0
      %3160 = vmatmul.mubr.bf16.gmra.mxu0 %v3046
      %v3161 = vpop.f32.mrf.mxu0
      %v3162 = vadd.f32 0.0, %v3161
      %v3163 = vpop.f32.mrf.mxu0
      %v3164 = vpop.f32.mrf.mxu0
      %v3165 = vadd.f32 0.0, %v3164
      %v3166 = vpop.f32.mrf.mxu0
      %3167 = vmatprep.mubr.bf16.mxu0 0
      %3168 = vmatmul.mubr.bf16.gmra.mxu0 %v3054
      %v3169 = vpop.f32.mrf.mxu0
      %v3170 = vadd.f32 0.0, %v3169
      %v3171 = vpop.f32.mrf.mxu0
      %v3172 = vpop.f32.mrf.mxu0
      %v3173 = vadd.f32 0.0, %v3172
      %v3174 = vpop.f32.mrf.mxu0
      %3175 = vmatprep.mubr.bf16.mxu0 0
      %3176 = vmatmul.mubr.bf16.gmra.mxu0 %v3057
      %v3177 = vpop.f32.mrf.mxu0
      %v3178 = vadd.f32 0.0, %v3177
      %v3179 = vpop.f32.mrf.mxu0
      %v3180 = vpop.f32.mrf.mxu0
      %v3181 = vadd.f32 0.0, %v3180
      %v3182 = vpop.f32.mrf.mxu0
      %3183 = vdwg.mxu0
      %v3184 = vadd.f32 %v2957, %v3146
      %v3185 = vadd.f32 %v2958, %v3149
      %v3186 = vadd.f32 %v2959, %v3154
      %v3187 = vadd.f32 %v2960, %v3157
      %v3188 = vadd.f32 %v2961, %v3162
      %v3189 = vadd.f32 %v2962, %v3165
      %v3190 = vadd.f32 %v2963, %v3170
      %v3191 = vadd.f32 %v2964, %v3173
      %v3192 = vadd.f32 %v2965, %v3178
      %v3193 = vadd.f32 %v2966, %v3181
      %v3194 = vld [vmem:[%s165 + $0x10] sm:$0xe]
      %v3195 = vld [vmem:[%s165 + $0x34] sm:$0x3]
      %s3196 = scalar_lea.vmem %s1, 1024
      %v3197 = vld [vmem:[%s3196] sm:$0xf]
      %v3198 = vld [vmem:[%s3196 + $0x4] sm:$0xf]
      %v3199 = vld [vmem:[%s3196 + $0x8] sm:$0xf]
      %v3200 = vld [vmem:[%s3196 + $0xc] sm:$0xf]
      %v3201 = vld [vmem:[%s3196 + $0x10] sm:$0xf]
      %v3202 = vld [vmem:[%s3196 + $0x14] sm:$0xf]
      %v3203 = vld [vmem:[%s3196 + $0x18] sm:$0xf]
      %v3204 = vld [vmem:[%s3196 + $0x1c] sm:$0xf]
      %v3205 = vld [vmem:[%s3196 + $0x20] sm:$0xf]
      %v3206 = vld [vmem:[%s3196 + $0x24] sm:$0xf]
      %v3207 = vld [vmem:[%s3196 + $0x28] sm:$0xf]
      %v3208 = vld [vmem:[%s3196 + $0x2c] sm:$0xf]
      %v3209 = vld [vmem:[%s3196 + $0x30] sm:$0xf]
      %v3210 = vld [vmem:[%s3196 + $0x34] sm:$0xf]
      %v3211 = vld [vmem:[%s3196 + $0x38] sm:$0xf]
      %v3212 = vld [vmem:[%s3196 + $0x3c] sm:$0xf]
      %v3215 = vunpack.c.l.b16 %v3194
      %v3216 = vunpack.c.l.b16 %v3195
      %v3217 = vpack.c.b16 %v3005, %v3215
      %v3218 = vpack.c.b16 %v3216, %v3012
      %v3219 = vrot.slane %v3217, 1
      %v3220 = vrot.slane %v3015, 1
      %v3221 = vsel %vm584, %v3219, %v3220
      %v3222 = vrot.slane %v3016, 1
      %v3223 = vsel %vm584, %v3220, %v3222
      %v3224 = vrot.slane %v3017, 1
      %v3225 = vsel %vm584, %v3222, %v3224
      %v3226 = vrot.slane %v3218, 1
      %v3227 = vsel %vm584, %v3224, %v3226
      %v3249 = vunpack.c.l.b16 %v3197
      %v3250 = vunpack.c.l.b16 %v3198
      %v3251 = vunpack.c.l.b16 %v3199
      %v3252 = vunpack.c.l.b16 %v3200
      %v3253 = vunpack.c.l.b16 %v3201
      %v3254 = vunpack.c.l.b16 %v3202
      %v3255 = vunpack.c.l.b16 %v3203
      %v3256 = vunpack.c.l.b16 %v3204
      %v3257 = vunpack.c.l.b16 %v3205
      %v3258 = vunpack.c.l.b16 %v3206
      %v3259 = vunpack.c.l.b16 %v3207
      %v3260 = vunpack.c.l.b16 %v3208
      %v3261 = vunpack.c.l.b16 %v3209
      %v3262 = vunpack.c.l.b16 %v3210
      %v3263 = vunpack.c.l.b16 %v3211
      %v3264 = vunpack.c.l.b16 %v3212
      %v3265 = vpack.c.b16 %v3250, %v3249
      %v3266 = vpack.c.b16 %v3252, %v3251
      %v3267 = vpack.c.b16 %v3254, %v3253
      %v3268 = vpack.c.b16 %v3256, %v3255
      %v3269 = vpack.c.b16 %v3258, %v3257
      %v3270 = vpack.c.b16 %v3260, %v3259
      %v3271 = vpack.c.b16 %v3262, %v3261
      %v3272 = vpack.c.b16 %v3264, %v3263
      %3281 = vmatprep.subr.bf16.mxu0 0
      %3282 = vmatpush1.bf16.msra.mxu0 %v3272
      %3283 = vmatprep.subr.bf16.mxu0 0
      %3284 = vmatpush1.bf16.msra.mxu0 %v3271
      %3285 = vmatprep.subr.bf16.mxu0 0
      %3286 = vmatpush1.bf16.msra.mxu0 %v3270
      %3287 = vmatprep.subr.bf16.mxu0 0
      %3288 = vmatpush1.bf16.msra.mxu0 %v3269
      %3289 = vmatprep.subr.bf16.mxu0 0
      %3290 = vmatpush1.bf16.msra.mxu0 %v3268
      %3291 = vmatprep.subr.bf16.mxu0 0
      %3292 = vmatpush1.bf16.msra.mxu0 %v3267
      %3293 = vmatprep.subr.bf16.mxu0 0
      %3294 = vmatpush1.bf16.msra.mxu0 %v3266
      %3295 = vmatprep.subr.bf16.mxu0 0
      %3296 = vmatpush1.bf16.msra.mxu0 %v3265
      %3297 = vmatprep.subr.bf16.mxu0 0
      %3298 = vmatpush2.bf16.msra.mxu0 0
      %3299 = vmatprep.subr.bf16.mxu0 0
      %3300 = vmatpush2.bf16.msra.mxu0 0
      %3301 = vmatprep.subr.bf16.mxu0 0
      %3302 = vmatpush2.bf16.msra.mxu0 0
      %3303 = vmatprep.subr.bf16.mxu0 0
      %3304 = vmatpush2.bf16.msra.mxu0 0
      %3305 = vmatprep.subr.bf16.mxu0 0
      %3306 = vmatpush2.bf16.msra.mxu0 0
      %3307 = vmatprep.subr.bf16.mxu0 0
      %3308 = vmatpush2.bf16.msra.mxu0 0
      %3309 = vmatprep.subr.bf16.mxu0 0
      %3310 = vmatpush2.bf16.msra.mxu0 0
      %3311 = vmatprep.subr.bf16.mxu0 0
      %3312 = vmatpush2.bf16.msra.mxu0 0
      %3313 = vmatprep.mubr.bf16.mxu0 0
      %3314 = vmatmul.mubr.bf16.gmra.mxu0 %v3221
      %v3315 = vpop.f32.mrf.mxu0
      %v3316 = vadd.f32 0.0, %v3315
      %v3317 = vpop.f32.mrf.mxu0
      %v3318 = vpop.f32.mrf.mxu0
      %v3319 = vadd.f32 0.0, %v3318
      %v3320 = vpop.f32.mrf.mxu0
      %3321 = vmatprep.mubr.bf16.mxu0 0
      %3322 = vmatmul.mubr.bf16.gmra.mxu0 %v3223
      %v3323 = vpop.f32.mrf.mxu0
      %v3324 = vadd.f32 0.0, %v3323
      %v3325 = vpop.f32.mrf.mxu0
      %v3326 = vpop.f32.mrf.mxu0
      %v3327 = vadd.f32 0.0, %v3326
      %v3328 = vpop.f32.mrf.mxu0
      %3329 = vmatprep.mubr.bf16.mxu0 0
      %3330 = vmatmul.mubr.bf16.gmra.mxu0 %v3225
      %v3331 = vpop.f32.mrf.mxu0
      %v3332 = vadd.f32 0.0, %v3331
      %v3333 = vpop.f32.mrf.mxu0
      %v3334 = vpop.f32.mrf.mxu0
      %v3335 = vadd.f32 0.0, %v3334
      %v3336 = vpop.f32.mrf.mxu0
      %3337 = vmatprep.mubr.bf16.mxu0 0
      %3338 = vmatmul.mubr.bf16.gmra.mxu0 %v3227
      %v3339 = vpop.f32.mrf.mxu0
      %v3340 = vadd.f32 0.0, %v3339
      %v3341 = vpop.f32.mrf.mxu0
      %v3342 = vpop.f32.mrf.mxu0
      %v3343 = vadd.f32 0.0, %v3342
      %v3344 = vpop.f32.mrf.mxu0
      %3345 = vmatprep.mubr.bf16.mxu0 0
      %3346 = vmatmul.mubr.bf16.gmra.mxu0 %v3226
      %v3347 = vpop.f32.mrf.mxu0
      %v3348 = vadd.f32 0.0, %v3347
      %v3349 = vpop.f32.mrf.mxu0
      %v3350 = vpop.f32.mrf.mxu0
      %v3351 = vadd.f32 0.0, %v3350
      %v3352 = vpop.f32.mrf.mxu0
      %3353 = vdwg.mxu0
      %v3354 = vadd.f32 %v3184, %v3316
      %v3355 = vadd.f32 %v3185, %v3319
      %v3356 = vadd.f32 %v3186, %v3324
      %v3357 = vadd.f32 %v3187, %v3327
      %v3358 = vadd.f32 %v3188, %v3332
      %v3359 = vadd.f32 %v3189, %v3335
      %v3360 = vadd.f32 %v3190, %v3340
      %v3361 = vadd.f32 %v3191, %v3343
      %v3362 = vadd.f32 %v3192, %v3348
      %v3363 = vadd.f32 %v3193, %v3351
      %s3364 = scalar_lea.vmem %s1, 1088
      %v3365 = vld [vmem:[%s3364] sm:$0xf]
      %v3366 = vld [vmem:[%s3364 + $0x4] sm:$0xf]
      %v3367 = vld [vmem:[%s3364 + $0x8] sm:$0xf]
      %v3368 = vld [vmem:[%s3364 + $0xc] sm:$0xf]
      %v3369 = vld [vmem:[%s3364 + $0x10] sm:$0xf]
      %v3370 = vld [vmem:[%s3364 + $0x14] sm:$0xf]
      %v3371 = vld [vmem:[%s3364 + $0x18] sm:$0xf]
      %v3372 = vld [vmem:[%s3364 + $0x1c] sm:$0xf]
      %v3373 = vld [vmem:[%s3364 + $0x20] sm:$0xf]
      %v3374 = vld [vmem:[%s3364 + $0x24] sm:$0xf]
      %v3375 = vld [vmem:[%s3364 + $0x28] sm:$0xf]
      %v3376 = vld [vmem:[%s3364 + $0x2c] sm:$0xf]
      %v3377 = vld [vmem:[%s3364 + $0x30] sm:$0xf]
      %v3378 = vld [vmem:[%s3364 + $0x34] sm:$0xf]
      %v3379 = vld [vmem:[%s3364 + $0x38] sm:$0xf]
      %v3380 = vld [vmem:[%s3364 + $0x3c] sm:$0xf]
      %v3382 = vshrl.u32 %v3217, 16
      %v3384 = vrot.slane %v3382, 1
      %v3385 = vshll.u32 %v3217, 16
      %v3387 = vrot.slane %v3385, 2
      %v3388 = vor.u32 %v3384, %v3387
      %v3389 = vrot.slane %v3031, 1
      %v3390 = vrot.slane %v3027, 2
      %v3391 = vor.u32 %v3389, %v3390
      %v3392 = vsel %vm747, %v3388, %v3391
      %v3393 = vrot.slane %v3039, 1
      %v3394 = vrot.slane %v3035, 2
      %v3395 = vor.u32 %v3393, %v3394
      %v3396 = vsel %vm747, %v3391, %v3395
      %v3397 = vrot.slane %v3047, 1
      %v3398 = vrot.slane %v3043, 2
      %v3399 = vor.u32 %v3397, %v3398
      %v3400 = vsel %vm747, %v3395, %v3399
      %v3402 = vshrl.u32 %v3218, 16
      %v3404 = vrot.slane %v3402, 1
      %v3405 = vshll.u32 %v3218, 16
      %v3407 = vrot.slane %v3405, 2
      %v3408 = vor.u32 %v3404, %v3407
      %v3409 = vsel %vm747, %v3399, %v3408
      %v3431 = vunpack.c.l.b16 %v3365
      %v3432 = vunpack.c.l.b16 %v3366
      %v3433 = vunpack.c.l.b16 %v3367
      %v3434 = vunpack.c.l.b16 %v3368
      %v3435 = vunpack.c.l.b16 %v3369
      %v3436 = vunpack.c.l.b16 %v3370
      %v3437 = vunpack.c.l.b16 %v3371
      %v3438 = vunpack.c.l.b16 %v3372
      %v3439 = vunpack.c.l.b16 %v3373
      %v3440 = vunpack.c.l.b16 %v3374
      %v3441 = vunpack.c.l.b16 %v3375
      %v3442 = vunpack.c.l.b16 %v3376
      %v3443 = vunpack.c.l.b16 %v3377
      %v3444 = vunpack.c.l.b16 %v3378
      %v3445 = vunpack.c.l.b16 %v3379
      %v3446 = vunpack.c.l.b16 %v3380
      %v3447 = vpack.c.b16 %v3432, %v3431
      %v3448 = vpack.c.b16 %v3434, %v3433
      %v3449 = vpack.c.b16 %v3436, %v3435
      %v3450 = vpack.c.b16 %v3438, %v3437
      %v3451 = vpack.c.b16 %v3440, %v3439
      %v3452 = vpack.c.b16 %v3442, %v3441
      %v3453 = vpack.c.b16 %v3444, %v3443
      %v3454 = vpack.c.b16 %v3446, %v3445
      %3463 = vmatprep.subr.bf16.mxu0 0
      %3464 = vmatpush1.bf16.msra.mxu0 %v3454
      %3465 = vmatprep.subr.bf16.mxu0 0
      %3466 = vmatpush1.bf16.msra.mxu0 %v3453
      %3467 = vmatprep.subr.bf16.mxu0 0
      %3468 = vmatpush1.bf16.msra.mxu0 %v3452
      %3469 = vmatprep.subr.bf16.mxu0 0
      %3470 = vmatpush1.bf16.msra.mxu0 %v3451
      %3471 = vmatprep.subr.bf16.mxu0 0
      %3472 = vmatpush1.bf16.msra.mxu0 %v3450
      %3473 = vmatprep.subr.bf16.mxu0 0
      %3474 = vmatpush1.bf16.msra.mxu0 %v3449
      %3475 = vmatprep.subr.bf16.mxu0 0
      %3476 = vmatpush1.bf16.msra.mxu0 %v3448
      %3477 = vmatprep.subr.bf16.mxu0 0
      %3478 = vmatpush1.bf16.msra.mxu0 %v3447
      %3479 = vmatprep.subr.bf16.mxu0 0
      %3480 = vmatpush2.bf16.msra.mxu0 0
      %3481 = vmatprep.subr.bf16.mxu0 0
      %3482 = vmatpush2.bf16.msra.mxu0 0
      %3483 = vmatprep.subr.bf16.mxu0 0
      %3484 = vmatpush2.bf16.msra.mxu0 0
      %3485 = vmatprep.subr.bf16.mxu0 0
      %3486 = vmatpush2.bf16.msra.mxu0 0
      %3487 = vmatprep.subr.bf16.mxu0 0
      %3488 = vmatpush2.bf16.msra.mxu0 0
      %3489 = vmatprep.subr.bf16.mxu0 0
      %3490 = vmatpush2.bf16.msra.mxu0 0
      %3491 = vmatprep.subr.bf16.mxu0 0
      %3492 = vmatpush2.bf16.msra.mxu0 0
      %3493 = vmatprep.subr.bf16.mxu0 0
      %3494 = vmatpush2.bf16.msra.mxu0 0
      %3495 = vmatprep.mubr.bf16.mxu0 0
      %3496 = vmatmul.mubr.bf16.gmra.mxu0 %v3392
      %v3497 = vpop.f32.mrf.mxu0
      %v3498 = vadd.f32 0.0, %v3497
      %v3499 = vpop.f32.mrf.mxu0
      %v3500 = vpop.f32.mrf.mxu0
      %v3501 = vadd.f32 0.0, %v3500
      %v3502 = vpop.f32.mrf.mxu0
      %3503 = vmatprep.mubr.bf16.mxu0 0
      %3504 = vmatmul.mubr.bf16.gmra.mxu0 %v3396
      %v3505 = vpop.f32.mrf.mxu0
      %v3506 = vadd.f32 0.0, %v3505
      %v3507 = vpop.f32.mrf.mxu0
      %v3508 = vpop.f32.mrf.mxu0
      %v3509 = vadd.f32 0.0, %v3508
      %v3510 = vpop.f32.mrf.mxu0
      %3511 = vmatprep.mubr.bf16.mxu0 0
      %3512 = vmatmul.mubr.bf16.gmra.mxu0 %v3400
      %v3513 = vpop.f32.mrf.mxu0
      %v3514 = vadd.f32 0.0, %v3513
      %v3515 = vpop.f32.mrf.mxu0
      %v3516 = vpop.f32.mrf.mxu0
      %v3517 = vadd.f32 0.0, %v3516
      %v3518 = vpop.f32.mrf.mxu0
      %3519 = vmatprep.mubr.bf16.mxu0 0
      %3520 = vmatmul.mubr.bf16.gmra.mxu0 %v3409
      %v3521 = vpop.f32.mrf.mxu0
      %v3522 = vadd.f32 0.0, %v3521
      %v3523 = vpop.f32.mrf.mxu0
      %v3524 = vpop.f32.mrf.mxu0
      %v3525 = vadd.f32 0.0, %v3524
      %v3526 = vpop.f32.mrf.mxu0
      %3527 = vmatprep.mubr.bf16.mxu0 0
      %3528 = vmatmul.mubr.bf16.gmra.mxu0 %v3408
      %v3529 = vpop.f32.mrf.mxu0
      %v3530 = vadd.f32 0.0, %v3529
      %v3531 = vpop.f32.mrf.mxu0
      %v3532 = vpop.f32.mrf.mxu0
      %v3533 = vadd.f32 0.0, %v3532
      %v3534 = vpop.f32.mrf.mxu0
      %3535 = vdwg.mxu0
      %v3536 = vadd.f32 %v3354, %v3498
      %v3537 = vadd.f32 %v3355, %v3501
      %v3538 = vadd.f32 %v3356, %v3506
      %v3539 = vadd.f32 %v3357, %v3509
      %v3540 = vadd.f32 %v3358, %v3514
      %v3541 = vadd.f32 %v3359, %v3517
      %v3542 = vadd.f32 %v3360, %v3522
      %v3543 = vadd.f32 %v3361, %v3525
      %v3544 = vadd.f32 %v3362, %v3530
      %v3545 = vadd.f32 %v3363, %v3533
      %v3546 = vld [vmem:[%s165 + $0x10] sm:$0xc]
      %v3547 = vld [vmem:[%s165 + $0x34] sm:$0x7]
      %s3548 = scalar_lea.vmem %s1, 1152
      %v3549 = vld [vmem:[%s3548] sm:$0xf]
      %v3550 = vld [vmem:[%s3548 + $0x4] sm:$0xf]
      %v3551 = vld [vmem:[%s3548 + $0x8] sm:$0xf]
      %v3552 = vld [vmem:[%s3548 + $0xc] sm:$0xf]
      %v3553 = vld [vmem:[%s3548 + $0x10] sm:$0xf]
      %v3554 = vld [vmem:[%s3548 + $0x14] sm:$0xf]
      %v3555 = vld [vmem:[%s3548 + $0x18] sm:$0xf]
      %v3556 = vld [vmem:[%s3548 + $0x1c] sm:$0xf]
      %v3557 = vld [vmem:[%s3548 + $0x20] sm:$0xf]
      %v3558 = vld [vmem:[%s3548 + $0x24] sm:$0xf]
      %v3559 = vld [vmem:[%s3548 + $0x28] sm:$0xf]
      %v3560 = vld [vmem:[%s3548 + $0x2c] sm:$0xf]
      %v3561 = vld [vmem:[%s3548 + $0x30] sm:$0xf]
      %v3562 = vld [vmem:[%s3548 + $0x34] sm:$0xf]
      %v3563 = vld [vmem:[%s3548 + $0x38] sm:$0xf]
      %v3564 = vld [vmem:[%s3548 + $0x3c] sm:$0xf]
      %v3567 = vunpack.c.l.b16 %v3546
      %v3568 = vunpack.c.l.b16 %v3547
      %v3569 = vpack.c.b16 %v3005, %v3567
      %v3570 = vpack.c.b16 %v3568, %v3012
      %v3571 = vrot.slane %v3569, 2
      %v3572 = vrot.slane %v3015, 2
      %v3573 = vsel %vm938, %v3571, %v3572
      %v3574 = vrot.slane %v3016, 2
      %v3575 = vsel %vm938, %v3572, %v3574
      %v3576 = vrot.slane %v3017, 2
      %v3577 = vsel %vm938, %v3574, %v3576
      %v3578 = vrot.slane %v3570, 2
      %v3579 = vsel %vm938, %v3576, %v3578
      %v3601 = vunpack.c.l.b16 %v3549
      %v3602 = vunpack.c.l.b16 %v3550
      %v3603 = vunpack.c.l.b16 %v3551
      %v3604 = vunpack.c.l.b16 %v3552
      %v3605 = vunpack.c.l.b16 %v3553
      %v3606 = vunpack.c.l.b16 %v3554
      %v3607 = vunpack.c.l.b16 %v3555
      %v3608 = vunpack.c.l.b16 %v3556
      %v3609 = vunpack.c.l.b16 %v3557
      %v3610 = vunpack.c.l.b16 %v3558
      %v3611 = vunpack.c.l.b16 %v3559
      %v3612 = vunpack.c.l.b16 %v3560
      %v3613 = vunpack.c.l.b16 %v3561
      %v3614 = vunpack.c.l.b16 %v3562
      %v3615 = vunpack.c.l.b16 %v3563
      %v3616 = vunpack.c.l.b16 %v3564
      %v3617 = vpack.c.b16 %v3602, %v3601
      %v3618 = vpack.c.b16 %v3604, %v3603
      %v3619 = vpack.c.b16 %v3606, %v3605
      %v3620 = vpack.c.b16 %v3608, %v3607
      %v3621 = vpack.c.b16 %v3610, %v3609
      %v3622 = vpack.c.b16 %v3612, %v3611
      %v3623 = vpack.c.b16 %v3614, %v3613
      %v3624 = vpack.c.b16 %v3616, %v3615
      %3633 = vmatprep.subr.bf16.mxu0 0
      %3634 = vmatpush1.bf16.msra.mxu0 %v3624
      %3635 = vmatprep.subr.bf16.mxu0 0
      %3636 = vmatpush1.bf16.msra.mxu0 %v3623
      %3637 = vmatprep.subr.bf16.mxu0 0
      %3638 = vmatpush1.bf16.msra.mxu0 %v3622
      %3639 = vmatprep.subr.bf16.mxu0 0
      %3640 = vmatpush1.bf16.msra.mxu0 %v3621
      %3641 = vmatprep.subr.bf16.mxu0 0
      %3642 = vmatpush1.bf16.msra.mxu0 %v3620
      %3643 = vmatprep.subr.bf16.mxu0 0
      %3644 = vmatpush1.bf16.msra.mxu0 %v3619
      %3645 = vmatprep.subr.bf16.mxu0 0
      %3646 = vmatpush1.bf16.msra.mxu0 %v3618
      %3647 = vmatprep.subr.bf16.mxu0 0
      %3648 = vmatpush1.bf16.msra.mxu0 %v3617
      %3649 = vmatprep.subr.bf16.mxu0 0
      %3650 = vmatpush2.bf16.msra.mxu0 0
      %3651 = vmatprep.subr.bf16.mxu0 0
      %3652 = vmatpush2.bf16.msra.mxu0 0
      %3653 = vmatprep.subr.bf16.mxu0 0
      %3654 = vmatpush2.bf16.msra.mxu0 0
      %3655 = vmatprep.subr.bf16.mxu0 0
      %3656 = vmatpush2.bf16.msra.mxu0 0
      %3657 = vmatprep.subr.bf16.mxu0 0
      %3658 = vmatpush2.bf16.msra.mxu0 0
      %3659 = vmatprep.subr.bf16.mxu0 0
      %3660 = vmatpush2.bf16.msra.mxu0 0
      %3661 = vmatprep.subr.bf16.mxu0 0
      %3662 = vmatpush2.bf16.msra.mxu0 0
      %3663 = vmatprep.subr.bf16.mxu0 0
      %3664 = vmatpush2.bf16.msra.mxu0 0
      %3665 = vmatprep.mubr.bf16.mxu0 0
      %3666 = vmatmul.mubr.bf16.gmra.mxu0 %v3573
      %v3667 = vpop.f32.mrf.mxu0
      %v3668 = vadd.f32 0.0, %v3667
      %v3669 = vpop.f32.mrf.mxu0
      %v3670 = vpop.f32.mrf.mxu0
      %v3671 = vadd.f32 0.0, %v3670
      %v3672 = vpop.f32.mrf.mxu0
      %3673 = vmatprep.mubr.bf16.mxu0 0
      %3674 = vmatmul.mubr.bf16.gmra.mxu0 %v3575
      %v3675 = vpop.f32.mrf.mxu0
      %v3676 = vadd.f32 0.0, %v3675
      %v3677 = vpop.f32.mrf.mxu0
      %v3678 = vpop.f32.mrf.mxu0
      %v3679 = vadd.f32 0.0, %v3678
      %v3680 = vpop.f32.mrf.mxu0
      %3681 = vmatprep.mubr.bf16.mxu0 0
      %3682 = vmatmul.mubr.bf16.gmra.mxu0 %v3577
      %v3683 = vpop.f32.mrf.mxu0
      %v3684 = vadd.f32 0.0, %v3683
      %v3685 = vpop.f32.mrf.mxu0
      %v3686 = vpop.f32.mrf.mxu0
      %v3687 = vadd.f32 0.0, %v3686
      %v3688 = vpop.f32.mrf.mxu0
      %3689 = vmatprep.mubr.bf16.mxu0 0
      %3690 = vmatmul.mubr.bf16.gmra.mxu0 %v3579
      %v3691 = vpop.f32.mrf.mxu0
      %v3692 = vadd.f32 0.0, %v3691
      %v3693 = vpop.f32.mrf.mxu0
      %v3694 = vpop.f32.mrf.mxu0
      %v3695 = vadd.f32 0.0, %v3694
      %v3696 = vpop.f32.mrf.mxu0
      %3697 = vmatprep.mubr.bf16.mxu0 0
      %3698 = vmatmul.mubr.bf16.gmra.mxu0 %v3578
      %v3699 = vpop.f32.mrf.mxu0
      %v3700 = vadd.f32 0.0, %v3699
      %v3701 = vpop.f32.mrf.mxu0
      %v3702 = vpop.f32.mrf.mxu0
      %v3703 = vadd.f32 0.0, %v3702
      %v3704 = vpop.f32.mrf.mxu0
      %3705 = vdwg.mxu0
      %v3706 = vadd.f32 %v3536, %v3668
      %v3707 = vadd.f32 %v3537, %v3671
      %v3708 = vadd.f32 %v3538, %v3676
      %v3709 = vadd.f32 %v3539, %v3679
      %v3710 = vadd.f32 %v3540, %v3684
      %v3711 = vadd.f32 %v3541, %v3687
      %v3712 = vadd.f32 %v3542, %v3692
      %v3713 = vadd.f32 %v3543, %v3695
      %v3714 = vadd.f32 %v3544, %v3700
      %v3715 = vadd.f32 %v3545, %v3703
      %s3716 = scalar_lea.vmem %s1, 1216
      %v3717 = vld [vmem:[%s3716] sm:$0xf]
      %v3718 = vld [vmem:[%s3716 + $0x4] sm:$0xf]
      %v3719 = vld [vmem:[%s3716 + $0x8] sm:$0xf]
      %v3720 = vld [vmem:[%s3716 + $0xc] sm:$0xf]
      %v3721 = vld [vmem:[%s3716 + $0x10] sm:$0xf]
      %v3722 = vld [vmem:[%s3716 + $0x14] sm:$0xf]
      %v3723 = vld [vmem:[%s3716 + $0x18] sm:$0xf]
      %v3724 = vld [vmem:[%s3716 + $0x1c] sm:$0xf]
      %v3725 = vld [vmem:[%s3716 + $0x20] sm:$0xf]
      %v3726 = vld [vmem:[%s3716 + $0x24] sm:$0xf]
      %v3727 = vld [vmem:[%s3716 + $0x28] sm:$0xf]
      %v3728 = vld [vmem:[%s3716 + $0x2c] sm:$0xf]
      %v3729 = vld [vmem:[%s3716 + $0x30] sm:$0xf]
      %v3730 = vld [vmem:[%s3716 + $0x34] sm:$0xf]
      %v3731 = vld [vmem:[%s3716 + $0x38] sm:$0xf]
      %v3732 = vld [vmem:[%s3716 + $0x3c] sm:$0xf]
      %v3734 = vshrl.u32 %v3569, 16
      %v3736 = vrot.slane %v3734, 2
      %v3737 = vshll.u32 %v3569, 16
      %v3739 = vrot.slane %v3737, 3
      %v3740 = vor.u32 %v3736, %v3739
      %v3741 = vrot.slane %v3031, 2
      %v3742 = vrot.slane %v3027, 3
      %v3743 = vor.u32 %v3741, %v3742
      %v3744 = vsel %vm1503, %v3740, %v3743
      %v3745 = vrot.slane %v3039, 2
      %v3746 = vrot.slane %v3035, 3
      %v3747 = vor.u32 %v3745, %v3746
      %v3748 = vsel %vm1503, %v3743, %v3747
      %v3749 = vrot.slane %v3047, 2
      %v3750 = vrot.slane %v3043, 3
      %v3751 = vor.u32 %v3749, %v3750
      %v3752 = vsel %vm1503, %v3747, %v3751
      %v3754 = vshrl.u32 %v3570, 16
      %v3756 = vrot.slane %v3754, 2
      %v3757 = vshll.u32 %v3570, 16
      %v3759 = vrot.slane %v3757, 3
      %v3760 = vor.u32 %v3756, %v3759
      %v3761 = vsel %vm1503, %v3751, %v3760
      %v3783 = vunpack.c.l.b16 %v3717
      %v3784 = vunpack.c.l.b16 %v3718
      %v3785 = vunpack.c.l.b16 %v3719
      %v3786 = vunpack.c.l.b16 %v3720
      %v3787 = vunpack.c.l.b16 %v3721
      %v3788 = vunpack.c.l.b16 %v3722
      %v3789 = vunpack.c.l.b16 %v3723
      %v3790 = vunpack.c.l.b16 %v3724
      %v3791 = vunpack.c.l.b16 %v3725
      %v3792 = vunpack.c.l.b16 %v3726
      %v3793 = vunpack.c.l.b16 %v3727
      %v3794 = vunpack.c.l.b16 %v3728
      %v3795 = vunpack.c.l.b16 %v3729
      %v3796 = vunpack.c.l.b16 %v3730
      %v3797 = vunpack.c.l.b16 %v3731
      %v3798 = vunpack.c.l.b16 %v3732
      %v3799 = vpack.c.b16 %v3784, %v3783
      %v3800 = vpack.c.b16 %v3786, %v3785
      %v3801 = vpack.c.b16 %v3788, %v3787
      %v3802 = vpack.c.b16 %v3790, %v3789
      %v3803 = vpack.c.b16 %v3792, %v3791
      %v3804 = vpack.c.b16 %v3794, %v3793
      %v3805 = vpack.c.b16 %v3796, %v3795
      %v3806 = vpack.c.b16 %v3798, %v3797
      %3815 = vmatprep.subr.bf16.mxu0 0
      %3816 = vmatpush1.bf16.msra.mxu0 %v3806
      %3817 = vmatprep.subr.bf16.mxu0 0
      %3818 = vmatpush1.bf16.msra.mxu0 %v3805
      %3819 = vmatprep.subr.bf16.mxu0 0
      %3820 = vmatpush1.bf16.msra.mxu0 %v3804
      %3821 = vmatprep.subr.bf16.mxu0 0
      %3822 = vmatpush1.bf16.msra.mxu0 %v3803
      %3823 = vmatprep.subr.bf16.mxu0 0
      %3824 = vmatpush1.bf16.msra.mxu0 %v3802
      %3825 = vmatprep.subr.bf16.mxu0 0
      %3826 = vmatpush1.bf16.msra.mxu0 %v3801
      %3827 = vmatprep.subr.bf16.mxu0 0
      %3828 = vmatpush1.bf16.msra.mxu0 %v3800
      %3829 = vmatprep.subr.bf16.mxu0 0
      %3830 = vmatpush1.bf16.msra.mxu0 %v3799
      %3831 = vmatprep.subr.bf16.mxu0 0
      %3832 = vmatpush2.bf16.msra.mxu0 0
      %3833 = vmatprep.subr.bf16.mxu0 0
      %3834 = vmatpush2.bf16.msra.mxu0 0
      %3835 = vmatprep.subr.bf16.mxu0 0
      %3836 = vmatpush2.bf16.msra.mxu0 0
      %3837 = vmatprep.subr.bf16.mxu0 0
      %3838 = vmatpush2.bf16.msra.mxu0 0
      %3839 = vmatprep.subr.bf16.mxu0 0
      %3840 = vmatpush2.bf16.msra.mxu0 0
      %3841 = vmatprep.subr.bf16.mxu0 0
      %3842 = vmatpush2.bf16.msra.mxu0 0
      %3843 = vmatprep.subr.bf16.mxu0 0
      %3844 = vmatpush2.bf16.msra.mxu0 0
      %3845 = vmatprep.subr.bf16.mxu0 0
      %3846 = vmatpush2.bf16.msra.mxu0 0
      %3847 = vmatprep.mubr.bf16.mxu0 0
      %3848 = vmatmul.mubr.bf16.gmra.mxu0 %v3744
      %v3849 = vpop.f32.mrf.mxu0
      %v3850 = vadd.f32 0.0, %v3849
      %v3851 = vpop.f32.mrf.mxu0
      %v3852 = vpop.f32.mrf.mxu0
      %v3853 = vadd.f32 0.0, %v3852
      %v3854 = vpop.f32.mrf.mxu0
      %3855 = vmatprep.mubr.bf16.mxu0 0
      %3856 = vmatmul.mubr.bf16.gmra.mxu0 %v3748
      %v3857 = vpop.f32.mrf.mxu0
      %v3858 = vadd.f32 0.0, %v3857
      %v3859 = vpop.f32.mrf.mxu0
      %v3860 = vpop.f32.mrf.mxu0
      %v3861 = vadd.f32 0.0, %v3860
      %v3862 = vpop.f32.mrf.mxu0
      %3863 = vmatprep.mubr.bf16.mxu0 0
      %3864 = vmatmul.mubr.bf16.gmra.mxu0 %v3752
      %v3865 = vpop.f32.mrf.mxu0
      %v3866 = vadd.f32 0.0, %v3865
      %v3867 = vpop.f32.mrf.mxu0
      %v3868 = vpop.f32.mrf.mxu0
      %v3869 = vadd.f32 0.0, %v3868
      %v3870 = vpop.f32.mrf.mxu0
      %3871 = vmatprep.mubr.bf16.mxu0 0
      %3872 = vmatmul.mubr.bf16.gmra.mxu0 %v3761
      %v3873 = vpop.f32.mrf.mxu0
      %v3874 = vadd.f32 0.0, %v3873
      %v3875 = vpop.f32.mrf.mxu0
      %v3876 = vpop.f32.mrf.mxu0
      %v3877 = vadd.f32 0.0, %v3876
      %v3878 = vpop.f32.mrf.mxu0
      %3879 = vmatprep.mubr.bf16.mxu0 0
      %3880 = vmatmul.mubr.bf16.gmra.mxu0 %v3760
      %v3881 = vpop.f32.mrf.mxu0
      %v3882 = vadd.f32 0.0, %v3881
      %v3883 = vpop.f32.mrf.mxu0
      %v3884 = vpop.f32.mrf.mxu0
      %v3885 = vadd.f32 0.0, %v3884
      %v3886 = vpop.f32.mrf.mxu0
      %3887 = vdwg.mxu0
      %v3888 = vadd.f32 %v3706, %v3850
      %v3889 = vadd.f32 %v3707, %v3853
      %v3890 = vadd.f32 %v3708, %v3858
      %v3891 = vadd.f32 %v3709, %v3861
      %v3892 = vadd.f32 %v3710, %v3866
      %v3893 = vadd.f32 %v3711, %v3869
      %v3894 = vadd.f32 %v3712, %v3874
      %v3895 = vadd.f32 %v3713, %v3877
      %v3896 = vadd.f32 %v3714, %v3882
      %v3897 = vadd.f32 %v3715, %v3885
      %v3898 = vld [vmem:[%s165 + $0x14] sm:$0xc]
      %v3899 = vld [vmem:[%s165 + $0x18] sm:$0xf]
      %v3900 = vld [vmem:[%s165 + $0x1c] sm:$0xf]
      %v3901 = vld [vmem:[%s165 + $0x20] sm:$0xf]
      %v3902 = vld [vmem:[%s165 + $0x24] sm:$0xf]
      %v3903 = vld [vmem:[%s165 + $0x28] sm:$0xf]
      %v3904 = vld [vmem:[%s165 + $0x2c] sm:$0xf]
      %v3905 = vld [vmem:[%s165 + $0x30] sm:$0xf]
      %v3906 = vld [vmem:[%s165 + $0x34] sm:$0xf]
      %v3907 = vld [vmem:[%s165 + $0x38] sm:$0x7]
      %s3908 = scalar_lea.vmem %s1, 1280
      %v3909 = vld [vmem:[%s3908] sm:$0xf]
      %v3910 = vld [vmem:[%s3908 + $0x4] sm:$0xf]
      %v3911 = vld [vmem:[%s3908 + $0x8] sm:$0xf]
      %v3912 = vld [vmem:[%s3908 + $0xc] sm:$0xf]
      %v3913 = vld [vmem:[%s3908 + $0x10] sm:$0xf]
      %v3914 = vld [vmem:[%s3908 + $0x14] sm:$0xf]
      %v3915 = vld [vmem:[%s3908 + $0x18] sm:$0xf]
      %v3916 = vld [vmem:[%s3908 + $0x1c] sm:$0xf]
      %v3917 = vld [vmem:[%s3908 + $0x20] sm:$0xf]
      %v3918 = vld [vmem:[%s3908 + $0x24] sm:$0xf]
      %v3919 = vld [vmem:[%s3908 + $0x28] sm:$0xf]
      %v3920 = vld [vmem:[%s3908 + $0x2c] sm:$0xf]
      %v3921 = vld [vmem:[%s3908 + $0x30] sm:$0xf]
      %v3922 = vld [vmem:[%s3908 + $0x34] sm:$0xf]
      %v3923 = vld [vmem:[%s3908 + $0x38] sm:$0xf]
      %v3924 = vld [vmem:[%s3908 + $0x3c] sm:$0xf]
      %v3935 = vunpack.c.l.b16 %v3898
      %v3936 = vunpack.c.l.b16 %v3899
      %v3937 = vunpack.c.l.b16 %v3900
      %v3938 = vunpack.c.l.b16 %v3901
      %v3939 = vunpack.c.l.b16 %v3902
      %v3940 = vunpack.c.l.b16 %v3903
      %v3941 = vunpack.c.l.b16 %v3904
      %v3942 = vunpack.c.l.b16 %v3905
      %v3943 = vunpack.c.l.b16 %v3906
      %v3944 = vunpack.c.l.b16 %v3907
      %v3945 = vpack.c.b16 %v3936, %v3935
      %v3946 = vpack.c.b16 %v3938, %v3937
      %v3947 = vpack.c.b16 %v3940, %v3939
      %v3948 = vpack.c.b16 %v3942, %v3941
      %v3949 = vpack.c.b16 %v3944, %v3943
      %v3950 = vrot.slane %v3945, 2
      %v3951 = vrot.slane %v3946, 2
      %v3952 = vsel %vm938, %v3950, %v3951
      %v3953 = vrot.slane %v3947, 2
      %v3954 = vsel %vm938, %v3951, %v3953
      %v3955 = vrot.slane %v3948, 2
      %v3956 = vsel %vm938, %v3953, %v3955
      %v3957 = vrot.slane %v3949, 2
      %v3958 = vsel %vm938, %v3955, %v3957
      %v3980 = vunpack.c.l.b16 %v3909
      %v3981 = vunpack.c.l.b16 %v3910
      %v3982 = vunpack.c.l.b16 %v3911
      %v3983 = vunpack.c.l.b16 %v3912
      %v3984 = vunpack.c.l.b16 %v3913
      %v3985 = vunpack.c.l.b16 %v3914
      %v3986 = vunpack.c.l.b16 %v3915
      %v3987 = vunpack.c.l.b16 %v3916
      %v3988 = vunpack.c.l.b16 %v3917
      %v3989 = vunpack.c.l.b16 %v3918
      %v3990 = vunpack.c.l.b16 %v3919
      %v3991 = vunpack.c.l.b16 %v3920
      %v3992 = vunpack.c.l.b16 %v3921
      %v3993 = vunpack.c.l.b16 %v3922
      %v3994 = vunpack.c.l.b16 %v3923
      %v3995 = vunpack.c.l.b16 %v3924
      %v3996 = vpack.c.b16 %v3981, %v3980
      %v3997 = vpack.c.b16 %v3983, %v3982
      %v3998 = vpack.c.b16 %v3985, %v3984
      %v3999 = vpack.c.b16 %v3987, %v3986
      %v4000 = vpack.c.b16 %v3989, %v3988
      %v4001 = vpack.c.b16 %v3991, %v3990
      %v4002 = vpack.c.b16 %v3993, %v3992
      %v4003 = vpack.c.b16 %v3995, %v3994
      %4012 = vmatprep.subr.bf16.mxu0 0
      %4013 = vmatpush1.bf16.msra.mxu0 %v4003
      %4014 = vmatprep.subr.bf16.mxu0 0
      %4015 = vmatpush1.bf16.msra.mxu0 %v4002
      %4016 = vmatprep.subr.bf16.mxu0 0
      %4017 = vmatpush1.bf16.msra.mxu0 %v4001
      %4018 = vmatprep.subr.bf16.mxu0 0
      %4019 = vmatpush1.bf16.msra.mxu0 %v4000
      %4020 = vmatprep.subr.bf16.mxu0 0
      %4021 = vmatpush1.bf16.msra.mxu0 %v3999
      %4022 = vmatprep.subr.bf16.mxu0 0
      %4023 = vmatpush1.bf16.msra.mxu0 %v3998
      %4024 = vmatprep.subr.bf16.mxu0 0
      %4025 = vmatpush1.bf16.msra.mxu0 %v3997
      %4026 = vmatprep.subr.bf16.mxu0 0
      %4027 = vmatpush1.bf16.msra.mxu0 %v3996
      %4028 = vmatprep.subr.bf16.mxu0 0
      %4029 = vmatpush2.bf16.msra.mxu0 0
      %4030 = vmatprep.subr.bf16.mxu0 0
      %4031 = vmatpush2.bf16.msra.mxu0 0
      %4032 = vmatprep.subr.bf16.mxu0 0
      %4033 = vmatpush2.bf16.msra.mxu0 0
      %4034 = vmatprep.subr.bf16.mxu0 0
      %4035 = vmatpush2.bf16.msra.mxu0 0
      %4036 = vmatprep.subr.bf16.mxu0 0
      %4037 = vmatpush2.bf16.msra.mxu0 0
      %4038 = vmatprep.subr.bf16.mxu0 0
      %4039 = vmatpush2.bf16.msra.mxu0 0
      %4040 = vmatprep.subr.bf16.mxu0 0
      %4041 = vmatpush2.bf16.msra.mxu0 0
      %4042 = vmatprep.subr.bf16.mxu0 0
      %4043 = vmatpush2.bf16.msra.mxu0 0
      %4044 = vmatprep.mubr.bf16.mxu0 0
      %4045 = vmatmul.mubr.bf16.gmra.mxu0 %v3952
      %v4046 = vpop.f32.mrf.mxu0
      %v4047 = vadd.f32 0.0, %v4046
      %v4048 = vpop.f32.mrf.mxu0
      %v4049 = vpop.f32.mrf.mxu0
      %v4050 = vadd.f32 0.0, %v4049
      %v4051 = vpop.f32.mrf.mxu0
      %4052 = vmatprep.mubr.bf16.mxu0 0
      %4053 = vmatmul.mubr.bf16.gmra.mxu0 %v3954
      %v4054 = vpop.f32.mrf.mxu0
      %v4055 = vadd.f32 0.0, %v4054
      %v4056 = vpop.f32.mrf.mxu0
      %v4057 = vpop.f32.mrf.mxu0
      %v4058 = vadd.f32 0.0, %v4057
      %v4059 = vpop.f32.mrf.mxu0
      %4060 = vmatprep.mubr.bf16.mxu0 0
      %4061 = vmatmul.mubr.bf16.gmra.mxu0 %v3956
      %v4062 = vpop.f32.mrf.mxu0
      %v4063 = vadd.f32 0.0, %v4062
      %v4064 = vpop.f32.mrf.mxu0
      %v4065 = vpop.f32.mrf.mxu0
      %v4066 = vadd.f32 0.0, %v4065
      %v4067 = vpop.f32.mrf.mxu0
      %4068 = vmatprep.mubr.bf16.mxu0 0
      %4069 = vmatmul.mubr.bf16.gmra.mxu0 %v3958
      %v4070 = vpop.f32.mrf.mxu0
      %v4071 = vadd.f32 0.0, %v4070
      %v4072 = vpop.f32.mrf.mxu0
      %v4073 = vpop.f32.mrf.mxu0
      %v4074 = vadd.f32 0.0, %v4073
      %v4075 = vpop.f32.mrf.mxu0
      %4076 = vmatprep.mubr.bf16.mxu0 0
      %4077 = vmatmul.mubr.bf16.gmra.mxu0 %v3957
      %v4078 = vpop.f32.mrf.mxu0
      %v4079 = vadd.f32 0.0, %v4078
      %v4080 = vpop.f32.mrf.mxu0
      %v4081 = vpop.f32.mrf.mxu0
      %v4082 = vadd.f32 0.0, %v4081
      %v4083 = vpop.f32.mrf.mxu0
      %4084 = vdwg.mxu0
      %v4085 = vadd.f32 %v3888, %v4047
      %v4086 = vadd.f32 %v3889, %v4050
      %v4087 = vadd.f32 %v3890, %v4055
      %v4088 = vadd.f32 %v3891, %v4058
      %v4089 = vadd.f32 %v3892, %v4063
      %v4090 = vadd.f32 %v3893, %v4066
      %v4091 = vadd.f32 %v3894, %v4071
      %v4092 = vadd.f32 %v3895, %v4074
      %v4093 = vadd.f32 %v3896, %v4079
      %v4094 = vadd.f32 %v3897, %v4082
      %s4095 = scalar_lea.vmem %s1, 1344
      %v4096 = vld [vmem:[%s4095] sm:$0xf]
      %v4097 = vld [vmem:[%s4095 + $0x4] sm:$0xf]
      %v4098 = vld [vmem:[%s4095 + $0x8] sm:$0xf]
      %v4099 = vld [vmem:[%s4095 + $0xc] sm:$0xf]
      %v4100 = vld [vmem:[%s4095 + $0x10] sm:$0xf]
      %v4101 = vld [vmem:[%s4095 + $0x14] sm:$0xf]
      %v4102 = vld [vmem:[%s4095 + $0x18] sm:$0xf]
      %v4103 = vld [vmem:[%s4095 + $0x1c] sm:$0xf]
      %v4104 = vld [vmem:[%s4095 + $0x20] sm:$0xf]
      %v4105 = vld [vmem:[%s4095 + $0x24] sm:$0xf]
      %v4106 = vld [vmem:[%s4095 + $0x28] sm:$0xf]
      %v4107 = vld [vmem:[%s4095 + $0x2c] sm:$0xf]
      %v4108 = vld [vmem:[%s4095 + $0x30] sm:$0xf]
      %v4109 = vld [vmem:[%s4095 + $0x34] sm:$0xf]
      %v4110 = vld [vmem:[%s4095 + $0x38] sm:$0xf]
      %v4111 = vld [vmem:[%s4095 + $0x3c] sm:$0xf]
      %v4113 = vshrl.u32 %v3945, 16
      %v4115 = vrot.slane %v4113, 2
      %v4116 = vshll.u32 %v3945, 16
      %v4118 = vrot.slane %v4116, 3
      %v4119 = vor.u32 %v4115, %v4118
      %v4121 = vshrl.u32 %v3946, 16
      %v4123 = vrot.slane %v4121, 2
      %v4124 = vshll.u32 %v3946, 16
      %v4126 = vrot.slane %v4124, 3
      %v4127 = vor.u32 %v4123, %v4126
      %v4128 = vsel %vm1503, %v4119, %v4127
      %v4130 = vshrl.u32 %v3947, 16
      %v4132 = vrot.slane %v4130, 2
      %v4133 = vshll.u32 %v3947, 16
      %v4135 = vrot.slane %v4133, 3
      %v4136 = vor.u32 %v4132, %v4135
      %v4137 = vsel %vm1503, %v4127, %v4136
      %v4139 = vshrl.u32 %v3948, 16
      %v4141 = vrot.slane %v4139, 2
      %v4142 = vshll.u32 %v3948, 16
      %v4144 = vrot.slane %v4142, 3
      %v4145 = vor.u32 %v4141, %v4144
      %v4146 = vsel %vm1503, %v4136, %v4145
      %v4148 = vshrl.u32 %v3949, 16
      %v4150 = vrot.slane %v4148, 2
      %v4151 = vshll.u32 %v3949, 16
      %v4153 = vrot.slane %v4151, 3
      %v4154 = vor.u32 %v4150, %v4153
      %v4155 = vsel %vm1503, %v4145, %v4154
      %v4177 = vunpack.c.l.b16 %v4096
      %v4178 = vunpack.c.l.b16 %v4097
      %v4179 = vunpack.c.l.b16 %v4098
      %v4180 = vunpack.c.l.b16 %v4099
      %v4181 = vunpack.c.l.b16 %v4100
      %v4182 = vunpack.c.l.b16 %v4101
      %v4183 = vunpack.c.l.b16 %v4102
      %v4184 = vunpack.c.l.b16 %v4103
      %v4185 = vunpack.c.l.b16 %v4104
      %v4186 = vunpack.c.l.b16 %v4105
      %v4187 = vunpack.c.l.b16 %v4106
      %v4188 = vunpack.c.l.b16 %v4107
      %v4189 = vunpack.c.l.b16 %v4108
      %v4190 = vunpack.c.l.b16 %v4109
      %v4191 = vunpack.c.l.b16 %v4110
      %v4192 = vunpack.c.l.b16 %v4111
      %v4193 = vpack.c.b16 %v4178, %v4177
      %v4194 = vpack.c.b16 %v4180, %v4179
      %v4195 = vpack.c.b16 %v4182, %v4181
      %v4196 = vpack.c.b16 %v4184, %v4183
      %v4197 = vpack.c.b16 %v4186, %v4185
      %v4198 = vpack.c.b16 %v4188, %v4187
      %v4199 = vpack.c.b16 %v4190, %v4189
      %v4200 = vpack.c.b16 %v4192, %v4191
      %4209 = vmatprep.subr.bf16.mxu0 0
      %4210 = vmatpush1.bf16.msra.mxu0 %v4200
      %4211 = vmatprep.subr.bf16.mxu0 0
      %4212 = vmatpush1.bf16.msra.mxu0 %v4199
      %4213 = vmatprep.subr.bf16.mxu0 0
      %4214 = vmatpush1.bf16.msra.mxu0 %v4198
      %4215 = vmatprep.subr.bf16.mxu0 0
      %4216 = vmatpush1.bf16.msra.mxu0 %v4197
      %4217 = vmatprep.subr.bf16.mxu0 0
      %4218 = vmatpush1.bf16.msra.mxu0 %v4196
      %4219 = vmatprep.subr.bf16.mxu0 0
      %4220 = vmatpush1.bf16.msra.mxu0 %v4195
      %4221 = vmatprep.subr.bf16.mxu0 0
      %4222 = vmatpush1.bf16.msra.mxu0 %v4194
      %4223 = vmatprep.subr.bf16.mxu0 0
      %4224 = vmatpush1.bf16.msra.mxu0 %v4193
      %4225 = vmatprep.subr.bf16.mxu0 0
      %4226 = vmatpush2.bf16.msra.mxu0 0
      %4227 = vmatprep.subr.bf16.mxu0 0
      %4228 = vmatpush2.bf16.msra.mxu0 0
      %4229 = vmatprep.subr.bf16.mxu0 0
      %4230 = vmatpush2.bf16.msra.mxu0 0
      %4231 = vmatprep.subr.bf16.mxu0 0
      %4232 = vmatpush2.bf16.msra.mxu0 0
      %4233 = vmatprep.subr.bf16.mxu0 0
      %4234 = vmatpush2.bf16.msra.mxu0 0
      %4235 = vmatprep.subr.bf16.mxu0 0
      %4236 = vmatpush2.bf16.msra.mxu0 0
      %4237 = vmatprep.subr.bf16.mxu0 0
      %4238 = vmatpush2.bf16.msra.mxu0 0
      %4239 = vmatprep.subr.bf16.mxu0 0
      %4240 = vmatpush2.bf16.msra.mxu0 0
      %4241 = vmatprep.mubr.bf16.mxu0 0
      %4242 = vmatmul.mubr.bf16.gmra.mxu0 %v4128
      %v4243 = vpop.f32.mrf.mxu0
      %v4244 = vadd.f32 0.0, %v4243
      %v4245 = vpop.f32.mrf.mxu0
      %v4246 = vpop.f32.mrf.mxu0
      %v4247 = vadd.f32 0.0, %v4246
      %v4248 = vpop.f32.mrf.mxu0
      %4249 = vmatprep.mubr.bf16.mxu0 0
      %4250 = vmatmul.mubr.bf16.gmra.mxu0 %v4137
      %v4251 = vpop.f32.mrf.mxu0
      %v4252 = vadd.f32 0.0, %v4251
      %v4253 = vpop.f32.mrf.mxu0
      %v4254 = vpop.f32.mrf.mxu0
      %v4255 = vadd.f32 0.0, %v4254
      %v4256 = vpop.f32.mrf.mxu0
      %4257 = vmatprep.mubr.bf16.mxu0 0
      %4258 = vmatmul.mubr.bf16.gmra.mxu0 %v4146
      %v4259 = vpop.f32.mrf.mxu0
      %v4260 = vadd.f32 0.0, %v4259
      %v4261 = vpop.f32.mrf.mxu0
      %v4262 = vpop.f32.mrf.mxu0
      %v4263 = vadd.f32 0.0, %v4262
      %v4264 = vpop.f32.mrf.mxu0
      %4265 = vmatprep.mubr.bf16.mxu0 0
      %4266 = vmatmul.mubr.bf16.gmra.mxu0 %v4155
      %v4267 = vpop.f32.mrf.mxu0
      %v4268 = vadd.f32 0.0, %v4267
      %v4269 = vpop.f32.mrf.mxu0
      %v4270 = vpop.f32.mrf.mxu0
      %v4271 = vadd.f32 0.0, %v4270
      %v4272 = vpop.f32.mrf.mxu0
      %4273 = vmatprep.mubr.bf16.mxu0 0
      %4274 = vmatmul.mubr.bf16.gmra.mxu0 %v4154
      %v4275 = vpop.f32.mrf.mxu0
      %v4276 = vadd.f32 0.0, %v4275
      %v4277 = vpop.f32.mrf.mxu0
      %v4278 = vpop.f32.mrf.mxu0
      %v4279 = vadd.f32 0.0, %v4278
      %v4280 = vpop.f32.mrf.mxu0
      %4281 = vdwg.mxu0
      %v4282 = vadd.f32 %v4085, %v4244
      %v4283 = vadd.f32 %v4086, %v4247
      %v4284 = vadd.f32 %v4087, %v4252
      %v4285 = vadd.f32 %v4088, %v4255
      %v4286 = vadd.f32 %v4089, %v4260
      %v4287 = vadd.f32 %v4090, %v4263
      %v4288 = vadd.f32 %v4091, %v4268
      %v4289 = vadd.f32 %v4092, %v4271
      %v4290 = vadd.f32 %v4093, %v4276
      %v4291 = vadd.f32 %v4094, %v4279
      %v4292 = vld [vmem:[%s165 + $0x14] sm:$0x8]
      %v4293 = vld [vmem:[%s165 + $0x38] sm:$0xf]
      %s4294 = scalar_lea.vmem %s1, 1408
      %v4295 = vld [vmem:[%s4294] sm:$0xf]
      %v4296 = vld [vmem:[%s4294 + $0x4] sm:$0xf]
      %v4297 = vld [vmem:[%s4294 + $0x8] sm:$0xf]
      %v4298 = vld [vmem:[%s4294 + $0xc] sm:$0xf]
      %v4299 = vld [vmem:[%s4294 + $0x10] sm:$0xf]
      %v4300 = vld [vmem:[%s4294 + $0x14] sm:$0xf]
      %v4301 = vld [vmem:[%s4294 + $0x18] sm:$0xf]
      %v4302 = vld [vmem:[%s4294 + $0x1c] sm:$0xf]
      %v4303 = vld [vmem:[%s4294 + $0x20] sm:$0xf]
      %v4304 = vld [vmem:[%s4294 + $0x24] sm:$0xf]
      %v4305 = vld [vmem:[%s4294 + $0x28] sm:$0xf]
      %v4306 = vld [vmem:[%s4294 + $0x2c] sm:$0xf]
      %v4307 = vld [vmem:[%s4294 + $0x30] sm:$0xf]
      %v4308 = vld [vmem:[%s4294 + $0x34] sm:$0xf]
      %v4309 = vld [vmem:[%s4294 + $0x38] sm:$0xf]
      %v4310 = vld [vmem:[%s4294 + $0x3c] sm:$0xf]
      %v4313 = vunpack.c.l.b16 %v4292
      %v4314 = vunpack.c.l.b16 %v4293
      %v4315 = vpack.c.b16 %v3936, %v4313
      %v4316 = vpack.c.b16 %v4314, %v3943
      %v4317 = vrot.slane %v4315, 3
      %v4318 = vrot.slane %v3946, 3
      %v4319 = vsel %vm1694, %v4317, %v4318
      %v4320 = vrot.slane %v3947, 3
      %v4321 = vsel %vm1694, %v4318, %v4320
      %v4322 = vrot.slane %v3948, 3
      %v4323 = vsel %vm1694, %v4320, %v4322
      %v4324 = vrot.slane %v4316, 3
      %v4325 = vsel %vm1694, %v4322, %v4324
      %v4347 = vunpack.c.l.b16 %v4295
      %v4348 = vunpack.c.l.b16 %v4296
      %v4349 = vunpack.c.l.b16 %v4297
      %v4350 = vunpack.c.l.b16 %v4298
      %v4351 = vunpack.c.l.b16 %v4299
      %v4352 = vunpack.c.l.b16 %v4300
      %v4353 = vunpack.c.l.b16 %v4301
      %v4354 = vunpack.c.l.b16 %v4302
      %v4355 = vunpack.c.l.b16 %v4303
      %v4356 = vunpack.c.l.b16 %v4304
      %v4357 = vunpack.c.l.b16 %v4305
      %v4358 = vunpack.c.l.b16 %v4306
      %v4359 = vunpack.c.l.b16 %v4307
      %v4360 = vunpack.c.l.b16 %v4308
      %v4361 = vunpack.c.l.b16 %v4309
      %v4362 = vunpack.c.l.b16 %v4310
      %v4363 = vpack.c.b16 %v4348, %v4347
      %v4364 = vpack.c.b16 %v4350, %v4349
      %v4365 = vpack.c.b16 %v4352, %v4351
      %v4366 = vpack.c.b16 %v4354, %v4353
      %v4367 = vpack.c.b16 %v4356, %v4355
      %v4368 = vpack.c.b16 %v4358, %v4357
      %v4369 = vpack.c.b16 %v4360, %v4359
      %v4370 = vpack.c.b16 %v4362, %v4361
      %4379 = vmatprep.subr.bf16.mxu0 0
      %4380 = vmatpush1.bf16.msra.mxu0 %v4370
      %4381 = vmatprep.subr.bf16.mxu0 0
      %4382 = vmatpush1.bf16.msra.mxu0 %v4369
      %4383 = vmatprep.subr.bf16.mxu0 0
      %4384 = vmatpush1.bf16.msra.mxu0 %v4368
      %4385 = vmatprep.subr.bf16.mxu0 0
      %4386 = vmatpush1.bf16.msra.mxu0 %v4367
      %4387 = vmatprep.subr.bf16.mxu0 0
      %4388 = vmatpush1.bf16.msra.mxu0 %v4366
      %4389 = vmatprep.subr.bf16.mxu0 0
      %4390 = vmatpush1.bf16.msra.mxu0 %v4365
      %4391 = vmatprep.subr.bf16.mxu0 0
      %4392 = vmatpush1.bf16.msra.mxu0 %v4364
      %4393 = vmatprep.subr.bf16.mxu0 0
      %4394 = vmatpush1.bf16.msra.mxu0 %v4363
      %4395 = vmatprep.subr.bf16.mxu0 0
      %4396 = vmatpush2.bf16.msra.mxu0 0
      %4397 = vmatprep.subr.bf16.mxu0 0
      %4398 = vmatpush2.bf16.msra.mxu0 0
      %4399 = vmatprep.subr.bf16.mxu0 0
      %4400 = vmatpush2.bf16.msra.mxu0 0
      %4401 = vmatprep.subr.bf16.mxu0 0
      %4402 = vmatpush2.bf16.msra.mxu0 0
      %4403 = vmatprep.subr.bf16.mxu0 0
      %4404 = vmatpush2.bf16.msra.mxu0 0
      %4405 = vmatprep.subr.bf16.mxu0 0
      %4406 = vmatpush2.bf16.msra.mxu0 0
      %4407 = vmatprep.subr.bf16.mxu0 0
      %4408 = vmatpush2.bf16.msra.mxu0 0
      %4409 = vmatprep.subr.bf16.mxu0 0
      %4410 = vmatpush2.bf16.msra.mxu0 0
      %4411 = vmatprep.mubr.bf16.mxu0 0
      %4412 = vmatmul.mubr.bf16.gmra.mxu0 %v4319
      %v4413 = vpop.f32.mrf.mxu0
      %v4414 = vadd.f32 0.0, %v4413
      %v4415 = vpop.f32.mrf.mxu0
      %v4416 = vpop.f32.mrf.mxu0
      %v4417 = vadd.f32 0.0, %v4416
      %v4418 = vpop.f32.mrf.mxu0
      %4419 = vmatprep.mubr.bf16.mxu0 0
      %4420 = vmatmul.mubr.bf16.gmra.mxu0 %v4321
      %v4421 = vpop.f32.mrf.mxu0
      %v4422 = vadd.f32 0.0, %v4421
      %v4423 = vpop.f32.mrf.mxu0
      %v4424 = vpop.f32.mrf.mxu0
      %v4425 = vadd.f32 0.0, %v4424
      %v4426 = vpop.f32.mrf.mxu0
      %4427 = vmatprep.mubr.bf16.mxu0 0
      %4428 = vmatmul.mubr.bf16.gmra.mxu0 %v4323
      %v4429 = vpop.f32.mrf.mxu0
      %v4430 = vadd.f32 0.0, %v4429
      %v4431 = vpop.f32.mrf.mxu0
      %v4432 = vpop.f32.mrf.mxu0
      %v4433 = vadd.f32 0.0, %v4432
      %v4434 = vpop.f32.mrf.mxu0
      %4435 = vmatprep.mubr.bf16.mxu0 0
      %4436 = vmatmul.mubr.bf16.gmra.mxu0 %v4325
      %v4437 = vpop.f32.mrf.mxu0
      %v4438 = vadd.f32 0.0, %v4437
      %v4439 = vpop.f32.mrf.mxu0
      %v4440 = vpop.f32.mrf.mxu0
      %v4441 = vadd.f32 0.0, %v4440
      %v4442 = vpop.f32.mrf.mxu0
      %4443 = vmatprep.mubr.bf16.mxu0 0
      %4444 = vmatmul.mubr.bf16.gmra.mxu0 %v4324
      %v4445 = vpop.f32.mrf.mxu0
      %v4446 = vadd.f32 0.0, %v4445
      %v4447 = vpop.f32.mrf.mxu0
      %v4448 = vpop.f32.mrf.mxu0
      %v4449 = vadd.f32 0.0, %v4448
      %v4450 = vpop.f32.mrf.mxu0
      %4451 = vdwg.mxu0
      %v4452 = vadd.f32 %v4282, %v4414
      %v4453 = vadd.f32 %v4283, %v4417
      %v4454 = vadd.f32 %v4284, %v4422
      %v4455 = vadd.f32 %v4285, %v4425
      %v4456 = vadd.f32 %v4286, %v4430
      %v4457 = vadd.f32 %v4287, %v4433
      %v4458 = vadd.f32 %v4288, %v4438
      %v4459 = vadd.f32 %v4289, %v4441
      %v4460 = vadd.f32 %v4290, %v4446
      %v4461 = vadd.f32 %v4291, %v4449
      %s4462 = scalar_lea.vmem %s1, 1472
      %v4463 = vld [vmem:[%s4462] sm:$0xf]
      %v4464 = vld [vmem:[%s4462 + $0x4] sm:$0xf]
      %v4465 = vld [vmem:[%s4462 + $0x8] sm:$0xf]
      %v4466 = vld [vmem:[%s4462 + $0xc] sm:$0xf]
      %v4467 = vld [vmem:[%s4462 + $0x10] sm:$0xf]
      %v4468 = vld [vmem:[%s4462 + $0x14] sm:$0xf]
      %v4469 = vld [vmem:[%s4462 + $0x18] sm:$0xf]
      %v4470 = vld [vmem:[%s4462 + $0x1c] sm:$0xf]
      %v4471 = vld [vmem:[%s4462 + $0x20] sm:$0xf]
      %v4472 = vld [vmem:[%s4462 + $0x24] sm:$0xf]
      %v4473 = vld [vmem:[%s4462 + $0x28] sm:$0xf]
      %v4474 = vld [vmem:[%s4462 + $0x2c] sm:$0xf]
      %v4475 = vld [vmem:[%s4462 + $0x30] sm:$0xf]
      %v4476 = vld [vmem:[%s4462 + $0x34] sm:$0xf]
      %v4477 = vld [vmem:[%s4462 + $0x38] sm:$0xf]
      %v4478 = vld [vmem:[%s4462 + $0x3c] sm:$0xf]
      %v4480 = vshrl.u32 %v4315, 16
      %v4482 = vrot.slane %v4480, 3
      %v4483 = vshll.u32 %v4315, 16
      %v4485 = vrot.slane %v4483, 4
      %v4486 = vor.u32 %v4482, %v4485
      %v4487 = vrot.slane %v4121, 3
      %v4488 = vrot.slane %v4124, 4
      %v4489 = vor.u32 %v4487, %v4488
      %v4490 = vsel %vm1857, %v4486, %v4489
      %v4491 = vrot.slane %v4130, 3
      %v4492 = vrot.slane %v4133, 4
      %v4493 = vor.u32 %v4491, %v4492
      %v4494 = vsel %vm1857, %v4489, %v4493
      %v4495 = vrot.slane %v4139, 3
      %v4496 = vrot.slane %v4142, 4
      %v4497 = vor.u32 %v4495, %v4496
      %v4498 = vsel %vm1857, %v4493, %v4497
      %v4500 = vshrl.u32 %v4316, 16
      %v4502 = vrot.slane %v4500, 3
      %v4503 = vshll.u32 %v4316, 16
      %v4505 = vrot.slane %v4503, 4
      %v4506 = vor.u32 %v4502, %v4505
      %v4507 = vsel %vm1857, %v4497, %v4506
      %v4529 = vunpack.c.l.b16 %v4463
      %v4530 = vunpack.c.l.b16 %v4464
      %v4531 = vunpack.c.l.b16 %v4465
      %v4532 = vunpack.c.l.b16 %v4466
      %v4533 = vunpack.c.l.b16 %v4467
      %v4534 = vunpack.c.l.b16 %v4468
      %v4535 = vunpack.c.l.b16 %v4469
      %v4536 = vunpack.c.l.b16 %v4470
      %v4537 = vunpack.c.l.b16 %v4471
      %v4538 = vunpack.c.l.b16 %v4472
      %v4539 = vunpack.c.l.b16 %v4473
      %v4540 = vunpack.c.l.b16 %v4474
      %v4541 = vunpack.c.l.b16 %v4475
      %v4542 = vunpack.c.l.b16 %v4476
      %v4543 = vunpack.c.l.b16 %v4477
      %v4544 = vunpack.c.l.b16 %v4478
      %v4545 = vpack.c.b16 %v4530, %v4529
      %v4546 = vpack.c.b16 %v4532, %v4531
      %v4547 = vpack.c.b16 %v4534, %v4533
      %v4548 = vpack.c.b16 %v4536, %v4535
      %v4549 = vpack.c.b16 %v4538, %v4537
      %v4550 = vpack.c.b16 %v4540, %v4539
      %v4551 = vpack.c.b16 %v4542, %v4541
      %v4552 = vpack.c.b16 %v4544, %v4543
      %4561 = vmatprep.subr.bf16.mxu0 0
      %4562 = vmatpush1.bf16.msra.mxu0 %v4552
      %4563 = vmatprep.subr.bf16.mxu0 0
      %4564 = vmatpush1.bf16.msra.mxu0 %v4551
      %4565 = vmatprep.subr.bf16.mxu0 0
      %4566 = vmatpush1.bf16.msra.mxu0 %v4550
      %4567 = vmatprep.subr.bf16.mxu0 0
      %4568 = vmatpush1.bf16.msra.mxu0 %v4549
      %4569 = vmatprep.subr.bf16.mxu0 0
      %4570 = vmatpush1.bf16.msra.mxu0 %v4548
      %4571 = vmatprep.subr.bf16.mxu0 0
      %4572 = vmatpush1.bf16.msra.mxu0 %v4547
      %4573 = vmatprep.subr.bf16.mxu0 0
      %4574 = vmatpush1.bf16.msra.mxu0 %v4546
      %4575 = vmatprep.subr.bf16.mxu0 0
      %4576 = vmatpush1.bf16.msra.mxu0 %v4545
      %4577 = vmatprep.subr.bf16.mxu0 0
      %4578 = vmatpush2.bf16.msra.mxu0 0
      %4579 = vmatprep.subr.bf16.mxu0 0
      %4580 = vmatpush2.bf16.msra.mxu0 0
      %4581 = vmatprep.subr.bf16.mxu0 0
      %4582 = vmatpush2.bf16.msra.mxu0 0
      %4583 = vmatprep.subr.bf16.mxu0 0
      %4584 = vmatpush2.bf16.msra.mxu0 0
      %4585 = vmatprep.subr.bf16.mxu0 0
      %4586 = vmatpush2.bf16.msra.mxu0 0
      %4587 = vmatprep.subr.bf16.mxu0 0
      %4588 = vmatpush2.bf16.msra.mxu0 0
      %4589 = vmatprep.subr.bf16.mxu0 0
      %4590 = vmatpush2.bf16.msra.mxu0 0
      %4591 = vmatprep.subr.bf16.mxu0 0
      %4592 = vmatpush2.bf16.msra.mxu0 0
      %4593 = vmatprep.mubr.bf16.mxu0 0
      %4594 = vmatmul.mubr.bf16.gmra.mxu0 %v4490
      %v4595 = vpop.f32.mrf.mxu0
      %v4596 = vadd.f32 0.0, %v4595
      %v4597 = vpop.f32.mrf.mxu0
      %v4598 = vpop.f32.mrf.mxu0
      %v4599 = vadd.f32 0.0, %v4598
      %v4600 = vpop.f32.mrf.mxu0
      %4601 = vmatprep.mubr.bf16.mxu0 0
      %4602 = vmatmul.mubr.bf16.gmra.mxu0 %v4494
      %v4603 = vpop.f32.mrf.mxu0
      %v4604 = vadd.f32 0.0, %v4603
      %v4605 = vpop.f32.mrf.mxu0
      %v4606 = vpop.f32.mrf.mxu0
      %v4607 = vadd.f32 0.0, %v4606
      %v4608 = vpop.f32.mrf.mxu0
      %4609 = vmatprep.mubr.bf16.mxu0 0
      %4610 = vmatmul.mubr.bf16.gmra.mxu0 %v4498
      %v4611 = vpop.f32.mrf.mxu0
      %v4612 = vadd.f32 0.0, %v4611
      %v4613 = vpop.f32.mrf.mxu0
      %v4614 = vpop.f32.mrf.mxu0
      %v4615 = vadd.f32 0.0, %v4614
      %v4616 = vpop.f32.mrf.mxu0
      %4617 = vmatprep.mubr.bf16.mxu0 0
      %4618 = vmatmul.mubr.bf16.gmra.mxu0 %v4507
      %v4619 = vpop.f32.mrf.mxu0
      %v4620 = vadd.f32 0.0, %v4619
      %v4621 = vpop.f32.mrf.mxu0
      %v4622 = vpop.f32.mrf.mxu0
      %v4623 = vadd.f32 0.0, %v4622
      %v4624 = vpop.f32.mrf.mxu0
      %4625 = vmatprep.mubr.bf16.mxu0 0
      %4626 = vmatmul.mubr.bf16.gmra.mxu0 %v4506
      %v4627 = vpop.f32.mrf.mxu0
      %v4628 = vadd.f32 0.0, %v4627
      %v4629 = vpop.f32.mrf.mxu0
      %v4630 = vpop.f32.mrf.mxu0
      %v4631 = vadd.f32 0.0, %v4630
      %v4632 = vpop.f32.mrf.mxu0
      %4633 = vdwg.mxu0
      %v4634 = vadd.f32 %v4452, %v4596
      %v4635 = vadd.f32 %v4453, %v4599
      %v4636 = vadd.f32 %v4454, %v4604
      %v4637 = vadd.f32 %v4455, %v4607
      %v4638 = vadd.f32 %v4456, %v4612
      %v4639 = vadd.f32 %v4457, %v4615
      %v4640 = vadd.f32 %v4458, %v4620
      %v4641 = vadd.f32 %v4459, %v4623
      %v4642 = vadd.f32 %v4460, %v4628
      %v4643 = vadd.f32 %v4461, %v4631
      %v4644 = vld [vmem:[%s165 + $0x18] sm:$0xf]
      %v4645 = vld [vmem:[%s165 + $0x1c] sm:$0xf]
      %v4646 = vld [vmem:[%s165 + $0x20] sm:$0xf]
      %v4647 = vld [vmem:[%s165 + $0x24] sm:$0xf]
      %v4648 = vld [vmem:[%s165 + $0x28] sm:$0xf]
      %v4649 = vld [vmem:[%s165 + $0x2c] sm:$0xf]
      %v4650 = vld [vmem:[%s165 + $0x30] sm:$0xf]
      %v4651 = vld [vmem:[%s165 + $0x34] sm:$0xf]
      %v4652 = vld [vmem:[%s165 + $0x38] sm:$0xf]
      %v4653 = vld [vmem:[%s165 + $0x3c] sm:$0x1]
      %s4654 = scalar_lea.vmem %s1, 1536
      %v4655 = vld [vmem:[%s4654] sm:$0xf]
      %v4656 = vld [vmem:[%s4654 + $0x4] sm:$0xf]
      %v4657 = vld [vmem:[%s4654 + $0x8] sm:$0xf]
      %v4658 = vld [vmem:[%s4654 + $0xc] sm:$0xf]
      %v4659 = vld [vmem:[%s4654 + $0x10] sm:$0xf]
      %v4660 = vld [vmem:[%s4654 + $0x14] sm:$0xf]
      %v4661 = vld [vmem:[%s4654 + $0x18] sm:$0xf]
      %v4662 = vld [vmem:[%s4654 + $0x1c] sm:$0xf]
      %v4663 = vld [vmem:[%s4654 + $0x20] sm:$0xf]
      %v4664 = vld [vmem:[%s4654 + $0x24] sm:$0xf]
      %v4665 = vld [vmem:[%s4654 + $0x28] sm:$0xf]
      %v4666 = vld [vmem:[%s4654 + $0x2c] sm:$0xf]
      %v4667 = vld [vmem:[%s4654 + $0x30] sm:$0xf]
      %v4668 = vld [vmem:[%s4654 + $0x34] sm:$0xf]
      %v4669 = vld [vmem:[%s4654 + $0x38] sm:$0xf]
      %v4670 = vld [vmem:[%s4654 + $0x3c] sm:$0xf]
      %v4681 = vunpack.c.l.b16 %v4644
      %v4682 = vunpack.c.l.b16 %v4645
      %v4683 = vunpack.c.l.b16 %v4646
      %v4684 = vunpack.c.l.b16 %v4647
      %v4685 = vunpack.c.l.b16 %v4648
      %v4686 = vunpack.c.l.b16 %v4649
      %v4687 = vunpack.c.l.b16 %v4650
      %v4688 = vunpack.c.l.b16 %v4651
      %v4689 = vunpack.c.l.b16 %v4652
      %v4690 = vunpack.c.l.b16 %v4653
      %v4691 = vpack.c.b16 %v4682, %v4681
      %v4692 = vpack.c.b16 %v4684, %v4683
      %v4693 = vpack.c.b16 %v4686, %v4685
      %v4694 = vpack.c.b16 %v4688, %v4687
      %v4695 = vpack.c.b16 %v4690, %v4689
      %v4717 = vunpack.c.l.b16 %v4655
      %v4718 = vunpack.c.l.b16 %v4656
      %v4719 = vunpack.c.l.b16 %v4657
      %v4720 = vunpack.c.l.b16 %v4658
      %v4721 = vunpack.c.l.b16 %v4659
      %v4722 = vunpack.c.l.b16 %v4660
      %v4723 = vunpack.c.l.b16 %v4661
      %v4724 = vunpack.c.l.b16 %v4662
      %v4725 = vunpack.c.l.b16 %v4663
      %v4726 = vunpack.c.l.b16 %v4664
      %v4727 = vunpack.c.l.b16 %v4665
      %v4728 = vunpack.c.l.b16 %v4666
      %v4729 = vunpack.c.l.b16 %v4667
      %v4730 = vunpack.c.l.b16 %v4668
      %v4731 = vunpack.c.l.b16 %v4669
      %v4732 = vunpack.c.l.b16 %v4670
      %v4733 = vpack.c.b16 %v4718, %v4717
      %v4734 = vpack.c.b16 %v4720, %v4719
      %v4735 = vpack.c.b16 %v4722, %v4721
      %v4736 = vpack.c.b16 %v4724, %v4723
      %v4737 = vpack.c.b16 %v4726, %v4725
      %v4738 = vpack.c.b16 %v4728, %v4727
      %v4739 = vpack.c.b16 %v4730, %v4729
      %v4740 = vpack.c.b16 %v4732, %v4731
      %4749 = vmatprep.subr.bf16.mxu0 0
      %4750 = vmatpush1.bf16.msra.mxu0 %v4740
      %4751 = vmatprep.subr.bf16.mxu0 0
      %4752 = vmatpush1.bf16.msra.mxu0 %v4739
      %4753 = vmatprep.subr.bf16.mxu0 0
      %4754 = vmatpush1.bf16.msra.mxu0 %v4738
      %4755 = vmatprep.subr.bf16.mxu0 0
      %4756 = vmatpush1.bf16.msra.mxu0 %v4737
      %4757 = vmatprep.subr.bf16.mxu0 0
      %4758 = vmatpush1.bf16.msra.mxu0 %v4736
      %4759 = vmatprep.subr.bf16.mxu0 0
      %4760 = vmatpush1.bf16.msra.mxu0 %v4735
      %4761 = vmatprep.subr.bf16.mxu0 0
      %4762 = vmatpush1.bf16.msra.mxu0 %v4734
      %4763 = vmatprep.subr.bf16.mxu0 0
      %4764 = vmatpush1.bf16.msra.mxu0 %v4733
      %4765 = vmatprep.subr.bf16.mxu0 0
      %4766 = vmatpush2.bf16.msra.mxu0 0
      %4767 = vmatprep.subr.bf16.mxu0 0
      %4768 = vmatpush2.bf16.msra.mxu0 0
      %4769 = vmatprep.subr.bf16.mxu0 0
      %4770 = vmatpush2.bf16.msra.mxu0 0
      %4771 = vmatprep.subr.bf16.mxu0 0
      %4772 = vmatpush2.bf16.msra.mxu0 0
      %4773 = vmatprep.subr.bf16.mxu0 0
      %4774 = vmatpush2.bf16.msra.mxu0 0
      %4775 = vmatprep.subr.bf16.mxu0 0
      %4776 = vmatpush2.bf16.msra.mxu0 0
      %4777 = vmatprep.subr.bf16.mxu0 0
      %4778 = vmatpush2.bf16.msra.mxu0 0
      %4779 = vmatprep.subr.bf16.mxu0 0
      %4780 = vmatpush2.bf16.msra.mxu0 0
      %4781 = vmatprep.mubr.bf16.mxu0 0
      %4782 = vmatmul.mubr.bf16.gmra.mxu0 %v4691
      %v4783 = vpop.f32.mrf.mxu0
      %v4784 = vadd.f32 0.0, %v4783
      %v4785 = vpop.f32.mrf.mxu0
      %v4786 = vpop.f32.mrf.mxu0
      %v4787 = vadd.f32 0.0, %v4786
      %v4788 = vpop.f32.mrf.mxu0
      %4789 = vmatprep.mubr.bf16.mxu0 0
      %4790 = vmatmul.mubr.bf16.gmra.mxu0 %v4692
      %v4791 = vpop.f32.mrf.mxu0
      %v4792 = vadd.f32 0.0, %v4791
      %v4793 = vpop.f32.mrf.mxu0
      %v4794 = vpop.f32.mrf.mxu0
      %v4795 = vadd.f32 0.0, %v4794
      %v4796 = vpop.f32.mrf.mxu0
      %4797 = vmatprep.mubr.bf16.mxu0 0
      %4798 = vmatmul.mubr.bf16.gmra.mxu0 %v4693
      %v4799 = vpop.f32.mrf.mxu0
      %v4800 = vadd.f32 0.0, %v4799
      %v4801 = vpop.f32.mrf.mxu0
      %v4802 = vpop.f32.mrf.mxu0
      %v4803 = vadd.f32 0.0, %v4802
      %v4804 = vpop.f32.mrf.mxu0
      %4805 = vmatprep.mubr.bf16.mxu0 0
      %4806 = vmatmul.mubr.bf16.gmra.mxu0 %v4694
      %v4807 = vpop.f32.mrf.mxu0
      %v4808 = vadd.f32 0.0, %v4807
      %v4809 = vpop.f32.mrf.mxu0
      %v4810 = vpop.f32.mrf.mxu0
      %v4811 = vadd.f32 0.0, %v4810
      %v4812 = vpop.f32.mrf.mxu0
      %4813 = vmatprep.mubr.bf16.mxu0 0
      %4814 = vmatmul.mubr.bf16.gmra.mxu0 %v4695
      %v4815 = vpop.f32.mrf.mxu0
      %v4816 = vadd.f32 0.0, %v4815
      %v4817 = vpop.f32.mrf.mxu0
      %v4818 = vpop.f32.mrf.mxu0
      %v4819 = vadd.f32 0.0, %v4818
      %v4820 = vpop.f32.mrf.mxu0
      %4821 = vdwg.mxu0
      %v4822 = vadd.f32 %v4634, %v4784
      %v4823 = vadd.f32 %v4635, %v4787
      %v4824 = vadd.f32 %v4636, %v4792
      %v4825 = vadd.f32 %v4637, %v4795
      %v4826 = vadd.f32 %v4638, %v4800
      %v4827 = vadd.f32 %v4639, %v4803
      %v4828 = vadd.f32 %v4640, %v4808
      %v4829 = vadd.f32 %v4641, %v4811
      %v4830 = vadd.f32 %v4642, %v4816
      %v4831 = vadd.f32 %v4643, %v4819
      %v4832 = vmax.f32 %v4822, 0.0
      %v4833 = vmax.f32 %v4823, 0.0
      %v4834 = vmax.f32 %v4824, 0.0
      %v4835 = vmax.f32 %v4825, 0.0
      %v4836 = vmax.f32 %v4826, 0.0
      %v4837 = vmax.f32 %v4827, 0.0
      %v4838 = vmax.f32 %v4828, 0.0
      %v4839 = vmax.f32 %v4829, 0.0
      %v4840 = vmax.f32 %v4830, 0.0
      %v4841 = vmax.f32 %v4831, 0.0
      %4842 = vst [vmem:[#allocation2] sm:$0xff] %v4832
      %4843 = vst [vmem:[#allocation2 + $0x8] sm:$0xff] %v4833
      %4844 = vst [vmem:[#allocation2 + $0x10] sm:$0xff] %v4834
      %4845 = vst [vmem:[#allocation2 + $0x18] sm:$0xff] %v4835
      %4846 = vst [vmem:[#allocation2 + $0x20] sm:$0xff] %v4836
      %4847 = vst [vmem:[#allocation2 + $0x28] sm:$0xff] %v4837
      %4848 = vst [vmem:[#allocation2 + $0x30] sm:$0xff] %v4838
      %4849 = vst [vmem:[#allocation2 + $0x38] sm:$0xff] %v4839
      %4850 = vst [vmem:[#allocation2 + $0x40] sm:$0xff] %v4840
      %4851 = vst [vmem:[#allocation2 + $0x48] sm:$0x1] %v4841
      %v4852 = vld [vmem:[#allocation2] sm:$0x7f]
      %v4853 = vld [vmem:[#allocation2 + $0xb] sm:$0x7f]
      %v4854 = vmax.f32 %v4852, %v4853
      %v4855 = vld [vmem:[#allocation2 + $0x16] sm:$0x7f]
      %v4856 = vmax.f32 %v4854, %v4855
      %vm4857 = vcmask 1042432
      %v4858 = vsel %vm4857, %v4856, -inf
      %v4859 = vrot.slane %v4858, 4
      %v4860 = vmax.f32 %v4858, %v4859
      %v4861 = vrot.slane %v4860, 2
      %v4862 = vmax.f32 %v4860, %v4861
      %v4863 = vrot.slane %v4862, 1
      %v4864 = vmax.f32 %v4862, %v4863
      %vm4865 = vcmask 1044482
      %v4866 = vsel %vm4865, %v4856, -inf
      %v4867 = vrot.slane %v4866, 4
      %v4868 = vmax.f32 %v4866, %v4867
      %v4869 = vrot.slane %v4868, 2
      %v4870 = vmax.f32 %v4868, %v4869
      %v4871 = vrot.slane %v4870, 1
      %v4872 = vmax.f32 %v4870, %v4871
      %vm4873 = vcmask 1046532
      %v4874 = vsel %vm4873, %v4856, -inf
      %v4875 = vrot.slane %v4874, 4
      %v4876 = vmax.f32 %v4874, %v4875
      %v4877 = vrot.slane %v4876, 2
      %v4878 = vmax.f32 %v4876, %v4877
      %v4879 = vrot.slane %v4878, 1
      %v4880 = vmax.f32 %v4878, %v4879
      %vm4881 = vcmask 1040384
      %v4882 = vsel %vm4881, %v4864, %v4872
      %vm4883 = vcmask 1041408
      %v4884 = vsel %vm4883, %v4882, %v4880
      %v4885 = vpack.c.bf16 %v4884, %v4884
      %vm4886 = vcmask 1041408
      %vm4887 = vsmask.f32 1280
      %vm4888 = vmand %vm4886, %vm4887
      %v4889 = vld [vmem:[%s170] sm:$0x3]
      %v4890 = vsel %vm4888, %v4885, %v4889
      %4891 = vst [vmem:[%s170] sm:$0x3] %v4890
      %v4892 = vld [vmem:[#allocation2 + $0x16] sm:$0x7f]
      %v4893 = vld [vmem:[#allocation2 + $0x21] sm:$0x7f]
      %v4894 = vmax.f32 %v4892, %v4893
      %v4895 = vld [vmem:[#allocation2 + $0x2c] sm:$0x7f]
      %v4896 = vmax.f32 %v4894, %v4895
      %v4897 = vsel %vm4857, %v4896, -inf
      %v4898 = vrot.slane %v4897, 4
      %v4899 = vmax.f32 %v4897, %v4898
      %v4900 = vrot.slane %v4899, 2
      %v4901 = vmax.f32 %v4899, %v4900
      %v4902 = vrot.slane %v4901, 1
      %v4903 = vmax.f32 %v4901, %v4902
      %v4904 = vsel %vm4865, %v4896, -inf
      %v4905 = vrot.slane %v4904, 4
      %v4906 = vmax.f32 %v4904, %v4905
      %v4907 = vrot.slane %v4906, 2
      %v4908 = vmax.f32 %v4906, %v4907
      %v4909 = vrot.slane %v4908, 1
      %v4910 = vmax.f32 %v4908, %v4909
      %v4911 = vsel %vm4873, %v4896, -inf
      %v4912 = vrot.slane %v4911, 4
      %v4913 = vmax.f32 %v4911, %v4912
      %v4914 = vrot.slane %v4913, 2
      %v4915 = vmax.f32 %v4913, %v4914
      %v4916 = vrot.slane %v4915, 1
      %v4917 = vmax.f32 %v4915, %v4916
      %v4918 = vsel %vm4881, %v4903, %v4910
      %v4919 = vsel %vm4883, %v4918, %v4917
      %v4920 = vpack.c.bf16 %v4919, %v4919
      %s4921 = scalar_lea.vmem %s170, 2
      %v4922 = vld [vmem:[%s4921] sm:$0x3]
      %v4923 = vsel %vm4888, %v4920, %v4922
      %4924 = vst [vmem:[%s4921] sm:$0x3] %v4923
      %v4925 = vld [vmem:[#allocation2 + $0x2c] sm:$0x7f]
      %v4926 = vld [vmem:[#allocation2 + $0x37] sm:$0x7f]
      %v4927 = vmax.f32 %v4925, %v4926
      %v4928 = vld [vmem:[#allocation2 + $0x42] sm:$0x7f]
      %v4929 = vmax.f32 %v4927, %v4928
      %v4930 = vsel %vm4857, %v4929, -inf
      %v4931 = vrot.slane %v4930, 4
      %v4932 = vmax.f32 %v4930, %v4931
      %v4933 = vrot.slane %v4932, 2
      %v4934 = vmax.f32 %v4932, %v4933
      %v4935 = vrot.slane %v4934, 1
      %v4936 = vmax.f32 %v4934, %v4935
      %v4937 = vsel %vm4865, %v4929, -inf
      %v4938 = vrot.slane %v4937, 4
      %v4939 = vmax.f32 %v4937, %v4938
      %v4940 = vrot.slane %v4939, 2
      %v4941 = vmax.f32 %v4939, %v4940
      %v4942 = vrot.slane %v4941, 1
      %v4943 = vmax.f32 %v4941, %v4942
      %v4944 = vsel %vm4873, %v4929, -inf
      %v4945 = vrot.slane %v4944, 4
      %v4946 = vmax.f32 %v4944, %v4945
      %v4947 = vrot.slane %v4946, 2
      %v4948 = vmax.f32 %v4946, %v4947
      %v4949 = vrot.slane %v4948, 1
      %v4950 = vmax.f32 %v4948, %v4949
      %v4951 = vsel %vm4881, %v4936, %v4943
      %v4952 = vsel %vm4883, %v4951, %v4950
      %v4953 = vpack.c.bf16 %v4952, %v4952
      %s4954 = scalar_lea.vmem %s170, 4
      %v4955 = vld [vmem:[%s4954] sm:$0x3]
      %v4956 = vsel %vm4888, %v4953, %v4955
      %4957 = vst [vmem:[%s4954] sm:$0x3] %v4956
      %p4958 = scmp.lt.s32.totalorder %s14, 1
      %s4959 = scalar_select %p4958, %s14, 1
      %s4960 = smul.addr %s4959, 3
      %s4961 = smul.addr %s4960, 2
      %s4962 = scalar_lea.vmem %s3, %s4961
      // Predicated region
      $region33: #{alexnet_embeddings.7} parent=31 // pred_check
        %p4963 = pneg %p100
      $region34: #{alexnet_embeddings.7} parent=31 // pred_check_branch
        %4965 = sbr.rel (%p4963) target = $region36
      $region35: #{alexnet_embeddings.7} parent=31 // pred_region
        _
      $region36: #{alexnet_embeddings.7} parent=31 // pred_fallthru
        _
    $region32: #{alexnet_embeddings.7} parent=5 // pred_fallthru
      _
    %p4966 = scmp.le.s32.totalorder 2, %s9
    // Predicated region
    $region37: #{alexnet_embeddings.7} parent=5 // pred_check
      %p4967 = pneg %p4966
    $region38: #{alexnet_embeddings.7} parent=5 // pred_check_branch
      %4969 = sbr.rel (%p4967) target = $region40
    $region39: #{alexnet_embeddings.7} parent=5 // pred_region
      %s4970 = ssub.s32 %s9, 2
      // Predicated region
      $region41: #{alexnet_embeddings.7} parent=39 // pred_check
        %p4971 = pneg %p106
      $region42: #{alexnet_embeddings.7} parent=39 // pred_check_branch
        %4973 = sbr.rel (%p4971) target = $region44
      $region43: #{alexnet_embeddings.7} parent=39 // pred_region
        %p4974 = scmp.lt.s32.totalorder %s15, 1
        %s4975 = scalar_select %p4974, %s15, 1
        %s4976 = smul.addr %s4975, 3
        %s4977 = smul.addr %s4976, 2
        %s4978 = scalar_lea.vmem %s3, %s4977
      $region44: #{alexnet_embeddings.7} parent=39 // pred_fallthru
        _
    $region40: #{alexnet_embeddings.7} parent=5 // pred_fallthru
      _
  $region6: #{alexnet_embeddings.7} parent=0 // loop_footer
    %s13 = sadd.s32 1, %s9
  $region7: #{alexnet_embeddings.7} parent=0 // loop_footer_branch
    %8 = sbr.rel target = $region3
  $region8: #{alexnet_embeddings.7} parent=0 // loop_exit
    _

// kernel: alexnet_embeddings.8
$region0: #{alexnet_embeddings.8}
  #allocation0 [shape = 'u32[]', space=smem, size = 0x4, offset = 0x4, fixed_abs, tag = 'smem constant byte address 0x4 - core index']
  #allocation1 [shape = 'u32[144,128]{1,0:T(1,128)}', space=vmem, size = 0x12000, scoped, tag = 'internal scratch']
  %s0 = inlined_call_operand.vmem [shape: bf16[2,25,128], index: 0, kind: input, shape index: {}]
  %s1 = inlined_call_operand.vmem [shape: bf16[9,128,128], index: 1, kind: input, shape index: {}]
  %s2 = inlined_call_operand.vmem [shape: f32[1,128], index: 2, kind: input, shape index: {}]
  %s3 = inlined_call_operand.vmem [shape: bf16[2,3,3,128], index: 3, kind: output, shape index: {}]
  %s4 = sld [smem:[#allocation0]]
  $region45: #{alexnet_embeddings.8} parent=0
    _
  %s6 = ssub.s32 1, %s4
  %s7 = scalar_select 0, %s6, %s4
  loop: start=0, step=1, limit=4
  $region2: #{alexnet_embeddings.8} parent=0 // loop_pre_header
    _
  $region3: #{alexnet_embeddings.8} parent=0 // loop_header
    %s9 = sphi 0, %s13
    %p10 = scmp.ge.s32.totalorder %s9, 4
    %s19 = sphi 0, %s21
    %s22 = sphi 0, %s19
    %s23 = sphi 0, %s22
    %s39 = sphi 0, %s23
    %s43 = sphi 0, %s43
    %s45 = sphi 0, %s43
    %s46 = sphi 0, %s45
    %s60 = sphi 0, %s46
    %s64 = sphi 0, %s64
    %s66 = sphi 0, %s64
    %s67 = sphi 0, %s66
    %s81 = sphi 0, %s67
    %s87 = sphi 0, %s89
    %s90 = sphi 0, %s87
    %s91 = sphi 0, %s90
    %s107 = sphi 0, %s91
  $region4: #{alexnet_embeddings.8} parent=0 // loop_header_branch
    %12 = sbr.rel (%p10) target = $region8
  $region5: #{alexnet_embeddings.8} parent=0 // loop_body
    %s14 = ssub.s32 %s9, 1
    %s15 = ssub.s32 %s9, 2
    %s16 = sadd.s32 %s9, 1
    %s17 = ssub.s32 %s9, %s16
    %p18 = scmp.eq.s32.totalorder %s17, 0
    %s20 = sadd.s32 %s19, 1
    %s21 = scalar_select %p18, %s19, %s20
    %p24 = pneg %p18
    %p25 = scmp.eq.s32.totalorder %s9, 1
    %p26 = por %p24, %p25
    %p27 = scmp.ne.s32.totalorder %s19, %s22
    %p28 = scmp.eq.s32.totalorder %s9, 0
    %p29 = por %p27, %p28
    %p30 = scmp.ne.s32.totalorder %s19, %s22
    %p31 = scmp.eq.s32.totalorder %s14, 1
    %p32 = por %p30, %p31
    %p33 = scmp.ne.s32.totalorder %s22, %s23
    %p34 = scmp.eq.s32.totalorder %s14, 0
    %p35 = por %p33, %p34
    %p36 = scmp.ne.s32.totalorder %s22, %s23
    %p37 = scmp.eq.s32.totalorder %s15, 1
    %p38 = por %p36, %p37
    %p40 = scmp.ne.s32.totalorder %s23, %s39
    %p41 = scmp.eq.s32.totalorder %s15, 0
    %p42 = por %p40, %p41
    %s44 = sadd.s32 %s43, 1
    %p47 = scmp.eq.s32.totalorder %s9, 1
    %p48 = scmp.ne.s32.totalorder %s43, %s45
    %p49 = scmp.eq.s32.totalorder %s9, 0
    %p50 = por %p48, %p49
    %p51 = scmp.ne.s32.totalorder %s43, %s45
    %p52 = scmp.eq.s32.totalorder %s14, 1
    %p53 = por %p51, %p52
    %p54 = scmp.ne.s32.totalorder %s45, %s46
    %p55 = scmp.eq.s32.totalorder %s14, 0
    %p56 = por %p54, %p55
    %p57 = scmp.ne.s32.totalorder %s45, %s46
    %p58 = scmp.eq.s32.totalorder %s15, 1
    %p59 = por %p57, %p58
    %p61 = scmp.ne.s32.totalorder %s46, %s60
    %p62 = scmp.eq.s32.totalorder %s15, 0
    %p63 = por %p61, %p62
    %s65 = sadd.s32 %s64, 1
    %p68 = scmp.eq.s32.totalorder %s9, 1
    %p69 = scmp.ne.s32.totalorder %s64, %s66
    %p70 = scmp.eq.s32.totalorder %s9, 0
    %p71 = por %p69, %p70
    %p72 = scmp.ne.s32.totalorder %s64, %s66
    %p73 = scmp.eq.s32.totalorder %s14, 1
    %p74 = por %p72, %p73
    %p75 = scmp.ne.s32.totalorder %s66, %s67
    %p76 = scmp.eq.s32.totalorder %s14, 0
    %p77 = por %p75, %p76
    %p78 = scmp.ne.s32.totalorder %s66, %s67
    %p79 = scmp.eq.s32.totalorder %s15, 1
    %p80 = por %p78, %p79
    %p82 = scmp.ne.s32.totalorder %s67, %s81
    %p83 = scmp.eq.s32.totalorder %s15, 0
    %p84 = por %p82, %p83
    %s85 = ssub.s32 %s9, %s16
    %p86 = scmp.eq.s32.totalorder %s85, 0
    %s88 = sadd.s32 %s87, 1
    %s89 = scalar_select %p86, %s87, %s88
    %p92 = pneg %p86
    %p93 = scmp.eq.s32.totalorder %s9, 1
    %p94 = por %p92, %p93
    %p95 = scmp.ne.s32.totalorder %s87, %s90
    %p96 = scmp.eq.s32.totalorder %s9, 0
    %p97 = por %p95, %p96
    %p98 = scmp.ne.s32.totalorder %s87, %s90
    %p99 = scmp.eq.s32.totalorder %s14, 1
    %p100 = por %p98, %p99
    %p101 = scmp.ne.s32.totalorder %s90, %s91
    %p102 = scmp.eq.s32.totalorder %s14, 0
    %p103 = por %p101, %p102
    %p104 = scmp.ne.s32.totalorder %s90, %s91
    %p105 = scmp.eq.s32.totalorder %s15, 1
    %p106 = por %p104, %p105
    %p108 = scmp.ne.s32.totalorder %s91, %s107
    %p109 = scmp.eq.s32.totalorder %s15, 0
    %p110 = por %p108, %p109
    %p111 = scmp.le.s32.totalorder 1, %s9
    %p112 = scmp.lt.s32.totalorder %s9, 3
    %p113 = pnand %p111, %p112
    %p114 = pneg %p113
    // Predicated region
    $region9: #{alexnet_embeddings.8} parent=5 // pred_check
      _
    $region10: #{alexnet_embeddings.8} parent=5 // pred_check_branch
      %116 = sbr.rel (%p113) target = $region12
    $region11: #{alexnet_embeddings.8} parent=5 // pred_region
      %s117 = ssub.s32 %s9, 1
      // Predicated region
      $region13: #{alexnet_embeddings.8} parent=11 // pred_check
        %p118 = pneg %p56
      $region14: #{alexnet_embeddings.8} parent=11 // pred_check_branch
        %120 = sbr.rel (%p118) target = $region16
      $region15: #{alexnet_embeddings.8} parent=11 // pred_region
        _
      $region16: #{alexnet_embeddings.8} parent=11 // pred_fallthru
        _
      // Predicated region
      $region17: #{alexnet_embeddings.8} parent=11 // pred_check
        %p121 = pneg %p77
      $region18: #{alexnet_embeddings.8} parent=11 // pred_check_branch
        %123 = sbr.rel (%p121) target = $region20
      $region19: #{alexnet_embeddings.8} parent=11 // pred_region
        _
      $region20: #{alexnet_embeddings.8} parent=11 // pred_fallthru
        _
    $region12: #{alexnet_embeddings.8} parent=5 // pred_fallthru
      _
    %p124 = scmp.lt.s32.totalorder %s9, 2
    // Predicated region
    $region21: #{alexnet_embeddings.8} parent=5 // pred_check
      %p125 = pneg %p124
    $region22: #{alexnet_embeddings.8} parent=5 // pred_check_branch
      %127 = sbr.rel (%p125) target = $region24
    $region23: #{alexnet_embeddings.8} parent=5 // pred_region
      // Predicated region
      $region25: #{alexnet_embeddings.8} parent=23 // pred_check
        %p128 = pneg %p29
      $region26: #{alexnet_embeddings.8} parent=23 // pred_check_branch
        %130 = sbr.rel (%p128) target = $region28
      $region27: #{alexnet_embeddings.8} parent=23 // pred_region
        %p131 = scmp.lt.s32.totalorder %s9, 1
        %s132 = scalar_select %p131, %s9, 1
        %s133 = smul.addr %s132, 4
        %s134 = smul.addr %s133, 4
        %s135 = scalar_lea.vmem %s0, %s134
      $region28: #{alexnet_embeddings.8} parent=23 // pred_fallthru
        _
    $region24: #{alexnet_embeddings.8} parent=5 // pred_fallthru
      _
    %p136 = scmp.le.s32.totalorder 1, %s9
    %p137 = scmp.lt.s32.totalorder %s9, 3
    %p138 = pnand %p136, %p137
    %p139 = pneg %p138
    // Predicated region
    $region29: #{alexnet_embeddings.8} parent=5 // pred_check
      _
    $region30: #{alexnet_embeddings.8} parent=5 // pred_check_branch
      %141 = sbr.rel (%p138) target = $region32
    $region31: #{alexnet_embeddings.8} parent=5 // pred_region
      %s142 = ssub.s32 %s9, 1
      %p143 = scmp.lt.s32.totalorder %s14, 1
      %s144 = scalar_select %p143, %s14, 1
      %s145 = smul.addr %s144, 4
      %s146 = smul.addr %s145, 4
      %s147 = scalar_lea.vmem %s0, %s146
      %p148 = pneg %p35
      %p149 = pneg %p32
      %p150 = pneg %p56
      %p151 = pneg %p53
      %p152 = pneg %p77
      %p153 = pneg %p74
      %p154 = pneg %p103
      %p155 = pneg %p100
      %p156 = scmp.lt.s32.totalorder %s14, 1
      %s157 = scalar_select %p156, %s14, 1
      %s158 = smul.addr %s157, 3
      %s159 = smul.addr %s158, 2
      %s160 = scalar_lea.vmem %s3, %s159
      %p161 = scmp.lt.s32.totalorder %s14, 1
      %s162 = scalar_select %p161, %s14, 1
      %s163 = smul.addr %s162, 4
      %s164 = smul.addr %s163, 4
      %s165 = scalar_lea.vmem %s0, %s164
      %p166 = scmp.lt.s32.totalorder %s14, 1
      %s167 = scalar_select %p166, %s14, 1
      %s168 = smul.addr %s167, 3
      %s169 = smul.addr %s168, 2
      %s170 = scalar_lea.vmem %s3, %s169
      %v172 = vld [vmem:[%s2] sm:$0x1]
      %v174 = vlaneseq
      %v175 = vshrl.u32 %v174, 7
      %v176 = vsub.s32 0, %v175
      %v177 = vrot.slane %v172, %v176
      %v179 = vld [vmem:[%s165] sm:$0xf]
      %v180 = vld [vmem:[%s165 + $0x4] sm:$0x7]
      %v181 = vld [vmem:[%s1] sm:$0xf]
      %v182 = vld [vmem:[%s1 + $0x4] sm:$0xf]
      %v183 = vld [vmem:[%s1 + $0x8] sm:$0xf]
      %v184 = vld [vmem:[%s1 + $0xc] sm:$0xf]
      %v185 = vld [vmem:[%s1 + $0x10] sm:$0xf]
      %v186 = vld [vmem:[%s1 + $0x14] sm:$0xf]
      %v187 = vld [vmem:[%s1 + $0x18] sm:$0xf]
      %v188 = vld [vmem:[%s1 + $0x1c] sm:$0xf]
      %v189 = vld [vmem:[%s1 + $0x20] sm:$0xf]
      %v190 = vld [vmem:[%s1 + $0x24] sm:$0xf]
      %v191 = vld [vmem:[%s1 + $0x28] sm:$0xf]
      %v192 = vld [vmem:[%s1 + $0x2c] sm:$0xf]
      %v193 = vld [vmem:[%s1 + $0x30] sm:$0xf]
      %v194 = vld [vmem:[%s1 + $0x34] sm:$0xf]
      %v195 = vld [vmem:[%s1 + $0x38] sm:$0xf]
      %v196 = vld [vmem:[%s1 + $0x3c] sm:$0xf]
      %v199 = vunpack.c.l.b16 %v179
      %v200 = vunpack.c.l.b16 %v180
      %v201 = vpack.c.b16 %v200, %v199
      %v219 = vunpack.c.l.b16 %v181
      %v220 = vunpack.c.l.b16 %v182
      %v221 = vunpack.c.l.b16 %v183
      %v222 = vunpack.c.l.b16 %v184
      %v223 = vunpack.c.l.b16 %v185
      %v224 = vunpack.c.l.b16 %v186
      %v225 = vunpack.c.l.b16 %v187
      %v226 = vunpack.c.l.b16 %v188
      %v227 = vunpack.c.l.b16 %v189
      %v228 = vunpack.c.l.b16 %v190
      %v229 = vunpack.c.l.b16 %v191
      %v230 = vunpack.c.l.b16 %v192
      %v231 = vunpack.c.l.b16 %v193
      %v232 = vunpack.c.l.b16 %v194
      %v233 = vunpack.c.l.b16 %v195
      %v234 = vunpack.c.l.b16 %v196
      %v235 = vpack.c.b16 %v220, %v219
      %v236 = vpack.c.b16 %v222, %v221
      %v237 = vpack.c.b16 %v224, %v223
      %v238 = vpack.c.b16 %v226, %v225
      %v239 = vpack.c.b16 %v228, %v227
      %v240 = vpack.c.b16 %v230, %v229
      %v241 = vpack.c.b16 %v232, %v231
      %v242 = vpack.c.b16 %v234, %v233
      %251 = vmatprep.subr.bf16.mxu0 0
      %252 = vmatpush1.bf16.msra.mxu0 %v242
      %253 = vmatprep.subr.bf16.mxu0 0
      %254 = vmatpush1.bf16.msra.mxu0 %v241
      %255 = vmatprep.subr.bf16.mxu0 0
      %256 = vmatpush1.bf16.msra.mxu0 %v240
      %257 = vmatprep.subr.bf16.mxu0 0
      %258 = vmatpush1.bf16.msra.mxu0 %v239
      %259 = vmatprep.subr.bf16.mxu0 0
      %260 = vmatpush1.bf16.msra.mxu0 %v238
      %261 = vmatprep.subr.bf16.mxu0 0
      %262 = vmatpush1.bf16.msra.mxu0 %v237
      %263 = vmatprep.subr.bf16.mxu0 0
      %264 = vmatpush1.bf16.msra.mxu0 %v236
      %265 = vmatprep.subr.bf16.mxu0 0
      %266 = vmatpush1.bf16.msra.mxu0 %v235
      %267 = vmatprep.subr.bf16.mxu0 0
      %268 = vmatpush2.bf16.msra.mxu0 0
      %269 = vmatprep.subr.bf16.mxu0 0
      %270 = vmatpush2.bf16.msra.mxu0 0
      %271 = vmatprep.subr.bf16.mxu0 0
      %272 = vmatpush2.bf16.msra.mxu0 0
      %273 = vmatprep.subr.bf16.mxu0 0
      %274 = vmatpush2.bf16.msra.mxu0 0
      %275 = vmatprep.subr.bf16.mxu0 0
      %276 = vmatpush2.bf16.msra.mxu0 0
      %277 = vmatprep.subr.bf16.mxu0 0
      %278 = vmatpush2.bf16.msra.mxu0 0
      %279 = vmatprep.subr.bf16.mxu0 0
      %280 = vmatpush2.bf16.msra.mxu0 0
      %281 = vmatprep.subr.bf16.mxu0 0
      %282 = vmatpush2.bf16.msra.mxu0 0
      %283 = vmatprep.mubr.bf16.mxu0 0
      %284 = vmatmul.mubr.bf16.gmra.mxu0 %v201
      %v285 = vpop.f32.mrf.mxu0
      %v286 = vadd.f32 0.0, %v285
      %v287 = vpop.f32.mrf.mxu0
      %v288 = vpop.f32.mrf.mxu0
      %v289 = vadd.f32 0.0, %v288
      %v290 = vpop.f32.mrf.mxu0
      %291 = vdwg.mxu0
      %v292 = vadd.f32 %v177, %v286
      %v293 = vadd.f32 %v177, %v289
      %s294 = scalar_lea.vmem %s1, 64
      %v295 = vld [vmem:[%s294] sm:$0xf]
      %v296 = vld [vmem:[%s294 + $0x4] sm:$0xf]
      %v297 = vld [vmem:[%s294 + $0x8] sm:$0xf]
      %v298 = vld [vmem:[%s294 + $0xc] sm:$0xf]
      %v299 = vld [vmem:[%s294 + $0x10] sm:$0xf]
      %v300 = vld [vmem:[%s294 + $0x14] sm:$0xf]
      %v301 = vld [vmem:[%s294 + $0x18] sm:$0xf]
      %v302 = vld [vmem:[%s294 + $0x1c] sm:$0xf]
      %v303 = vld [vmem:[%s294 + $0x20] sm:$0xf]
      %v304 = vld [vmem:[%s294 + $0x24] sm:$0xf]
      %v305 = vld [vmem:[%s294 + $0x28] sm:$0xf]
      %v306 = vld [vmem:[%s294 + $0x2c] sm:$0xf]
      %v307 = vld [vmem:[%s294 + $0x30] sm:$0xf]
      %v308 = vld [vmem:[%s294 + $0x34] sm:$0xf]
      %v309 = vld [vmem:[%s294 + $0x38] sm:$0xf]
      %v310 = vld [vmem:[%s294 + $0x3c] sm:$0xf]
      %v312 = vshrl.u32 %v201, 16
      %v314 = vshll.u32 %v201, 16
      %v316 = vrot.slane %v314, 1
      %v317 = vor.u32 %v312, %v316
      %v335 = vunpack.c.l.b16 %v295
      %v336 = vunpack.c.l.b16 %v296
      %v337 = vunpack.c.l.b16 %v297
      %v338 = vunpack.c.l.b16 %v298
      %v339 = vunpack.c.l.b16 %v299
      %v340 = vunpack.c.l.b16 %v300
      %v341 = vunpack.c.l.b16 %v301
      %v342 = vunpack.c.l.b16 %v302
      %v343 = vunpack.c.l.b16 %v303
      %v344 = vunpack.c.l.b16 %v304
      %v345 = vunpack.c.l.b16 %v305
      %v346 = vunpack.c.l.b16 %v306
      %v347 = vunpack.c.l.b16 %v307
      %v348 = vunpack.c.l.b16 %v308
      %v349 = vunpack.c.l.b16 %v309
      %v350 = vunpack.c.l.b16 %v310
      %v351 = vpack.c.b16 %v336, %v335
      %v352 = vpack.c.b16 %v338, %v337
      %v353 = vpack.c.b16 %v340, %v339
      %v354 = vpack.c.b16 %v342, %v341
      %v355 = vpack.c.b16 %v344, %v343
      %v356 = vpack.c.b16 %v346, %v345
      %v357 = vpack.c.b16 %v348, %v347
      %v358 = vpack.c.b16 %v350, %v349
      %367 = vmatprep.subr.bf16.mxu0 0
      %368 = vmatpush1.bf16.msra.mxu0 %v358
      %369 = vmatprep.subr.bf16.mxu0 0
      %370 = vmatpush1.bf16.msra.mxu0 %v357
      %371 = vmatprep.subr.bf16.mxu0 0
      %372 = vmatpush1.bf16.msra.mxu0 %v356
      %373 = vmatprep.subr.bf16.mxu0 0
      %374 = vmatpush1.bf16.msra.mxu0 %v355
      %375 = vmatprep.subr.bf16.mxu0 0
      %376 = vmatpush1.bf16.msra.mxu0 %v354
      %377 = vmatprep.subr.bf16.mxu0 0
      %378 = vmatpush1.bf16.msra.mxu0 %v353
      %379 = vmatprep.subr.bf16.mxu0 0
      %380 = vmatpush1.bf16.msra.mxu0 %v352
      %381 = vmatprep.subr.bf16.mxu0 0
      %382 = vmatpush1.bf16.msra.mxu0 %v351
      %383 = vmatprep.subr.bf16.mxu0 0
      %384 = vmatpush2.bf16.msra.mxu0 0
      %385 = vmatprep.subr.bf16.mxu0 0
      %386 = vmatpush2.bf16.msra.mxu0 0
      %387 = vmatprep.subr.bf16.mxu0 0
      %388 = vmatpush2.bf16.msra.mxu0 0
      %389 = vmatprep.subr.bf16.mxu0 0
      %390 = vmatpush2.bf16.msra.mxu0 0
      %391 = vmatprep.subr.bf16.mxu0 0
      %392 = vmatpush2.bf16.msra.mxu0 0
      %393 = vmatprep.subr.bf16.mxu0 0
      %394 = vmatpush2.bf16.msra.mxu0 0
      %395 = vmatprep.subr.bf16.mxu0 0
      %396 = vmatpush2.bf16.msra.mxu0 0
      %397 = vmatprep.subr.bf16.mxu0 0
      %398 = vmatpush2.bf16.msra.mxu0 0
      %399 = vmatprep.mubr.bf16.mxu0 0
      %400 = vmatmul.mubr.bf16.gmra.mxu0 %v317
      %v401 = vpop.f32.mrf.mxu0
      %v402 = vadd.f32 0.0, %v401
      %v403 = vpop.f32.mrf.mxu0
      %v404 = vpop.f32.mrf.mxu0
      %v405 = vadd.f32 0.0, %v404
      %v406 = vpop.f32.mrf.mxu0
      %407 = vdwg.mxu0
      %v408 = vadd.f32 %v292, %v402
      %v409 = vadd.f32 %v293, %v405
      %v410 = vld [vmem:[%s165] sm:$0xe]
      %v411 = vld [vmem:[%s165 + $0x4] sm:$0xf]
      %s412 = scalar_lea.vmem %s1, 128
      %v413 = vld [vmem:[%s412] sm:$0xf]
      %v414 = vld [vmem:[%s412 + $0x4] sm:$0xf]
      %v415 = vld [vmem:[%s412 + $0x8] sm:$0xf]
      %v416 = vld [vmem:[%s412 + $0xc] sm:$0xf]
      %v417 = vld [vmem:[%s412 + $0x10] sm:$0xf]
      %v418 = vld [vmem:[%s412 + $0x14] sm:$0xf]
      %v419 = vld [vmem:[%s412 + $0x18] sm:$0xf]
      %v420 = vld [vmem:[%s412 + $0x1c] sm:$0xf]
      %v421 = vld [vmem:[%s412 + $0x20] sm:$0xf]
      %v422 = vld [vmem:[%s412 + $0x24] sm:$0xf]
      %v423 = vld [vmem:[%s412 + $0x28] sm:$0xf]
      %v424 = vld [vmem:[%s412 + $0x2c] sm:$0xf]
      %v425 = vld [vmem:[%s412 + $0x30] sm:$0xf]
      %v426 = vld [vmem:[%s412 + $0x34] sm:$0xf]
      %v427 = vld [vmem:[%s412 + $0x38] sm:$0xf]
      %v428 = vld [vmem:[%s412 + $0x3c] sm:$0xf]
      %v431 = vunpack.c.l.b16 %v410
      %v432 = vunpack.c.l.b16 %v411
      %v433 = vpack.c.b16 %v432, %v431
      %v434 = vrot.slane %v433, 1
      %v452 = vunpack.c.l.b16 %v413
      %v453 = vunpack.c.l.b16 %v414
      %v454 = vunpack.c.l.b16 %v415
      %v455 = vunpack.c.l.b16 %v416
      %v456 = vunpack.c.l.b16 %v417
      %v457 = vunpack.c.l.b16 %v418
      %v458 = vunpack.c.l.b16 %v419
      %v459 = vunpack.c.l.b16 %v420
      %v460 = vunpack.c.l.b16 %v421
      %v461 = vunpack.c.l.b16 %v422
      %v462 = vunpack.c.l.b16 %v423
      %v463 = vunpack.c.l.b16 %v424
      %v464 = vunpack.c.l.b16 %v425
      %v465 = vunpack.c.l.b16 %v426
      %v466 = vunpack.c.l.b16 %v427
      %v467 = vunpack.c.l.b16 %v428
      %v468 = vpack.c.b16 %v453, %v452
      %v469 = vpack.c.b16 %v455, %v454
      %v470 = vpack.c.b16 %v457, %v456
      %v471 = vpack.c.b16 %v459, %v458
      %v472 = vpack.c.b16 %v461, %v460
      %v473 = vpack.c.b16 %v463, %v462
      %v474 = vpack.c.b16 %v465, %v464
      %v475 = vpack.c.b16 %v467, %v466
      %484 = vmatprep.subr.bf16.mxu0 0
      %485 = vmatpush1.bf16.msra.mxu0 %v475
      %486 = vmatprep.subr.bf16.mxu0 0
      %487 = vmatpush1.bf16.msra.mxu0 %v474
      %488 = vmatprep.subr.bf16.mxu0 0
      %489 = vmatpush1.bf16.msra.mxu0 %v473
      %490 = vmatprep.subr.bf16.mxu0 0
      %491 = vmatpush1.bf16.msra.mxu0 %v472
      %492 = vmatprep.subr.bf16.mxu0 0
      %493 = vmatpush1.bf16.msra.mxu0 %v471
      %494 = vmatprep.subr.bf16.mxu0 0
      %495 = vmatpush1.bf16.msra.mxu0 %v470
      %496 = vmatprep.subr.bf16.mxu0 0
      %497 = vmatpush1.bf16.msra.mxu0 %v469
      %498 = vmatprep.subr.bf16.mxu0 0
      %499 = vmatpush1.bf16.msra.mxu0 %v468
      %500 = vmatprep.subr.bf16.mxu0 0
      %501 = vmatpush2.bf16.msra.mxu0 0
      %502 = vmatprep.subr.bf16.mxu0 0
      %503 = vmatpush2.bf16.msra.mxu0 0
      %504 = vmatprep.subr.bf16.mxu0 0
      %505 = vmatpush2.bf16.msra.mxu0 0
      %506 = vmatprep.subr.bf16.mxu0 0
      %507 = vmatpush2.bf16.msra.mxu0 0
      %508 = vmatprep.subr.bf16.mxu0 0
      %509 = vmatpush2.bf16.msra.mxu0 0
      %510 = vmatprep.subr.bf16.mxu0 0
      %511 = vmatpush2.bf16.msra.mxu0 0
      %512 = vmatprep.subr.bf16.mxu0 0
      %513 = vmatpush2.bf16.msra.mxu0 0
      %514 = vmatprep.subr.bf16.mxu0 0
      %515 = vmatpush2.bf16.msra.mxu0 0
      %516 = vmatprep.mubr.bf16.mxu0 0
      %517 = vmatmul.mubr.bf16.gmra.mxu0 %v434
      %v518 = vpop.f32.mrf.mxu0
      %v519 = vadd.f32 0.0, %v518
      %v520 = vpop.f32.mrf.mxu0
      %v521 = vpop.f32.mrf.mxu0
      %v522 = vadd.f32 0.0, %v521
      %v523 = vpop.f32.mrf.mxu0
      %524 = vdwg.mxu0
      %v525 = vadd.f32 %v408, %v519
      %v526 = vadd.f32 %v409, %v522
      %v527 = vld [vmem:[%s165] sm:$0xc]
      %v528 = vld [vmem:[%s165 + $0x4] sm:$0xf]
      %v529 = vld [vmem:[%s165 + $0x8] sm:$0x1]
      %s530 = scalar_lea.vmem %s1, 192
      %v531 = vld [vmem:[%s530] sm:$0xf]
      %v532 = vld [vmem:[%s530 + $0x4] sm:$0xf]
      %v533 = vld [vmem:[%s530 + $0x8] sm:$0xf]
      %v534 = vld [vmem:[%s530 + $0xc] sm:$0xf]
      %v535 = vld [vmem:[%s530 + $0x10] sm:$0xf]
      %v536 = vld [vmem:[%s530 + $0x14] sm:$0xf]
      %v537 = vld [vmem:[%s530 + $0x18] sm:$0xf]
      %v538 = vld [vmem:[%s530 + $0x1c] sm:$0xf]
      %v539 = vld [vmem:[%s530 + $0x20] sm:$0xf]
      %v540 = vld [vmem:[%s530 + $0x24] sm:$0xf]
      %v541 = vld [vmem:[%s530 + $0x28] sm:$0xf]
      %v542 = vld [vmem:[%s530 + $0x2c] sm:$0xf]
      %v543 = vld [vmem:[%s530 + $0x30] sm:$0xf]
      %v544 = vld [vmem:[%s530 + $0x34] sm:$0xf]
      %v545 = vld [vmem:[%s530 + $0x38] sm:$0xf]
      %v546 = vld [vmem:[%s530 + $0x3c] sm:$0xf]
      %v550 = vunpack.c.l.b16 %v527
      %v551 = vunpack.c.l.b16 %v528
      %v552 = vunpack.c.l.b16 %v529
      %v553 = vpack.c.b16 %v551, %v550
      %v554 = vpack.c.b16 %v552, %v552
      %vm555 = vsmask.f32 5376
      %v557 = vshrl.u32 %v553, 16
      %v559 = vrot.slane %v557, 2
      %v560 = vshll.u32 %v553, 16
      %v562 = vrot.slane %v560, 3
      %v563 = vor.u32 %v559, %v562
      %v565 = vshrl.u32 %v554, 16
      %v567 = vrot.slane %v565, 2
      %v568 = vshll.u32 %v554, 16
      %v570 = vrot.slane %v568, 3
      %v571 = vor.u32 %v567, %v570
      %v572 = vsel %vm555, %v563, %v571
      %v590 = vunpack.c.l.b16 %v531
      %v591 = vunpack.c.l.b16 %v532
      %v592 = vunpack.c.l.b16 %v533
      %v593 = vunpack.c.l.b16 %v534
      %v594 = vunpack.c.l.b16 %v535
      %v595 = vunpack.c.l.b16 %v536
      %v596 = vunpack.c.l.b16 %v537
      %v597 = vunpack.c.l.b16 %v538
      %v598 = vunpack.c.l.b16 %v539
      %v599 = vunpack.c.l.b16 %v540
      %v600 = vunpack.c.l.b16 %v541
      %v601 = vunpack.c.l.b16 %v542
      %v602 = vunpack.c.l.b16 %v543
      %v603 = vunpack.c.l.b16 %v544
      %v604 = vunpack.c.l.b16 %v545
      %v605 = vunpack.c.l.b16 %v546
      %v606 = vpack.c.b16 %v591, %v590
      %v607 = vpack.c.b16 %v593, %v592
      %v608 = vpack.c.b16 %v595, %v594
      %v609 = vpack.c.b16 %v597, %v596
      %v610 = vpack.c.b16 %v599, %v598
      %v611 = vpack.c.b16 %v601, %v600
      %v612 = vpack.c.b16 %v603, %v602
      %v613 = vpack.c.b16 %v605, %v604
      %622 = vmatprep.subr.bf16.mxu0 0
      %623 = vmatpush1.bf16.msra.mxu0 %v613
      %624 = vmatprep.subr.bf16.mxu0 0
      %625 = vmatpush1.bf16.msra.mxu0 %v612
      %626 = vmatprep.subr.bf16.mxu0 0
      %627 = vmatpush1.bf16.msra.mxu0 %v611
      %628 = vmatprep.subr.bf16.mxu0 0
      %629 = vmatpush1.bf16.msra.mxu0 %v610
      %630 = vmatprep.subr.bf16.mxu0 0
      %631 = vmatpush1.bf16.msra.mxu0 %v609
      %632 = vmatprep.subr.bf16.mxu0 0
      %633 = vmatpush1.bf16.msra.mxu0 %v608
      %634 = vmatprep.subr.bf16.mxu0 0
      %635 = vmatpush1.bf16.msra.mxu0 %v607
      %636 = vmatprep.subr.bf16.mxu0 0
      %637 = vmatpush1.bf16.msra.mxu0 %v606
      %638 = vmatprep.subr.bf16.mxu0 0
      %639 = vmatpush2.bf16.msra.mxu0 0
      %640 = vmatprep.subr.bf16.mxu0 0
      %641 = vmatpush2.bf16.msra.mxu0 0
      %642 = vmatprep.subr.bf16.mxu0 0
      %643 = vmatpush2.bf16.msra.mxu0 0
      %644 = vmatprep.subr.bf16.mxu0 0
      %645 = vmatpush2.bf16.msra.mxu0 0
      %646 = vmatprep.subr.bf16.mxu0 0
      %647 = vmatpush2.bf16.msra.mxu0 0
      %648 = vmatprep.subr.bf16.mxu0 0
      %649 = vmatpush2.bf16.msra.mxu0 0
      %650 = vmatprep.subr.bf16.mxu0 0
      %651 = vmatpush2.bf16.msra.mxu0 0
      %652 = vmatprep.subr.bf16.mxu0 0
      %653 = vmatpush2.bf16.msra.mxu0 0
      %654 = vmatprep.mubr.bf16.mxu0 0
      %655 = vmatmul.mubr.bf16.gmra.mxu0 %v572
      %v656 = vpop.f32.mrf.mxu0
      %v657 = vadd.f32 0.0, %v656
      %v658 = vpop.f32.mrf.mxu0
      %v659 = vpop.f32.mrf.mxu0
      %v660 = vadd.f32 0.0, %v659
      %v661 = vpop.f32.mrf.mxu0
      %662 = vdwg.mxu0
      %v663 = vadd.f32 %v525, %v657
      %v664 = vadd.f32 %v526, %v660
      %v665 = vld [vmem:[%s165] sm:$0x8]
      %v666 = vld [vmem:[%s165 + $0x8] sm:$0x3]
      %s667 = scalar_lea.vmem %s1, 256
      %v668 = vld [vmem:[%s667] sm:$0xf]
      %v669 = vld [vmem:[%s667 + $0x4] sm:$0xf]
      %v670 = vld [vmem:[%s667 + $0x8] sm:$0xf]
      %v671 = vld [vmem:[%s667 + $0xc] sm:$0xf]
      %v672 = vld [vmem:[%s667 + $0x10] sm:$0xf]
      %v673 = vld [vmem:[%s667 + $0x14] sm:$0xf]
      %v674 = vld [vmem:[%s667 + $0x18] sm:$0xf]
      %v675 = vld [vmem:[%s667 + $0x1c] sm:$0xf]
      %v676 = vld [vmem:[%s667 + $0x20] sm:$0xf]
      %v677 = vld [vmem:[%s667 + $0x24] sm:$0xf]
      %v678 = vld [vmem:[%s667 + $0x28] sm:$0xf]
      %v679 = vld [vmem:[%s667 + $0x2c] sm:$0xf]
      %v680 = vld [vmem:[%s667 + $0x30] sm:$0xf]
      %v681 = vld [vmem:[%s667 + $0x34] sm:$0xf]
      %v682 = vld [vmem:[%s667 + $0x38] sm:$0xf]
      %v683 = vld [vmem:[%s667 + $0x3c] sm:$0xf]
      %v686 = vunpack.c.l.b16 %v665
      %v687 = vunpack.c.l.b16 %v666
      %v688 = vpack.c.b16 %v551, %v686
      %v689 = vpack.c.b16 %v687, %v687
      %vm690 = vcmask 1044480
      %v691 = vrot.slane %v688, 3
      %v692 = vrot.slane %v689, 3
      %v693 = vsel %vm690, %v691, %v692
      %v711 = vunpack.c.l.b16 %v668
      %v712 = vunpack.c.l.b16 %v669
      %v713 = vunpack.c.l.b16 %v670
      %v714 = vunpack.c.l.b16 %v671
      %v715 = vunpack.c.l.b16 %v672
      %v716 = vunpack.c.l.b16 %v673
      %v717 = vunpack.c.l.b16 %v674
      %v718 = vunpack.c.l.b16 %v675
      %v719 = vunpack.c.l.b16 %v676
      %v720 = vunpack.c.l.b16 %v677
      %v721 = vunpack.c.l.b16 %v678
      %v722 = vunpack.c.l.b16 %v679
      %v723 = vunpack.c.l.b16 %v680
      %v724 = vunpack.c.l.b16 %v681
      %v725 = vunpack.c.l.b16 %v682
      %v726 = vunpack.c.l.b16 %v683
      %v727 = vpack.c.b16 %v712, %v711
      %v728 = vpack.c.b16 %v714, %v713
      %v729 = vpack.c.b16 %v716, %v715
      %v730 = vpack.c.b16 %v718, %v717
      %v731 = vpack.c.b16 %v720, %v719
      %v732 = vpack.c.b16 %v722, %v721
      %v733 = vpack.c.b16 %v724, %v723
      %v734 = vpack.c.b16 %v726, %v725
      %743 = vmatprep.subr.bf16.mxu0 0
      %744 = vmatpush1.bf16.msra.mxu0 %v734
      %745 = vmatprep.subr.bf16.mxu0 0
      %746 = vmatpush1.bf16.msra.mxu0 %v733
      %747 = vmatprep.subr.bf16.mxu0 0
      %748 = vmatpush1.bf16.msra.mxu0 %v732
      %749 = vmatprep.subr.bf16.mxu0 0
      %750 = vmatpush1.bf16.msra.mxu0 %v731
      %751 = vmatprep.subr.bf16.mxu0 0
      %752 = vmatpush1.bf16.msra.mxu0 %v730
      %753 = vmatprep.subr.bf16.mxu0 0
      %754 = vmatpush1.bf16.msra.mxu0 %v729
      %755 = vmatprep.subr.bf16.mxu0 0
      %756 = vmatpush1.bf16.msra.mxu0 %v728
      %757 = vmatprep.subr.bf16.mxu0 0
      %758 = vmatpush1.bf16.msra.mxu0 %v727
      %759 = vmatprep.subr.bf16.mxu0 0
      %760 = vmatpush2.bf16.msra.mxu0 0
      %761 = vmatprep.subr.bf16.mxu0 0
      %762 = vmatpush2.bf16.msra.mxu0 0
      %763 = vmatprep.subr.bf16.mxu0 0
      %764 = vmatpush2.bf16.msra.mxu0 0
      %765 = vmatprep.subr.bf16.mxu0 0
      %766 = vmatpush2.bf16.msra.mxu0 0
      %767 = vmatprep.subr.bf16.mxu0 0
      %768 = vmatpush2.bf16.msra.mxu0 0
      %769 = vmatprep.subr.bf16.mxu0 0
      %770 = vmatpush2.bf16.msra.mxu0 0
      %771 = vmatprep.subr.bf16.mxu0 0
      %772 = vmatpush2.bf16.msra.mxu0 0
      %773 = vmatprep.subr.bf16.mxu0 0
      %774 = vmatpush2.bf16.msra.mxu0 0
      %775 = vmatprep.mubr.bf16.mxu0 0
      %776 = vmatmul.mubr.bf16.gmra.mxu0 %v693
      %v777 = vpop.f32.mrf.mxu0
      %v778 = vadd.f32 0.0, %v777
      %v779 = vpop.f32.mrf.mxu0
      %v780 = vpop.f32.mrf.mxu0
      %v781 = vadd.f32 0.0, %v780
      %v782 = vpop.f32.mrf.mxu0
      %783 = vdwg.mxu0
      %v784 = vadd.f32 %v663, %v778
      %v785 = vadd.f32 %v664, %v781
      %s786 = scalar_lea.vmem %s1, 320
      %v787 = vld [vmem:[%s786] sm:$0xf]
      %v788 = vld [vmem:[%s786 + $0x4] sm:$0xf]
      %v789 = vld [vmem:[%s786 + $0x8] sm:$0xf]
      %v790 = vld [vmem:[%s786 + $0xc] sm:$0xf]
      %v791 = vld [vmem:[%s786 + $0x10] sm:$0xf]
      %v792 = vld [vmem:[%s786 + $0x14] sm:$0xf]
      %v793 = vld [vmem:[%s786 + $0x18] sm:$0xf]
      %v794 = vld [vmem:[%s786 + $0x1c] sm:$0xf]
      %v795 = vld [vmem:[%s786 + $0x20] sm:$0xf]
      %v796 = vld [vmem:[%s786 + $0x24] sm:$0xf]
      %v797 = vld [vmem:[%s786 + $0x28] sm:$0xf]
      %v798 = vld [vmem:[%s786 + $0x2c] sm:$0xf]
      %v799 = vld [vmem:[%s786 + $0x30] sm:$0xf]
      %v800 = vld [vmem:[%s786 + $0x34] sm:$0xf]
      %v801 = vld [vmem:[%s786 + $0x38] sm:$0xf]
      %v802 = vld [vmem:[%s786 + $0x3c] sm:$0xf]
      %vm803 = vsmask.f32 4352
      %v805 = vshrl.u32 %v688, 16
      %v807 = vrot.slane %v805, 3
      %v808 = vshll.u32 %v688, 16
      %v810 = vrot.slane %v808, 4
      %v811 = vor.u32 %v807, %v810
      %v813 = vshrl.u32 %v689, 16
      %v815 = vrot.slane %v813, 3
      %v816 = vshll.u32 %v689, 16
      %v818 = vrot.slane %v816, 4
      %v819 = vor.u32 %v815, %v818
      %v820 = vsel %vm803, %v811, %v819
      %v838 = vunpack.c.l.b16 %v787
      %v839 = vunpack.c.l.b16 %v788
      %v840 = vunpack.c.l.b16 %v789
      %v841 = vunpack.c.l.b16 %v790
      %v842 = vunpack.c.l.b16 %v791
      %v843 = vunpack.c.l.b16 %v792
      %v844 = vunpack.c.l.b16 %v793
      %v845 = vunpack.c.l.b16 %v794
      %v846 = vunpack.c.l.b16 %v795
      %v847 = vunpack.c.l.b16 %v796
      %v848 = vunpack.c.l.b16 %v797
      %v849 = vunpack.c.l.b16 %v798
      %v850 = vunpack.c.l.b16 %v799
      %v851 = vunpack.c.l.b16 %v800
      %v852 = vunpack.c.l.b16 %v801
      %v853 = vunpack.c.l.b16 %v802
      %v854 = vpack.c.b16 %v839, %v838
      %v855 = vpack.c.b16 %v841, %v840
      %v856 = vpack.c.b16 %v843, %v842
      %v857 = vpack.c.b16 %v845, %v844
      %v858 = vpack.c.b16 %v847, %v846
      %v859 = vpack.c.b16 %v849, %v848
      %v860 = vpack.c.b16 %v851, %v850
      %v861 = vpack.c.b16 %v853, %v852
      %870 = vmatprep.subr.bf16.mxu0 0
      %871 = vmatpush1.bf16.msra.mxu0 %v861
      %872 = vmatprep.subr.bf16.mxu0 0
      %873 = vmatpush1.bf16.msra.mxu0 %v860
      %874 = vmatprep.subr.bf16.mxu0 0
      %875 = vmatpush1.bf16.msra.mxu0 %v859
      %876 = vmatprep.subr.bf16.mxu0 0
      %877 = vmatpush1.bf16.msra.mxu0 %v858
      %878 = vmatprep.subr.bf16.mxu0 0
      %879 = vmatpush1.bf16.msra.mxu0 %v857
      %880 = vmatprep.subr.bf16.mxu0 0
      %881 = vmatpush1.bf16.msra.mxu0 %v856
      %882 = vmatprep.subr.bf16.mxu0 0
      %883 = vmatpush1.bf16.msra.mxu0 %v855
      %884 = vmatprep.subr.bf16.mxu0 0
      %885 = vmatpush1.bf16.msra.mxu0 %v854
      %886 = vmatprep.subr.bf16.mxu0 0
      %887 = vmatpush2.bf16.msra.mxu0 0
      %888 = vmatprep.subr.bf16.mxu0 0
      %889 = vmatpush2.bf16.msra.mxu0 0
      %890 = vmatprep.subr.bf16.mxu0 0
      %891 = vmatpush2.bf16.msra.mxu0 0
      %892 = vmatprep.subr.bf16.mxu0 0
      %893 = vmatpush2.bf16.msra.mxu0 0
      %894 = vmatprep.subr.bf16.mxu0 0
      %895 = vmatpush2.bf16.msra.mxu0 0
      %896 = vmatprep.subr.bf16.mxu0 0
      %897 = vmatpush2.bf16.msra.mxu0 0
      %898 = vmatprep.subr.bf16.mxu0 0
      %899 = vmatpush2.bf16.msra.mxu0 0
      %900 = vmatprep.subr.bf16.mxu0 0
      %901 = vmatpush2.bf16.msra.mxu0 0
      %902 = vmatprep.mubr.bf16.mxu0 0
      %903 = vmatmul.mubr.bf16.gmra.mxu0 %v820
      %v904 = vpop.f32.mrf.mxu0
      %v905 = vadd.f32 0.0, %v904
      %v906 = vpop.f32.mrf.mxu0
      %v907 = vpop.f32.mrf.mxu0
      %v908 = vadd.f32 0.0, %v907
      %v909 = vpop.f32.mrf.mxu0
      %910 = vdwg.mxu0
      %v911 = vadd.f32 %v784, %v905
      %v912 = vadd.f32 %v785, %v908
      %v913 = vld [vmem:[%s165 + $0x4] sm:$0xe]
      %v914 = vld [vmem:[%s165 + $0x8] sm:$0xf]
      %s915 = scalar_lea.vmem %s1, 384
      %v916 = vld [vmem:[%s915] sm:$0xf]
      %v917 = vld [vmem:[%s915 + $0x4] sm:$0xf]
      %v918 = vld [vmem:[%s915 + $0x8] sm:$0xf]
      %v919 = vld [vmem:[%s915 + $0xc] sm:$0xf]
      %v920 = vld [vmem:[%s915 + $0x10] sm:$0xf]
      %v921 = vld [vmem:[%s915 + $0x14] sm:$0xf]
      %v922 = vld [vmem:[%s915 + $0x18] sm:$0xf]
      %v923 = vld [vmem:[%s915 + $0x1c] sm:$0xf]
      %v924 = vld [vmem:[%s915 + $0x20] sm:$0xf]
      %v925 = vld [vmem:[%s915 + $0x24] sm:$0xf]
      %v926 = vld [vmem:[%s915 + $0x28] sm:$0xf]
      %v927 = vld [vmem:[%s915 + $0x2c] sm:$0xf]
      %v928 = vld [vmem:[%s915 + $0x30] sm:$0xf]
      %v929 = vld [vmem:[%s915 + $0x34] sm:$0xf]
      %v930 = vld [vmem:[%s915 + $0x38] sm:$0xf]
      %v931 = vld [vmem:[%s915 + $0x3c] sm:$0xf]
      %v934 = vunpack.c.l.b16 %v913
      %v935 = vunpack.c.l.b16 %v914
      %v936 = vpack.c.b16 %v935, %v934
      %v937 = vrot.slane %v936, 1
      %v955 = vunpack.c.l.b16 %v916
      %v956 = vunpack.c.l.b16 %v917
      %v957 = vunpack.c.l.b16 %v918
      %v958 = vunpack.c.l.b16 %v919
      %v959 = vunpack.c.l.b16 %v920
      %v960 = vunpack.c.l.b16 %v921
      %v961 = vunpack.c.l.b16 %v922
      %v962 = vunpack.c.l.b16 %v923
      %v963 = vunpack.c.l.b16 %v924
      %v964 = vunpack.c.l.b16 %v925
      %v965 = vunpack.c.l.b16 %v926
      %v966 = vunpack.c.l.b16 %v927
      %v967 = vunpack.c.l.b16 %v928
      %v968 = vunpack.c.l.b16 %v929
      %v969 = vunpack.c.l.b16 %v930
      %v970 = vunpack.c.l.b16 %v931
      %v971 = vpack.c.b16 %v956, %v955
      %v972 = vpack.c.b16 %v958, %v957
      %v973 = vpack.c.b16 %v960, %v959
      %v974 = vpack.c.b16 %v962, %v961
      %v975 = vpack.c.b16 %v964, %v963
      %v976 = vpack.c.b16 %v966, %v965
      %v977 = vpack.c.b16 %v968, %v967
      %v978 = vpack.c.b16 %v970, %v969
      %987 = vmatprep.subr.bf16.mxu0 0
      %988 = vmatpush1.bf16.msra.mxu0 %v978
      %989 = vmatprep.subr.bf16.mxu0 0
      %990 = vmatpush1.bf16.msra.mxu0 %v977
      %991 = vmatprep.subr.bf16.mxu0 0
      %992 = vmatpush1.bf16.msra.mxu0 %v976
      %993 = vmatprep.subr.bf16.mxu0 0
      %994 = vmatpush1.bf16.msra.mxu0 %v975
      %995 = vmatprep.subr.bf16.mxu0 0
      %996 = vmatpush1.bf16.msra.mxu0 %v974
      %997 = vmatprep.subr.bf16.mxu0 0
      %998 = vmatpush1.bf16.msra.mxu0 %v973
      %999 = vmatprep.subr.bf16.mxu0 0
      %1000 = vmatpush1.bf16.msra.mxu0 %v972
      %1001 = vmatprep.subr.bf16.mxu0 0
      %1002 = vmatpush1.bf16.msra.mxu0 %v971
      %1003 = vmatprep.subr.bf16.mxu0 0
      %1004 = vmatpush2.bf16.msra.mxu0 0
      %1005 = vmatprep.subr.bf16.mxu0 0
      %1006 = vmatpush2.bf16.msra.mxu0 0
      %1007 = vmatprep.subr.bf16.mxu0 0
      %1008 = vmatpush2.bf16.msra.mxu0 0
      %1009 = vmatprep.subr.bf16.mxu0 0
      %1010 = vmatpush2.bf16.msra.mxu0 0
      %1011 = vmatprep.subr.bf16.mxu0 0
      %1012 = vmatpush2.bf16.msra.mxu0 0
      %1013 = vmatprep.subr.bf16.mxu0 0
      %1014 = vmatpush2.bf16.msra.mxu0 0
      %1015 = vmatprep.subr.bf16.mxu0 0
      %1016 = vmatpush2.bf16.msra.mxu0 0
      %1017 = vmatprep.subr.bf16.mxu0 0
      %1018 = vmatpush2.bf16.msra.mxu0 0
      %1019 = vmatprep.mubr.bf16.mxu0 0
      %1020 = vmatmul.mubr.bf16.gmra.mxu0 %v937
      %v1021 = vpop.f32.mrf.mxu0
      %v1022 = vadd.f32 0.0, %v1021
      %v1023 = vpop.f32.mrf.mxu0
      %v1024 = vpop.f32.mrf.mxu0
      %v1025 = vadd.f32 0.0, %v1024
      %v1026 = vpop.f32.mrf.mxu0
      %1027 = vdwg.mxu0
      %v1028 = vadd.f32 %v911, %v1022
      %v1029 = vadd.f32 %v912, %v1025
      %s1030 = scalar_lea.vmem %s1, 448
      %v1031 = vld [vmem:[%s1030] sm:$0xf]
      %v1032 = vld [vmem:[%s1030 + $0x4] sm:$0xf]
      %v1033 = vld [vmem:[%s1030 + $0x8] sm:$0xf]
      %v1034 = vld [vmem:[%s1030 + $0xc] sm:$0xf]
      %v1035 = vld [vmem:[%s1030 + $0x10] sm:$0xf]
      %v1036 = vld [vmem:[%s1030 + $0x14] sm:$0xf]
      %v1037 = vld [vmem:[%s1030 + $0x18] sm:$0xf]
      %v1038 = vld [vmem:[%s1030 + $0x1c] sm:$0xf]
      %v1039 = vld [vmem:[%s1030 + $0x20] sm:$0xf]
      %v1040 = vld [vmem:[%s1030 + $0x24] sm:$0xf]
      %v1041 = vld [vmem:[%s1030 + $0x28] sm:$0xf]
      %v1042 = vld [vmem:[%s1030 + $0x2c] sm:$0xf]
      %v1043 = vld [vmem:[%s1030 + $0x30] sm:$0xf]
      %v1044 = vld [vmem:[%s1030 + $0x34] sm:$0xf]
      %v1045 = vld [vmem:[%s1030 + $0x38] sm:$0xf]
      %v1046 = vld [vmem:[%s1030 + $0x3c] sm:$0xf]
      %v1048 = vshrl.u32 %v936, 16
      %v1050 = vrot.slane %v1048, 1
      %v1051 = vshll.u32 %v936, 16
      %v1053 = vrot.slane %v1051, 2
      %v1054 = vor.u32 %v1050, %v1053
      %v1072 = vunpack.c.l.b16 %v1031
      %v1073 = vunpack.c.l.b16 %v1032
      %v1074 = vunpack.c.l.b16 %v1033
      %v1075 = vunpack.c.l.b16 %v1034
      %v1076 = vunpack.c.l.b16 %v1035
      %v1077 = vunpack.c.l.b16 %v1036
      %v1078 = vunpack.c.l.b16 %v1037
      %v1079 = vunpack.c.l.b16 %v1038
      %v1080 = vunpack.c.l.b16 %v1039
      %v1081 = vunpack.c.l.b16 %v1040
      %v1082 = vunpack.c.l.b16 %v1041
      %v1083 = vunpack.c.l.b16 %v1042
      %v1084 = vunpack.c.l.b16 %v1043
      %v1085 = vunpack.c.l.b16 %v1044
      %v1086 = vunpack.c.l.b16 %v1045
      %v1087 = vunpack.c.l.b16 %v1046
      %v1088 = vpack.c.b16 %v1073, %v1072
      %v1089 = vpack.c.b16 %v1075, %v1074
      %v1090 = vpack.c.b16 %v1077, %v1076
      %v1091 = vpack.c.b16 %v1079, %v1078
      %v1092 = vpack.c.b16 %v1081, %v1080
      %v1093 = vpack.c.b16 %v1083, %v1082
      %v1094 = vpack.c.b16 %v1085, %v1084
      %v1095 = vpack.c.b16 %v1087, %v1086
      %1104 = vmatprep.subr.bf16.mxu0 0
      %1105 = vmatpush1.bf16.msra.mxu0 %v1095
      %1106 = vmatprep.subr.bf16.mxu0 0
      %1107 = vmatpush1.bf16.msra.mxu0 %v1094
      %1108 = vmatprep.subr.bf16.mxu0 0
      %1109 = vmatpush1.bf16.msra.mxu0 %v1093
      %1110 = vmatprep.subr.bf16.mxu0 0
      %1111 = vmatpush1.bf16.msra.mxu0 %v1092
      %1112 = vmatprep.subr.bf16.mxu0 0
      %1113 = vmatpush1.bf16.msra.mxu0 %v1091
      %1114 = vmatprep.subr.bf16.mxu0 0
      %1115 = vmatpush1.bf16.msra.mxu0 %v1090
      %1116 = vmatprep.subr.bf16.mxu0 0
      %1117 = vmatpush1.bf16.msra.mxu0 %v1089
      %1118 = vmatprep.subr.bf16.mxu0 0
      %1119 = vmatpush1.bf16.msra.mxu0 %v1088
      %1120 = vmatprep.subr.bf16.mxu0 0
      %1121 = vmatpush2.bf16.msra.mxu0 0
      %1122 = vmatprep.subr.bf16.mxu0 0
      %1123 = vmatpush2.bf16.msra.mxu0 0
      %1124 = vmatprep.subr.bf16.mxu0 0
      %1125 = vmatpush2.bf16.msra.mxu0 0
      %1126 = vmatprep.subr.bf16.mxu0 0
      %1127 = vmatpush2.bf16.msra.mxu0 0
      %1128 = vmatprep.subr.bf16.mxu0 0
      %1129 = vmatpush2.bf16.msra.mxu0 0
      %1130 = vmatprep.subr.bf16.mxu0 0
      %1131 = vmatpush2.bf16.msra.mxu0 0
      %1132 = vmatprep.subr.bf16.mxu0 0
      %1133 = vmatpush2.bf16.msra.mxu0 0
      %1134 = vmatprep.subr.bf16.mxu0 0
      %1135 = vmatpush2.bf16.msra.mxu0 0
      %1136 = vmatprep.mubr.bf16.mxu0 0
      %1137 = vmatmul.mubr.bf16.gmra.mxu0 %v1054
      %v1138 = vpop.f32.mrf.mxu0
      %v1139 = vadd.f32 0.0, %v1138
      %v1140 = vpop.f32.mrf.mxu0
      %v1141 = vpop.f32.mrf.mxu0
      %v1142 = vadd.f32 0.0, %v1141
      %v1143 = vpop.f32.mrf.mxu0
      %1144 = vdwg.mxu0
      %v1145 = vadd.f32 %v1028, %v1139
      %v1146 = vadd.f32 %v1029, %v1142
      %v1147 = vld [vmem:[%s165 + $0x4] sm:$0xc]
      %v1148 = vld [vmem:[%s165 + $0x8] sm:$0xf]
      %v1149 = vld [vmem:[%s165 + $0xc] sm:$0x1]
      %s1150 = scalar_lea.vmem %s1, 512
      %v1151 = vld [vmem:[%s1150] sm:$0xf]
      %v1152 = vld [vmem:[%s1150 + $0x4] sm:$0xf]
      %v1153 = vld [vmem:[%s1150 + $0x8] sm:$0xf]
      %v1154 = vld [vmem:[%s1150 + $0xc] sm:$0xf]
      %v1155 = vld [vmem:[%s1150 + $0x10] sm:$0xf]
      %v1156 = vld [vmem:[%s1150 + $0x14] sm:$0xf]
      %v1157 = vld [vmem:[%s1150 + $0x18] sm:$0xf]
      %v1158 = vld [vmem:[%s1150 + $0x1c] sm:$0xf]
      %v1159 = vld [vmem:[%s1150 + $0x20] sm:$0xf]
      %v1160 = vld [vmem:[%s1150 + $0x24] sm:$0xf]
      %v1161 = vld [vmem:[%s1150 + $0x28] sm:$0xf]
      %v1162 = vld [vmem:[%s1150 + $0x2c] sm:$0xf]
      %v1163 = vld [vmem:[%s1150 + $0x30] sm:$0xf]
      %v1164 = vld [vmem:[%s1150 + $0x34] sm:$0xf]
      %v1165 = vld [vmem:[%s1150 + $0x38] sm:$0xf]
      %v1166 = vld [vmem:[%s1150 + $0x3c] sm:$0xf]
      %v1170 = vunpack.c.l.b16 %v1147
      %v1171 = vunpack.c.l.b16 %v1148
      %v1172 = vunpack.c.l.b16 %v1149
      %v1173 = vpack.c.b16 %v1171, %v1170
      %v1174 = vpack.c.b16 %v1172, %v1172
      %vm1175 = vcmask 1045504
      %v1176 = vrot.slane %v1173, 2
      %v1177 = vrot.slane %v1174, 2
      %v1178 = vsel %vm1175, %v1176, %v1177
      %v1196 = vunpack.c.l.b16 %v1151
      %v1197 = vunpack.c.l.b16 %v1152
      %v1198 = vunpack.c.l.b16 %v1153
      %v1199 = vunpack.c.l.b16 %v1154
      %v1200 = vunpack.c.l.b16 %v1155
      %v1201 = vunpack.c.l.b16 %v1156
      %v1202 = vunpack.c.l.b16 %v1157
      %v1203 = vunpack.c.l.b16 %v1158
      %v1204 = vunpack.c.l.b16 %v1159
      %v1205 = vunpack.c.l.b16 %v1160
      %v1206 = vunpack.c.l.b16 %v1161
      %v1207 = vunpack.c.l.b16 %v1162
      %v1208 = vunpack.c.l.b16 %v1163
      %v1209 = vunpack.c.l.b16 %v1164
      %v1210 = vunpack.c.l.b16 %v1165
      %v1211 = vunpack.c.l.b16 %v1166
      %v1212 = vpack.c.b16 %v1197, %v1196
      %v1213 = vpack.c.b16 %v1199, %v1198
      %v1214 = vpack.c.b16 %v1201, %v1200
      %v1215 = vpack.c.b16 %v1203, %v1202
      %v1216 = vpack.c.b16 %v1205, %v1204
      %v1217 = vpack.c.b16 %v1207, %v1206
      %v1218 = vpack.c.b16 %v1209, %v1208
      %v1219 = vpack.c.b16 %v1211, %v1210
      %1228 = vmatprep.subr.bf16.mxu0 0
      %1229 = vmatpush1.bf16.msra.mxu0 %v1219
      %1230 = vmatprep.subr.bf16.mxu0 0
      %1231 = vmatpush1.bf16.msra.mxu0 %v1218
      %1232 = vmatprep.subr.bf16.mxu0 0
      %1233 = vmatpush1.bf16.msra.mxu0 %v1217
      %1234 = vmatprep.subr.bf16.mxu0 0
      %1235 = vmatpush1.bf16.msra.mxu0 %v1216
      %1236 = vmatprep.subr.bf16.mxu0 0
      %1237 = vmatpush1.bf16.msra.mxu0 %v1215
      %1238 = vmatprep.subr.bf16.mxu0 0
      %1239 = vmatpush1.bf16.msra.mxu0 %v1214
      %1240 = vmatprep.subr.bf16.mxu0 0
      %1241 = vmatpush1.bf16.msra.mxu0 %v1213
      %1242 = vmatprep.subr.bf16.mxu0 0
      %1243 = vmatpush1.bf16.msra.mxu0 %v1212
      %1244 = vmatprep.subr.bf16.mxu0 0
      %1245 = vmatpush2.bf16.msra.mxu0 0
      %1246 = vmatprep.subr.bf16.mxu0 0
      %1247 = vmatpush2.bf16.msra.mxu0 0
      %1248 = vmatprep.subr.bf16.mxu0 0
      %1249 = vmatpush2.bf16.msra.mxu0 0
      %1250 = vmatprep.subr.bf16.mxu0 0
      %1251 = vmatpush2.bf16.msra.mxu0 0
      %1252 = vmatprep.subr.bf16.mxu0 0
      %1253 = vmatpush2.bf16.msra.mxu0 0
      %1254 = vmatprep.subr.bf16.mxu0 0
      %1255 = vmatpush2.bf16.msra.mxu0 0
      %1256 = vmatprep.subr.bf16.mxu0 0
      %1257 = vmatpush2.bf16.msra.mxu0 0
      %1258 = vmatprep.subr.bf16.mxu0 0
      %1259 = vmatpush2.bf16.msra.mxu0 0
      %1260 = vmatprep.mubr.bf16.mxu0 0
      %1261 = vmatmul.mubr.bf16.gmra.mxu0 %v1178
      %v1262 = vpop.f32.mrf.mxu0
      %v1263 = vadd.f32 0.0, %v1262
      %v1264 = vpop.f32.mrf.mxu0
      %v1265 = vpop.f32.mrf.mxu0
      %v1266 = vadd.f32 0.0, %v1265
      %v1267 = vpop.f32.mrf.mxu0
      %1268 = vdwg.mxu0
      %v1269 = vadd.f32 %v1145, %v1263
      %v1270 = vadd.f32 %v1146, %v1266
      %v1271 = vmax.f32 %v1269, 0.0
      %v1272 = vmax.f32 %v1270, 0.0
      %v1273 = vpack.c.bf16 %v1271, %v1271
      %vm1274 = vcmask 1041408
      %vm1275 = vsmask.f32 1280
      %vm1276 = vmand %vm1274, %vm1275
      %v1277 = vld [vmem:[%s170] sm:$0x3]
      %v1278 = vsel %vm1276, %v1273, %v1277
      %1279 = vst [vmem:[%s170] sm:$0x3] %v1278
      %v1282 = vunpack.c.l.s4 1983009808
      %v1283 = vunpack.c.0.s8 %v1282
      %v1284 = vlaneseq
      %v1285 = vshrl.u32 %v1284, 7
      %v1286 = vsub.s32 %v1283, %v1285
      %v1287 = vrot.slane %v1273, %v1286
      %v1288 = vcombine.high %v1287, %v1287
      %v1290 = vshrl.u32 %v1288, 16
      %v1292 = vrot.slane %v1290, 6
      %v1293 = vshll.u32 %v1288, 16
      %v1295 = vrot.slane %v1293, 7
      %v1296 = vor.u32 %v1292, %v1295
      %v1297 = vrot.slane %v1296, 2
      %s1299 = scalar_lea.vmem %s170, 2
      %v1300 = vld [vmem:[%s1299] sm:$0x3]
      %v1301 = vsel %vm1276, %v1297, %v1300
      %1302 = vst [vmem:[%s1299] sm:$0x3] %v1301
      %v1303 = vpack.c.bf16 %v1272, %v1272
      %v1306 = vunpack.c.l.s4 1983009808
      %v1307 = vunpack.c.0.s8 %v1306
      %v1308 = vlaneseq
      %v1309 = vshrl.u32 %v1308, 7
      %v1310 = vsub.s32 %v1307, %v1309
      %v1311 = vrot.slane %v1303, %v1310
      %v1312 = vcombine.high %v1311, %v1311
      %vm1313 = vcmask 1040384
      %vm1314 = vcmask 1042434
      %vm1315 = vmor %vm1313, %vm1314
      %vm1316 = vcmask 1044484
      %vm1317 = vmor %vm1315, %vm1316
      %vm1318 = vcmask 1046534
      %vm1319 = vmor %vm1317, %vm1318
      %v1320 = vrot.slane %v1311, 7
      %v1321 = vrot.slane %v1320, 2
      %v1322 = vrot.slane %v1312, 7
      %v1323 = vsel %vm1319, %v1321, %v1322
      %s1325 = scalar_lea.vmem %s170, 4
      %v1326 = vld [vmem:[%s1325] sm:$0x3]
      %v1327 = vsel %vm1276, %v1323, %v1326
      %1328 = vst [vmem:[%s1325] sm:$0x3] %v1327
      %p1329 = scmp.lt.s32.totalorder %s14, 1
      %s1330 = scalar_select %p1329, %s14, 1
      %s1331 = smul.addr %s1330, 3
      %s1332 = smul.addr %s1331, 2
      %s1333 = scalar_lea.vmem %s3, %s1332
      // Predicated region
      $region33: #{alexnet_embeddings.8} parent=31 // pred_check
        %p1334 = pneg %p100
      $region34: #{alexnet_embeddings.8} parent=31 // pred_check_branch
        %1336 = sbr.rel (%p1334) target = $region36
      $region35: #{alexnet_embeddings.8} parent=31 // pred_region
        _
      $region36: #{alexnet_embeddings.8} parent=31 // pred_fallthru
        _
    $region32: #{alexnet_embeddings.8} parent=5 // pred_fallthru
      _
    %p1337 = scmp.le.s32.totalorder 2, %s9
    // Predicated region
    $region37: #{alexnet_embeddings.8} parent=5 // pred_check
      %p1338 = pneg %p1337
    $region38: #{alexnet_embeddings.8} parent=5 // pred_check_branch
      %1340 = sbr.rel (%p1338) target = $region40
    $region39: #{alexnet_embeddings.8} parent=5 // pred_region
      %s1341 = ssub.s32 %s9, 2
      // Predicated region
      $region41: #{alexnet_embeddings.8} parent=39 // pred_check
        %p1342 = pneg %p106
      $region42: #{alexnet_embeddings.8} parent=39 // pred_check_branch
        %1344 = sbr.rel (%p1342) target = $region44
      $region43: #{alexnet_embeddings.8} parent=39 // pred_region
        %p1345 = scmp.lt.s32.totalorder %s15, 1
        %s1346 = scalar_select %p1345, %s15, 1
        %s1347 = smul.addr %s1346, 3
        %s1348 = smul.addr %s1347, 2
        %s1349 = scalar_lea.vmem %s3, %s1348
      $region44: #{alexnet_embeddings.8} parent=39 // pred_fallthru
        _
    $region40: #{alexnet_embeddings.8} parent=5 // pred_fallthru
      _
  $region6: #{alexnet_embeddings.8} parent=0 // loop_footer
    %s13 = sadd.s32 1, %s9
  $region7: #{alexnet_embeddings.8} parent=0 // loop_footer_branch
    %8 = sbr.rel target = $region3
  $region8: #{alexnet_embeddings.8} parent=0 // loop_exit
    _

// kernel: alexnet_embeddings.11
$region0: #{alexnet_embeddings.11}
  #allocation0 [shape = 'u32[]', space=smem, size = 0x4, offset = 0x4, fixed_abs, tag = 'smem constant byte address 0x4 - core index']
  #allocation1 [shape = 'u32[144,128]{1,0:T(1,128)}', space=vmem, size = 0x12000, scoped, tag = 'internal scratch']
  %s0 = inlined_call_operand.vmem [shape: bf16[8,128], index: 0, kind: input, shape index: {}]
  %s1 = inlined_call_operand.vmem [shape: bf16[128,128], index: 1, kind: input, shape index: {}]
  %s2 = inlined_call_operand.vmem [shape: f32[1,128], index: 2, kind: input, shape index: {}]
  %s3 = inlined_call_operand.vmem [shape: bf16[128,128], index: 3, kind: input, shape index: {}]
  %s4 = inlined_call_operand.vmem [shape: f32[1,128], index: 4, kind: input, shape index: {}]
  %s5 = inlined_call_operand.vmem [shape: f32[8,128], index: 5, kind: output, shape index: {0}]
  %s6 = inlined_call_operand.vmem [shape: f32[8,128], index: 6, kind: output, shape index: {1}]
  %s7 = inlined_call_operand.vmem [shape: f32[8,128], index: 7, kind: output, shape index: {2}]
  %8 = xla_tuple %s5, %s6, %s7
  %s9 = sld [smem:[#allocation0]]
  $region46: #{alexnet_embeddings.11} parent=0
    _
  %s11 = ssub.s32 1, %s9
  %s12 = scalar_select 0, %s11, %s9
  // Predicated region
  $region2: #{alexnet_embeddings.11} parent=0 // pred_check
    _
  $region3: #{alexnet_embeddings.11} parent=0 // pred_check_branch
    %14 = sbr.rel (0) target = $region5
  $region4: #{alexnet_embeddings.11} parent=0 // pred_region
    _
  $region5: #{alexnet_embeddings.11} parent=0 // pred_fallthru
    _
  // Predicated region
  $region6: #{alexnet_embeddings.11} parent=0 // pred_check
    _
  $region7: #{alexnet_embeddings.11} parent=0 // pred_check_branch
    %16 = sbr.rel (0) target = $region9
  $region8: #{alexnet_embeddings.11} parent=0 // pred_region
    _
  $region9: #{alexnet_embeddings.11} parent=0 // pred_fallthru
    _
  // Predicated region
  $region10: #{alexnet_embeddings.11} parent=0 // pred_check
    _
  $region11: #{alexnet_embeddings.11} parent=0 // pred_check_branch
    %18 = sbr.rel (0) target = $region13
  $region12: #{alexnet_embeddings.11} parent=0 // pred_region
    _
  $region13: #{alexnet_embeddings.11} parent=0 // pred_fallthru
    _
  // Predicated region
  $region14: #{alexnet_embeddings.11} parent=0 // pred_check
    _
  $region15: #{alexnet_embeddings.11} parent=0 // pred_check_branch
    %20 = sbr.rel (0) target = $region17
  $region16: #{alexnet_embeddings.11} parent=0 // pred_region
    _
  $region17: #{alexnet_embeddings.11} parent=0 // pred_fallthru
    _
  // Predicated region
  $region18: #{alexnet_embeddings.11} parent=0 // pred_check
    _
  $region19: #{alexnet_embeddings.11} parent=0 // pred_check_branch
    %22 = sbr.rel (0) target = $region21
  $region20: #{alexnet_embeddings.11} parent=0 // pred_region
    _
  $region21: #{alexnet_embeddings.11} parent=0 // pred_fallthru
    _
  %v24 = vld [vmem:[%s0] sm:$0xf]
  %v25 = vld [vmem:[%s1] sm:$0xf]
  %v26 = vld [vmem:[%s1 + $0x4] sm:$0xf]
  %v27 = vld [vmem:[%s1 + $0x8] sm:$0xf]
  %v28 = vld [vmem:[%s1 + $0xc] sm:$0xf]
  %v29 = vld [vmem:[%s1 + $0x10] sm:$0xf]
  %v30 = vld [vmem:[%s1 + $0x14] sm:$0xf]
  %v31 = vld [vmem:[%s1 + $0x18] sm:$0xf]
  %v32 = vld [vmem:[%s1 + $0x1c] sm:$0xf]
  %v33 = vld [vmem:[%s1 + $0x20] sm:$0xf]
  %v34 = vld [vmem:[%s1 + $0x24] sm:$0xf]
  %v35 = vld [vmem:[%s1 + $0x28] sm:$0xf]
  %v36 = vld [vmem:[%s1 + $0x2c] sm:$0xf]
  %v37 = vld [vmem:[%s1 + $0x30] sm:$0xf]
  %v38 = vld [vmem:[%s1 + $0x34] sm:$0xf]
  %v39 = vld [vmem:[%s1 + $0x38] sm:$0xf]
  %v40 = vld [vmem:[%s1 + $0x3c] sm:$0xf]
  %v41 = vld [vmem:[%s2] sm:$0x1]
  %v43 = vlaneseq
  %v44 = vshrl.u32 %v43, 7
  %v45 = vsub.s32 0, %v44
  %v46 = vrot.slane %v41, %v45
  %v64 = vunpack.c.l.b16 %v25
  %v65 = vunpack.c.l.b16 %v26
  %v66 = vunpack.c.l.b16 %v27
  %v67 = vunpack.c.l.b16 %v28
  %v68 = vunpack.c.l.b16 %v29
  %v69 = vunpack.c.l.b16 %v30
  %v70 = vunpack.c.l.b16 %v31
  %v71 = vunpack.c.l.b16 %v32
  %v72 = vunpack.c.l.b16 %v33
  %v73 = vunpack.c.l.b16 %v34
  %v74 = vunpack.c.l.b16 %v35
  %v75 = vunpack.c.l.b16 %v36
  %v76 = vunpack.c.l.b16 %v37
  %v77 = vunpack.c.l.b16 %v38
  %v78 = vunpack.c.l.b16 %v39
  %v79 = vunpack.c.l.b16 %v40
  %v80 = vpack.c.b16 %v65, %v64
  %v81 = vpack.c.b16 %v67, %v66
  %v82 = vpack.c.b16 %v69, %v68
  %v83 = vpack.c.b16 %v71, %v70
  %v84 = vpack.c.b16 %v73, %v72
  %v85 = vpack.c.b16 %v75, %v74
  %v86 = vpack.c.b16 %v77, %v76
  %v87 = vpack.c.b16 %v79, %v78
  %96 = vmatprep.subr.bf16.mxu0 0
  %97 = vmatpush1.bf16.msra.mxu0 %v87
  %98 = vmatprep.subr.bf16.mxu0 0
  %99 = vmatpush1.bf16.msra.mxu0 %v86
  %100 = vmatprep.subr.bf16.mxu0 0
  %101 = vmatpush1.bf16.msra.mxu0 %v85
  %102 = vmatprep.subr.bf16.mxu0 0
  %103 = vmatpush1.bf16.msra.mxu0 %v84
  %104 = vmatprep.subr.bf16.mxu0 0
  %105 = vmatpush1.bf16.msra.mxu0 %v83
  %106 = vmatprep.subr.bf16.mxu0 0
  %107 = vmatpush1.bf16.msra.mxu0 %v82
  %108 = vmatprep.subr.bf16.mxu0 0
  %109 = vmatpush1.bf16.msra.mxu0 %v81
  %110 = vmatprep.subr.bf16.mxu0 0
  %111 = vmatpush1.bf16.msra.mxu0 %v80
  %112 = vmatprep.subr.bf16.mxu0 0
  %113 = vmatpush2.bf16.msra.mxu0 0
  %114 = vmatprep.subr.bf16.mxu0 0
  %115 = vmatpush2.bf16.msra.mxu0 0
  %116 = vmatprep.subr.bf16.mxu0 0
  %117 = vmatpush2.bf16.msra.mxu0 0
  %118 = vmatprep.subr.bf16.mxu0 0
  %119 = vmatpush2.bf16.msra.mxu0 0
  %120 = vmatprep.subr.bf16.mxu0 0
  %121 = vmatpush2.bf16.msra.mxu0 0
  %122 = vmatprep.subr.bf16.mxu0 0
  %123 = vmatpush2.bf16.msra.mxu0 0
  %124 = vmatprep.subr.bf16.mxu0 0
  %125 = vmatpush2.bf16.msra.mxu0 0
  %126 = vmatprep.subr.bf16.mxu0 0
  %127 = vmatpush2.bf16.msra.mxu0 0
  %128 = vmatprep.mubr.bf16.mxu0 0
  %129 = vmatmul.mubr.bf16.gmra.mxu0 %v24
  %v130 = vpop.f32.mrf.mxu0
  %v131 = vadd.f32 %v46, %v130
  %v132 = vpop.f32.mrf.mxu0
  %v133 = vpop.f32.mrf.mxu0
  %v134 = vpop.f32.mrf.mxu0
  %135 = vdwg.mxu0
  %v136 = vmax.f32 %v131, 0.0
  %v137 = vpack.c.bf16 %v136, %v136
  %v138 = vld [vmem:[%s3] sm:$0xf]
  %v139 = vld [vmem:[%s3 + $0x4] sm:$0xf]
  %v140 = vld [vmem:[%s3 + $0x8] sm:$0xf]
  %v141 = vld [vmem:[%s3 + $0xc] sm:$0xf]
  %v142 = vld [vmem:[%s3 + $0x10] sm:$0xf]
  %v143 = vld [vmem:[%s3 + $0x14] sm:$0xf]
  %v144 = vld [vmem:[%s3 + $0x18] sm:$0xf]
  %v145 = vld [vmem:[%s3 + $0x1c] sm:$0xf]
  %v146 = vld [vmem:[%s3 + $0x20] sm:$0xf]
  %v147 = vld [vmem:[%s3 + $0x24] sm:$0xf]
  %v148 = vld [vmem:[%s3 + $0x28] sm:$0xf]
  %v149 = vld [vmem:[%s3 + $0x2c] sm:$0xf]
  %v150 = vld [vmem:[%s3 + $0x30] sm:$0xf]
  %v151 = vld [vmem:[%s3 + $0x34] sm:$0xf]
  %v152 = vld [vmem:[%s3 + $0x38] sm:$0xf]
  %v153 = vld [vmem:[%s3 + $0x3c] sm:$0xf]
  %v154 = vld [vmem:[%s4] sm:$0x1]
  %v156 = vlaneseq
  %v157 = vshrl.u32 %v156, 7
  %v158 = vsub.s32 0, %v157
  %v159 = vrot.slane %v154, %v158
  %v177 = vunpack.c.l.b16 %v138
  %v178 = vunpack.c.l.b16 %v139
  %v179 = vunpack.c.l.b16 %v140
  %v180 = vunpack.c.l.b16 %v141
  %v181 = vunpack.c.l.b16 %v142
  %v182 = vunpack.c.l.b16 %v143
  %v183 = vunpack.c.l.b16 %v144
  %v184 = vunpack.c.l.b16 %v145
  %v185 = vunpack.c.l.b16 %v146
  %v186 = vunpack.c.l.b16 %v147
  %v187 = vunpack.c.l.b16 %v148
  %v188 = vunpack.c.l.b16 %v149
  %v189 = vunpack.c.l.b16 %v150
  %v190 = vunpack.c.l.b16 %v151
  %v191 = vunpack.c.l.b16 %v152
  %v192 = vunpack.c.l.b16 %v153
  %v193 = vpack.c.b16 %v178, %v177
  %v194 = vpack.c.b16 %v180, %v179
  %v195 = vpack.c.b16 %v182, %v181
  %v196 = vpack.c.b16 %v184, %v183
  %v197 = vpack.c.b16 %v186, %v185
  %v198 = vpack.c.b16 %v188, %v187
  %v199 = vpack.c.b16 %v190, %v189
  %v200 = vpack.c.b16 %v192, %v191
  %209 = vmatprep.subr.bf16.mxu0 0
  %210 = vmatpush1.bf16.msra.mxu0 %v200
  %211 = vmatprep.subr.bf16.mxu0 0
  %212 = vmatpush1.bf16.msra.mxu0 %v199
  %213 = vmatprep.subr.bf16.mxu0 0
  %214 = vmatpush1.bf16.msra.mxu0 %v198
  %215 = vmatprep.subr.bf16.mxu0 0
  %216 = vmatpush1.bf16.msra.mxu0 %v197
  %217 = vmatprep.subr.bf16.mxu0 0
  %218 = vmatpush1.bf16.msra.mxu0 %v196
  %219 = vmatprep.subr.bf16.mxu0 0
  %220 = vmatpush1.bf16.msra.mxu0 %v195
  %221 = vmatprep.subr.bf16.mxu0 0
  %222 = vmatpush1.bf16.msra.mxu0 %v194
  %223 = vmatprep.subr.bf16.mxu0 0
  %224 = vmatpush1.bf16.msra.mxu0 %v193
  %225 = vmatprep.subr.bf16.mxu0 0
  %226 = vmatpush2.bf16.msra.mxu0 0
  %227 = vmatprep.subr.bf16.mxu0 0
  %228 = vmatpush2.bf16.msra.mxu0 0
  %229 = vmatprep.subr.bf16.mxu0 0
  %230 = vmatpush2.bf16.msra.mxu0 0
  %231 = vmatprep.subr.bf16.mxu0 0
  %232 = vmatpush2.bf16.msra.mxu0 0
  %233 = vmatprep.subr.bf16.mxu0 0
  %234 = vmatpush2.bf16.msra.mxu0 0
  %235 = vmatprep.subr.bf16.mxu0 0
  %236 = vmatpush2.bf16.msra.mxu0 0
  %237 = vmatprep.subr.bf16.mxu0 0
  %238 = vmatpush2.bf16.msra.mxu0 0
  %239 = vmatprep.subr.bf16.mxu0 0
  %240 = vmatpush2.bf16.msra.mxu0 0
  %241 = vmatprep.mubr.bf16.mxu0 0
  %242 = vmatmul.mubr.bf16.gmra.mxu0 %v137
  %v243 = vpop.f32.mrf.mxu0
  %v244 = vadd.f32 %v159, %v243
  %v245 = vpop.f32.mrf.mxu0
  %v246 = vpop.f32.mrf.mxu0
  %v247 = vpop.f32.mrf.mxu0
  %248 = vdwg.mxu0
  %v249 = vmax.f32 %v244, 0.0
  %v250 = vpack.c.bf16 %v249, %v249
  %251 = vmatprep.subr.bf16.mxu0 0
  %252 = vmatpush1.bf16.msra.mxu0 %v200
  %253 = vmatprep.subr.bf16.mxu0 0
  %254 = vmatpush1.bf16.msra.mxu0 %v199
  %255 = vmatprep.subr.bf16.mxu0 0
  %256 = vmatpush1.bf16.msra.mxu0 %v198
  %257 = vmatprep.subr.bf16.mxu0 0
  %258 = vmatpush1.bf16.msra.mxu0 %v197
  %259 = vmatprep.subr.bf16.mxu0 0
  %260 = vmatpush1.bf16.msra.mxu0 %v196
  %261 = vmatprep.subr.bf16.mxu0 0
  %262 = vmatpush1.bf16.msra.mxu0 %v195
  %263 = vmatprep.subr.bf16.mxu0 0
  %264 = vmatpush1.bf16.msra.mxu0 %v194
  %265 = vmatprep.subr.bf16.mxu0 0
  %266 = vmatpush1.bf16.msra.mxu0 %v193
  %267 = vmatprep.subr.bf16.mxu0 0
  %268 = vmatpush2.bf16.msra.mxu0 0
  %269 = vmatprep.subr.bf16.mxu0 0
  %270 = vmatpush2.bf16.msra.mxu0 0
  %271 = vmatprep.subr.bf16.mxu0 0
  %272 = vmatpush2.bf16.msra.mxu0 0
  %273 = vmatprep.subr.bf16.mxu0 0
  %274 = vmatpush2.bf16.msra.mxu0 0
  %275 = vmatprep.subr.bf16.mxu0 0
  %276 = vmatpush2.bf16.msra.mxu0 0
  %277 = vmatprep.subr.bf16.mxu0 0
  %278 = vmatpush2.bf16.msra.mxu0 0
  %279 = vmatprep.subr.bf16.mxu0 0
  %280 = vmatpush2.bf16.msra.mxu0 0
  %281 = vmatprep.subr.bf16.mxu0 0
  %282 = vmatpush2.bf16.msra.mxu0 0
  %283 = vmatprep.mubr.bf16.mxu0 0
  %284 = vmatmul.mubr.bf16.gmra.mxu0 %v250
  %v285 = vpop.f32.mrf.mxu0
  %v286 = vadd.f32 %v159, %v285
  %v287 = vpop.f32.mrf.mxu0
  %v288 = vpop.f32.mrf.mxu0
  %v289 = vpop.f32.mrf.mxu0
  %290 = vdwg.mxu0
  %v291 = vmax.f32 %v286, 0.0
  %292 = vst [vmem:[%s5] sm:$0xff] %v136
  %293 = vst [vmem:[%s6] sm:$0xff] %v249
  %294 = vst [vmem:[%s7] sm:$0xff] %v291
  // Predicated region
  $region22: #{alexnet_embeddings.11} parent=0 // pred_check
    _
  $region23: #{alexnet_embeddings.11} parent=0 // pred_check_branch
    %296 = sbr.rel (0) target = $region25
  $region24: #{alexnet_embeddings.11} parent=0 // pred_region
    _
  $region25: #{alexnet_embeddings.11} parent=0 // pred_fallthru
    _
  // Predicated region
  $region26: #{alexnet_embeddings.11} parent=0 // pred_check
    _
  $region27: #{alexnet_embeddings.11} parent=0 // pred_check_branch
    %298 = sbr.rel (0) target = $region29
  $region28: #{alexnet_embeddings.11} parent=0 // pred_region
    _
  $region29: #{alexnet_embeddings.11} parent=0 // pred_fallthru
    _
  // Predicated region
  $region30: #{alexnet_embeddings.11} parent=0 // pred_check
    _
  $region31: #{alexnet_embeddings.11} parent=0 // pred_check_branch
    %300 = sbr.rel (0) target = $region33
  $region32: #{alexnet_embeddings.11} parent=0 // pred_region
    _
  $region33: #{alexnet_embeddings.11} parent=0 // pred_fallthru
    _
  // Predicated region
  $region34: #{alexnet_embeddings.11} parent=0 // pred_check
    _
  $region35: #{alexnet_embeddings.11} parent=0 // pred_check_branch
    %302 = sbr.rel (0) target = $region37
  $region36: #{alexnet_embeddings.11} parent=0 // pred_region
    _
  $region37: #{alexnet_embeddings.11} parent=0 // pred_fallthru
    _
  // Predicated region
  $region38: #{alexnet_embeddings.11} parent=0 // pred_check
    _
  $region39: #{alexnet_embeddings.11} parent=0 // pred_check_branch
    %304 = sbr.rel (0) target = $region41
  $region40: #{alexnet_embeddings.11} parent=0 // pred_region
    _
  $region41: #{alexnet_embeddings.11} parent=0 // pred_fallthru
    _
  // Predicated region
  $region42: #{alexnet_embeddings.11} parent=0 // pred_check
    _
  $region43: #{alexnet_embeddings.11} parent=0 // pred_check_branch
    %306 = sbr.rel (0) target = $region45
  $region44: #{alexnet_embeddings.11} parent=0 // pred_region
    _
  $region45: #{alexnet_embeddings.11} parent=0 // pred_fallthru
    _

// kernel: alexnet_embeddings.10
$region0: #{alexnet_embeddings.10}
  #allocation0 [shape = 'u32[]', space=smem, size = 0x4, offset = 0x4, fixed_abs, tag = 'smem constant byte address 0x4 - core index']
  #allocation1 [shape = 'u32[144,128]{1,0:T(1,128)}', space=vmem, size = 0x12000, scoped, tag = 'internal scratch']
  #allocation2 [shape = 'f32[13,128]{1,0:T(8,128)}', space=vmem, size = 0x2000, scoped, tag = 'scratch operand']
  %s0 = inlined_call_operand.vmem [shape: bf16[2,25,128], index: 0, kind: input, shape index: {}]
  %s1 = inlined_call_operand.vmem [shape: bf16[9,128,128], index: 1, kind: input, shape index: {}]
  %s2 = inlined_call_operand.vmem [shape: f32[1,128], index: 2, kind: input, shape index: {}]
  %s3 = inlined_call_operand.vmem [shape: bf16[2,1,1,128], index: 3, kind: output, shape index: {}]
  %s4 = sld [smem:[#allocation0]]
  $region45: #{alexnet_embeddings.10} parent=0
    _
  %s6 = ssub.s32 1, %s4
  %s7 = scalar_select 0, %s6, %s4
  loop: start=0, step=1, limit=4
  $region2: #{alexnet_embeddings.10} parent=0 // loop_pre_header
    _
  $region3: #{alexnet_embeddings.10} parent=0 // loop_header
    %s9 = sphi 0, %s13
    %p10 = scmp.ge.s32.totalorder %s9, 4
    %s19 = sphi 0, %s21
    %s22 = sphi 0, %s19
    %s23 = sphi 0, %s22
    %s39 = sphi 0, %s23
    %s43 = sphi 0, %s43
    %s45 = sphi 0, %s43
    %s46 = sphi 0, %s45
    %s60 = sphi 0, %s46
    %s64 = sphi 0, %s64
    %s66 = sphi 0, %s64
    %s67 = sphi 0, %s66
    %s81 = sphi 0, %s67
    %s87 = sphi 0, %s89
    %s90 = sphi 0, %s87
    %s91 = sphi 0, %s90
    %s107 = sphi 0, %s91
  $region4: #{alexnet_embeddings.10} parent=0 // loop_header_branch
    %12 = sbr.rel (%p10) target = $region8
  $region5: #{alexnet_embeddings.10} parent=0 // loop_body
    %s14 = ssub.s32 %s9, 1
    %s15 = ssub.s32 %s9, 2
    %s16 = sadd.s32 %s9, 1
    %s17 = ssub.s32 %s9, %s16
    %p18 = scmp.eq.s32.totalorder %s17, 0
    %s20 = sadd.s32 %s19, 1
    %s21 = scalar_select %p18, %s19, %s20
    %p24 = pneg %p18
    %p25 = scmp.eq.s32.totalorder %s9, 1
    %p26 = por %p24, %p25
    %p27 = scmp.ne.s32.totalorder %s19, %s22
    %p28 = scmp.eq.s32.totalorder %s9, 0
    %p29 = por %p27, %p28
    %p30 = scmp.ne.s32.totalorder %s19, %s22
    %p31 = scmp.eq.s32.totalorder %s14, 1
    %p32 = por %p30, %p31
    %p33 = scmp.ne.s32.totalorder %s22, %s23
    %p34 = scmp.eq.s32.totalorder %s14, 0
    %p35 = por %p33, %p34
    %p36 = scmp.ne.s32.totalorder %s22, %s23
    %p37 = scmp.eq.s32.totalorder %s15, 1
    %p38 = por %p36, %p37
    %p40 = scmp.ne.s32.totalorder %s23, %s39
    %p41 = scmp.eq.s32.totalorder %s15, 0
    %p42 = por %p40, %p41
    %s44 = sadd.s32 %s43, 1
    %p47 = scmp.eq.s32.totalorder %s9, 1
    %p48 = scmp.ne.s32.totalorder %s43, %s45
    %p49 = scmp.eq.s32.totalorder %s9, 0
    %p50 = por %p48, %p49
    %p51 = scmp.ne.s32.totalorder %s43, %s45
    %p52 = scmp.eq.s32.totalorder %s14, 1
    %p53 = por %p51, %p52
    %p54 = scmp.ne.s32.totalorder %s45, %s46
    %p55 = scmp.eq.s32.totalorder %s14, 0
    %p56 = por %p54, %p55
    %p57 = scmp.ne.s32.totalorder %s45, %s46
    %p58 = scmp.eq.s32.totalorder %s15, 1
    %p59 = por %p57, %p58
    %p61 = scmp.ne.s32.totalorder %s46, %s60
    %p62 = scmp.eq.s32.totalorder %s15, 0
    %p63 = por %p61, %p62
    %s65 = sadd.s32 %s64, 1
    %p68 = scmp.eq.s32.totalorder %s9, 1
    %p69 = scmp.ne.s32.totalorder %s64, %s66
    %p70 = scmp.eq.s32.totalorder %s9, 0
    %p71 = por %p69, %p70
    %p72 = scmp.ne.s32.totalorder %s64, %s66
    %p73 = scmp.eq.s32.totalorder %s14, 1
    %p74 = por %p72, %p73
    %p75 = scmp.ne.s32.totalorder %s66, %s67
    %p76 = scmp.eq.s32.totalorder %s14, 0
    %p77 = por %p75, %p76
    %p78 = scmp.ne.s32.totalorder %s66, %s67
    %p79 = scmp.eq.s32.totalorder %s15, 1
    %p80 = por %p78, %p79
    %p82 = scmp.ne.s32.totalorder %s67, %s81
    %p83 = scmp.eq.s32.totalorder %s15, 0
    %p84 = por %p82, %p83
    %s85 = ssub.s32 %s9, %s16
    %p86 = scmp.eq.s32.totalorder %s85, 0
    %s88 = sadd.s32 %s87, 1
    %s89 = scalar_select %p86, %s87, %s88
    %p92 = pneg %p86
    %p93 = scmp.eq.s32.totalorder %s9, 1
    %p94 = por %p92, %p93
    %p95 = scmp.ne.s32.totalorder %s87, %s90
    %p96 = scmp.eq.s32.totalorder %s9, 0
    %p97 = por %p95, %p96
    %p98 = scmp.ne.s32.totalorder %s87, %s90
    %p99 = scmp.eq.s32.totalorder %s14, 1
    %p100 = por %p98, %p99
    %p101 = scmp.ne.s32.totalorder %s90, %s91
    %p102 = scmp.eq.s32.totalorder %s14, 0
    %p103 = por %p101, %p102
    %p104 = scmp.ne.s32.totalorder %s90, %s91
    %p105 = scmp.eq.s32.totalorder %s15, 1
    %p106 = por %p104, %p105
    %p108 = scmp.ne.s32.totalorder %s91, %s107
    %p109 = scmp.eq.s32.totalorder %s15, 0
    %p110 = por %p108, %p109
    %p111 = scmp.le.s32.totalorder 1, %s9
    %p112 = scmp.lt.s32.totalorder %s9, 3
    %p113 = pnand %p111, %p112
    %p114 = pneg %p113
    // Predicated region
    $region9: #{alexnet_embeddings.10} parent=5 // pred_check
      _
    $region10: #{alexnet_embeddings.10} parent=5 // pred_check_branch
      %116 = sbr.rel (%p113) target = $region12
    $region11: #{alexnet_embeddings.10} parent=5 // pred_region
      %s117 = ssub.s32 %s9, 1
      // Predicated region
      $region13: #{alexnet_embeddings.10} parent=11 // pred_check
        %p118 = pneg %p56
      $region14: #{alexnet_embeddings.10} parent=11 // pred_check_branch
        %120 = sbr.rel (%p118) target = $region16
      $region15: #{alexnet_embeddings.10} parent=11 // pred_region
        _
      $region16: #{alexnet_embeddings.10} parent=11 // pred_fallthru
        _
      // Predicated region
      $region17: #{alexnet_embeddings.10} parent=11 // pred_check
        %p121 = pneg %p77
      $region18: #{alexnet_embeddings.10} parent=11 // pred_check_branch
        %123 = sbr.rel (%p121) target = $region20
      $region19: #{alexnet_embeddings.10} parent=11 // pred_region
        _
      $region20: #{alexnet_embeddings.10} parent=11 // pred_fallthru
        _
    $region12: #{alexnet_embeddings.10} parent=5 // pred_fallthru
      _
    %p124 = scmp.lt.s32.totalorder %s9, 2
    // Predicated region
    $region21: #{alexnet_embeddings.10} parent=5 // pred_check
      %p125 = pneg %p124
    $region22: #{alexnet_embeddings.10} parent=5 // pred_check_branch
      %127 = sbr.rel (%p125) target = $region24
    $region23: #{alexnet_embeddings.10} parent=5 // pred_region
      // Predicated region
      $region25: #{alexnet_embeddings.10} parent=23 // pred_check
        %p128 = pneg %p29
      $region26: #{alexnet_embeddings.10} parent=23 // pred_check_branch
        %130 = sbr.rel (%p128) target = $region28
      $region27: #{alexnet_embeddings.10} parent=23 // pred_region
        %p131 = scmp.lt.s32.totalorder %s9, 1
        %s132 = scalar_select %p131, %s9, 1
        %s133 = smul.addr %s132, 4
        %s134 = smul.addr %s133, 4
        %s135 = scalar_lea.vmem %s0, %s134
      $region28: #{alexnet_embeddings.10} parent=23 // pred_fallthru
        _
    $region24: #{alexnet_embeddings.10} parent=5 // pred_fallthru
      _
    %p136 = scmp.le.s32.totalorder 1, %s9
    %p137 = scmp.lt.s32.totalorder %s9, 3
    %p138 = pnand %p136, %p137
    %p139 = pneg %p138
    // Predicated region
    $region29: #{alexnet_embeddings.10} parent=5 // pred_check
      _
    $region30: #{alexnet_embeddings.10} parent=5 // pred_check_branch
      %141 = sbr.rel (%p138) target = $region32
    $region31: #{alexnet_embeddings.10} parent=5 // pred_region
      %s142 = ssub.s32 %s9, 1
      %p143 = scmp.lt.s32.totalorder %s14, 1
      %s144 = scalar_select %p143, %s14, 1
      %s145 = smul.addr %s144, 4
      %s146 = smul.addr %s145, 4
      %s147 = scalar_lea.vmem %s0, %s146
      %p148 = pneg %p35
      %p149 = pneg %p32
      %p150 = pneg %p56
      %p151 = pneg %p53
      %p152 = pneg %p77
      %p153 = pneg %p74
      %p154 = pneg %p103
      %p155 = pneg %p100
      %p156 = scmp.lt.s32.totalorder %s14, 1
      %s157 = scalar_select %p156, %s14, 1
      %s158 = scalar_lea.vmem %s3, %s157
      %p159 = scmp.lt.s32.totalorder %s14, 1
      %s160 = scalar_select %p159, %s14, 1
      %s161 = smul.addr %s160, 4
      %s162 = smul.addr %s161, 4
      %s163 = scalar_lea.vmem %s0, %s162
      %p164 = scmp.lt.s32.totalorder %s14, 1
      %s165 = scalar_select %p164, %s14, 1
      %s166 = scalar_lea.vmem %s3, %s165
      %v168 = vld [vmem:[%s2] sm:$0x1]
      %v170 = vlaneseq
      %v171 = vshrl.u32 %v170, 7
      %v172 = vsub.s32 0, %v171
      %v173 = vrot.slane %v168, %v172
      %v175 = vld [vmem:[%s163] sm:$0xf]
      %v176 = vld [vmem:[%s163 + $0x4] sm:$0x7]
      %v177 = vld [vmem:[%s1] sm:$0xf]
      %v178 = vld [vmem:[%s1 + $0x4] sm:$0xf]
      %v179 = vld [vmem:[%s1 + $0x8] sm:$0xf]
      %v180 = vld [vmem:[%s1 + $0xc] sm:$0xf]
      %v181 = vld [vmem:[%s1 + $0x10] sm:$0xf]
      %v182 = vld [vmem:[%s1 + $0x14] sm:$0xf]
      %v183 = vld [vmem:[%s1 + $0x18] sm:$0xf]
      %v184 = vld [vmem:[%s1 + $0x1c] sm:$0xf]
      %v185 = vld [vmem:[%s1 + $0x20] sm:$0xf]
      %v186 = vld [vmem:[%s1 + $0x24] sm:$0xf]
      %v187 = vld [vmem:[%s1 + $0x28] sm:$0xf]
      %v188 = vld [vmem:[%s1 + $0x2c] sm:$0xf]
      %v189 = vld [vmem:[%s1 + $0x30] sm:$0xf]
      %v190 = vld [vmem:[%s1 + $0x34] sm:$0xf]
      %v191 = vld [vmem:[%s1 + $0x38] sm:$0xf]
      %v192 = vld [vmem:[%s1 + $0x3c] sm:$0xf]
      %v195 = vunpack.c.l.b16 %v175
      %v196 = vunpack.c.l.b16 %v176
      %v197 = vpack.c.b16 %v196, %v195
      %v215 = vunpack.c.l.b16 %v177
      %v216 = vunpack.c.l.b16 %v178
      %v217 = vunpack.c.l.b16 %v179
      %v218 = vunpack.c.l.b16 %v180
      %v219 = vunpack.c.l.b16 %v181
      %v220 = vunpack.c.l.b16 %v182
      %v221 = vunpack.c.l.b16 %v183
      %v222 = vunpack.c.l.b16 %v184
      %v223 = vunpack.c.l.b16 %v185
      %v224 = vunpack.c.l.b16 %v186
      %v225 = vunpack.c.l.b16 %v187
      %v226 = vunpack.c.l.b16 %v188
      %v227 = vunpack.c.l.b16 %v189
      %v228 = vunpack.c.l.b16 %v190
      %v229 = vunpack.c.l.b16 %v191
      %v230 = vunpack.c.l.b16 %v192
      %v231 = vpack.c.b16 %v216, %v215
      %v232 = vpack.c.b16 %v218, %v217
      %v233 = vpack.c.b16 %v220, %v219
      %v234 = vpack.c.b16 %v222, %v221
      %v235 = vpack.c.b16 %v224, %v223
      %v236 = vpack.c.b16 %v226, %v225
      %v237 = vpack.c.b16 %v228, %v227
      %v238 = vpack.c.b16 %v230, %v229
      %247 = vmatprep.subr.bf16.mxu0 0
      %248 = vmatpush1.bf16.msra.mxu0 %v238
      %249 = vmatprep.subr.bf16.mxu0 0
      %250 = vmatpush1.bf16.msra.mxu0 %v237
      %251 = vmatprep.subr.bf16.mxu0 0
      %252 = vmatpush1.bf16.msra.mxu0 %v236
      %253 = vmatprep.subr.bf16.mxu0 0
      %254 = vmatpush1.bf16.msra.mxu0 %v235
      %255 = vmatprep.subr.bf16.mxu0 0
      %256 = vmatpush1.bf16.msra.mxu0 %v234
      %257 = vmatprep.subr.bf16.mxu0 0
      %258 = vmatpush1.bf16.msra.mxu0 %v233
      %259 = vmatprep.subr.bf16.mxu0 0
      %260 = vmatpush1.bf16.msra.mxu0 %v232
      %261 = vmatprep.subr.bf16.mxu0 0
      %262 = vmatpush1.bf16.msra.mxu0 %v231
      %263 = vmatprep.subr.bf16.mxu0 0
      %264 = vmatpush2.bf16.msra.mxu0 0
      %265 = vmatprep.subr.bf16.mxu0 0
      %266 = vmatpush2.bf16.msra.mxu0 0
      %267 = vmatprep.subr.bf16.mxu0 0
      %268 = vmatpush2.bf16.msra.mxu0 0
      %269 = vmatprep.subr.bf16.mxu0 0
      %270 = vmatpush2.bf16.msra.mxu0 0
      %271 = vmatprep.subr.bf16.mxu0 0
      %272 = vmatpush2.bf16.msra.mxu0 0
      %273 = vmatprep.subr.bf16.mxu0 0
      %274 = vmatpush2.bf16.msra.mxu0 0
      %275 = vmatprep.subr.bf16.mxu0 0
      %276 = vmatpush2.bf16.msra.mxu0 0
      %277 = vmatprep.subr.bf16.mxu0 0
      %278 = vmatpush2.bf16.msra.mxu0 0
      %279 = vmatprep.mubr.bf16.mxu0 0
      %280 = vmatmul.mubr.bf16.gmra.mxu0 %v197
      %v281 = vpop.f32.mrf.mxu0
      %v282 = vadd.f32 0.0, %v281
      %v283 = vpop.f32.mrf.mxu0
      %v284 = vpop.f32.mrf.mxu0
      %v285 = vadd.f32 0.0, %v284
      %v286 = vpop.f32.mrf.mxu0
      %287 = vdwg.mxu0
      %v288 = vadd.f32 %v173, %v282
      %v289 = vadd.f32 %v173, %v285
      %s290 = scalar_lea.vmem %s1, 64
      %v291 = vld [vmem:[%s290] sm:$0xf]
      %v292 = vld [vmem:[%s290 + $0x4] sm:$0xf]
      %v293 = vld [vmem:[%s290 + $0x8] sm:$0xf]
      %v294 = vld [vmem:[%s290 + $0xc] sm:$0xf]
      %v295 = vld [vmem:[%s290 + $0x10] sm:$0xf]
      %v296 = vld [vmem:[%s290 + $0x14] sm:$0xf]
      %v297 = vld [vmem:[%s290 + $0x18] sm:$0xf]
      %v298 = vld [vmem:[%s290 + $0x1c] sm:$0xf]
      %v299 = vld [vmem:[%s290 + $0x20] sm:$0xf]
      %v300 = vld [vmem:[%s290 + $0x24] sm:$0xf]
      %v301 = vld [vmem:[%s290 + $0x28] sm:$0xf]
      %v302 = vld [vmem:[%s290 + $0x2c] sm:$0xf]
      %v303 = vld [vmem:[%s290 + $0x30] sm:$0xf]
      %v304 = vld [vmem:[%s290 + $0x34] sm:$0xf]
      %v305 = vld [vmem:[%s290 + $0x38] sm:$0xf]
      %v306 = vld [vmem:[%s290 + $0x3c] sm:$0xf]
      %v308 = vshrl.u32 %v197, 16
      %v310 = vshll.u32 %v197, 16
      %v312 = vrot.slane %v310, 1
      %v313 = vor.u32 %v308, %v312
      %v331 = vunpack.c.l.b16 %v291
      %v332 = vunpack.c.l.b16 %v292
      %v333 = vunpack.c.l.b16 %v293
      %v334 = vunpack.c.l.b16 %v294
      %v335 = vunpack.c.l.b16 %v295
      %v336 = vunpack.c.l.b16 %v296
      %v337 = vunpack.c.l.b16 %v297
      %v338 = vunpack.c.l.b16 %v298
      %v339 = vunpack.c.l.b16 %v299
      %v340 = vunpack.c.l.b16 %v300
      %v341 = vunpack.c.l.b16 %v301
      %v342 = vunpack.c.l.b16 %v302
      %v343 = vunpack.c.l.b16 %v303
      %v344 = vunpack.c.l.b16 %v304
      %v345 = vunpack.c.l.b16 %v305
      %v346 = vunpack.c.l.b16 %v306
      %v347 = vpack.c.b16 %v332, %v331
      %v348 = vpack.c.b16 %v334, %v333
      %v349 = vpack.c.b16 %v336, %v335
      %v350 = vpack.c.b16 %v338, %v337
      %v351 = vpack.c.b16 %v340, %v339
      %v352 = vpack.c.b16 %v342, %v341
      %v353 = vpack.c.b16 %v344, %v343
      %v354 = vpack.c.b16 %v346, %v345
      %363 = vmatprep.subr.bf16.mxu0 0
      %364 = vmatpush1.bf16.msra.mxu0 %v354
      %365 = vmatprep.subr.bf16.mxu0 0
      %366 = vmatpush1.bf16.msra.mxu0 %v353
      %367 = vmatprep.subr.bf16.mxu0 0
      %368 = vmatpush1.bf16.msra.mxu0 %v352
      %369 = vmatprep.subr.bf16.mxu0 0
      %370 = vmatpush1.bf16.msra.mxu0 %v351
      %371 = vmatprep.subr.bf16.mxu0 0
      %372 = vmatpush1.bf16.msra.mxu0 %v350
      %373 = vmatprep.subr.bf16.mxu0 0
      %374 = vmatpush1.bf16.msra.mxu0 %v349
      %375 = vmatprep.subr.bf16.mxu0 0
      %376 = vmatpush1.bf16.msra.mxu0 %v348
      %377 = vmatprep.subr.bf16.mxu0 0
      %378 = vmatpush1.bf16.msra.mxu0 %v347
      %379 = vmatprep.subr.bf16.mxu0 0
      %380 = vmatpush2.bf16.msra.mxu0 0
      %381 = vmatprep.subr.bf16.mxu0 0
      %382 = vmatpush2.bf16.msra.mxu0 0
      %383 = vmatprep.subr.bf16.mxu0 0
      %384 = vmatpush2.bf16.msra.mxu0 0
      %385 = vmatprep.subr.bf16.mxu0 0
      %386 = vmatpush2.bf16.msra.mxu0 0
      %387 = vmatprep.subr.bf16.mxu0 0
      %388 = vmatpush2.bf16.msra.mxu0 0
      %389 = vmatprep.subr.bf16.mxu0 0
      %390 = vmatpush2.bf16.msra.mxu0 0
      %391 = vmatprep.subr.bf16.mxu0 0
      %392 = vmatpush2.bf16.msra.mxu0 0
      %393 = vmatprep.subr.bf16.mxu0 0
      %394 = vmatpush2.bf16.msra.mxu0 0
      %395 = vmatprep.mubr.bf16.mxu0 0
      %396 = vmatmul.mubr.bf16.gmra.mxu0 %v313
      %v397 = vpop.f32.mrf.mxu0
      %v398 = vadd.f32 0.0, %v397
      %v399 = vpop.f32.mrf.mxu0
      %v400 = vpop.f32.mrf.mxu0
      %v401 = vadd.f32 0.0, %v400
      %v402 = vpop.f32.mrf.mxu0
      %403 = vdwg.mxu0
      %v404 = vadd.f32 %v288, %v398
      %v405 = vadd.f32 %v289, %v401
      %v406 = vld [vmem:[%s163] sm:$0xe]
      %v407 = vld [vmem:[%s163 + $0x4] sm:$0xf]
      %s408 = scalar_lea.vmem %s1, 128
      %v409 = vld [vmem:[%s408] sm:$0xf]
      %v410 = vld [vmem:[%s408 + $0x4] sm:$0xf]
      %v411 = vld [vmem:[%s408 + $0x8] sm:$0xf]
      %v412 = vld [vmem:[%s408 + $0xc] sm:$0xf]
      %v413 = vld [vmem:[%s408 + $0x10] sm:$0xf]
      %v414 = vld [vmem:[%s408 + $0x14] sm:$0xf]
      %v415 = vld [vmem:[%s408 + $0x18] sm:$0xf]
      %v416 = vld [vmem:[%s408 + $0x1c] sm:$0xf]
      %v417 = vld [vmem:[%s408 + $0x20] sm:$0xf]
      %v418 = vld [vmem:[%s408 + $0x24] sm:$0xf]
      %v419 = vld [vmem:[%s408 + $0x28] sm:$0xf]
      %v420 = vld [vmem:[%s408 + $0x2c] sm:$0xf]
      %v421 = vld [vmem:[%s408 + $0x30] sm:$0xf]
      %v422 = vld [vmem:[%s408 + $0x34] sm:$0xf]
      %v423 = vld [vmem:[%s408 + $0x38] sm:$0xf]
      %v424 = vld [vmem:[%s408 + $0x3c] sm:$0xf]
      %v427 = vunpack.c.l.b16 %v406
      %v428 = vunpack.c.l.b16 %v407
      %v429 = vpack.c.b16 %v428, %v427
      %v430 = vrot.slane %v429, 1
      %v448 = vunpack.c.l.b16 %v409
      %v449 = vunpack.c.l.b16 %v410
      %v450 = vunpack.c.l.b16 %v411
      %v451 = vunpack.c.l.b16 %v412
      %v452 = vunpack.c.l.b16 %v413
      %v453 = vunpack.c.l.b16 %v414
      %v454 = vunpack.c.l.b16 %v415
      %v455 = vunpack.c.l.b16 %v416
      %v456 = vunpack.c.l.b16 %v417
      %v457 = vunpack.c.l.b16 %v418
      %v458 = vunpack.c.l.b16 %v419
      %v459 = vunpack.c.l.b16 %v420
      %v460 = vunpack.c.l.b16 %v421
      %v461 = vunpack.c.l.b16 %v422
      %v462 = vunpack.c.l.b16 %v423
      %v463 = vunpack.c.l.b16 %v424
      %v464 = vpack.c.b16 %v449, %v448
      %v465 = vpack.c.b16 %v451, %v450
      %v466 = vpack.c.b16 %v453, %v452
      %v467 = vpack.c.b16 %v455, %v454
      %v468 = vpack.c.b16 %v457, %v456
      %v469 = vpack.c.b16 %v459, %v458
      %v470 = vpack.c.b16 %v461, %v460
      %v471 = vpack.c.b16 %v463, %v462
      %480 = vmatprep.subr.bf16.mxu0 0
      %481 = vmatpush1.bf16.msra.mxu0 %v471
      %482 = vmatprep.subr.bf16.mxu0 0
      %483 = vmatpush1.bf16.msra.mxu0 %v470
      %484 = vmatprep.subr.bf16.mxu0 0
      %485 = vmatpush1.bf16.msra.mxu0 %v469
      %486 = vmatprep.subr.bf16.mxu0 0
      %487 = vmatpush1.bf16.msra.mxu0 %v468
      %488 = vmatprep.subr.bf16.mxu0 0
      %489 = vmatpush1.bf16.msra.mxu0 %v467
      %490 = vmatprep.subr.bf16.mxu0 0
      %491 = vmatpush1.bf16.msra.mxu0 %v466
      %492 = vmatprep.subr.bf16.mxu0 0
      %493 = vmatpush1.bf16.msra.mxu0 %v465
      %494 = vmatprep.subr.bf16.mxu0 0
      %495 = vmatpush1.bf16.msra.mxu0 %v464
      %496 = vmatprep.subr.bf16.mxu0 0
      %497 = vmatpush2.bf16.msra.mxu0 0
      %498 = vmatprep.subr.bf16.mxu0 0
      %499 = vmatpush2.bf16.msra.mxu0 0
      %500 = vmatprep.subr.bf16.mxu0 0
      %501 = vmatpush2.bf16.msra.mxu0 0
      %502 = vmatprep.subr.bf16.mxu0 0
      %503 = vmatpush2.bf16.msra.mxu0 0
      %504 = vmatprep.subr.bf16.mxu0 0
      %505 = vmatpush2.bf16.msra.mxu0 0
      %506 = vmatprep.subr.bf16.mxu0 0
      %507 = vmatpush2.bf16.msra.mxu0 0
      %508 = vmatprep.subr.bf16.mxu0 0
      %509 = vmatpush2.bf16.msra.mxu0 0
      %510 = vmatprep.subr.bf16.mxu0 0
      %511 = vmatpush2.bf16.msra.mxu0 0
      %512 = vmatprep.mubr.bf16.mxu0 0
      %513 = vmatmul.mubr.bf16.gmra.mxu0 %v430
      %v514 = vpop.f32.mrf.mxu0
      %v515 = vadd.f32 0.0, %v514
      %v516 = vpop.f32.mrf.mxu0
      %v517 = vpop.f32.mrf.mxu0
      %v518 = vadd.f32 0.0, %v517
      %v519 = vpop.f32.mrf.mxu0
      %520 = vdwg.mxu0
      %v521 = vadd.f32 %v404, %v515
      %v522 = vadd.f32 %v405, %v518
      %v523 = vld [vmem:[%s163] sm:$0xc]
      %v524 = vld [vmem:[%s163 + $0x4] sm:$0xf]
      %v525 = vld [vmem:[%s163 + $0x8] sm:$0x1]
      %s526 = scalar_lea.vmem %s1, 192
      %v527 = vld [vmem:[%s526] sm:$0xf]
      %v528 = vld [vmem:[%s526 + $0x4] sm:$0xf]
      %v529 = vld [vmem:[%s526 + $0x8] sm:$0xf]
      %v530 = vld [vmem:[%s526 + $0xc] sm:$0xf]
      %v531 = vld [vmem:[%s526 + $0x10] sm:$0xf]
      %v532 = vld [vmem:[%s526 + $0x14] sm:$0xf]
      %v533 = vld [vmem:[%s526 + $0x18] sm:$0xf]
      %v534 = vld [vmem:[%s526 + $0x1c] sm:$0xf]
      %v535 = vld [vmem:[%s526 + $0x20] sm:$0xf]
      %v536 = vld [vmem:[%s526 + $0x24] sm:$0xf]
      %v537 = vld [vmem:[%s526 + $0x28] sm:$0xf]
      %v538 = vld [vmem:[%s526 + $0x2c] sm:$0xf]
      %v539 = vld [vmem:[%s526 + $0x30] sm:$0xf]
      %v540 = vld [vmem:[%s526 + $0x34] sm:$0xf]
      %v541 = vld [vmem:[%s526 + $0x38] sm:$0xf]
      %v542 = vld [vmem:[%s526 + $0x3c] sm:$0xf]
      %v546 = vunpack.c.l.b16 %v523
      %v547 = vunpack.c.l.b16 %v524
      %v548 = vunpack.c.l.b16 %v525
      %v549 = vpack.c.b16 %v547, %v546
      %v550 = vpack.c.b16 %v548, %v548
      %vm551 = vsmask.f32 5376
      %v553 = vshrl.u32 %v549, 16
      %v555 = vrot.slane %v553, 2
      %v556 = vshll.u32 %v549, 16
      %v558 = vrot.slane %v556, 3
      %v559 = vor.u32 %v555, %v558
      %v561 = vshrl.u32 %v550, 16
      %v563 = vrot.slane %v561, 2
      %v564 = vshll.u32 %v550, 16
      %v566 = vrot.slane %v564, 3
      %v567 = vor.u32 %v563, %v566
      %v568 = vsel %vm551, %v559, %v567
      %v586 = vunpack.c.l.b16 %v527
      %v587 = vunpack.c.l.b16 %v528
      %v588 = vunpack.c.l.b16 %v529
      %v589 = vunpack.c.l.b16 %v530
      %v590 = vunpack.c.l.b16 %v531
      %v591 = vunpack.c.l.b16 %v532
      %v592 = vunpack.c.l.b16 %v533
      %v593 = vunpack.c.l.b16 %v534
      %v594 = vunpack.c.l.b16 %v535
      %v595 = vunpack.c.l.b16 %v536
      %v596 = vunpack.c.l.b16 %v537
      %v597 = vunpack.c.l.b16 %v538
      %v598 = vunpack.c.l.b16 %v539
      %v599 = vunpack.c.l.b16 %v540
      %v600 = vunpack.c.l.b16 %v541
      %v601 = vunpack.c.l.b16 %v542
      %v602 = vpack.c.b16 %v587, %v586
      %v603 = vpack.c.b16 %v589, %v588
      %v604 = vpack.c.b16 %v591, %v590
      %v605 = vpack.c.b16 %v593, %v592
      %v606 = vpack.c.b16 %v595, %v594
      %v607 = vpack.c.b16 %v597, %v596
      %v608 = vpack.c.b16 %v599, %v598
      %v609 = vpack.c.b16 %v601, %v600
      %618 = vmatprep.subr.bf16.mxu0 0
      %619 = vmatpush1.bf16.msra.mxu0 %v609
      %620 = vmatprep.subr.bf16.mxu0 0
      %621 = vmatpush1.bf16.msra.mxu0 %v608
      %622 = vmatprep.subr.bf16.mxu0 0
      %623 = vmatpush1.bf16.msra.mxu0 %v607
      %624 = vmatprep.subr.bf16.mxu0 0
      %625 = vmatpush1.bf16.msra.mxu0 %v606
      %626 = vmatprep.subr.bf16.mxu0 0
      %627 = vmatpush1.bf16.msra.mxu0 %v605
      %628 = vmatprep.subr.bf16.mxu0 0
      %629 = vmatpush1.bf16.msra.mxu0 %v604
      %630 = vmatprep.subr.bf16.mxu0 0
      %631 = vmatpush1.bf16.msra.mxu0 %v603
      %632 = vmatprep.subr.bf16.mxu0 0
      %633 = vmatpush1.bf16.msra.mxu0 %v602
      %634 = vmatprep.subr.bf16.mxu0 0
      %635 = vmatpush2.bf16.msra.mxu0 0
      %636 = vmatprep.subr.bf16.mxu0 0
      %637 = vmatpush2.bf16.msra.mxu0 0
      %638 = vmatprep.subr.bf16.mxu0 0
      %639 = vmatpush2.bf16.msra.mxu0 0
      %640 = vmatprep.subr.bf16.mxu0 0
      %641 = vmatpush2.bf16.msra.mxu0 0
      %642 = vmatprep.subr.bf16.mxu0 0
      %643 = vmatpush2.bf16.msra.mxu0 0
      %644 = vmatprep.subr.bf16.mxu0 0
      %645 = vmatpush2.bf16.msra.mxu0 0
      %646 = vmatprep.subr.bf16.mxu0 0
      %647 = vmatpush2.bf16.msra.mxu0 0
      %648 = vmatprep.subr.bf16.mxu0 0
      %649 = vmatpush2.bf16.msra.mxu0 0
      %650 = vmatprep.mubr.bf16.mxu0 0
      %651 = vmatmul.mubr.bf16.gmra.mxu0 %v568
      %v652 = vpop.f32.mrf.mxu0
      %v653 = vadd.f32 0.0, %v652
      %v654 = vpop.f32.mrf.mxu0
      %v655 = vpop.f32.mrf.mxu0
      %v656 = vadd.f32 0.0, %v655
      %v657 = vpop.f32.mrf.mxu0
      %658 = vdwg.mxu0
      %v659 = vadd.f32 %v521, %v653
      %v660 = vadd.f32 %v522, %v656
      %v661 = vld [vmem:[%s163] sm:$0x8]
      %v662 = vld [vmem:[%s163 + $0x8] sm:$0x3]
      %s663 = scalar_lea.vmem %s1, 256
      %v664 = vld [vmem:[%s663] sm:$0xf]
      %v665 = vld [vmem:[%s663 + $0x4] sm:$0xf]
      %v666 = vld [vmem:[%s663 + $0x8] sm:$0xf]
      %v667 = vld [vmem:[%s663 + $0xc] sm:$0xf]
      %v668 = vld [vmem:[%s663 + $0x10] sm:$0xf]
      %v669 = vld [vmem:[%s663 + $0x14] sm:$0xf]
      %v670 = vld [vmem:[%s663 + $0x18] sm:$0xf]
      %v671 = vld [vmem:[%s663 + $0x1c] sm:$0xf]
      %v672 = vld [vmem:[%s663 + $0x20] sm:$0xf]
      %v673 = vld [vmem:[%s663 + $0x24] sm:$0xf]
      %v674 = vld [vmem:[%s663 + $0x28] sm:$0xf]
      %v675 = vld [vmem:[%s663 + $0x2c] sm:$0xf]
      %v676 = vld [vmem:[%s663 + $0x30] sm:$0xf]
      %v677 = vld [vmem:[%s663 + $0x34] sm:$0xf]
      %v678 = vld [vmem:[%s663 + $0x38] sm:$0xf]
      %v679 = vld [vmem:[%s663 + $0x3c] sm:$0xf]
      %v682 = vunpack.c.l.b16 %v661
      %v683 = vunpack.c.l.b16 %v662
      %v684 = vpack.c.b16 %v547, %v682
      %v685 = vpack.c.b16 %v683, %v683
      %vm686 = vcmask 1044480
      %v687 = vrot.slane %v684, 3
      %v688 = vrot.slane %v685, 3
      %v689 = vsel %vm686, %v687, %v688
      %v707 = vunpack.c.l.b16 %v664
      %v708 = vunpack.c.l.b16 %v665
      %v709 = vunpack.c.l.b16 %v666
      %v710 = vunpack.c.l.b16 %v667
      %v711 = vunpack.c.l.b16 %v668
      %v712 = vunpack.c.l.b16 %v669
      %v713 = vunpack.c.l.b16 %v670
      %v714 = vunpack.c.l.b16 %v671
      %v715 = vunpack.c.l.b16 %v672
      %v716 = vunpack.c.l.b16 %v673
      %v717 = vunpack.c.l.b16 %v674
      %v718 = vunpack.c.l.b16 %v675
      %v719 = vunpack.c.l.b16 %v676
      %v720 = vunpack.c.l.b16 %v677
      %v721 = vunpack.c.l.b16 %v678
      %v722 = vunpack.c.l.b16 %v679
      %v723 = vpack.c.b16 %v708, %v707
      %v724 = vpack.c.b16 %v710, %v709
      %v725 = vpack.c.b16 %v712, %v711
      %v726 = vpack.c.b16 %v714, %v713
      %v727 = vpack.c.b16 %v716, %v715
      %v728 = vpack.c.b16 %v718, %v717
      %v729 = vpack.c.b16 %v720, %v719
      %v730 = vpack.c.b16 %v722, %v721
      %739 = vmatprep.subr.bf16.mxu0 0
      %740 = vmatpush1.bf16.msra.mxu0 %v730
      %741 = vmatprep.subr.bf16.mxu0 0
      %742 = vmatpush1.bf16.msra.mxu0 %v729
      %743 = vmatprep.subr.bf16.mxu0 0
      %744 = vmatpush1.bf16.msra.mxu0 %v728
      %745 = vmatprep.subr.bf16.mxu0 0
      %746 = vmatpush1.bf16.msra.mxu0 %v727
      %747 = vmatprep.subr.bf16.mxu0 0
      %748 = vmatpush1.bf16.msra.mxu0 %v726
      %749 = vmatprep.subr.bf16.mxu0 0
      %750 = vmatpush1.bf16.msra.mxu0 %v725
      %751 = vmatprep.subr.bf16.mxu0 0
      %752 = vmatpush1.bf16.msra.mxu0 %v724
      %753 = vmatprep.subr.bf16.mxu0 0
      %754 = vmatpush1.bf16.msra.mxu0 %v723
      %755 = vmatprep.subr.bf16.mxu0 0
      %756 = vmatpush2.bf16.msra.mxu0 0
      %757 = vmatprep.subr.bf16.mxu0 0
      %758 = vmatpush2.bf16.msra.mxu0 0
      %759 = vmatprep.subr.bf16.mxu0 0
      %760 = vmatpush2.bf16.msra.mxu0 0
      %761 = vmatprep.subr.bf16.mxu0 0
      %762 = vmatpush2.bf16.msra.mxu0 0
      %763 = vmatprep.subr.bf16.mxu0 0
      %764 = vmatpush2.bf16.msra.mxu0 0
      %765 = vmatprep.subr.bf16.mxu0 0
      %766 = vmatpush2.bf16.msra.mxu0 0
      %767 = vmatprep.subr.bf16.mxu0 0
      %768 = vmatpush2.bf16.msra.mxu0 0
      %769 = vmatprep.subr.bf16.mxu0 0
      %770 = vmatpush2.bf16.msra.mxu0 0
      %771 = vmatprep.mubr.bf16.mxu0 0
      %772 = vmatmul.mubr.bf16.gmra.mxu0 %v689
      %v773 = vpop.f32.mrf.mxu0
      %v774 = vadd.f32 0.0, %v773
      %v775 = vpop.f32.mrf.mxu0
      %v776 = vpop.f32.mrf.mxu0
      %v777 = vadd.f32 0.0, %v776
      %v778 = vpop.f32.mrf.mxu0
      %779 = vdwg.mxu0
      %v780 = vadd.f32 %v659, %v774
      %v781 = vadd.f32 %v660, %v777
      %s782 = scalar_lea.vmem %s1, 320
      %v783 = vld [vmem:[%s782] sm:$0xf]
      %v784 = vld [vmem:[%s782 + $0x4] sm:$0xf]
      %v785 = vld [vmem:[%s782 + $0x8] sm:$0xf]
      %v786 = vld [vmem:[%s782 + $0xc] sm:$0xf]
      %v787 = vld [vmem:[%s782 + $0x10] sm:$0xf]
      %v788 = vld [vmem:[%s782 + $0x14] sm:$0xf]
      %v789 = vld [vmem:[%s782 + $0x18] sm:$0xf]
      %v790 = vld [vmem:[%s782 + $0x1c] sm:$0xf]
      %v791 = vld [vmem:[%s782 + $0x20] sm:$0xf]
      %v792 = vld [vmem:[%s782 + $0x24] sm:$0xf]
      %v793 = vld [vmem:[%s782 + $0x28] sm:$0xf]
      %v794 = vld [vmem:[%s782 + $0x2c] sm:$0xf]
      %v795 = vld [vmem:[%s782 + $0x30] sm:$0xf]
      %v796 = vld [vmem:[%s782 + $0x34] sm:$0xf]
      %v797 = vld [vmem:[%s782 + $0x38] sm:$0xf]
      %v798 = vld [vmem:[%s782 + $0x3c] sm:$0xf]
      %vm799 = vsmask.f32 4352
      %v801 = vshrl.u32 %v684, 16
      %v803 = vrot.slane %v801, 3
      %v804 = vshll.u32 %v684, 16
      %v806 = vrot.slane %v804, 4
      %v807 = vor.u32 %v803, %v806
      %v809 = vshrl.u32 %v685, 16
      %v811 = vrot.slane %v809, 3
      %v812 = vshll.u32 %v685, 16
      %v814 = vrot.slane %v812, 4
      %v815 = vor.u32 %v811, %v814
      %v816 = vsel %vm799, %v807, %v815
      %v834 = vunpack.c.l.b16 %v783
      %v835 = vunpack.c.l.b16 %v784
      %v836 = vunpack.c.l.b16 %v785
      %v837 = vunpack.c.l.b16 %v786
      %v838 = vunpack.c.l.b16 %v787
      %v839 = vunpack.c.l.b16 %v788
      %v840 = vunpack.c.l.b16 %v789
      %v841 = vunpack.c.l.b16 %v790
      %v842 = vunpack.c.l.b16 %v791
      %v843 = vunpack.c.l.b16 %v792
      %v844 = vunpack.c.l.b16 %v793
      %v845 = vunpack.c.l.b16 %v794
      %v846 = vunpack.c.l.b16 %v795
      %v847 = vunpack.c.l.b16 %v796
      %v848 = vunpack.c.l.b16 %v797
      %v849 = vunpack.c.l.b16 %v798
      %v850 = vpack.c.b16 %v835, %v834
      %v851 = vpack.c.b16 %v837, %v836
      %v852 = vpack.c.b16 %v839, %v838
      %v853 = vpack.c.b16 %v841, %v840
      %v854 = vpack.c.b16 %v843, %v842
      %v855 = vpack.c.b16 %v845, %v844
      %v856 = vpack.c.b16 %v847, %v846
      %v857 = vpack.c.b16 %v849, %v848
      %866 = vmatprep.subr.bf16.mxu0 0
      %867 = vmatpush1.bf16.msra.mxu0 %v857
      %868 = vmatprep.subr.bf16.mxu0 0
      %869 = vmatpush1.bf16.msra.mxu0 %v856
      %870 = vmatprep.subr.bf16.mxu0 0
      %871 = vmatpush1.bf16.msra.mxu0 %v855
      %872 = vmatprep.subr.bf16.mxu0 0
      %873 = vmatpush1.bf16.msra.mxu0 %v854
      %874 = vmatprep.subr.bf16.mxu0 0
      %875 = vmatpush1.bf16.msra.mxu0 %v853
      %876 = vmatprep.subr.bf16.mxu0 0
      %877 = vmatpush1.bf16.msra.mxu0 %v852
      %878 = vmatprep.subr.bf16.mxu0 0
      %879 = vmatpush1.bf16.msra.mxu0 %v851
      %880 = vmatprep.subr.bf16.mxu0 0
      %881 = vmatpush1.bf16.msra.mxu0 %v850
      %882 = vmatprep.subr.bf16.mxu0 0
      %883 = vmatpush2.bf16.msra.mxu0 0
      %884 = vmatprep.subr.bf16.mxu0 0
      %885 = vmatpush2.bf16.msra.mxu0 0
      %886 = vmatprep.subr.bf16.mxu0 0
      %887 = vmatpush2.bf16.msra.mxu0 0
      %888 = vmatprep.subr.bf16.mxu0 0
      %889 = vmatpush2.bf16.msra.mxu0 0
      %890 = vmatprep.subr.bf16.mxu0 0
      %891 = vmatpush2.bf16.msra.mxu0 0
      %892 = vmatprep.subr.bf16.mxu0 0
      %893 = vmatpush2.bf16.msra.mxu0 0
      %894 = vmatprep.subr.bf16.mxu0 0
      %895 = vmatpush2.bf16.msra.mxu0 0
      %896 = vmatprep.subr.bf16.mxu0 0
      %897 = vmatpush2.bf16.msra.mxu0 0
      %898 = vmatprep.mubr.bf16.mxu0 0
      %899 = vmatmul.mubr.bf16.gmra.mxu0 %v816
      %v900 = vpop.f32.mrf.mxu0
      %v901 = vadd.f32 0.0, %v900
      %v902 = vpop.f32.mrf.mxu0
      %v903 = vpop.f32.mrf.mxu0
      %v904 = vadd.f32 0.0, %v903
      %v905 = vpop.f32.mrf.mxu0
      %906 = vdwg.mxu0
      %v907 = vadd.f32 %v780, %v901
      %v908 = vadd.f32 %v781, %v904
      %v909 = vld [vmem:[%s163 + $0x4] sm:$0xe]
      %v910 = vld [vmem:[%s163 + $0x8] sm:$0xf]
      %s911 = scalar_lea.vmem %s1, 384
      %v912 = vld [vmem:[%s911] sm:$0xf]
      %v913 = vld [vmem:[%s911 + $0x4] sm:$0xf]
      %v914 = vld [vmem:[%s911 + $0x8] sm:$0xf]
      %v915 = vld [vmem:[%s911 + $0xc] sm:$0xf]
      %v916 = vld [vmem:[%s911 + $0x10] sm:$0xf]
      %v917 = vld [vmem:[%s911 + $0x14] sm:$0xf]
      %v918 = vld [vmem:[%s911 + $0x18] sm:$0xf]
      %v919 = vld [vmem:[%s911 + $0x1c] sm:$0xf]
      %v920 = vld [vmem:[%s911 + $0x20] sm:$0xf]
      %v921 = vld [vmem:[%s911 + $0x24] sm:$0xf]
      %v922 = vld [vmem:[%s911 + $0x28] sm:$0xf]
      %v923 = vld [vmem:[%s911 + $0x2c] sm:$0xf]
      %v924 = vld [vmem:[%s911 + $0x30] sm:$0xf]
      %v925 = vld [vmem:[%s911 + $0x34] sm:$0xf]
      %v926 = vld [vmem:[%s911 + $0x38] sm:$0xf]
      %v927 = vld [vmem:[%s911 + $0x3c] sm:$0xf]
      %v930 = vunpack.c.l.b16 %v909
      %v931 = vunpack.c.l.b16 %v910
      %v932 = vpack.c.b16 %v931, %v930
      %v933 = vrot.slane %v932, 1
      %v951 = vunpack.c.l.b16 %v912
      %v952 = vunpack.c.l.b16 %v913
      %v953 = vunpack.c.l.b16 %v914
      %v954 = vunpack.c.l.b16 %v915
      %v955 = vunpack.c.l.b16 %v916
      %v956 = vunpack.c.l.b16 %v917
      %v957 = vunpack.c.l.b16 %v918
      %v958 = vunpack.c.l.b16 %v919
      %v959 = vunpack.c.l.b16 %v920
      %v960 = vunpack.c.l.b16 %v921
      %v961 = vunpack.c.l.b16 %v922
      %v962 = vunpack.c.l.b16 %v923
      %v963 = vunpack.c.l.b16 %v924
      %v964 = vunpack.c.l.b16 %v925
      %v965 = vunpack.c.l.b16 %v926
      %v966 = vunpack.c.l.b16 %v927
      %v967 = vpack.c.b16 %v952, %v951
      %v968 = vpack.c.b16 %v954, %v953
      %v969 = vpack.c.b16 %v956, %v955
      %v970 = vpack.c.b16 %v958, %v957
      %v971 = vpack.c.b16 %v960, %v959
      %v972 = vpack.c.b16 %v962, %v961
      %v973 = vpack.c.b16 %v964, %v963
      %v974 = vpack.c.b16 %v966, %v965
      %983 = vmatprep.subr.bf16.mxu0 0
      %984 = vmatpush1.bf16.msra.mxu0 %v974
      %985 = vmatprep.subr.bf16.mxu0 0
      %986 = vmatpush1.bf16.msra.mxu0 %v973
      %987 = vmatprep.subr.bf16.mxu0 0
      %988 = vmatpush1.bf16.msra.mxu0 %v972
      %989 = vmatprep.subr.bf16.mxu0 0
      %990 = vmatpush1.bf16.msra.mxu0 %v971
      %991 = vmatprep.subr.bf16.mxu0 0
      %992 = vmatpush1.bf16.msra.mxu0 %v970
      %993 = vmatprep.subr.bf16.mxu0 0
      %994 = vmatpush1.bf16.msra.mxu0 %v969
      %995 = vmatprep.subr.bf16.mxu0 0
      %996 = vmatpush1.bf16.msra.mxu0 %v968
      %997 = vmatprep.subr.bf16.mxu0 0
      %998 = vmatpush1.bf16.msra.mxu0 %v967
      %999 = vmatprep.subr.bf16.mxu0 0
      %1000 = vmatpush2.bf16.msra.mxu0 0
      %1001 = vmatprep.subr.bf16.mxu0 0
      %1002 = vmatpush2.bf16.msra.mxu0 0
      %1003 = vmatprep.subr.bf16.mxu0 0
      %1004 = vmatpush2.bf16.msra.mxu0 0
      %1005 = vmatprep.subr.bf16.mxu0 0
      %1006 = vmatpush2.bf16.msra.mxu0 0
      %1007 = vmatprep.subr.bf16.mxu0 0
      %1008 = vmatpush2.bf16.msra.mxu0 0
      %1009 = vmatprep.subr.bf16.mxu0 0
      %1010 = vmatpush2.bf16.msra.mxu0 0
      %1011 = vmatprep.subr.bf16.mxu0 0
      %1012 = vmatpush2.bf16.msra.mxu0 0
      %1013 = vmatprep.subr.bf16.mxu0 0
      %1014 = vmatpush2.bf16.msra.mxu0 0
      %1015 = vmatprep.mubr.bf16.mxu0 0
      %1016 = vmatmul.mubr.bf16.gmra.mxu0 %v933
      %v1017 = vpop.f32.mrf.mxu0
      %v1018 = vadd.f32 0.0, %v1017
      %v1019 = vpop.f32.mrf.mxu0
      %v1020 = vpop.f32.mrf.mxu0
      %v1021 = vadd.f32 0.0, %v1020
      %v1022 = vpop.f32.mrf.mxu0
      %1023 = vdwg.mxu0
      %v1024 = vadd.f32 %v907, %v1018
      %v1025 = vadd.f32 %v908, %v1021
      %s1026 = scalar_lea.vmem %s1, 448
      %v1027 = vld [vmem:[%s1026] sm:$0xf]
      %v1028 = vld [vmem:[%s1026 + $0x4] sm:$0xf]
      %v1029 = vld [vmem:[%s1026 + $0x8] sm:$0xf]
      %v1030 = vld [vmem:[%s1026 + $0xc] sm:$0xf]
      %v1031 = vld [vmem:[%s1026 + $0x10] sm:$0xf]
      %v1032 = vld [vmem:[%s1026 + $0x14] sm:$0xf]
      %v1033 = vld [vmem:[%s1026 + $0x18] sm:$0xf]
      %v1034 = vld [vmem:[%s1026 + $0x1c] sm:$0xf]
      %v1035 = vld [vmem:[%s1026 + $0x20] sm:$0xf]
      %v1036 = vld [vmem:[%s1026 + $0x24] sm:$0xf]
      %v1037 = vld [vmem:[%s1026 + $0x28] sm:$0xf]
      %v1038 = vld [vmem:[%s1026 + $0x2c] sm:$0xf]
      %v1039 = vld [vmem:[%s1026 + $0x30] sm:$0xf]
      %v1040 = vld [vmem:[%s1026 + $0x34] sm:$0xf]
      %v1041 = vld [vmem:[%s1026 + $0x38] sm:$0xf]
      %v1042 = vld [vmem:[%s1026 + $0x3c] sm:$0xf]
      %v1044 = vshrl.u32 %v932, 16
      %v1046 = vrot.slane %v1044, 1
      %v1047 = vshll.u32 %v932, 16
      %v1049 = vrot.slane %v1047, 2
      %v1050 = vor.u32 %v1046, %v1049
      %v1068 = vunpack.c.l.b16 %v1027
      %v1069 = vunpack.c.l.b16 %v1028
      %v1070 = vunpack.c.l.b16 %v1029
      %v1071 = vunpack.c.l.b16 %v1030
      %v1072 = vunpack.c.l.b16 %v1031
      %v1073 = vunpack.c.l.b16 %v1032
      %v1074 = vunpack.c.l.b16 %v1033
      %v1075 = vunpack.c.l.b16 %v1034
      %v1076 = vunpack.c.l.b16 %v1035
      %v1077 = vunpack.c.l.b16 %v1036
      %v1078 = vunpack.c.l.b16 %v1037
      %v1079 = vunpack.c.l.b16 %v1038
      %v1080 = vunpack.c.l.b16 %v1039
      %v1081 = vunpack.c.l.b16 %v1040
      %v1082 = vunpack.c.l.b16 %v1041
      %v1083 = vunpack.c.l.b16 %v1042
      %v1084 = vpack.c.b16 %v1069, %v1068
      %v1085 = vpack.c.b16 %v1071, %v1070
      %v1086 = vpack.c.b16 %v1073, %v1072
      %v1087 = vpack.c.b16 %v1075, %v1074
      %v1088 = vpack.c.b16 %v1077, %v1076
      %v1089 = vpack.c.b16 %v1079, %v1078
      %v1090 = vpack.c.b16 %v1081, %v1080
      %v1091 = vpack.c.b16 %v1083, %v1082
      %1100 = vmatprep.subr.bf16.mxu0 0
      %1101 = vmatpush1.bf16.msra.mxu0 %v1091
      %1102 = vmatprep.subr.bf16.mxu0 0
      %1103 = vmatpush1.bf16.msra.mxu0 %v1090
      %1104 = vmatprep.subr.bf16.mxu0 0
      %1105 = vmatpush1.bf16.msra.mxu0 %v1089
      %1106 = vmatprep.subr.bf16.mxu0 0
      %1107 = vmatpush1.bf16.msra.mxu0 %v1088
      %1108 = vmatprep.subr.bf16.mxu0 0
      %1109 = vmatpush1.bf16.msra.mxu0 %v1087
      %1110 = vmatprep.subr.bf16.mxu0 0
      %1111 = vmatpush1.bf16.msra.mxu0 %v1086
      %1112 = vmatprep.subr.bf16.mxu0 0
      %1113 = vmatpush1.bf16.msra.mxu0 %v1085
      %1114 = vmatprep.subr.bf16.mxu0 0
      %1115 = vmatpush1.bf16.msra.mxu0 %v1084
      %1116 = vmatprep.subr.bf16.mxu0 0
      %1117 = vmatpush2.bf16.msra.mxu0 0
      %1118 = vmatprep.subr.bf16.mxu0 0
      %1119 = vmatpush2.bf16.msra.mxu0 0
      %1120 = vmatprep.subr.bf16.mxu0 0
      %1121 = vmatpush2.bf16.msra.mxu0 0
      %1122 = vmatprep.subr.bf16.mxu0 0
      %1123 = vmatpush2.bf16.msra.mxu0 0
      %1124 = vmatprep.subr.bf16.mxu0 0
      %1125 = vmatpush2.bf16.msra.mxu0 0
      %1126 = vmatprep.subr.bf16.mxu0 0
      %1127 = vmatpush2.bf16.msra.mxu0 0
      %1128 = vmatprep.subr.bf16.mxu0 0
      %1129 = vmatpush2.bf16.msra.mxu0 0
      %1130 = vmatprep.subr.bf16.mxu0 0
      %1131 = vmatpush2.bf16.msra.mxu0 0
      %1132 = vmatprep.mubr.bf16.mxu0 0
      %1133 = vmatmul.mubr.bf16.gmra.mxu0 %v1050
      %v1134 = vpop.f32.mrf.mxu0
      %v1135 = vadd.f32 0.0, %v1134
      %v1136 = vpop.f32.mrf.mxu0
      %v1137 = vpop.f32.mrf.mxu0
      %v1138 = vadd.f32 0.0, %v1137
      %v1139 = vpop.f32.mrf.mxu0
      %1140 = vdwg.mxu0
      %v1141 = vadd.f32 %v1024, %v1135
      %v1142 = vadd.f32 %v1025, %v1138
      %v1143 = vld [vmem:[%s163 + $0x4] sm:$0xc]
      %v1144 = vld [vmem:[%s163 + $0x8] sm:$0xf]
      %v1145 = vld [vmem:[%s163 + $0xc] sm:$0x1]
      %s1146 = scalar_lea.vmem %s1, 512
      %v1147 = vld [vmem:[%s1146] sm:$0xf]
      %v1148 = vld [vmem:[%s1146 + $0x4] sm:$0xf]
      %v1149 = vld [vmem:[%s1146 + $0x8] sm:$0xf]
      %v1150 = vld [vmem:[%s1146 + $0xc] sm:$0xf]
      %v1151 = vld [vmem:[%s1146 + $0x10] sm:$0xf]
      %v1152 = vld [vmem:[%s1146 + $0x14] sm:$0xf]
      %v1153 = vld [vmem:[%s1146 + $0x18] sm:$0xf]
      %v1154 = vld [vmem:[%s1146 + $0x1c] sm:$0xf]
      %v1155 = vld [vmem:[%s1146 + $0x20] sm:$0xf]
      %v1156 = vld [vmem:[%s1146 + $0x24] sm:$0xf]
      %v1157 = vld [vmem:[%s1146 + $0x28] sm:$0xf]
      %v1158 = vld [vmem:[%s1146 + $0x2c] sm:$0xf]
      %v1159 = vld [vmem:[%s1146 + $0x30] sm:$0xf]
      %v1160 = vld [vmem:[%s1146 + $0x34] sm:$0xf]
      %v1161 = vld [vmem:[%s1146 + $0x38] sm:$0xf]
      %v1162 = vld [vmem:[%s1146 + $0x3c] sm:$0xf]
      %v1166 = vunpack.c.l.b16 %v1143
      %v1167 = vunpack.c.l.b16 %v1144
      %v1168 = vunpack.c.l.b16 %v1145
      %v1169 = vpack.c.b16 %v1167, %v1166
      %v1170 = vpack.c.b16 %v1168, %v1168
      %vm1171 = vcmask 1045504
      %v1172 = vrot.slane %v1169, 2
      %v1173 = vrot.slane %v1170, 2
      %v1174 = vsel %vm1171, %v1172, %v1173
      %v1192 = vunpack.c.l.b16 %v1147
      %v1193 = vunpack.c.l.b16 %v1148
      %v1194 = vunpack.c.l.b16 %v1149
      %v1195 = vunpack.c.l.b16 %v1150
      %v1196 = vunpack.c.l.b16 %v1151
      %v1197 = vunpack.c.l.b16 %v1152
      %v1198 = vunpack.c.l.b16 %v1153
      %v1199 = vunpack.c.l.b16 %v1154
      %v1200 = vunpack.c.l.b16 %v1155
      %v1201 = vunpack.c.l.b16 %v1156
      %v1202 = vunpack.c.l.b16 %v1157
      %v1203 = vunpack.c.l.b16 %v1158
      %v1204 = vunpack.c.l.b16 %v1159
      %v1205 = vunpack.c.l.b16 %v1160
      %v1206 = vunpack.c.l.b16 %v1161
      %v1207 = vunpack.c.l.b16 %v1162
      %v1208 = vpack.c.b16 %v1193, %v1192
      %v1209 = vpack.c.b16 %v1195, %v1194
      %v1210 = vpack.c.b16 %v1197, %v1196
      %v1211 = vpack.c.b16 %v1199, %v1198
      %v1212 = vpack.c.b16 %v1201, %v1200
      %v1213 = vpack.c.b16 %v1203, %v1202
      %v1214 = vpack.c.b16 %v1205, %v1204
      %v1215 = vpack.c.b16 %v1207, %v1206
      %1224 = vmatprep.subr.bf16.mxu0 0
      %1225 = vmatpush1.bf16.msra.mxu0 %v1215
      %1226 = vmatprep.subr.bf16.mxu0 0
      %1227 = vmatpush1.bf16.msra.mxu0 %v1214
      %1228 = vmatprep.subr.bf16.mxu0 0
      %1229 = vmatpush1.bf16.msra.mxu0 %v1213
      %1230 = vmatprep.subr.bf16.mxu0 0
      %1231 = vmatpush1.bf16.msra.mxu0 %v1212
      %1232 = vmatprep.subr.bf16.mxu0 0
      %1233 = vmatpush1.bf16.msra.mxu0 %v1211
      %1234 = vmatprep.subr.bf16.mxu0 0
      %1235 = vmatpush1.bf16.msra.mxu0 %v1210
      %1236 = vmatprep.subr.bf16.mxu0 0
      %1237 = vmatpush1.bf16.msra.mxu0 %v1209
      %1238 = vmatprep.subr.bf16.mxu0 0
      %1239 = vmatpush1.bf16.msra.mxu0 %v1208
      %1240 = vmatprep.subr.bf16.mxu0 0
      %1241 = vmatpush2.bf16.msra.mxu0 0
      %1242 = vmatprep.subr.bf16.mxu0 0
      %1243 = vmatpush2.bf16.msra.mxu0 0
      %1244 = vmatprep.subr.bf16.mxu0 0
      %1245 = vmatpush2.bf16.msra.mxu0 0
      %1246 = vmatprep.subr.bf16.mxu0 0
      %1247 = vmatpush2.bf16.msra.mxu0 0
      %1248 = vmatprep.subr.bf16.mxu0 0
      %1249 = vmatpush2.bf16.msra.mxu0 0
      %1250 = vmatprep.subr.bf16.mxu0 0
      %1251 = vmatpush2.bf16.msra.mxu0 0
      %1252 = vmatprep.subr.bf16.mxu0 0
      %1253 = vmatpush2.bf16.msra.mxu0 0
      %1254 = vmatprep.subr.bf16.mxu0 0
      %1255 = vmatpush2.bf16.msra.mxu0 0
      %1256 = vmatprep.mubr.bf16.mxu0 0
      %1257 = vmatmul.mubr.bf16.gmra.mxu0 %v1174
      %v1258 = vpop.f32.mrf.mxu0
      %v1259 = vadd.f32 0.0, %v1258
      %v1260 = vpop.f32.mrf.mxu0
      %v1261 = vpop.f32.mrf.mxu0
      %v1262 = vadd.f32 0.0, %v1261
      %v1263 = vpop.f32.mrf.mxu0
      %1264 = vdwg.mxu0
      %v1265 = vadd.f32 %v1141, %v1259
      %v1266 = vadd.f32 %v1142, %v1262
      %v1267 = vmax.f32 %v1265, 0.0
      %v1268 = vmax.f32 %v1266, 0.0
      %1269 = vst [vmem:[#allocation2] sm:$0xff] %v1267
      %1270 = vst [vmem:[#allocation2 + $0x8] sm:$0x1f] %v1268
      %v1271 = vld [vmem:[#allocation2] sm:$0x7]
      %v1272 = vld [vmem:[#allocation2 + $0x5] sm:$0x7]
      %v1273 = vmax.f32 %v1271, %v1272
      %v1274 = vld [vmem:[#allocation2 + $0xa] sm:$0x7]
      %v1275 = vmax.f32 %v1273, %v1274
      %vm1276 = vcmask 1042432
      %v1277 = vsel %vm1276, %v1275, -inf
      %v1278 = vrot.slane %v1277, 4
      %v1279 = vmax.f32 %v1277, %v1278
      %v1280 = vrot.slane %v1279, 2
      %v1281 = vmax.f32 %v1279, %v1280
      %v1282 = vrot.slane %v1281, 1
      %v1283 = vmax.f32 %v1281, %v1282
      %v1284 = vpack.c.bf16 %v1283, %v1283
      %vm1285 = vcmask 1040384
      %vm1286 = vsmask.f32 256
      %vm1287 = vmand %vm1285, %vm1286
      %v1288 = vld [vmem:[%s166] sm:$0x1]
      %v1289 = vsel %vm1287, %v1284, %v1288
      %1290 = vst [vmem:[%s166] sm:$0x1] %v1289
      %p1291 = scmp.lt.s32.totalorder %s14, 1
      %s1292 = scalar_select %p1291, %s14, 1
      %s1293 = scalar_lea.vmem %s3, %s1292
      // Predicated region
      $region33: #{alexnet_embeddings.10} parent=31 // pred_check
        %p1294 = pneg %p100
      $region34: #{alexnet_embeddings.10} parent=31 // pred_check_branch
        %1296 = sbr.rel (%p1294) target = $region36
      $region35: #{alexnet_embeddings.10} parent=31 // pred_region
        _
      $region36: #{alexnet_embeddings.10} parent=31 // pred_fallthru
        _
    $region32: #{alexnet_embeddings.10} parent=5 // pred_fallthru
      _
    %p1297 = scmp.le.s32.totalorder 2, %s9
    // Predicated region
    $region37: #{alexnet_embeddings.10} parent=5 // pred_check
      %p1298 = pneg %p1297
    $region38: #{alexnet_embeddings.10} parent=5 // pred_check_branch
      %1300 = sbr.rel (%p1298) target = $region40
    $region39: #{alexnet_embeddings.10} parent=5 // pred_region
      %s1301 = ssub.s32 %s9, 2
      // Predicated region
      $region41: #{alexnet_embeddings.10} parent=39 // pred_check
        %p1302 = pneg %p106
      $region42: #{alexnet_embeddings.10} parent=39 // pred_check_branch
        %1304 = sbr.rel (%p1302) target = $region44
      $region43: #{alexnet_embeddings.10} parent=39 // pred_region
        %p1305 = scmp.lt.s32.totalorder %s15, 1
        %s1306 = scalar_select %p1305, %s15, 1
        %s1307 = scalar_lea.vmem %s3, %s1306
      $region44: #{alexnet_embeddings.10} parent=39 // pred_fallthru
        _
    $region40: #{alexnet_embeddings.10} parent=5 // pred_fallthru
      _
  $region6: #{alexnet_embeddings.10} parent=0 // loop_footer
    %s13 = sadd.s32 1, %s9
  $region7: #{alexnet_embeddings.10} parent=0 // loop_footer_branch
    %8 = sbr.rel target = $region3
  $region8: #{alexnet_embeddings.10} parent=0 // loop_exit
    _

</llo_original>
